<compile_context>
chip_gen: v6e
topology: v6e:2x2x1
jax: 0.10.0
libtpu: 0.0.40
codegen_flags: <defaults>
</compile_context>

<pallas_src>
import functools
import math

import jax
import jax.numpy as jnp
from jax.experimental import pallas as pl
from jax.experimental.pallas import tpu as pltpu  # noqa: F401

# ----------------------- small synthetic configuration -----------------------
IMG_H = 16          # input image height
IMG_W = 80          # input image width (cropped to IMG_W - 64 = 16 inside forward)
IN_CH = 3
PATCH = 4
EMBED_DIM = 32      # ViT embed dim
NUM_HEADS = 4
MLP_DIM = 64
DEPTH = 2           # number of ViT encoder blocks
HEAD_DIM = 32       # SMPL-head transformer-decoder dim
HEAD_MLP_DIM = 64
NUM_JOINTS = 24     # 1 global_orient + 23 body_pose
NPOSE = NUM_JOINTS * 6
NUM_BETAS = 10
OUT_RAW = NPOSE + NUM_BETAS + 3   # 157 = pose6d | betas | cam
OUT_PAD = 256                     # lane-dense padded width for the fused head output
LN_EPS = 1e-6

HP = IMG_H // PATCH
WP = (IMG_W - 64) // PATCH
N_TOKENS = HP * WP


# ------------------------------ kernel helpers -------------------------------
def _layernorm(x, g, b):
    mu = jnp.mean(x, axis=-1, keepdims=True)
    var = jnp.mean((x - mu) ** 2, axis=-1, keepdims=True)
    return (x - mu) * jax.lax.rsqrt(var + LN_EPS) * g + b


def _softmax_lastdim(s):
    s = s - jnp.max(s, axis=-1, keepdims=True)
    p = jnp.exp(s)
    return p * pl.reciprocal(jnp.sum(p, axis=-1, keepdims=True), approx=True)


# ------------------------------- Pallas kernels -------------------------------
def _backbone_kernel(patch_ref, pw_ref, pb_ref, pos_ref,
                     ln1g_ref, ln1b_ref, wqkv_ref, bqkv_ref, wo_ref, bo_ref,
                     ln2g_ref, ln2b_ref, w1_ref, b1_ref, w2_ref, b2_ref,
                     o_ref, *, b, n):
    """Fused ViT backbone: patch-embed + pos-emb + DEPTH encoder blocks.

    Works on the batch-folded token slab x: (B*N, D).
    """
    d = EMBED_DIM
    hd = d // NUM_HEADS
    scale = 1.0 / math.sqrt(hd)

    # patch embedding (conv-as-matmul) + positional embedding
    x = jnp.dot(patch_ref[...], pw_ref[...],
                preferred_element_type=jnp.float32) + pb_ref[...]
    x = (x.reshape(b, n, d) + pos_ref[...]).reshape(b * n, d)

    for blk in range(DEPTH):                      # static unroll over depth
        # ---- multi-head self-attention ----
        xn = _layernorm(x, ln1g_ref[blk], ln1b_ref[blk])
        qkv = jnp.dot(xn, wqkv_ref[blk],
                      preferred_element_type=jnp.float32) + bqkv_ref[blk]
        wo = wo_ref[blk]
        attn = jnp.zeros((b * n, d), jnp.float32)
        for h in range(NUM_HEADS):                # static unroll over heads
            q = qkv[:, h * hd:(h + 1) * hd].reshape(b, n, hd)
            k = qkv[:, d + h * hd:d + (h + 1) * hd].reshape(b, n, hd)
            v = qkv[:, 2 * d + h * hd:2 * d + (h + 1) * hd].reshape(b, n, hd)
            s = jnp.einsum('bqd,bkd->bqk', q, k,
                           preferred_element_type=jnp.float32) * scale
            p = _softmax_lastdim(s)
            ctx = jnp.einsum('bqk,bkd->bqd', p, v,
                             preferred_element_type=jnp.float32)
            # fold the head-merge into the output projection (no lane concat)
            attn = attn + jnp.dot(ctx.reshape(b * n, hd),
                                  wo[h * hd:(h + 1) * hd, :],
                                  preferred_element_type=jnp.float32)
        x = x + attn + bo_ref[blk]

        # ---- MLP ----
        xn = _layernorm(x, ln2g_ref[blk], ln2b_ref[blk])
        # TODO(synk): PyTorch nn.GELU defaults to exact erf; tanh approximation kept here.
        h1 = jax.nn.gelu(jnp.dot(xn, w1_ref[blk],
                                 preferred_element_type=jnp.float32) + b1_ref[blk])
        x = x + jnp.dot(h1, w2_ref[blk],
                        preferred_element_type=jnp.float32) + b2_ref[blk]

    o_ref[...] = x.astype(o_ref.dtype)


def _head_kernel(ctx_ref, tok0_ref,
                 lnq_g, lnq_b, wq, bq, wk, bk, wv, bv, wo, bo,
                 ln2_g, ln2_b, w1, b1, w2, b2, wout, bout,
                 o_main_ref, o_camt_ref, *, b, n):
    """Fused SMPL head: cross-attn decoder block + fused output projections
    (pose6d|betas|cam padded to 256 lanes) + pred_cam_t."""
    ctx = ctx_ref[...]                                        # (B*N, D)
    tok = jnp.broadcast_to(tok0_ref[...], (b, HEAD_DIM))      # (B, Dh)

    # single-head cross-attention: 1 query token per batch attends over ctx
    q = jnp.dot(_layernorm(tok, lnq_g[...], lnq_b[...]), wq[...],
                preferred_element_type=jnp.float32) + bq[...]            # (B, Dh)
    k = (jnp.dot(ctx, wk[...], preferred_element_type=jnp.float32)
         + bk[...]).reshape(b, n, HEAD_DIM)
    v = (jnp.dot(ctx, wv[...], preferred_element_type=jnp.float32)
         + bv[...]).reshape(b, n, HEAD_DIM)

    s = jnp.sum(q[:, None, :] * k, axis=-1) * (1.0 / math.sqrt(HEAD_DIM))  # (B, N)
    p = _softmax_lastdim(s)
    attn = jnp.sum(p[:, :, None] * v, axis=1)                              # (B, Dh)
    attn = jnp.dot(attn, wo[...], preferred_element_type=jnp.float32) + bo[...]
    tok = tok + attn

    hmid = jnp.dot(_layernorm(tok, ln2_g[...], ln2_b[...]), w1[...],
                   preferred_element_type=jnp.float32) + b1[...]
    hmid = jax.nn.gelu(hmid)
    tok = tok + jnp.dot(hmid, w2[...], preferred_element_type=jnp.float32) + b2[...]

    # fused decpose/decshape/deccam projection; init offsets folded into bout;
    # padded to a lane-dense 256-wide output slab.
    out = jnp.dot(tok, wout[...], preferred_element_type=jnp.float32) + bout[...]
    o_main_ref[...] = out.astype(o_main_ref.dtype)

    # pred_cam_t = [cam_y, cam_z, 2*f / (256*cam_s + 1e-9)] with f = 5000
    cam = out[:, NPOSE + NUM_BETAS:NPOSE + NUM_BETAS + 3]
    tz = (2.0 * 5000.0) * pl.reciprocal(256.0 * cam[:, 0:1] + 1e-9, approx=True)
    o_camt_ref[...] = jnp.concatenate([cam[:, 1:2], cam[:, 2:3], tz],
                                      axis=-1).astype(o_camt_ref.dtype)


# --------------------------------- JAX glue ----------------------------------
def rot6d_to_rotmat(x):
    """x: [B, NUM_JOINTS*6] -> [B*NUM_JOINTS, 3, 3] (matches hmr2 rot6d_to_rotmat)."""
    x = x.reshape(-1, 3, 2)
    a1 = x[:, :, 0]
    a2 = x[:, :, 1]
    b1 = a1 / jnp.maximum(jnp.linalg.norm(a1, axis=-1, keepdims=True), 1e-8)
    dot = jnp.sum(b1 * a2, axis=-1, keepdims=True)
    b2u = a2 - dot * b1
    b2 = b2u / jnp.maximum(jnp.linalg.norm(b2u, axis=-1, keepdims=True), 1e-8)
    b3 = jnp.cross(b1, b2)
    return jnp.stack([b1, b2, b3], axis=-1)


def backbone_forward(params, x):
    """Fused ViT backbone. x: cropped NCHW image [B, 3, H, 16] -> tokens [B*N, D]."""
    bsz, c, h, w = x.shape
    hp, wp = h // PATCH, w // PATCH
    n = hp * wp
    # patch extraction (kernel == stride == PATCH) as a layout shuffle
    patches = x.reshape(bsz, c, hp, PATCH, wp, PATCH)
    patches = patches.transpose(0, 2, 4, 1, 3, 5).reshape(bsz * n, c * PATCH * PATCH)
    blk = params['blocks']
    tokens = pl.pallas_call(
        functools.partial(_backbone_kernel, b=bsz, n=n),
        out_shape=jax.ShapeDtypeStruct((bsz * n, EMBED_DIM), jnp.float32),
    )(patches, params['patch_w'], params['patch_b'], params['pos_emb'],
      blk['ln1_g'], blk['ln1_b'], blk['wqkv'], blk['bqkv'], blk['wo'], blk['bo'],
      blk['ln2_g'], blk['ln2_b'], blk['w1'], blk['b1'], blk['w2'], blk['b2'])
    return tokens   # [B*N, D] conditioning tokens (no NCHW round-trip)


def smpl_head_forward(params, tokens, bsz):
    """Fused SMPLTransformerDecoderHead (single cross-attn decoder layer)."""
    n = tokens.shape[0] // bsz
    dec = params['dec']
    out, pred_cam_t = pl.pallas_call(
        functools.partial(_head_kernel, b=bsz, n=n),
        out_shape=(jax.ShapeDtypeStruct((bsz, OUT_PAD), jnp.float32),
                   jax.ShapeDtypeStruct((bsz, 3), jnp.float32)),
    )(tokens, params['init_token'],
      dec['lnq_g'], dec['lnq_b'], dec['wq'], dec['bq'], dec['wk'], dec['bk'],
      dec['wv'], dec['bv'], dec['wo'], dec['bo'],
      dec['ln2_g'], dec['ln2_b'], dec['w1'], dec['b1'], dec['w2'], dec['b2'],
      params['wout'], params['bout'])

    pred_pose6d = out[:, :NPOSE]
    pred_betas = out[:, NPOSE:NPOSE + NUM_BETAS]
    pred_cam = out[:, NPOSE + NUM_BETAS:NPOSE + NUM_BETAS + 3]

    rotmats = rot6d_to_rotmat(pred_pose6d).reshape(bsz, NUM_JOINTS, 3, 3)
    pred_smpl_params = {
        'global_orient': rotmats[:, :1],    # [B, 1, 3, 3]
        'body_pose': rotmats[:, 1:],        # [B, 23, 3, 3]
        'betas': pred_betas,                # [B, 10]
    }
    return pred_smpl_params, pred_cam, pred_cam_t


def hmr2_forward(params, batch):
    x = batch
    batch_size = x.shape[0]
    conditioning_tokens = backbone_forward(params['backbone'], x[:, :, :, 32:-32])
    pred_smpl_params, pred_cam, pred_cam_t = smpl_head_forward(
        params['head'], conditioning_tokens, batch_size)

    output = {}
    output['pred_cam'] = pred_cam
    output['pred_smpl_params'] = {k: v for k, v in pred_smpl_params.items()}
    dtype = pred_smpl_params['body_pose'].dtype
    focal_length = 5000.0 * jnp.ones((batch_size, 2), dtype=dtype)
    output['pred_cam_t'] = pred_cam_t
    output['focal_length'] = focal_length
    return output


# ------------------------------ parameter setup -------------------------------
def _dense(key, fan_in, fan_out, scale=0.02):
    return jax.random.normal(key, (fan_in, fan_out), jnp.float32) * scale


def init_params(key):
    keys = jax.random.split(key, 32)
    ki = iter(keys)

    backbone = {
        'patch_w': _dense(next(ki), IN_CH * PATCH * PATCH, EMBED_DIM),
        'patch_b': jnp.zeros((1, EMBED_DIM), jnp.float32),
        'pos_emb': jax.random.normal(next(ki), (N_TOKENS, EMBED_DIM), jnp.float32) * 0.02,
        # per-block weights stacked along a leading DEPTH axis
        'blocks': {
            'ln1_g': jnp.ones((DEPTH, 1, EMBED_DIM), jnp.float32),
            'ln1_b': jnp.zeros((DEPTH, 1, EMBED_DIM), jnp.float32),
            'wqkv': jax.random.normal(next(ki), (DEPTH, EMBED_DIM, 3 * EMBED_DIM),
                                      jnp.float32) * 0.02,
            'bqkv': jnp.zeros((DEPTH, 1, 3 * EMBED_DIM), jnp.float32),
            'wo': jax.random.normal(next(ki), (DEPTH, EMBED_DIM, EMBED_DIM),
                                    jnp.float32) * 0.02,
            'bo': jnp.zeros((DEPTH, 1, EMBED_DIM), jnp.float32),
            'ln2_g': jnp.ones((DEPTH, 1, EMBED_DIM), jnp.float32),
            'ln2_b': jnp.zeros((DEPTH, 1, EMBED_DIM), jnp.float32),
            'w1': jax.random.normal(next(ki), (DEPTH, EMBED_DIM, MLP_DIM),
                                    jnp.float32) * 0.02,
            'b1': jnp.zeros((DEPTH, 1, MLP_DIM), jnp.float32),
            'w2': jax.random.normal(next(ki), (DEPTH, MLP_DIM, EMBED_DIM),
                                    jnp.float32) * 0.02,
            'b2': jnp.zeros((DEPTH, 1, EMBED_DIM), jnp.float32),
        },
    }

    dec = {
        'lnq_g': jnp.ones((1, HEAD_DIM), jnp.float32),
        'lnq_b': jnp.zeros((1, HEAD_DIM), jnp.float32),
        'wq': _dense(next(ki), HEAD_DIM, HEAD_DIM),
        'bq': jnp.zeros((1, HEAD_DIM), jnp.float32),
        'wk': _dense(next(ki), EMBED_DIM, HEAD_DIM),
        'bk': jnp.zeros((1, HEAD_DIM), jnp.float32),
        'wv': _dense(next(ki), EMBED_DIM, HEAD_DIM),
        'bv': jnp.zeros((1, HEAD_DIM), jnp.float32),
        'wo': _dense(next(ki), HEAD_DIM, HEAD_DIM),
        'bo': jnp.zeros((1, HEAD_DIM), jnp.float32),
        'ln2_g': jnp.ones((1, HEAD_DIM), jnp.float32),
        'ln2_b': jnp.zeros((1, HEAD_DIM), jnp.float32),
        'w1': _dense(next(ki), HEAD_DIM, HEAD_MLP_DIM),
        'b1': jnp.zeros((1, HEAD_MLP_DIM), jnp.float32),
        'w2': _dense(next(ki), HEAD_MLP_DIM, HEAD_DIM),
        'b2': jnp.zeros((1, HEAD_DIM), jnp.float32),
    }

    # fused output projection [decpose | decshape | deccam], biases (zero) + init
    # offsets folded into bout, padded to a lane-dense 256-wide slab.
    decpose_w = _dense(next(ki), HEAD_DIM, NPOSE)
    decshape_w = _dense(next(ki), HEAD_DIM, NUM_BETAS)
    deccam_w = _dense(next(ki), HEAD_DIM, 3)
    # identity rotation in 6D (for the reshape(-1,3,2) convention) = [1,0,0,1,0,0]
    init_body_pose = jnp.tile(jnp.array([1., 0., 0., 1., 0., 0.], jnp.float32),
                              (NUM_JOINTS,))
    init_betas = jnp.zeros((NUM_BETAS,), jnp.float32)
    init_cam = jnp.array([0.9, 0.0, 0.0], jnp.float32)
    wout = jnp.concatenate([decpose_w, decshape_w, deccam_w], axis=1)        # (Dh, 157)
    wout = jnp.pad(wout, ((0, 0), (0, OUT_PAD - OUT_RAW)))                   # (Dh, 256)
    bout = jnp.concatenate([init_body_pose, init_betas, init_cam])           # (157,)
    bout = jnp.pad(bout, (0, OUT_PAD - OUT_RAW)).reshape(1, OUT_PAD)         # (1, 256)

    head = {
        'init_token': jax.random.normal(next(ki), (1, HEAD_DIM), jnp.float32) * 0.02,
        'dec': dec,
        'wout': wout,
        'bout': bout,
    }
    return {'backbone': backbone, 'head': head}


# ----------------------------------- main -------------------------------------
if __name__ == "__main__":
    key = jax.random.PRNGKey(0)
    k_param, k_data = jax.random.split(key)
    params = init_params(k_param)
    # NCHW image batch; width 80 so that the [:, :, :, 32:-32] crop leaves 16 cols
    x = jax.random.normal(k_data, (2, IN_CH, IMG_H, IMG_W), jnp.float32)

    fwd = jax.jit(hmr2_forward)
    out = fwd(params, x)
    jax.block_until_ready(out)

    # sanity on output shapes (mirrors the PyTorch module's output dict)
    assert out['pred_cam'].shape == (2, 3)
    assert out['pred_cam_t'].shape == (2, 3)
    assert out['focal_length'].shape == (2, 2)
    assert out['pred_smpl_params']['global_orient'].shape == (2, 1, 3, 3)
    assert out['pred_smpl_params']['body_pose'].shape == (2, 23, 3, 3)
    assert out['pred_smpl_params']['betas'].shape == (2, 10)
    print("KERNEL_OK")
</pallas_src>

<mosaic_0001>
module attributes {stable_mosaic.version = 11 : i64} {
  func.func @_head_kernel(%arg0: memref<32x32xf32, #tpu.memory_space<vmem>>, %arg1: memref<1x32xf32, #tpu.memory_space<vmem>>, %arg2: memref<1x32xf32, #tpu.memory_space<vmem>>, %arg3: memref<1x32xf32, #tpu.memory_space<vmem>>, %arg4: memref<32x32xf32, #tpu.memory_space<vmem>>, %arg5: memref<1x32xf32, #tpu.memory_space<vmem>>, %arg6: memref<32x32xf32, #tpu.memory_space<vmem>>, %arg7: memref<1x32xf32, #tpu.memory_space<vmem>>, %arg8: memref<32x32xf32, #tpu.memory_space<vmem>>, %arg9: memref<1x32xf32, #tpu.memory_space<vmem>>, %arg10: memref<32x32xf32, #tpu.memory_space<vmem>>, %arg11: memref<1x32xf32, #tpu.memory_space<vmem>>, %arg12: memref<1x32xf32, #tpu.memory_space<vmem>>, %arg13: memref<1x32xf32, #tpu.memory_space<vmem>>, %arg14: memref<32x64xf32, #tpu.memory_space<vmem>>, %arg15: memref<1x64xf32, #tpu.memory_space<vmem>>, %arg16: memref<64x32xf32, #tpu.memory_space<vmem>>, %arg17: memref<1x32xf32, #tpu.memory_space<vmem>>, %arg18: memref<32x256xf32, #tpu.memory_space<vmem>>, %arg19: memref<1x256xf32, #tpu.memory_space<vmem>>, %arg20: memref<2x256xf32, #tpu.memory_space<vmem>>, %arg21: memref<2x3xf32, #tpu.memory_space<vmem>>) attributes {dimension_semantics = [], scalar_prefetch = 0 : i64, scratch_operands = 0 : i64, tpu.core_type = #tpu.core_type<tc>} {
    %c0 = arith.constant 0 : index
    %c0_0 = arith.constant 0 : index
    %0 = vector.load %arg0[%c0, %c0_0] : memref<32x32xf32, #tpu.memory_space<vmem>>, vector<32x32xf32>
    %c0_1 = arith.constant 0 : index
    %c0_2 = arith.constant 0 : index
    %1 = vector.load %arg1[%c0_1, %c0_2] : memref<1x32xf32, #tpu.memory_space<vmem>>, vector<1x32xf32>
    %2 = vector.shape_cast %1 : vector<1x32xf32> to vector<1x32xf32>
    %3 = vector.broadcast %2 : vector<1x32xf32> to vector<2x32xf32>
    %c0_3 = arith.constant 0 : index
    %c0_4 = arith.constant 0 : index
    %4 = vector.load %arg2[%c0_3, %c0_4] : memref<1x32xf32, #tpu.memory_space<vmem>>, vector<1x32xf32>
    %c0_5 = arith.constant 0 : index
    %c0_6 = arith.constant 0 : index
    %5 = vector.load %arg3[%c0_5, %c0_6] : memref<1x32xf32, #tpu.memory_space<vmem>>, vector<1x32xf32>
    %cst = arith.constant dense<0.000000e+00> : vector<2xf32>
    %6 = vector.multi_reduction <add>, %3, %cst [1] : vector<2x32xf32> to vector<2xf32>
    %7 = vector.shape_cast %6 : vector<2xf32> to vector<2x1xf32>
    %cst_7 = arith.constant 3.200000e+01 : f32
    %8 = vector.broadcast %cst_7 : f32 to vector<2x1xf32>
    %9 = arith.divf %7, %8 : vector<2x1xf32>
    %10 = vector.broadcast %9 : vector<2x1xf32> to vector<2x32xf32>
    %11 = arith.subf %3, %10 : vector<2x32xf32>
    %12 = arith.mulf %11, %11 : vector<2x32xf32>
    %cst_8 = arith.constant dense<0.000000e+00> : vector<2xf32>
    %13 = vector.multi_reduction <add>, %12, %cst_8 [1] : vector<2x32xf32> to vector<2xf32>
    %14 = vector.shape_cast %13 : vector<2xf32> to vector<2x1xf32>
    %cst_9 = arith.constant 3.200000e+01 : f32
    %15 = vector.broadcast %cst_9 : f32 to vector<2x1xf32>
    %16 = arith.divf %14, %15 : vector<2x1xf32>
    %17 = vector.broadcast %9 : vector<2x1xf32> to vector<2x32xf32>
    %18 = arith.subf %3, %17 : vector<2x32xf32>
    %cst_10 = arith.constant 9.99999997E-7 : f32
    %19 = vector.broadcast %cst_10 : f32 to vector<2x1xf32>
    %20 = arith.addf %16, %19 : vector<2x1xf32>
    %21 = math.rsqrt %20 : vector<2x1xf32>
    %22 = vector.broadcast %21 : vector<2x1xf32> to vector<2x32xf32>
    %23 = arith.mulf %18, %22 : vector<2x32xf32>
    %24 = vector.broadcast %4 : vector<1x32xf32> to vector<2x32xf32>
    %25 = arith.mulf %23, %24 : vector<2x32xf32>
    %26 = vector.broadcast %5 : vector<1x32xf32> to vector<2x32xf32>
    %27 = arith.addf %25, %26 : vector<2x32xf32>
    %c0_11 = arith.constant 0 : index
    %c0_12 = arith.constant 0 : index
    %28 = vector.load %arg4[%c0_11, %c0_12] : memref<32x32xf32, #tpu.memory_space<vmem>>, vector<32x32xf32>
    %cst_13 = arith.constant dense<0.000000e+00> : vector<2x32xf32>
    %29 = tpu.matmul %27, %28, %cst_13 {dimension_numbers = #tpu.dot_dimension_numbers<[1], [0], [0], [1], [0, 0, 1, 1], [], []>} : vector<2x32xf32>, vector<32x32xf32>, vector<2x32xf32> -> vector<2x32xf32>
    %c0_14 = arith.constant 0 : index
    %c0_15 = arith.constant 0 : index
    %30 = vector.load %arg5[%c0_14, %c0_15] : memref<1x32xf32, #tpu.memory_space<vmem>>, vector<1x32xf32>
    %31 = vector.broadcast %30 : vector<1x32xf32> to vector<2x32xf32>
    %32 = arith.addf %29, %31 : vector<2x32xf32>
    %c0_16 = arith.constant 0 : index
    %c0_17 = arith.constant 0 : index
    %33 = vector.load %arg6[%c0_16, %c0_17] : memref<32x32xf32, #tpu.memory_space<vmem>>, vector<32x32xf32>
    %cst_18 = arith.constant dense<0.000000e+00> : vector<32x32xf32>
    %34 = tpu.matmul %0, %33, %cst_18 {dimension_numbers = #tpu.dot_dimension_numbers<[1], [0], [0], [1], [0, 0, 1, 1], [], []>} : vector<32x32xf32>, vector<32x32xf32>, vector<32x32xf32> -> vector<32x32xf32>
    %c0_19 = arith.constant 0 : index
    %c0_20 = arith.constant 0 : index
    %35 = vector.load %arg7[%c0_19, %c0_20] : memref<1x32xf32, #tpu.memory_space<vmem>>, vector<1x32xf32>
    %36 = vector.broadcast %35 : vector<1x32xf32> to vector<32x32xf32>
    %37 = arith.addf %34, %36 : vector<32x32xf32>
    %38 = vector.shape_cast %37 : vector<32x32xf32> to vector<2x16x32xf32>
    %c0_21 = arith.constant 0 : index
    %c0_22 = arith.constant 0 : index
    %39 = vector.load %arg8[%c0_21, %c0_22] : memref<32x32xf32, #tpu.memory_space<vmem>>, vector<32x32xf32>
    %cst_23 = arith.constant dense<0.000000e+00> : vector<32x32xf32>
    %40 = tpu.matmul %0, %39, %cst_23 {dimension_numbers = #tpu.dot_dimension_numbers<[1], [0], [0], [1], [0, 0, 1, 1], [], []>} : vector<32x32xf32>, vector<32x32xf32>, vector<32x32xf32> -> vector<32x32xf32>
    %c0_24 = arith.constant 0 : index
    %c0_25 = arith.constant 0 : index
    %41 = vector.load %arg9[%c0_24, %c0_25] : memref<1x32xf32, #tpu.memory_space<vmem>>, vector<1x32xf32>
    %42 = vector.broadcast %41 : vector<1x32xf32> to vector<32x32xf32>
    %43 = arith.addf %40, %42 : vector<32x32xf32>
    %44 = vector.shape_cast %43 : vector<32x32xf32> to vector<2x16x32xf32>
    %45 = vector.shape_cast %32 : vector<2x32xf32> to vector<2x1x32xf32>
    %46 = vector.broadcast %45 : vector<2x1x32xf32> to vector<2x16x32xf32>
    %47 = arith.mulf %46, %38 : vector<2x16x32xf32>
    %cst_26 = arith.constant dense<0.000000e+00> : vector<2x16xf32>
    %48 = vector.multi_reduction <add>, %47, %cst_26 [2] : vector<2x16x32xf32> to vector<2x16xf32>
    %cst_27 = arith.constant 0.176776692 : f32
    %49 = vector.broadcast %cst_27 : f32 to vector<2x16xf32>
    %50 = arith.mulf %48, %49 : vector<2x16xf32>
    %cst_28 = arith.constant dense<0xFF800000> : vector<2xf32>
    %51 = vector.multi_reduction <maximumf>, %50, %cst_28 [1] : vector<2x16xf32> to vector<2xf32>
    %52 = vector.shape_cast %51 : vector<2xf32> to vector<2x1xf32>
    %53 = vector.broadcast %52 : vector<2x1xf32> to vector<2x16xf32>
    %54 = arith.subf %50, %53 : vector<2x16xf32>
    %55 = math.exp %54 : vector<2x16xf32>
    %cst_29 = arith.constant dense<0.000000e+00> : vector<2xf32>
    %56 = vector.multi_reduction <add>, %55, %cst_29 [1] : vector<2x16xf32> to vector<2xf32>
    %57 = vector.shape_cast %56 : vector<2xf32> to vector<2x1xf32>
    %58 = tpu.reciprocal %57 {approx = true} : vector<2x1xf32> -> vector<2x1xf32>
    %59 = vector.broadcast %58 : vector<2x1xf32> to vector<2x16xf32>
    %60 = arith.mulf %55, %59 : vector<2x16xf32>
    %61 = vector.shape_cast %60 : vector<2x16xf32> to vector<2x16x1xf32>
    %62 = vector.broadcast %61 : vector<2x16x1xf32> to vector<2x16x32xf32>
    %63 = arith.mulf %62, %44 : vector<2x16x32xf32>
    %cst_30 = arith.constant dense<0.000000e+00> : vector<2x32xf32>
    %64 = vector.multi_reduction <add>, %63, %cst_30 [1] : vector<2x16x32xf32> to vector<2x32xf32>
    %c0_31 = arith.constant 0 : index
    %c0_32 = arith.constant 0 : index
    %65 = vector.load %arg10[%c0_31, %c0_32] : memref<32x32xf32, #tpu.memory_space<vmem>>, vector<32x32xf32>
    %cst_33 = arith.constant dense<0.000000e+00> : vector<2x32xf32>
    %66 = tpu.matmul %64, %65, %cst_33 {dimension_numbers = #tpu.dot_dimension_numbers<[1], [0], [0], [1], [0, 0, 1, 1], [], []>} : vector<2x32xf32>, vector<32x32xf32>, vector<2x32xf32> -> vector<2x32xf32>
    %c0_34 = arith.constant 0 : index
    %c0_35 = arith.constant 0 : index
    %67 = vector.load %arg11[%c0_34, %c0_35] : memref<1x32xf32, #tpu.memory_space<vmem>>, vector<1x32xf32>
    %68 = vector.broadcast %67 : vector<1x32xf32> to vector<2x32xf32>
    %69 = arith.addf %66, %68 : vector<2x32xf32>
    %70 = arith.addf %3, %69 : vector<2x32xf32>
    %c0_36 = arith.constant 0 : index
    %c0_37 = arith.constant 0 : index
    %71 = vector.load %arg12[%c0_36, %c0_37] : memref<1x32xf32, #tpu.memory_space<vmem>>, vector<1x32xf32>
    %c0_38 = arith.constant 0 : index
    %c0_39 = arith.constant 0 : index
    %72 = vector.load %arg13[%c0_38, %c0_39] : memref<1x32xf32, #tpu.memory_space<vmem>>, vector<1x32xf32>
    %cst_40 = arith.constant dense<0.000000e+00> : vector<2xf32>
    %73 = vector.multi_reduction <add>, %70, %cst_40 [1] : vector<2x32xf32> to vector<2xf32>
    %74 = vector.shape_cast %73 : vector<2xf32> to vector<2x1xf32>
    %cst_41 = arith.constant 3.200000e+01 : f32
    %75 = vector.broadcast %cst_41 : f32 to vector<2x1xf32>
    %76 = arith.divf %74, %75 : vector<2x1xf32>
    %77 = vector.broadcast %76 : vector<2x1xf32> to vector<2x32xf32>
    %78 = arith.subf %70, %77 : vector<2x32xf32>
    %79 = arith.mulf %78, %78 : vector<2x32xf32>
    %cst_42 = arith.constant dense<0.000000e+00> : vector<2xf32>
    %80 = vector.multi_reduction <add>, %79, %cst_42 [1] : vector<2x32xf32> to vector<2xf32>
    %81 = vector.shape_cast %80 : vector<2xf32> to vector<2x1xf32>
    %cst_43 = arith.constant 3.200000e+01 : f32
    %82 = vector.broadcast %cst_43 : f32 to vector<2x1xf32>
    %83 = arith.divf %81, %82 : vector<2x1xf32>
    %84 = vector.broadcast %76 : vector<2x1xf32> to vector<2x32xf32>
    %85 = arith.subf %70, %84 : vector<2x32xf32>
    %cst_44 = arith.constant 9.99999997E-7 : f32
    %86 = vector.broadcast %cst_44 : f32 to vector<2x1xf32>
    %87 = arith.addf %83, %86 : vector<2x1xf32>
    %88 = math.rsqrt %87 : vector<2x1xf32>
    %89 = vector.broadcast %88 : vector<2x1xf32> to vector<2x32xf32>
    %90 = arith.mulf %85, %89 : vector<2x32xf32>
    %91 = vector.broadcast %71 : vector<1x32xf32> to vector<2x32xf32>
    %92 = arith.mulf %90, %91 : vector<2x32xf32>
    %93 = vector.broadcast %72 : vector<1x32xf32> to vector<2x32xf32>
    %94 = arith.addf %92, %93 : vector<2x32xf32>
    %c0_45 = arith.constant 0 : index
    %c0_46 = arith.constant 0 : index
    %95 = vector.load %arg14[%c0_45, %c0_46] : memref<32x64xf32, #tpu.memory_space<vmem>>, vector<32x64xf32>
    %cst_47 = arith.constant dense<0.000000e+00> : vector<2x64xf32>
    %96 = tpu.matmul %94, %95, %cst_47 {dimension_numbers = #tpu.dot_dimension_numbers<[1], [0], [0], [1], [0, 0, 1, 1], [], []>} : vector<2x32xf32>, vector<32x64xf32>, vector<2x64xf32> -> vector<2x64xf32>
    %c0_48 = arith.constant 0 : index
    %c0_49 = arith.constant 0 : index
    %97 = vector.load %arg15[%c0_48, %c0_49] : memref<1x64xf32, #tpu.memory_space<vmem>>, vector<1x64xf32>
    %98 = vector.broadcast %97 : vector<1x64xf32> to vector<2x64xf32>
    %99 = arith.addf %96, %98 : vector<2x64xf32>
    %100 = arith.mulf %99, %99 : vector<2x64xf32>
    %101 = arith.mulf %99, %100 : vector<2x64xf32>
    %cst_50 = arith.constant 4.471500e-02 : f32
    %102 = vector.broadcast %cst_50 : f32 to vector<2x64xf32>
    %103 = arith.mulf %102, %101 : vector<2x64xf32>
    %104 = arith.addf %99, %103 : vector<2x64xf32>
    %cst_51 = arith.constant 0.797884583 : f32
    %105 = vector.broadcast %cst_51 : f32 to vector<2x64xf32>
    %106 = arith.mulf %105, %104 : vector<2x64xf32>
    %107 = math.tanh %106 : vector<2x64xf32>
    %cst_52 = arith.constant 1.000000e+00 : f32
    %108 = vector.broadcast %cst_52 : f32 to vector<2x64xf32>
    %109 = arith.addf %108, %107 : vector<2x64xf32>
    %cst_53 = arith.constant 5.000000e-01 : f32
    %110 = vector.broadcast %cst_53 : f32 to vector<2x64xf32>
    %111 = arith.mulf %110, %109 : vector<2x64xf32>
    %112 = arith.mulf %99, %111 : vector<2x64xf32>
    %c0_54 = arith.constant 0 : index
    %c0_55 = arith.constant 0 : index
    %113 = vector.load %arg16[%c0_54, %c0_55] : memref<64x32xf32, #tpu.memory_space<vmem>>, vector<64x32xf32>
    %cst_56 = arith.constant dense<0.000000e+00> : vector<2x32xf32>
    %114 = tpu.matmul %112, %113, %cst_56 {dimension_numbers = #tpu.dot_dimension_numbers<[1], [0], [0], [1], [0, 0, 1, 1], [], []>} : vector<2x64xf32>, vector<64x32xf32>, vector<2x32xf32> -> vector<2x32xf32>
    %115 = arith.addf %70, %114 : vector<2x32xf32>
    %c0_57 = arith.constant 0 : index
    %c0_58 = arith.constant 0 : index
    %116 = vector.load %arg17[%c0_57, %c0_58] : memref<1x32xf32, #tpu.memory_space<vmem>>, vector<1x32xf32>
    %117 = vector.broadcast %116 : vector<1x32xf32> to vector<2x32xf32>
    %118 = arith.addf %115, %117 : vector<2x32xf32>
    %c0_59 = arith.constant 0 : index
    %c0_60 = arith.constant 0 : index
    %119 = vector.load %arg18[%c0_59, %c0_60] : memref<32x256xf32, #tpu.memory_space<vmem>>, vector<32x256xf32>
    %cst_61 = arith.constant dense<0.000000e+00> : vector<2x256xf32>
    %120 = tpu.matmul %118, %119, %cst_61 {dimension_numbers = #tpu.dot_dimension_numbers<[1], [0], [0], [1], [0, 0, 1, 1], [], []>} : vector<2x32xf32>, vector<32x256xf32>, vector<2x256xf32> -> vector<2x256xf32>
    %c0_62 = arith.constant 0 : index
    %c0_63 = arith.constant 0 : index
    %121 = vector.load %arg19[%c0_62, %c0_63] : memref<1x256xf32, #tpu.memory_space<vmem>>, vector<1x256xf32>
    %122 = vector.broadcast %121 : vector<1x256xf32> to vector<2x256xf32>
    %123 = arith.addf %120, %122 : vector<2x256xf32>
    %c0_64 = arith.constant 0 : index
    %c0_65 = arith.constant 0 : index
    %124 = vector.load %arg20[%c0_64, %c0_65] : memref<2x256xf32, #tpu.memory_space<vmem>>, vector<2x256xf32>
    tpu.vector_store %arg20[%c0_64, %c0_65], %123 {strides = array<i32>} : memref<2x256xf32, #tpu.memory_space<vmem>>, vector<2x256xf32>,
    %125 = vector.extract_strided_slice %123 {offsets = [0, 154], sizes = [2, 3], strides = [1, 1]} : vector<2x256xf32> to vector<2x3xf32>
    %126 = vector.extract_strided_slice %125 {offsets = [0, 0], sizes = [2, 1], strides = [1, 1]} : vector<2x3xf32> to vector<2x1xf32>
    %cst_66 = arith.constant 2.560000e+02 : f32
    %127 = vector.broadcast %cst_66 : f32 to vector<2x1xf32>
    %128 = arith.mulf %127, %126 : vector<2x1xf32>
    %cst_67 = arith.constant 9.99999971E-10 : f32
    %129 = vector.broadcast %cst_67 : f32 to vector<2x1xf32>
    %130 = arith.addf %128, %129 : vector<2x1xf32>
    %131 = tpu.reciprocal %130 {approx = true} : vector<2x1xf32> -> vector<2x1xf32>
    %cst_68 = arith.constant 1.000000e+04 : f32
    %132 = vector.broadcast %cst_68 : f32 to vector<2x1xf32>
    %133 = arith.mulf %132, %131 : vector<2x1xf32>
    %134 = vector.extract_strided_slice %125 {offsets = [0, 1], sizes = [2, 1], strides = [1, 1]} : vector<2x3xf32> to vector<2x1xf32>
    %135 = vector.extract_strided_slice %125 {offsets = [0, 2], sizes = [2, 1], strides = [1, 1]} : vector<2x3xf32> to vector<2x1xf32>
    %136 = tpu.concatenate %134, %135, %133 in 1 : vector<2x1xf32>, vector<2x1xf32>, vector<2x1xf32> -> vector<2x3xf32>
    %c0_69 = arith.constant 0 : index
    %c0_70 = arith.constant 0 : index
    %137 = vector.load %arg21[%c0_69, %c0_70] : memref<2x3xf32, #tpu.memory_space<vmem>>, vector<2x3xf32>
    tpu.vector_store %arg21[%c0_69, %c0_70], %136 {strides = array<i32>} : memref<2x3xf32, #tpu.memory_space<vmem>>, vector<2x3xf32>,
    return
  }
}

module attributes {stable_mosaic.version = 11 : i64} {
  func.func @_backbone_kernel(%arg0: memref<32x48xf32, #tpu.memory_space<vmem>>, %arg1: memref<48x32xf32, #tpu.memory_space<vmem>>, %arg2: memref<1x32xf32, #tpu.memory_space<vmem>>, %arg3: memref<16x32xf32, #tpu.memory_space<vmem>>, %arg4: memref<2x1x32xf32, #tpu.memory_space<vmem>>, %arg5: memref<2x1x32xf32, #tpu.memory_space<vmem>>, %arg6: memref<2x32x96xf32, #tpu.memory_space<vmem>>, %arg7: memref<2x1x96xf32, #tpu.memory_space<vmem>>, %arg8: memref<2x32x32xf32, #tpu.memory_space<vmem>>, %arg9: memref<2x1x32xf32, #tpu.memory_space<vmem>>, %arg10: memref<2x1x32xf32, #tpu.memory_space<vmem>>, %arg11: memref<2x1x32xf32, #tpu.memory_space<vmem>>, %arg12: memref<2x32x64xf32, #tpu.memory_space<vmem>>, %arg13: memref<2x1x64xf32, #tpu.memory_space<vmem>>, %arg14: memref<2x64x32xf32, #tpu.memory_space<vmem>>, %arg15: memref<2x1x32xf32, #tpu.memory_space<vmem>>, %arg16: memref<32x32xf32, #tpu.memory_space<vmem>>) attributes {dimension_semantics = [], scalar_prefetch = 0 : i64, scratch_operands = 0 : i64, tpu.core_type = #tpu.core_type<tc>} {
    %c0 = arith.constant 0 : index
    %c0_0 = arith.constant 0 : index
    %0 = vector.load %arg0[%c0, %c0_0] : memref<32x48xf32, #tpu.memory_space<vmem>>, vector<32x48xf32>
    %c0_1 = arith.constant 0 : index
    %c0_2 = arith.constant 0 : index
    %1 = vector.load %arg1[%c0_1, %c0_2] : memref<48x32xf32, #tpu.memory_space<vmem>>, vector<48x32xf32>
    %cst = arith.constant dense<0.000000e+00> : vector<32x32xf32>
    %2 = tpu.matmul %0, %1, %cst {dimension_numbers = #tpu.dot_dimension_numbers<[1], [0], [0], [1], [0, 0, 1, 1], [], []>} : vector<32x48xf32>, vector<48x32xf32>, vector<32x32xf32> -> vector<32x32xf32>
    %c0_3 = arith.constant 0 : index
    %c0_4 = arith.constant 0 : index
    %3 = vector.load %arg2[%c0_3, %c0_4] : memref<1x32xf32, #tpu.memory_space<vmem>>, vector<1x32xf32>
    %4 = vector.broadcast %3 : vector<1x32xf32> to vector<32x32xf32>
    %5 = arith.addf %2, %4 : vector<32x32xf32>
    %6 = vector.shape_cast %5 : vector<32x32xf32> to vector<2x16x32xf32>
    %c0_5 = arith.constant 0 : index
    %c0_6 = arith.constant 0 : index
    %7 = vector.load %arg3[%c0_5, %c0_6] : memref<16x32xf32, #tpu.memory_space<vmem>>, vector<16x32xf32>
    %8 = vector.shape_cast %7 : vector<16x32xf32> to vector<1x16x32xf32>
    %9 = vector.broadcast %8 : vector<1x16x32xf32> to vector<2x16x32xf32>
    %10 = arith.addf %6, %9 : vector<2x16x32xf32>
    %11 = vector.shape_cast %10 : vector<2x16x32xf32> to vector<32x32xf32>
    %c0_7 = arith.constant 0 : index
    %c0_8 = arith.constant 0 : index
    %c0_9 = arith.constant 0 : index
    %12 = vector.load %arg4[%c0_7, %c0_8, %c0_9] : memref<2x1x32xf32, #tpu.memory_space<vmem>>, vector<1x1x32xf32>
    %13 = vector.shape_cast %12 : vector<1x1x32xf32> to vector<1x32xf32>
    %c0_10 = arith.constant 0 : index
    %c0_11 = arith.constant 0 : index
    %c0_12 = arith.constant 0 : index
    %14 = vector.load %arg5[%c0_10, %c0_11, %c0_12] : memref<2x1x32xf32, #tpu.memory_space<vmem>>, vector<1x1x32xf32>
    %15 = vector.shape_cast %14 : vector<1x1x32xf32> to vector<1x32xf32>
    %cst_13 = arith.constant dense<0.000000e+00> : vector<32xf32>
    %16 = vector.multi_reduction <add>, %11, %cst_13 [1] : vector<32x32xf32> to vector<32xf32>
    %17 = vector.shape_cast %16 : vector<32xf32> to vector<32x1xf32>
    %cst_14 = arith.constant 3.200000e+01 : f32
    %18 = vector.broadcast %cst_14 : f32 to vector<32x1xf32>
    %19 = arith.divf %17, %18 : vector<32x1xf32>
    %20 = vector.broadcast %19 : vector<32x1xf32> to vector<32x32xf32>
    %21 = arith.subf %11, %20 : vector<32x32xf32>
    %22 = arith.mulf %21, %21 : vector<32x32xf32>
    %cst_15 = arith.constant dense<0.000000e+00> : vector<32xf32>
    %23 = vector.multi_reduction <add>, %22, %cst_15 [1] : vector<32x32xf32> to vector<32xf32>
    %24 = vector.shape_cast %23 : vector<32xf32> to vector<32x1xf32>
    %cst_16 = arith.constant 3.200000e+01 : f32
    %25 = vector.broadcast %cst_16 : f32 to vector<32x1xf32>
    %26 = arith.divf %24, %25 : vector<32x1xf32>
    %27 = vector.broadcast %19 : vector<32x1xf32> to vector<32x32xf32>
    %28 = arith.subf %11, %27 : vector<32x32xf32>
    %cst_17 = arith.constant 9.99999997E-7 : f32
    %29 = vector.broadcast %cst_17 : f32 to vector<32x1xf32>
    %30 = arith.addf %26, %29 : vector<32x1xf32>
    %31 = math.rsqrt %30 : vector<32x1xf32>
    %32 = vector.broadcast %31 : vector<32x1xf32> to vector<32x32xf32>
    %33 = arith.mulf %28, %32 : vector<32x32xf32>
    %34 = vector.broadcast %13 : vector<1x32xf32> to vector<32x32xf32>
    %35 = arith.mulf %33, %34 : vector<32x32xf32>
    %36 = vector.broadcast %15 : vector<1x32xf32> to vector<32x32xf32>
    %37 = arith.addf %35, %36 : vector<32x32xf32>
    %c0_18 = arith.constant 0 : index
    %c0_19 = arith.constant 0 : index
    %c0_20 = arith.constant 0 : index
    %38 = vector.load %arg6[%c0_18, %c0_19, %c0_20] : memref<2x32x96xf32, #tpu.memory_space<vmem>>, vector<1x32x96xf32>
    %39 = vector.shape_cast %38 : vector<1x32x96xf32> to vector<32x96xf32>
    %cst_21 = arith.constant dense<0.000000e+00> : vector<32x96xf32>
    %40 = tpu.matmul %37, %39, %cst_21 {dimension_numbers = #tpu.dot_dimension_numbers<[1], [0], [0], [1], [0, 0, 1, 1], [], []>} : vector<32x32xf32>, vector<32x96xf32>, vector<32x96xf32> -> vector<32x96xf32>
    %c0_22 = arith.constant 0 : index
    %c0_23 = arith.constant 0 : index
    %c0_24 = arith.constant 0 : index
    %41 = vector.load %arg7[%c0_22, %c0_23, %c0_24] : memref<2x1x96xf32, #tpu.memory_space<vmem>>, vector<1x1x96xf32>
    %42 = vector.shape_cast %41 : vector<1x1x96xf32> to vector<1x96xf32>
    %43 = vector.broadcast %42 : vector<1x96xf32> to vector<32x96xf32>
    %44 = arith.addf %40, %43 : vector<32x96xf32>
    %c0_25 = arith.constant 0 : index
    %c0_26 = arith.constant 0 : index
    %c0_27 = arith.constant 0 : index
    %45 = vector.load %arg8[%c0_25, %c0_26, %c0_27] : memref<2x32x32xf32, #tpu.memory_space<vmem>>, vector<1x32x32xf32>
    %46 = vector.shape_cast %45 : vector<1x32x32xf32> to vector<32x32xf32>
    %cst_28 = arith.constant 0.000000e+00 : f32
    %47 = vector.broadcast %cst_28 : f32 to vector<32x32xf32>
    %48 = vector.extract_strided_slice %44 {offsets = [0, 0], sizes = [32, 8], strides = [1, 1]} : vector<32x96xf32> to vector<32x8xf32>
    %49 = vector.shape_cast %48 : vector<32x8xf32> to vector<2x16x8xf32>
    %50 = vector.extract_strided_slice %44 {offsets = [0, 32], sizes = [32, 8], strides = [1, 1]} : vector<32x96xf32> to vector<32x8xf32>
    %51 = vector.shape_cast %50 : vector<32x8xf32> to vector<2x16x8xf32>
    %52 = vector.extract_strided_slice %44 {offsets = [0, 64], sizes = [32, 8], strides = [1, 1]} : vector<32x96xf32> to vector<32x8xf32>
    %53 = vector.shape_cast %52 : vector<32x8xf32> to vector<2x16x8xf32>
    "tpu.trace_start"() <{level = 10 : i32, message = "bqd,bkd->bqk"}> : () -> ()
    %cst_29 = arith.constant dense<0.000000e+00> : vector<2x16x16xf32>
    %54 = tpu.matmul %49, %51, %cst_29 {dimension_numbers = #tpu.dot_dimension_numbers<[2], [2], [1], [1], [0, 0, 0, 1, 1, 1], [0], [0]>} : vector<2x16x8xf32>, vector<2x16x8xf32>, vector<2x16x16xf32> -> vector<2x16x16xf32>
    "tpu.trace_stop"() : () -> ()
    %cst_30 = arith.constant 0.353553385 : f32
    %55 = vector.broadcast %cst_30 : f32 to vector<2x16x16xf32>
    %56 = arith.mulf %54, %55 : vector<2x16x16xf32>
    %cst_31 = arith.constant dense<0xFF800000> : vector<2x16xf32>
    %57 = vector.multi_reduction <maximumf>, %56, %cst_31 [2] : vector<2x16x16xf32> to vector<2x16xf32>
    %58 = vector.shape_cast %57 : vector<2x16xf32> to vector<2x16x1xf32>
    %59 = vector.broadcast %58 : vector<2x16x1xf32> to vector<2x16x16xf32>
    %60 = arith.subf %56, %59 : vector<2x16x16xf32>
    %61 = math.exp %60 : vector<2x16x16xf32>
    %cst_32 = arith.constant dense<0.000000e+00> : vector<2x16xf32>
    %62 = vector.multi_reduction <add>, %61, %cst_32 [2] : vector<2x16x16xf32> to vector<2x16xf32>
    %63 = vector.shape_cast %62 : vector<2x16xf32> to vector<2x16x1xf32>
    %64 = tpu.reciprocal %63 {approx = true} : vector<2x16x1xf32> -> vector<2x16x1xf32>
    %65 = vector.broadcast %64 : vector<2x16x1xf32> to vector<2x16x16xf32>
    %66 = arith.mulf %61, %65 : vector<2x16x16xf32>
    "tpu.trace_start"() <{level = 10 : i32, message = "bqk,bkd->bqd"}> : () -> ()
    %cst_33 = arith.constant dense<0.000000e+00> : vector<2x16x8xf32>
    %67 = tpu.matmul %66, %53, %cst_33 {dimension_numbers = #tpu.dot_dimension_numbers<[2], [1], [1], [2], [0, 0, 0, 1, 1, 2], [0], [0]>} : vector<2x16x16xf32>, vector<2x16x8xf32>, vector<2x16x8xf32> -> vector<2x16x8xf32>
    "tpu.trace_stop"() : () -> ()
    %68 = vector.shape_cast %67 : vector<2x16x8xf32> to vector<32x8xf32>
    %69 = vector.extract_strided_slice %46 {offsets = [0, 0], sizes = [8, 32], strides = [1, 1]} : vector<32x32xf32> to vector<8x32xf32>
    %cst_34 = arith.constant dense<0.000000e+00> : vector<32x32xf32>
    %70 = tpu.matmul %68, %69, %cst_34 {dimension_numbers = #tpu.dot_dimension_numbers<[1], [0], [0], [1], [0, 0, 1, 1], [], []>} : vector<32x8xf32>, vector<8x32xf32>, vector<32x32xf32> -> vector<32x32xf32>
    %71 = arith.addf %47, %70 : vector<32x32xf32>
    %72 = vector.extract_strided_slice %44 {offsets = [0, 8], sizes = [32, 8], strides = [1, 1]} : vector<32x96xf32> to vector<32x8xf32>
    %73 = vector.shape_cast %72 : vector<32x8xf32> to vector<2x16x8xf32>
    %74 = vector.extract_strided_slice %44 {offsets = [0, 40], sizes = [32, 8], strides = [1, 1]} : vector<32x96xf32> to vector<32x8xf32>
    %75 = vector.shape_cast %74 : vector<32x8xf32> to vector<2x16x8xf32>
    %76 = vector.extract_strided_slice %44 {offsets = [0, 72], sizes = [32, 8], strides = [1, 1]} : vector<32x96xf32> to vector<32x8xf32>
    %77 = vector.shape_cast %76 : vector<32x8xf32> to vector<2x16x8xf32>
    "tpu.trace_start"() <{level = 10 : i32, message = "bqd,bkd->bqk"}> : () -> ()
    %cst_35 = arith.constant dense<0.000000e+00> : vector<2x16x16xf32>
    %78 = tpu.matmul %73, %75, %cst_35 {dimension_numbers = #tpu.dot_dimension_numbers<[2], [2], [1], [1], [0, 0, 0, 1, 1, 1], [0], [0]>} : vector<2x16x8xf32>, vector<2x16x8xf32>, vector<2x16x16xf32> -> vector<2x16x16xf32>
    "tpu.trace_stop"() : () -> ()
    %cst_36 = arith.constant 0.353553385 : f32
    %79 = vector.broadcast %cst_36 : f32 to vector<2x16x16xf32>
    %80 = arith.mulf %78, %79 : vector<2x16x16xf32>
    %cst_37 = arith.constant dense<0xFF800000> : vector<2x16xf32>
    %81 = vector.multi_reduction <maximumf>, %80, %cst_37 [2] : vector<2x16x16xf32> to vector<2x16xf32>
    %82 = vector.shape_cast %81 : vector<2x16xf32> to vector<2x16x1xf32>
    %83 = vector.broadcast %82 : vector<2x16x1xf32> to vector<2x16x16xf32>
    %84 = arith.subf %80, %83 : vector<2x16x16xf32>
    %85 = math.exp %84 : vector<2x16x16xf32>
    %cst_38 = arith.constant dense<0.000000e+00> : vector<2x16xf32>
    %86 = vector.multi_reduction <add>, %85, %cst_38 [2] : vector<2x16x16xf32> to vector<2x16xf32>
    %87 = vector.shape_cast %86 : vector<2x16xf32> to vector<2x16x1xf32>
    %88 = tpu.reciprocal %87 {approx = true} : vector<2x16x1xf32> -> vector<2x16x1xf32>
    %89 = vector.broadcast %88 : vector<2x16x1xf32> to vector<2x16x16xf32>
    %90 = arith.mulf %85, %89 : vector<2x16x16xf32>
    "tpu.trace_start"() <{level = 10 : i32, message = "bqk,bkd->bqd"}> : () -> ()
    %cst_39 = arith.constant dense<0.000000e+00> : vector<2x16x8xf32>
    %91 = tpu.matmul %90, %77, %cst_39 {dimension_numbers = #tpu.dot_dimension_numbers<[2], [1], [1], [2], [0, 0, 0, 1, 1, 2], [0], [0]>} : vector<2x16x16xf32>, vector<2x16x8xf32>, vector<2x16x8xf32> -> vector<2x16x8xf32>
    "tpu.trace_stop"() : () -> ()
    %92 = vector.shape_cast %91 : vector<2x16x8xf32> to vector<32x8xf32>
    %93 = vector.extract_strided_slice %46 {offsets = [8, 0], sizes = [8, 32], strides = [1, 1]} : vector<32x32xf32> to vector<8x32xf32>
    %cst_40 = arith.constant dense<0.000000e+00> : vector<32x32xf32>
    %94 = tpu.matmul %92, %93, %cst_40 {dimension_numbers = #tpu.dot_dimension_numbers<[1], [0], [0], [1], [0, 0, 1, 1], [], []>} : vector<32x8xf32>, vector<8x32xf32>, vector<32x32xf32> -> vector<32x32xf32>
    %95 = arith.addf %71, %94 : vector<32x32xf32>
    %96 = vector.extract_strided_slice %44 {offsets = [0, 16], sizes = [32, 8], strides = [1, 1]} : vector<32x96xf32> to vector<32x8xf32>
    %97 = vector.shape_cast %96 : vector<32x8xf32> to vector<2x16x8xf32>
    %98 = vector.extract_strided_slice %44 {offsets = [0, 48], sizes = [32, 8], strides = [1, 1]} : vector<32x96xf32> to vector<32x8xf32>
    %99 = vector.shape_cast %98 : vector<32x8xf32> to vector<2x16x8xf32>
    %100 = vector.extract_strided_slice %44 {offsets = [0, 80], sizes = [32, 8], strides = [1, 1]} : vector<32x96xf32> to vector<32x8xf32>
    %101 = vector.shape_cast %100 : vector<32x8xf32> to vector<2x16x8xf32>
    "tpu.trace_start"() <{level = 10 : i32, message = "bqd,bkd->bqk"}> : () -> ()
    %cst_41 = arith.constant dense<0.000000e+00> : vector<2x16x16xf32>
    %102 = tpu.matmul %97, %99, %cst_41 {dimension_numbers = #tpu.dot_dimension_numbers<[2], [2], [1], [1], [0, 0, 0, 1, 1, 1], [0], [0]>} : vector<2x16x8xf32>, vector<2x16x8xf32>, vector<2x16x16xf32> -> vector<2x16x16xf32>
    "tpu.trace_stop"() : () -> ()
    %cst_42 = arith.constant 0.353553385 : f32
    %103 = vector.broadcast %cst_42 : f32 to vector<2x16x16xf32>
    %104 = arith.mulf %102, %103 : vector<2x16x16xf32>
    %cst_43 = arith.constant dense<0xFF800000> : vector<2x16xf32>
    %105 = vector.multi_reduction <maximumf>, %104, %cst_43 [2] : vector<2x16x16xf32> to vector<2x16xf32>
    %106 = vector.shape_cast %105 : vector<2x16xf32> to vector<2x16x1xf32>
    %107 = vector.broadcast %106 : vector<2x16x1xf32> to vector<2x16x16xf32>
    %108 = arith.subf %104, %107 : vector<2x16x16xf32>
    %109 = math.exp %108 : vector<2x16x16xf32>
    %cst_44 = arith.constant dense<0.000000e+00> : vector<2x16xf32>
    %110 = vector.multi_reduction <add>, %109, %cst_44 [2] : vector<2x16x16xf32> to vector<2x16xf32>
    %111 = vector.shape_cast %110 : vector<2x16xf32> to vector<2x16x1xf32>
    %112 = tpu.reciprocal %111 {approx = true} : vector<2x16x1xf32> -> vector<2x16x1xf32>
    %113 = vector.broadcast %112 : vector<2x16x1xf32> to vector<2x16x16xf32>
    %114 = arith.mulf %109, %113 : vector<2x16x16xf32>
    "tpu.trace_start"() <{level = 10 : i32, message = "bqk,bkd->bqd"}> : () -> ()
    %cst_45 = arith.constant dense<0.000000e+00> : vector<2x16x8xf32>
    %115 = tpu.matmul %114, %101, %cst_45 {dimension_numbers = #tpu.dot_dimension_numbers<[2], [1], [1], [2], [0, 0, 0, 1, 1, 2], [0], [0]>} : vector<2x16x16xf32>, vector<2x16x8xf32>, vector<2x16x8xf32> -> vector<2x16x8xf32>
    "tpu.trace_stop"() : () -> ()
    %116 = vector.shape_cast %115 : vector<2x16x8xf32> to vector<32x8xf32>
    %117 = vector.extract_strided_slice %46 {offsets = [16, 0], sizes = [8, 32], strides = [1, 1]} : vector<32x32xf32> to vector<8x32xf32>
    %cst_46 = arith.constant dense<0.000000e+00> : vector<32x32xf32>
    %118 = tpu.matmul %116, %117, %cst_46 {dimension_numbers = #tpu.dot_dimension_numbers<[1], [0], [0], [1], [0, 0, 1, 1], [], []>} : vector<32x8xf32>, vector<8x32xf32>, vector<32x32xf32> -> vector<32x32xf32>
    %119 = arith.addf %95, %118 : vector<32x32xf32>
    %120 = vector.extract_strided_slice %44 {offsets = [0, 24], sizes = [32, 8], strides = [1, 1]} : vector<32x96xf32> to vector<32x8xf32>
    %121 = vector.shape_cast %120 : vector<32x8xf32> to vector<2x16x8xf32>
    %122 = vector.extract_strided_slice %44 {offsets = [0, 56], sizes = [32, 8], strides = [1, 1]} : vector<32x96xf32> to vector<32x8xf32>
    %123 = vector.shape_cast %122 : vector<32x8xf32> to vector<2x16x8xf32>
    %124 = vector.extract_strided_slice %44 {offsets = [0, 88], sizes = [32, 8], strides = [1, 1]} : vector<32x96xf32> to vector<32x8xf32>
    %125 = vector.shape_cast %124 : vector<32x8xf32> to vector<2x16x8xf32>
    "tpu.trace_start"() <{level = 10 : i32, message = "bqd,bkd->bqk"}> : () -> ()
    %cst_47 = arith.constant dense<0.000000e+00> : vector<2x16x16xf32>
    %126 = tpu.matmul %121, %123, %cst_47 {dimension_numbers = #tpu.dot_dimension_numbers<[2], [2], [1], [1], [0, 0, 0, 1, 1, 1], [0], [0]>} : vector<2x16x8xf32>, vector<2x16x8xf32>, vector<2x16x16xf32> -> vector<2x16x16xf32>
    "tpu.trace_stop"() : () -> ()
    %cst_48 = arith.constant 0.353553385 : f32
    %127 = vector.broadcast %cst_48 : f32 to vector<2x16x16xf32>
    %128 = arith.mulf %126, %127 : vector<2x16x16xf32>
    %cst_49 = arith.constant dense<0xFF800000> : vector<2x16xf32>
    %129 = vector.multi_reduction <maximumf>, %128, %cst_49 [2] : vector<2x16x16xf32> to vector<2x16xf32>
    %130 = vector.shape_cast %129 : vector<2x16xf32> to vector<2x16x1xf32>
    %131 = vector.broadcast %130 : vector<2x16x1xf32> to vector<2x16x16xf32>
    %132 = arith.subf %128, %131 : vector<2x16x16xf32>
    %133 = math.exp %132 : vector<2x16x16xf32>
    %cst_50 = arith.constant dense<0.000000e+00> : vector<2x16xf32>
    %134 = vector.multi_reduction <add>, %133, %cst_50 [2] : vector<2x16x16xf32> to vector<2x16xf32>
    %135 = vector.shape_cast %134 : vector<2x16xf32> to vector<2x16x1xf32>
    %136 = tpu.reciprocal %135 {approx = true} : vector<2x16x1xf32> -> vector<2x16x1xf32>
    %137 = vector.broadcast %136 : vector<2x16x1xf32> to vector<2x16x16xf32>
    %138 = arith.mulf %133, %137 : vector<2x16x16xf32>
    "tpu.trace_start"() <{level = 10 : i32, message = "bqk,bkd->bqd"}> : () -> ()
    %cst_51 = arith.constant dense<0.000000e+00> : vector<2x16x8xf32>
    %139 = tpu.matmul %138, %125, %cst_51 {dimension_numbers = #tpu.dot_dimension_numbers<[2], [1], [1], [2], [0, 0, 0, 1, 1, 2], [0], [0]>} : vector<2x16x16xf32>, vector<2x16x8xf32>, vector<2x16x8xf32> -> vector<2x16x8xf32>
    "tpu.trace_stop"() : () -> ()
    %140 = vector.shape_cast %139 : vector<2x16x8xf32> to vector<32x8xf32>
    %141 = vector.extract_strided_slice %46 {offsets = [24, 0], sizes = [8, 32], strides = [1, 1]} : vector<32x32xf32> to vector<8x32xf32>
    %cst_52 = arith.constant dense<0.000000e+00> : vector<32x32xf32>
    %142 = tpu.matmul %140, %141, %cst_52 {dimension_numbers = #tpu.dot_dimension_numbers<[1], [0], [0], [1], [0, 0, 1, 1], [], []>} : vector<32x8xf32>, vector<8x32xf32>, vector<32x32xf32> -> vector<32x32xf32>
    %143 = arith.addf %119, %142 : vector<32x32xf32>
    %144 = arith.addf %11, %143 : vector<32x32xf32>
    %c0_53 = arith.constant 0 : index
    %c0_54 = arith.constant 0 : index
    %c0_55 = arith.constant 0 : index
    %145 = vector.load %arg9[%c0_53, %c0_54, %c0_55] : memref<2x1x32xf32, #tpu.memory_space<vmem>>, vector<1x1x32xf32>
    %146 = vector.shape_cast %145 : vector<1x1x32xf32> to vector<1x32xf32>
    %147 = vector.broadcast %146 : vector<1x32xf32> to vector<32x32xf32>
    %148 = arith.addf %144, %147 : vector<32x32xf32>
    %c0_56 = arith.constant 0 : index
    %c0_57 = arith.constant 0 : index
    %c0_58 = arith.constant 0 : index
    %149 = vector.load %arg10[%c0_56, %c0_57, %c0_58] : memref<2x1x32xf32, #tpu.memory_space<vmem>>, vector<1x1x32xf32>
    %150 = vector.shape_cast %149 : vector<1x1x32xf32> to vector<1x32xf32>
    %c0_59 = arith.constant 0 : index
    %c0_60 = arith.constant 0 : index
    %c0_61 = arith.constant 0 : index
    %151 = vector.load %arg11[%c0_59, %c0_60, %c0_61] : memref<2x1x32xf32, #tpu.memory_space<vmem>>, vector<1x1x32xf32>
    %152 = vector.shape_cast %151 : vector<1x1x32xf32> to vector<1x32xf32>
    %cst_62 = arith.constant dense<0.000000e+00> : vector<32xf32>
    %153 = vector.multi_reduction <add>, %148, %cst_62 [1] : vector<32x32xf32> to vector<32xf32>
    %154 = vector.shape_cast %153 : vector<32xf32> to vector<32x1xf32>
    %cst_63 = arith.constant 3.200000e+01 : f32
    %155 = vector.broadcast %cst_63 : f32 to vector<32x1xf32>
    %156 = arith.divf %154, %155 : vector<32x1xf32>
    %157 = vector.broadcast %156 : vector<32x1xf32> to vector<32x32xf32>
    %158 = arith.subf %148, %157 : vector<32x32xf32>
    %159 = arith.mulf %158, %158 : vector<32x32xf32>
    %cst_64 = arith.constant dense<0.000000e+00> : vector<32xf32>
    %160 = vector.multi_reduction <add>, %159, %cst_64 [1] : vector<32x32xf32> to vector<32xf32>
    %161 = vector.shape_cast %160 : vector<32xf32> to vector<32x1xf32>
    %cst_65 = arith.constant 3.200000e+01 : f32
    %162 = vector.broadcast %cst_65 : f32 to vector<32x1xf32>
    %163 = arith.divf %161, %162 : vector<32x1xf32>
    %164 = vector.broadcast %156 : vector<32x1xf32> to vector<32x32xf32>
    %165 = arith.subf %148, %164 : vector<32x32xf32>
    %cst_66 = arith.constant 9.99999997E-7 : f32
    %166 = vector.broadcast %cst_66 : f32 to vector<32x1xf32>
    %167 = arith.addf %163, %166 : vector<32x1xf32>
    %168 = math.rsqrt %167 : vector<32x1xf32>
    %169 = vector.broadcast %168 : vector<32x1xf32> to vector<32x32xf32>
    %170 = arith.mulf %165, %169 : vector<32x32xf32>
    %171 = vector.broadcast %150 : vector<1x32xf32> to vector<32x32xf32>
    %172 = arith.mulf %170, %171 : vector<32x32xf32>
    %173 = vector.broadcast %152 : vector<1x32xf32> to vector<32x32xf32>
    %174 = arith.addf %172, %173 : vector<32x32xf32>
    %c0_67 = arith.constant 0 : index
    %c0_68 = arith.constant 0 : index
    %c0_69 = arith.constant 0 : index
    %175 = vector.load %arg12[%c0_67, %c0_68, %c0_69] : memref<2x32x64xf32, #tpu.memory_space<vmem>>, vector<1x32x64xf32>
    %176 = vector.shape_cast %175 : vector<1x32x64xf32> to vector<32x64xf32>
    %cst_70 = arith.constant dense<0.000000e+00> : vector<32x64xf32>
    %177 = tpu.matmul %174, %176, %cst_70 {dimension_numbers = #tpu.dot_dimension_numbers<[1], [0], [0], [1], [0, 0, 1, 1], [], []>} : vector<32x32xf32>, vector<32x64xf32>, vector<32x64xf32> -> vector<32x64xf32>
    %c0_71 = arith.constant 0 : index
    %c0_72 = arith.constant 0 : index
    %c0_73 = arith.constant 0 : index
    %178 = vector.load %arg13[%c0_71, %c0_72, %c0_73] : memref<2x1x64xf32, #tpu.memory_space<vmem>>, vector<1x1x64xf32>
    %179 = vector.shape_cast %178 : vector<1x1x64xf32> to vector<1x64xf32>
    %180 = vector.broadcast %179 : vector<1x64xf32> to vector<32x64xf32>
    %181 = arith.addf %177, %180 : vector<32x64xf32>
    %182 = arith.mulf %181, %181 : vector<32x64xf32>
    %183 = arith.mulf %181, %182 : vector<32x64xf32>
    %cst_74 = arith.constant 4.471500e-02 : f32
    %184 = vector.broadcast %cst_74 : f32 to vector<32x64xf32>
    %185 = arith.mulf %184, %183 : vector<32x64xf32>
    %186 = arith.addf %181, %185 : vector<32x64xf32>
    %cst_75 = arith.constant 0.797884583 : f32
    %187 = vector.broadcast %cst_75 : f32 to vector<32x64xf32>
    %188 = arith.mulf %187, %186 : vector<32x64xf32>
    %189 = math.tanh %188 : vector<32x64xf32>
    %cst_76 = arith.constant 1.000000e+00 : f32
    %190 = vector.broadcast %cst_76 : f32 to vector<32x64xf32>
    %191 = arith.addf %190, %189 : vector<32x64xf32>
    %cst_77 = arith.constant 5.000000e-01 : f32
    %192 = vector.broadcast %cst_77 : f32 to vector<32x64xf32>
    %193 = arith.mulf %192, %191 : vector<32x64xf32>
    %194 = arith.mulf %181, %193 : vector<32x64xf32>
    %c0_78 = arith.constant 0 : index
    %c0_79 = arith.constant 0 : index
    %c0_80 = arith.constant 0 : index
    %195 = vector.load %arg14[%c0_78, %c0_79, %c0_80] : memref<2x64x32xf32, #tpu.memory_space<vmem>>, vector<1x64x32xf32>
    %196 = vector.shape_cast %195 : vector<1x64x32xf32> to vector<64x32xf32>
    %cst_81 = arith.constant dense<0.000000e+00> : vector<32x32xf32>
    %197 = tpu.matmul %194, %196, %cst_81 {dimension_numbers = #tpu.dot_dimension_numbers<[1], [0], [0], [1], [0, 0, 1, 1], [], []>} : vector<32x64xf32>, vector<64x32xf32>, vector<32x32xf32> -> vector<32x32xf32>
    %198 = arith.addf %148, %197 : vector<32x32xf32>
    %c0_82 = arith.constant 0 : index
    %c0_83 = arith.constant 0 : index
    %c0_84 = arith.constant 0 : index
    %199 = vector.load %arg15[%c0_82, %c0_83, %c0_84] : memref<2x1x32xf32, #tpu.memory_space<vmem>>, vector<1x1x32xf32>
    %200 = vector.shape_cast %199 : vector<1x1x32xf32> to vector<1x32xf32>
    %201 = vector.broadcast %200 : vector<1x32xf32> to vector<32x32xf32>
    %202 = arith.addf %198, %201 : vector<32x32xf32>
    %c1 = arith.constant 1 : index
    %c0_85 = arith.constant 0 : index
    %c0_86 = arith.constant 0 : index
    %203 = vector.load %arg4[%c1, %c0_85, %c0_86] : memref<2x1x32xf32, #tpu.memory_space<vmem>>, vector<1x1x32xf32>
    %204 = vector.shape_cast %203 : vector<1x1x32xf32> to vector<1x32xf32>
    %c1_87 = arith.constant 1 : index
    %c0_88 = arith.constant 0 : index
    %c0_89 = arith.constant 0 : index
    %205 = vector.load %arg5[%c1_87, %c0_88, %c0_89] : memref<2x1x32xf32, #tpu.memory_space<vmem>>, vector<1x1x32xf32>
    %206 = vector.shape_cast %205 : vector<1x1x32xf32> to vector<1x32xf32>
    %cst_90 = arith.constant dense<0.000000e+00> : vector<32xf32>
    %207 = vector.multi_reduction <add>, %202, %cst_90 [1] : vector<32x32xf32> to vector<32xf32>
    %208 = vector.shape_cast %207 : vector<32xf32> to vector<32x1xf32>
    %cst_91 = arith.constant 3.200000e+01 : f32
    %209 = vector.broadcast %cst_91 : f32 to vector<32x1xf32>
    %210 = arith.divf %208, %209 : vector<32x1xf32>
    %211 = vector.broadcast %210 : vector<32x1xf32> to vector<32x32xf32>
    %212 = arith.subf %202, %211 : vector<32x32xf32>
    %213 = arith.mulf %212, %212 : vector<32x32xf32>
    %cst_92 = arith.constant dense<0.000000e+00> : vector<32xf32>
    %214 = vector.multi_reduction <add>, %213, %cst_92 [1] : vector<32x32xf32> to vector<32xf32>
    %215 = vector.shape_cast %214 : vector<32xf32> to vector<32x1xf32>
    %cst_93 = arith.constant 3.200000e+01 : f32
    %216 = vector.broadcast %cst_93 : f32 to vector<32x1xf32>
    %217 = arith.divf %215, %216 : vector<32x1xf32>
    %218 = vector.broadcast %210 : vector<32x1xf32> to vector<32x32xf32>
    %219 = arith.subf %202, %218 : vector<32x32xf32>
    %cst_94 = arith.constant 9.99999997E-7 : f32
    %220 = vector.broadcast %cst_94 : f32 to vector<32x1xf32>
    %221 = arith.addf %217, %220 : vector<32x1xf32>
    %222 = math.rsqrt %221 : vector<32x1xf32>
    %223 = vector.broadcast %222 : vector<32x1xf32> to vector<32x32xf32>
    %224 = arith.mulf %219, %223 : vector<32x32xf32>
    %225 = vector.broadcast %204 : vector<1x32xf32> to vector<32x32xf32>
    %226 = arith.mulf %224, %225 : vector<32x32xf32>
    %227 = vector.broadcast %206 : vector<1x32xf32> to vector<32x32xf32>
    %228 = arith.addf %226, %227 : vector<32x32xf32>
    %c1_95 = arith.constant 1 : index
    %c0_96 = arith.constant 0 : index
    %c0_97 = arith.constant 0 : index
    %229 = vector.load %arg6[%c1_95, %c0_96, %c0_97] : memref<2x32x96xf32, #tpu.memory_space<vmem>>, vector<1x32x96xf32>
    %230 = vector.shape_cast %229 : vector<1x32x96xf32> to vector<32x96xf32>
    %cst_98 = arith.constant dense<0.000000e+00> : vector<32x96xf32>
    %231 = tpu.matmul %228, %230, %cst_98 {dimension_numbers = #tpu.dot_dimension_numbers<[1], [0], [0], [1], [0, 0, 1, 1], [], []>} : vector<32x32xf32>, vector<32x96xf32>, vector<32x96xf32> -> vector<32x96xf32>
    %c1_99 = arith.constant 1 : index
    %c0_100 = arith.constant 0 : index
    %c0_101 = arith.constant 0 : index
    %232 = vector.load %arg7[%c1_99, %c0_100, %c0_101] : memref<2x1x96xf32, #tpu.memory_space<vmem>>, vector<1x1x96xf32>
    %233 = vector.shape_cast %232 : vector<1x1x96xf32> to vector<1x96xf32>
    %234 = vector.broadcast %233 : vector<1x96xf32> to vector<32x96xf32>
    %235 = arith.addf %231, %234 : vector<32x96xf32>
    %c1_102 = arith.constant 1 : index
    %c0_103 = arith.constant 0 : index
    %c0_104 = arith.constant 0 : index
    %236 = vector.load %arg8[%c1_102, %c0_103, %c0_104] : memref<2x32x32xf32, #tpu.memory_space<vmem>>, vector<1x32x32xf32>
    %237 = vector.shape_cast %236 : vector<1x32x32xf32> to vector<32x32xf32>
    %cst_105 = arith.constant 0.000000e+00 : f32
    %238 = vector.broadcast %cst_105 : f32 to vector<32x32xf32>
    %239 = vector.extract_strided_slice %235 {offsets = [0, 0], sizes = [32, 8], strides = [1, 1]} : vector<32x96xf32> to vector<32x8xf32>
    %240 = vector.shape_cast %239 : vector<32x8xf32> to vector<2x16x8xf32>
    %241 = vector.extract_strided_slice %235 {offsets = [0, 32], sizes = [32, 8], strides = [1, 1]} : vector<32x96xf32> to vector<32x8xf32>
    %242 = vector.shape_cast %241 : vector<32x8xf32> to vector<2x16x8xf32>
    %243 = vector.extract_strided_slice %235 {offsets = [0, 64], sizes = [32, 8], strides = [1, 1]} : vector<32x96xf32> to vector<32x8xf32>
    %244 = vector.shape_cast %243 : vector<32x8xf32> to vector<2x16x8xf32>
    "tpu.trace_start"() <{level = 10 : i32, message = "bqd,bkd->bqk"}> : () -> ()
    %cst_106 = arith.constant dense<0.000000e+00> : vector<2x16x16xf32>
    %245 = tpu.matmul %240, %242, %cst_106 {dimension_numbers = #tpu.dot_dimension_numbers<[2], [2], [1], [1], [0, 0, 0, 1, 1, 1], [0], [0]>} : vector<2x16x8xf32>, vector<2x16x8xf32>, vector<2x16x16xf32> -> vector<2x16x16xf32>
    "tpu.trace_stop"() : () -> ()
    %cst_107 = arith.constant 0.353553385 : f32
    %246 = vector.broadcast %cst_107 : f32 to vector<2x16x16xf32>
    %247 = arith.mulf %245, %246 : vector<2x16x16xf32>
    %cst_108 = arith.constant dense<0xFF800000> : vector<2x16xf32>
    %248 = vector.multi_reduction <maximumf>, %247, %cst_108 [2] : vector<2x16x16xf32> to vector<2x16xf32>
    %249 = vector.shape_cast %248 : vector<2x16xf32> to vector<2x16x1xf32>
    %250 = vector.broadcast %249 : vector<2x16x1xf32> to vector<2x16x16xf32>
    %251 = arith.subf %247, %250 : vector<2x16x16xf32>
    %252 = math.exp %251 : vector<2x16x16xf32>
    %cst_109 = arith.constant dense<0.000000e+00> : vector<2x16xf32>
    %253 = vector.multi_reduction <add>, %252, %cst_109 [2] : vector<2x16x16xf32> to vector<2x16xf32>
    %254 = vector.shape_cast %253 : vector<2x16xf32> to vector<2x16x1xf32>
    %255 = tpu.reciprocal %254 {approx = true} : vector<2x16x1xf32> -> vector<2x16x1xf32>
    %256 = vector.broadcast %255 : vector<2x16x1xf32> to vector<2x16x16xf32>
    %257 = arith.mulf %252, %256 : vector<2x16x16xf32>
    "tpu.trace_start"() <{level = 10 : i32, message = "bqk,bkd->bqd"}> : () -> ()
    %cst_110 = arith.constant dense<0.000000e+00> : vector<2x16x8xf32>
    %258 = tpu.matmul %257, %244, %cst_110 {dimension_numbers = #tpu.dot_dimension_numbers<[2], [1], [1], [2], [0, 0, 0, 1, 1, 2], [0], [0]>} : vector<2x16x16xf32>, vector<2x16x8xf32>, vector<2x16x8xf32> -> vector<2x16x8xf32>
    "tpu.trace_stop"() : () -> ()
    %259 = vector.shape_cast %258 : vector<2x16x8xf32> to vector<32x8xf32>
    %260 = vector.extract_strided_slice %237 {offsets = [0, 0], sizes = [8, 32], strides = [1, 1]} : vector<32x32xf32> to vector<8x32xf32>
    %cst_111 = arith.constant dense<0.000000e+00> : vector<32x32xf32>
    %261 = tpu.matmul %259, %260, %cst_111 {dimension_numbers = #tpu.dot_dimension_numbers<[1], [0], [0], [1], [0, 0, 1, 1], [], []>} : vector<32x8xf32>, vector<8x32xf32>, vector<32x32xf32> -> vector<32x32xf32>
    %262 = arith.addf %238, %261 : vector<32x32xf32>
    %263 = vector.extract_strided_slice %235 {offsets = [0, 8], sizes = [32, 8], strides = [1, 1]} : vector<32x96xf32> to vector<32x8xf32>
    %264 = vector.shape_cast %263 : vector<32x8xf32> to vector<2x16x8xf32>
    %265 = vector.extract_strided_slice %235 {offsets = [0, 40], sizes = [32, 8], strides = [1, 1]} : vector<32x96xf32> to vector<32x8xf32>
    %266 = vector.shape_cast %265 : vector<32x8xf32> to vector<2x16x8xf32>
    %267 = vector.extract_strided_slice %235 {offsets = [0, 72], sizes = [32, 8], strides = [1, 1]} : vector<32x96xf32> to vector<32x8xf32>
    %268 = vector.shape_cast %267 : vector<32x8xf32> to vector<2x16x8xf32>
    "tpu.trace_start"() <{level = 10 : i32, message = "bqd,bkd->bqk"}> : () -> ()
    %cst_112 = arith.constant dense<0.000000e+00> : vector<2x16x16xf32>
    %269 = tpu.matmul %264, %266, %cst_112 {dimension_numbers = #tpu.dot_dimension_numbers<[2], [2], [1], [1], [0, 0, 0, 1, 1, 1], [0], [0]>} : vector<2x16x8xf32>, vector<2x16x8xf32>, vector<2x16x16xf32> -> vector<2x16x16xf32>
    "tpu.trace_stop"() : () -> ()
    %cst_113 = arith.constant 0.353553385 : f32
    %270 = vector.broadcast %cst_113 : f32 to vector<2x16x16xf32>
    %271 = arith.mulf %269, %270 : vector<2x16x16xf32>
    %cst_114 = arith.constant dense<0xFF800000> : vector<2x16xf32>
    %272 = vector.multi_reduction <maximumf>, %271, %cst_114 [2] : vector<2x16x16xf32> to vector<2x16xf32>
    %273 = vector.shape_cast %272 : vector<2x16xf32> to vector<2x16x1xf32>
    %274 = vector.broadcast %273 : vector<2x16x1xf32> to vector<2x16x16xf32>
    %275 = arith.subf %271, %274 : vector<2x16x16xf32>
    %276 = math.exp %275 : vector<2x16x16xf32>
    %cst_115 = arith.constant dense<0.000000e+00> : vector<2x16xf32>
    %277 = vector.multi_reduction <add>, %276, %cst_115 [2] : vector<2x16x16xf32> to vector<2x16xf32>
    %278 = vector.shape_cast %277 : vector<2x16xf32> to vector<2x16x1xf32>
    %279 = tpu.reciprocal %278 {approx = true} : vector<2x16x1xf32> -> vector<2x16x1xf32>
    %280 = vector.broadcast %279 : vector<2x16x1xf32> to vector<2x16x16xf32>
    %281 = arith.mulf %276, %280 : vector<2x16x16xf32>
    "tpu.trace_start"() <{level = 10 : i32, message = "bqk,bkd->bqd"}> : () -> ()
    %cst_116 = arith.constant dense<0.000000e+00> : vector<2x16x8xf32>
    %282 = tpu.matmul %281, %268, %cst_116 {dimension_numbers = #tpu.dot_dimension_numbers<[2], [1], [1], [2], [0, 0, 0, 1, 1, 2], [0], [0]>} : vector<2x16x16xf32>, vector<2x16x8xf32>, vector<2x16x8xf32> -> vector<2x16x8xf32>
    "tpu.trace_stop"() : () -> ()
    %283 = vector.shape_cast %282 : vector<2x16x8xf32> to vector<32x8xf32>
    %284 = vector.extract_strided_slice %237 {offsets = [8, 0], sizes = [8, 32], strides = [1, 1]} : vector<32x32xf32> to vector<8x32xf32>
    %cst_117 = arith.constant dense<0.000000e+00> : vector<32x32xf32>
    %285 = tpu.matmul %283, %284, %cst_117 {dimension_numbers = #tpu.dot_dimension_numbers<[1], [0], [0], [1], [0, 0, 1, 1], [], []>} : vector<32x8xf32>, vector<8x32xf32>, vector<32x32xf32> -> vector<32x32xf32>
    %286 = arith.addf %262, %285 : vector<32x32xf32>
    %287 = vector.extract_strided_slice %235 {offsets = [0, 16], sizes = [32, 8], strides = [1, 1]} : vector<32x96xf32> to vector<32x8xf32>
    %288 = vector.shape_cast %287 : vector<32x8xf32> to vector<2x16x8xf32>
    %289 = vector.extract_strided_slice %235 {offsets = [0, 48], sizes = [32, 8], strides = [1, 1]} : vector<32x96xf32> to vector<32x8xf32>
    %290 = vector.shape_cast %289 : vector<32x8xf32> to vector<2x16x8xf32>
    %291 = vector.extract_strided_slice %235 {offsets = [0, 80], sizes = [32, 8], strides = [1, 1]} : vector<32x96xf32> to vector<32x8xf32>
    %292 = vector.shape_cast %291 : vector<32x8xf32> to vector<2x16x8xf32>
    "tpu.trace_start"() <{level = 10 : i32, message = "bqd,bkd->bqk"}> : () -> ()
    %cst_118 = arith.constant dense<0.000000e+00> : vector<2x16x16xf32>
    %293 = tpu.matmul %288, %290, %cst_118 {dimension_numbers = #tpu.dot_dimension_numbers<[2], [2], [1], [1], [0, 0, 0, 1, 1, 1], [0], [0]>} : vector<2x16x8xf32>, vector<2x16x8xf32>, vector<2x16x16xf32> -> vector<2x16x16xf32>
    "tpu.trace_stop"() : () -> ()
    %cst_119 = arith.constant 0.353553385 : f32
    %294 = vector.broadcast %cst_119 : f32 to vector<2x16x16xf32>
    %295 = arith.mulf %293, %294 : vector<2x16x16xf32>
    %cst_120 = arith.constant dense<0xFF800000> : vector<2x16xf32>
    %296 = vector.multi_reduction <maximumf>, %295, %cst_120 [2] : vector<2x16x16xf32> to vector<2x16xf32>
    %297 = vector.shape_cast %296 : vector<2x16xf32> to vector<2x16x1xf32>
    %298 = vector.broadcast %297 : vector<2x16x1xf32> to vector<2x16x16xf32>
    %299 = arith.subf %295, %298 : vector<2x16x16xf32>
    %300 = math.exp %299 : vector<2x16x16xf32>
    %cst_121 = arith.constant dense<0.000000e+00> : vector<2x16xf32>
    %301 = vector.multi_reduction <add>, %300, %cst_121 [2] : vector<2x16x16xf32> to vector<2x16xf32>
    %302 = vector.shape_cast %301 : vector<2x16xf32> to vector<2x16x1xf32>
    %303 = tpu.reciprocal %302 {approx = true} : vector<2x16x1xf32> -> vector<2x16x1xf32>
    %304 = vector.broadcast %303 : vector<2x16x1xf32> to vector<2x16x16xf32>
    %305 = arith.mulf %300, %304 : vector<2x16x16xf32>
    "tpu.trace_start"() <{level = 10 : i32, message = "bqk,bkd->bqd"}> : () -> ()
    %cst_122 = arith.constant dense<0.000000e+00> : vector<2x16x8xf32>
    %306 = tpu.matmul %305, %292, %cst_122 {dimension_numbers = #tpu.dot_dimension_numbers<[2], [1], [1], [2], [0, 0, 0, 1, 1, 2], [0], [0]>} : vector<2x16x16xf32>, vector<2x16x8xf32>, vector<2x16x8xf32> -> vector<2x16x8xf32>
    "tpu.trace_stop"() : () -> ()
    %307 = vector.shape_cast %306 : vector<2x16x8xf32> to vector<32x8xf32>
    %308 = vector.extract_strided_slice %237 {offsets = [16, 0], sizes = [8, 32], strides = [1, 1]} : vector<32x32xf32> to vector<8x32xf32>
    %cst_123 = arith.constant dense<0.000000e+00> : vector<32x32xf32>
    %309 = tpu.matmul %307, %308, %cst_123 {dimension_numbers = #tpu.dot_dimension_numbers<[1], [0], [0], [1], [0, 0, 1, 1], [], []>} : vector<32x8xf32>, vector<8x32xf32>, vector<32x32xf32> -> vector<32x32xf32>
    %310 = arith.addf %286, %309 : vector<32x32xf32>
    %311 = vector.extract_strided_slice %235 {offsets = [0, 24], sizes = [32, 8], strides = [1, 1]} : vector<32x96xf32> to vector<32x8xf32>
    %312 = vector.shape_cast %311 : vector<32x8xf32> to vector<2x16x8xf32>
    %313 = vector.extract_strided_slice %235 {offsets = [0, 56], sizes = [32, 8], strides = [1, 1]} : vector<32x96xf32> to vector<32x8xf32>
    %314 = vector.shape_cast %313 : vector<32x8xf32> to vector<2x16x8xf32>
    %315 = vector.extract_strided_slice %235 {offsets = [0, 88], sizes = [32, 8], strides = [1, 1]} : vector<32x96xf32> to vector<32x8xf32>
    %316 = vector.shape_cast %315 : vector<32x8xf32> to vector<2x16x8xf32>
    "tpu.trace_start"() <{level = 10 : i32, message = "bqd,bkd->bqk"}> : () -> ()
    %cst_124 = arith.constant dense<0.000000e+00> : vector<2x16x16xf32>
    %317 = tpu.matmul %312, %314, %cst_124 {dimension_numbers = #tpu.dot_dimension_numbers<[2], [2], [1], [1], [0, 0, 0, 1, 1, 1], [0], [0]>} : vector<2x16x8xf32>, vector<2x16x8xf32>, vector<2x16x16xf32> -> vector<2x16x16xf32>
    "tpu.trace_stop"() : () -> ()
    %cst_125 = arith.constant 0.353553385 : f32
    %318 = vector.broadcast %cst_125 : f32 to vector<2x16x16xf32>
    %319 = arith.mulf %317, %318 : vector<2x16x16xf32>
    %cst_126 = arith.constant dense<0xFF800000> : vector<2x16xf32>
    %320 = vector.multi_reduction <maximumf>, %319, %cst_126 [2] : vector<2x16x16xf32> to vector<2x16xf32>
    %321 = vector.shape_cast %320 : vector<2x16xf32> to vector<2x16x1xf32>
    %322 = vector.broadcast %321 : vector<2x16x1xf32> to vector<2x16x16xf32>
    %323 = arith.subf %319, %322 : vector<2x16x16xf32>
    %324 = math.exp %323 : vector<2x16x16xf32>
    %cst_127 = arith.constant dense<0.000000e+00> : vector<2x16xf32>
    %325 = vector.multi_reduction <add>, %324, %cst_127 [2] : vector<2x16x16xf32> to vector<2x16xf32>
    %326 = vector.shape_cast %325 : vector<2x16xf32> to vector<2x16x1xf32>
    %327 = tpu.reciprocal %326 {approx = true} : vector<2x16x1xf32> -> vector<2x16x1xf32>
    %328 = vector.broadcast %327 : vector<2x16x1xf32> to vector<2x16x16xf32>
    %329 = arith.mulf %324, %328 : vector<2x16x16xf32>
    "tpu.trace_start"() <{level = 10 : i32, message = "bqk,bkd->bqd"}> : () -> ()
    %cst_128 = arith.constant dense<0.000000e+00> : vector<2x16x8xf32>
    %330 = tpu.matmul %329, %316, %cst_128 {dimension_numbers = #tpu.dot_dimension_numbers<[2], [1], [1], [2], [0, 0, 0, 1, 1, 2], [0], [0]>} : vector<2x16x16xf32>, vector<2x16x8xf32>, vector<2x16x8xf32> -> vector<2x16x8xf32>
    "tpu.trace_stop"() : () -> ()
    %331 = vector.shape_cast %330 : vector<2x16x8xf32> to vector<32x8xf32>
    %332 = vector.extract_strided_slice %237 {offsets = [24, 0], sizes = [8, 32], strides = [1, 1]} : vector<32x32xf32> to vector<8x32xf32>
    %cst_129 = arith.constant dense<0.000000e+00> : vector<32x32xf32>
    %333 = tpu.matmul %331, %332, %cst_129 {dimension_numbers = #tpu.dot_dimension_numbers<[1], [0], [0], [1], [0, 0, 1, 1], [], []>} : vector<32x8xf32>, vector<8x32xf32>, vector<32x32xf32> -> vector<32x32xf32>
    %334 = arith.addf %310, %333 : vector<32x32xf32>
    %335 = arith.addf %202, %334 : vector<32x32xf32>
    %c1_130 = arith.constant 1 : index
    %c0_131 = arith.constant 0 : index
    %c0_132 = arith.constant 0 : index
    %336 = vector.load %arg9[%c1_130, %c0_131, %c0_132] : memref<2x1x32xf32, #tpu.memory_space<vmem>>, vector<1x1x32xf32>
    %337 = vector.shape_cast %336 : vector<1x1x32xf32> to vector<1x32xf32>
    %338 = vector.broadcast %337 : vector<1x32xf32> to vector<32x32xf32>
    %339 = arith.addf %335, %338 : vector<32x32xf32>
    %c1_133 = arith.constant 1 : index
    %c0_134 = arith.constant 0 : index
    %c0_135 = arith.constant 0 : index
    %340 = vector.load %arg10[%c1_133, %c0_134, %c0_135] : memref<2x1x32xf32, #tpu.memory_space<vmem>>, vector<1x1x32xf32>
    %341 = vector.shape_cast %340 : vector<1x1x32xf32> to vector<1x32xf32>
    %c1_136 = arith.constant 1 : index
    %c0_137 = arith.constant 0 : index
    %c0_138 = arith.constant 0 : index
    %342 = vector.load %arg11[%c1_136, %c0_137, %c0_138] : memref<2x1x32xf32, #tpu.memory_space<vmem>>, vector<1x1x32xf32>
    %343 = vector.shape_cast %342 : vector<1x1x32xf32> to vector<1x32xf32>
    %cst_139 = arith.constant dense<0.000000e+00> : vector<32xf32>
    %344 = vector.multi_reduction <add>, %339, %cst_139 [1] : vector<32x32xf32> to vector<32xf32>
    %345 = vector.shape_cast %344 : vector<32xf32> to vector<32x1xf32>
    %cst_140 = arith.constant 3.200000e+01 : f32
    %346 = vector.broadcast %cst_140 : f32 to vector<32x1xf32>
    %347 = arith.divf %345, %346 : vector<32x1xf32>
    %348 = vector.broadcast %347 : vector<32x1xf32> to vector<32x32xf32>
    %349 = arith.subf %339, %348 : vector<32x32xf32>
    %350 = arith.mulf %349, %349 : vector<32x32xf32>
    %cst_141 = arith.constant dense<0.000000e+00> : vector<32xf32>
    %351 = vector.multi_reduction <add>, %350, %cst_141 [1] : vector<32x32xf32> to vector<32xf32>
    %352 = vector.shape_cast %351 : vector<32xf32> to vector<32x1xf32>
    %cst_142 = arith.constant 3.200000e+01 : f32
    %353 = vector.broadcast %cst_142 : f32 to vector<32x1xf32>
    %354 = arith.divf %352, %353 : vector<32x1xf32>
    %355 = vector.broadcast %347 : vector<32x1xf32> to vector<32x32xf32>
    %356 = arith.subf %339, %355 : vector<32x32xf32>
    %cst_143 = arith.constant 9.99999997E-7 : f32
    %357 = vector.broadcast %cst_143 : f32 to vector<32x1xf32>
    %358 = arith.addf %354, %357 : vector<32x1xf32>
    %359 = math.rsqrt %358 : vector<32x1xf32>
    %360 = vector.broadcast %359 : vector<32x1xf32> to vector<32x32xf32>
    %361 = arith.mulf %356, %360 : vector<32x32xf32>
    %362 = vector.broadcast %341 : vector<1x32xf32> to vector<32x32xf32>
    %363 = arith.mulf %361, %362 : vector<32x32xf32>
    %364 = vector.broadcast %343 : vector<1x32xf32> to vector<32x32xf32>
    %365 = arith.addf %363, %364 : vector<32x32xf32>
    %c1_144 = arith.constant 1 : index
    %c0_145 = arith.constant 0 : index
    %c0_146 = arith.constant 0 : index
    %366 = vector.load %arg12[%c1_144, %c0_145, %c0_146] : memref<2x32x64xf32, #tpu.memory_space<vmem>>, vector<1x32x64xf32>
    %367 = vector.shape_cast %366 : vector<1x32x64xf32> to vector<32x64xf32>
    %cst_147 = arith.constant dense<0.000000e+00> : vector<32x64xf32>
    %368 = tpu.matmul %365, %367, %cst_147 {dimension_numbers = #tpu.dot_dimension_numbers<[1], [0], [0], [1], [0, 0, 1, 1], [], []>} : vector<32x32xf32>, vector<32x64xf32>, vector<32x64xf32> -> vector<32x64xf32>
    %c1_148 = arith.constant 1 : index
    %c0_149 = arith.constant 0 : index
    %c0_150 = arith.constant 0 : index
    %369 = vector.load %arg13[%c1_148, %c0_149, %c0_150] : memref<2x1x64xf32, #tpu.memory_space<vmem>>, vector<1x1x64xf32>
    %370 = vector.shape_cast %369 : vector<1x1x64xf32> to vector<1x64xf32>
    %371 = vector.broadcast %370 : vector<1x64xf32> to vector<32x64xf32>
    %372 = arith.addf %368, %371 : vector<32x64xf32>
    %373 = arith.mulf %372, %372 : vector<32x64xf32>
    %374 = arith.mulf %372, %373 : vector<32x64xf32>
    %cst_151 = arith.constant 4.471500e-02 : f32
    %375 = vector.broadcast %cst_151 : f32 to vector<32x64xf32>
    %376 = arith.mulf %375, %374 : vector<32x64xf32>
    %377 = arith.addf %372, %376 : vector<32x64xf32>
    %cst_152 = arith.constant 0.797884583 : f32
    %378 = vector.broadcast %cst_152 : f32 to vector<32x64xf32>
    %379 = arith.mulf %378, %377 : vector<32x64xf32>
    %380 = math.tanh %379 : vector<32x64xf32>
    %cst_153 = arith.constant 1.000000e+00 : f32
    %381 = vector.broadcast %cst_153 : f32 to vector<32x64xf32>
    %382 = arith.addf %381, %380 : vector<32x64xf32>
    %cst_154 = arith.constant 5.000000e-01 : f32
    %383 = vector.broadcast %cst_154 : f32 to vector<32x64xf32>
    %384 = arith.mulf %383, %382 : vector<32x64xf32>
    %385 = arith.mulf %372, %384 : vector<32x64xf32>
    %c1_155 = arith.constant 1 : index
    %c0_156 = arith.constant 0 : index
    %c0_157 = arith.constant 0 : index
    %386 = vector.load %arg14[%c1_155, %c0_156, %c0_157] : memref<2x64x32xf32, #tpu.memory_space<vmem>>, vector<1x64x32xf32>
    %387 = vector.shape_cast %386 : vector<1x64x32xf32> to vector<64x32xf32>
    %cst_158 = arith.constant dense<0.000000e+00> : vector<32x32xf32>
    %388 = tpu.matmul %385, %387, %cst_158 {dimension_numbers = #tpu.dot_dimension_numbers<[1], [0], [0], [1], [0, 0, 1, 1], [], []>} : vector<32x64xf32>, vector<64x32xf32>, vector<32x32xf32> -> vector<32x32xf32>
    %389 = arith.addf %339, %388 : vector<32x32xf32>
    %c1_159 = arith.constant 1 : index
    %c0_160 = arith.constant 0 : index
    %c0_161 = arith.constant 0 : index
    %390 = vector.load %arg15[%c1_159, %c0_160, %c0_161] : memref<2x1x32xf32, #tpu.memory_space<vmem>>, vector<1x1x32xf32>
    %391 = vector.shape_cast %390 : vector<1x1x32xf32> to vector<1x32xf32>
    %392 = vector.broadcast %391 : vector<1x32xf32> to vector<32x32xf32>
    %393 = arith.addf %389, %392 : vector<32x32xf32>
    %c0_162 = arith.constant 0 : index
    %c0_163 = arith.constant 0 : index
    %394 = vector.load %arg16[%c0_162, %c0_163] : memref<32x32xf32, #tpu.memory_space<vmem>>, vector<32x32xf32>
    tpu.vector_store %arg16[%c0_162, %c0_163], %393 {strides = array<i32>} : memref<32x32xf32, #tpu.memory_space<vmem>>, vector<32x32xf32>,
    return
  }
}

</mosaic_0001>

<llo_original>
// kernel: hmr2_forward.3
$region0: #{hmr2_forward.3}
  #allocation0 [shape = 'u32[]', space=smem, size = 0x4, offset = 0x4, fixed_abs, tag = 'smem constant byte address 0x4 - core index']
  #allocation1 [shape = 'u32[144,128]{1,0:T(1,128)}', space=vmem, size = 0x12000, scoped, tag = 'internal scratch']
  %s0 = inlined_call_operand.vmem [shape: f32[32,32], index: 0, kind: input, shape index: {}]
  %s1 = inlined_call_operand.vmem [shape: f32[1,32], index: 1, kind: input, shape index: {}]
  %s2 = inlined_call_operand.vmem [shape: f32[1,32], index: 2, kind: input, shape index: {}]
  %s3 = inlined_call_operand.vmem [shape: f32[1,32], index: 3, kind: input, shape index: {}]
  %s4 = inlined_call_operand.vmem [shape: f32[32,32], index: 4, kind: input, shape index: {}]
  %s5 = inlined_call_operand.vmem [shape: f32[1,32], index: 5, kind: input, shape index: {}]
  %s6 = inlined_call_operand.vmem [shape: f32[32,32], index: 6, kind: input, shape index: {}]
  %s7 = inlined_call_operand.vmem [shape: f32[1,32], index: 7, kind: input, shape index: {}]
  %s8 = inlined_call_operand.vmem [shape: f32[32,32], index: 8, kind: input, shape index: {}]
  %s9 = inlined_call_operand.vmem [shape: f32[1,32], index: 9, kind: input, shape index: {}]
  %s10 = inlined_call_operand.vmem [shape: f32[32,32], index: 10, kind: input, shape index: {}]
  %s11 = inlined_call_operand.vmem [shape: f32[1,32], index: 11, kind: input, shape index: {}]
  %s12 = inlined_call_operand.vmem [shape: f32[1,32], index: 12, kind: input, shape index: {}]
  %s13 = inlined_call_operand.vmem [shape: f32[1,32], index: 13, kind: input, shape index: {}]
  %s14 = inlined_call_operand.vmem [shape: f32[32,64], index: 14, kind: input, shape index: {}]
  %s15 = inlined_call_operand.vmem [shape: f32[1,64], index: 15, kind: input, shape index: {}]
  %s16 = inlined_call_operand.vmem [shape: f32[64,32], index: 16, kind: input, shape index: {}]
  %s17 = inlined_call_operand.vmem [shape: f32[1,32], index: 17, kind: input, shape index: {}]
  %s18 = inlined_call_operand.vmem [shape: f32[32,256], index: 18, kind: input, shape index: {}]
  %s19 = inlined_call_operand.vmem [shape: f32[1,256], index: 19, kind: input, shape index: {}]
  %s20 = inlined_call_operand.vmem [shape: f32[2,256], index: 20, kind: output, shape index: {0}]
  %s21 = inlined_call_operand.hbm [shape: f32[2,3], index: 21, kind: output, shape index: {1}]
  %22 = xla_tuple %s20, %s21
  %s23 = sld [smem:[#allocation0]]
  $region98: #{hmr2_forward.3} parent=0
    _
  %s25 = ssub.s32 1, %s23
  %s26 = scalar_select 0, %s25, %s23
  $region1: #{hmr2_forward.3} parent=0
    #allocation2 [shape = 'u8[1024]{0}', space=vmem, size = 0x400, scoped, tag = 'output window, operand 1, single buffered']
    #allocation3 [shape = 's32[1]{0}', space=sflag, size = 0x4, scoped, tag = 'scoped memory for hmr2_forward.3']
    %27 = vsyncpa [#allocation3], 0
    // Predicated region
    $region2: #{hmr2_forward.3} parent=1 // pred_check
      _
    $region3: #{hmr2_forward.3} parent=1 // pred_check_branch
      %29 = sbr.rel (0) target = $region5
    $region4: #{hmr2_forward.3} parent=1 // pred_region
      _
    $region5: #{hmr2_forward.3} parent=1 // pred_fallthru
      _
    // Predicated region
    $region6: #{hmr2_forward.3} parent=1 // pred_check
      _
    $region7: #{hmr2_forward.3} parent=1 // pred_check_branch
      %31 = sbr.rel (0) target = $region9
    $region8: #{hmr2_forward.3} parent=1 // pred_region
      _
    $region9: #{hmr2_forward.3} parent=1 // pred_fallthru
      _
    // Predicated region
    $region10: #{hmr2_forward.3} parent=1 // pred_check
      _
    $region11: #{hmr2_forward.3} parent=1 // pred_check_branch
      %33 = sbr.rel (0) target = $region13
    $region12: #{hmr2_forward.3} parent=1 // pred_region
      _
    $region13: #{hmr2_forward.3} parent=1 // pred_fallthru
      _
    // Predicated region
    $region14: #{hmr2_forward.3} parent=1 // pred_check
      _
    $region15: #{hmr2_forward.3} parent=1 // pred_check_branch
      %35 = sbr.rel (0) target = $region17
    $region16: #{hmr2_forward.3} parent=1 // pred_region
      _
    $region17: #{hmr2_forward.3} parent=1 // pred_fallthru
      _
    // Predicated region
    $region18: #{hmr2_forward.3} parent=1 // pred_check
      _
    $region19: #{hmr2_forward.3} parent=1 // pred_check_branch
      %37 = sbr.rel (0) target = $region21
    $region20: #{hmr2_forward.3} parent=1 // pred_region
      _
    $region21: #{hmr2_forward.3} parent=1 // pred_fallthru
      _
    // Predicated region
    $region22: #{hmr2_forward.3} parent=1 // pred_check
      _
    $region23: #{hmr2_forward.3} parent=1 // pred_check_branch
      %39 = sbr.rel (0) target = $region25
    $region24: #{hmr2_forward.3} parent=1 // pred_region
      _
    $region25: #{hmr2_forward.3} parent=1 // pred_fallthru
      _
    // Predicated region
    $region26: #{hmr2_forward.3} parent=1 // pred_check
      _
    $region27: #{hmr2_forward.3} parent=1 // pred_check_branch
      %41 = sbr.rel (0) target = $region29
    $region28: #{hmr2_forward.3} parent=1 // pred_region
      _
    $region29: #{hmr2_forward.3} parent=1 // pred_fallthru
      _
    // Predicated region
    $region30: #{hmr2_forward.3} parent=1 // pred_check
      _
    $region31: #{hmr2_forward.3} parent=1 // pred_check_branch
      %43 = sbr.rel (0) target = $region33
    $region32: #{hmr2_forward.3} parent=1 // pred_region
      _
    $region33: #{hmr2_forward.3} parent=1 // pred_fallthru
      _
    // Predicated region
    $region34: #{hmr2_forward.3} parent=1 // pred_check
      _
    $region35: #{hmr2_forward.3} parent=1 // pred_check_branch
      %45 = sbr.rel (0) target = $region37
    $region36: #{hmr2_forward.3} parent=1 // pred_region
      _
    $region37: #{hmr2_forward.3} parent=1 // pred_fallthru
      _
    // Predicated region
    $region38: #{hmr2_forward.3} parent=1 // pred_check
      _
    $region39: #{hmr2_forward.3} parent=1 // pred_check_branch
      %47 = sbr.rel (0) target = $region41
    $region40: #{hmr2_forward.3} parent=1 // pred_region
      _
    $region41: #{hmr2_forward.3} parent=1 // pred_fallthru
      _
    // Predicated region
    $region42: #{hmr2_forward.3} parent=1 // pred_check
      _
    $region43: #{hmr2_forward.3} parent=1 // pred_check_branch
      %49 = sbr.rel (0) target = $region45
    $region44: #{hmr2_forward.3} parent=1 // pred_region
      _
    $region45: #{hmr2_forward.3} parent=1 // pred_fallthru
      _
    // Predicated region
    $region46: #{hmr2_forward.3} parent=1 // pred_check
      _
    $region47: #{hmr2_forward.3} parent=1 // pred_check_branch
      %51 = sbr.rel (0) target = $region49
    $region48: #{hmr2_forward.3} parent=1 // pred_region
      _
    $region49: #{hmr2_forward.3} parent=1 // pred_fallthru
      _
    // Predicated region
    $region50: #{hmr2_forward.3} parent=1 // pred_check
      _
    $region51: #{hmr2_forward.3} parent=1 // pred_check_branch
      %53 = sbr.rel (0) target = $region53
    $region52: #{hmr2_forward.3} parent=1 // pred_region
      _
    $region53: #{hmr2_forward.3} parent=1 // pred_fallthru
      _
    // Predicated region
    $region54: #{hmr2_forward.3} parent=1 // pred_check
      _
    $region55: #{hmr2_forward.3} parent=1 // pred_check_branch
      %55 = sbr.rel (0) target = $region57
    $region56: #{hmr2_forward.3} parent=1 // pred_region
      _
    $region57: #{hmr2_forward.3} parent=1 // pred_fallthru
      _
    // Predicated region
    $region58: #{hmr2_forward.3} parent=1 // pred_check
      _
    $region59: #{hmr2_forward.3} parent=1 // pred_check_branch
      %57 = sbr.rel (0) target = $region61
    $region60: #{hmr2_forward.3} parent=1 // pred_region
      _
    $region61: #{hmr2_forward.3} parent=1 // pred_fallthru
      _
    // Predicated region
    $region62: #{hmr2_forward.3} parent=1 // pred_check
      _
    $region63: #{hmr2_forward.3} parent=1 // pred_check_branch
      %59 = sbr.rel (0) target = $region65
    $region64: #{hmr2_forward.3} parent=1 // pred_region
      _
    $region65: #{hmr2_forward.3} parent=1 // pred_fallthru
      _
    // Predicated region
    $region66: #{hmr2_forward.3} parent=1 // pred_check
      _
    $region67: #{hmr2_forward.3} parent=1 // pred_check_branch
      %61 = sbr.rel (0) target = $region69
    $region68: #{hmr2_forward.3} parent=1 // pred_region
      _
    $region69: #{hmr2_forward.3} parent=1 // pred_fallthru
      _
    // Predicated region
    $region70: #{hmr2_forward.3} parent=1 // pred_check
      _
    $region71: #{hmr2_forward.3} parent=1 // pred_check_branch
      %63 = sbr.rel (0) target = $region73
    $region72: #{hmr2_forward.3} parent=1 // pred_region
      _
    $region73: #{hmr2_forward.3} parent=1 // pred_fallthru
      _
    // Predicated region
    $region74: #{hmr2_forward.3} parent=1 // pred_check
      _
    $region75: #{hmr2_forward.3} parent=1 // pred_check_branch
      %65 = sbr.rel (0) target = $region77
    $region76: #{hmr2_forward.3} parent=1 // pred_region
      _
    $region77: #{hmr2_forward.3} parent=1 // pred_fallthru
      _
    // Predicated region
    $region78: #{hmr2_forward.3} parent=1 // pred_check
      _
    $region79: #{hmr2_forward.3} parent=1 // pred_check_branch
      %67 = sbr.rel (0) target = $region81
    $region80: #{hmr2_forward.3} parent=1 // pred_region
      _
    $region81: #{hmr2_forward.3} parent=1 // pred_fallthru
      _
    %v68 = vld [vmem:[%s0] sm:$0xff]
    %v69 = vld [vmem:[%s0 + $0x8] sm:$0xff]
    %v70 = vld [vmem:[%s0 + $0x10] sm:$0xff]
    %v71 = vld [vmem:[%s0 + $0x18] sm:$0xff]
    %v72 = vld [vmem:[%s1] sm:$0x1]
    %v74 = vlaneseq
    %v75 = vshrl.u32 %v74, 7
    %v76 = vsub.s32 0, %v75
    %v77 = vrot.slane %v72, %v76
    %v79 = vld [vmem:[%s2] sm:$0x1]
    %v80 = vld [vmem:[%s3] sm:$0x1]
    %vm81 = vcmask 261120
    %v82 = vsel %vm81, %v77, 0.0
    %83 = vadd.xlane.f32.xlu0 %v82
    %v84 = vpop.xlane.xlu0 %83
    %v85 = vrcp.pop 32.0
    %v86 = vmul.f32 %v84, %v85
    %v87 = vsub.f32 %v77, %v86
    %v88 = vmul.f32 %v87, %v87
    %v89 = vsel %vm81, %v88, 0.0
    %90 = vadd.xlane.f32.xlu0 %v89
    %v91 = vpop.xlane.xlu0 %90
    %v92 = vmul.f32 %v91, %v85
    %v93 = vadd.f32 %v92, 1e-06
    %v94 = vrsqrt.pop %v93
    %v95 = vmul.f32 %v87, %v94
    %v97 = vlaneseq
    %v98 = vshrl.u32 %v97, 7
    %v99 = vsub.s32 0, %v98
    %v100 = vrot.slane %v79, %v99
    %v102 = vmul.f32 %v95, %v100
    %v104 = vlaneseq
    %v105 = vshrl.u32 %v104, 7
    %v106 = vsub.s32 0, %v105
    %v107 = vrot.slane %v80, %v106
    %v109 = vadd.f32 %v102, %v107
    %v110 = vld [vmem:[%s4] sm:$0xff]
    %v111 = vld [vmem:[%s4 + $0x8] sm:$0xff]
    %v112 = vld [vmem:[%s4 + $0x10] sm:$0xff]
    %v113 = vld [vmem:[%s4 + $0x18] sm:$0xff]
    %v114 = vld [vmem:[%s5] sm:$0x1]
    %v116 = vlaneseq
    %v117 = vshrl.u32 %v116, 7
    %v118 = vsub.s32 0, %v117
    %v119 = vrot.slane %v114, %v118
    %v122 = vsel %vm81, %v109, 0
    %124 = vmatprep.subr.mxu0 0.0
    %125 = vmatpush1.msra.mxu0 0.0
    %126 = vmatprep.subr.mxu0 0.0
    %127 = vmatpush1.msra.mxu0 0.0
    %128 = vmatprep.subr.mxu0 0.0
    %129 = vmatpush1.msra.mxu0 0.0
    %130 = vmatprep.subr.mxu0 0.0
    %131 = vmatpush1.msra.mxu0 0.0
    %132 = vmatprep.subr.mxu0 0.0
    %133 = vmatpush1.msra.mxu0 0.0
    %134 = vmatprep.subr.mxu0 0.0
    %135 = vmatpush1.msra.mxu0 0.0
    %136 = vmatprep.subr.mxu0 0.0
    %137 = vmatpush1.msra.mxu0 0.0
    %138 = vmatprep.subr.mxu0 0.0
    %139 = vmatpush1.msra.mxu0 0.0
    %140 = vmatprep.subr.mxu0 0.0
    %141 = vmatpush1.msra.mxu0 0.0
    %142 = vmatprep.subr.mxu0 0.0
    %143 = vmatpush1.msra.mxu0 0.0
    %144 = vmatprep.subr.mxu0 0.0
    %145 = vmatpush1.msra.mxu0 0.0
    %146 = vmatprep.subr.mxu0 0.0
    %147 = vmatpush1.msra.mxu0 0.0
    %148 = vmatprep.subr.mxu0 0.0
    %149 = vmatpush1.msra.mxu0 %v113
    %150 = vmatprep.subr.mxu0 0.0
    %151 = vmatpush1.msra.mxu0 %v112
    %152 = vmatprep.subr.mxu0 0.0
    %153 = vmatpush1.msra.mxu0 %v111
    %154 = vmatprep.subr.mxu0 0.0
    %155 = vmatpush1.msra.mxu0 %v110
    %156 = vmatprep.subr.mxu0 0.0
    %157 = vmatpush2.msra.mxu0 0.0
    %158 = vmatprep.subr.mxu0 0.0
    %159 = vmatpush2.msra.mxu0 0.0
    %160 = vmatprep.subr.mxu0 0.0
    %161 = vmatpush2.msra.mxu0 0.0
    %162 = vmatprep.subr.mxu0 0.0
    %163 = vmatpush2.msra.mxu0 0.0
    %164 = vmatprep.subr.mxu0 0.0
    %165 = vmatpush2.msra.mxu0 0.0
    %166 = vmatprep.subr.mxu0 0.0
    %167 = vmatpush2.msra.mxu0 0.0
    %168 = vmatprep.subr.mxu0 0.0
    %169 = vmatpush2.msra.mxu0 0.0
    %170 = vmatprep.subr.mxu0 0.0
    %171 = vmatpush2.msra.mxu0 0.0
    %172 = vmatprep.subr.mxu0 0.0
    %173 = vmatpush2.msra.mxu0 0.0
    %174 = vmatprep.subr.mxu0 0.0
    %175 = vmatpush2.msra.mxu0 0.0
    %176 = vmatprep.subr.mxu0 0.0
    %177 = vmatpush2.msra.mxu0 0.0
    %178 = vmatprep.subr.mxu0 0.0
    %179 = vmatpush2.msra.mxu0 0.0
    %180 = vmatprep.subr.mxu0 0.0
    %181 = vmatpush2.msra.mxu0 0.0
    %182 = vmatprep.subr.mxu0 0.0
    %183 = vmatpush2.msra.mxu0 0.0
    %184 = vmatprep.subr.mxu0 0.0
    %185 = vmatpush2.msra.mxu0 0.0
    %186 = vmatprep.subr.mxu0 0.0
    %187 = vmatpush2.msra.mxu0 0.0
    %188 = vmatprep.mubr.f32.mxu0 0.0
    %189 = vmatmul.mubr.f32.gmra.mxu0 %v122
    %v190 = vpop.f32.mrf.mxu0
    %v191 = vadd.f32 %v119, %v190
    %v192 = vpop.f32.mrf.mxu0
    %193 = vdwg.mxu0
    %v194 = vld [vmem:[%s6] sm:$0xff]
    %v195 = vld [vmem:[%s6 + $0x8] sm:$0xff]
    %v196 = vld [vmem:[%s6 + $0x10] sm:$0xff]
    %v197 = vld [vmem:[%s6 + $0x18] sm:$0xff]
    %v198 = vld [vmem:[%s7] sm:$0x1]
    %v200 = vlaneseq
    %v201 = vshrl.u32 %v200, 7
    %v202 = vsub.s32 0, %v201
    %v203 = vrot.slane %v198, %v202
    %v206 = vsel %vm81, %v68, 0
    %v209 = vsel %vm81, %v69, 0
    %v212 = vsel %vm81, %v70, 0
    %v215 = vsel %vm81, %v71, 0
    %217 = vmatprep.subr.mxu0 0.0
    %218 = vmatpush1.msra.mxu0 0.0
    %219 = vmatprep.subr.mxu0 0.0
    %220 = vmatpush1.msra.mxu0 0.0
    %221 = vmatprep.subr.mxu0 0.0
    %222 = vmatpush1.msra.mxu0 0.0
    %223 = vmatprep.subr.mxu0 0.0
    %224 = vmatpush1.msra.mxu0 0.0
    %225 = vmatprep.subr.mxu0 0.0
    %226 = vmatpush1.msra.mxu0 0.0
    %227 = vmatprep.subr.mxu0 0.0
    %228 = vmatpush1.msra.mxu0 0.0
    %229 = vmatprep.subr.mxu0 0.0
    %230 = vmatpush1.msra.mxu0 0.0
    %231 = vmatprep.subr.mxu0 0.0
    %232 = vmatpush1.msra.mxu0 0.0
    %233 = vmatprep.subr.mxu0 0.0
    %234 = vmatpush1.msra.mxu0 0.0
    %235 = vmatprep.subr.mxu0 0.0
    %236 = vmatpush1.msra.mxu0 0.0
    %237 = vmatprep.subr.mxu0 0.0
    %238 = vmatpush1.msra.mxu0 0.0
    %239 = vmatprep.subr.mxu0 0.0
    %240 = vmatpush1.msra.mxu0 0.0
    %241 = vmatprep.subr.mxu0 0.0
    %242 = vmatpush1.msra.mxu0 %v197
    %243 = vmatprep.subr.mxu0 0.0
    %244 = vmatpush1.msra.mxu0 %v196
    %245 = vmatprep.subr.mxu0 0.0
    %246 = vmatpush1.msra.mxu0 %v195
    %247 = vmatprep.subr.mxu0 0.0
    %248 = vmatpush1.msra.mxu0 %v194
    %249 = vmatprep.subr.mxu0 0.0
    %250 = vmatpush2.msra.mxu0 0.0
    %251 = vmatprep.subr.mxu0 0.0
    %252 = vmatpush2.msra.mxu0 0.0
    %253 = vmatprep.subr.mxu0 0.0
    %254 = vmatpush2.msra.mxu0 0.0
    %255 = vmatprep.subr.mxu0 0.0
    %256 = vmatpush2.msra.mxu0 0.0
    %257 = vmatprep.subr.mxu0 0.0
    %258 = vmatpush2.msra.mxu0 0.0
    %259 = vmatprep.subr.mxu0 0.0
    %260 = vmatpush2.msra.mxu0 0.0
    %261 = vmatprep.subr.mxu0 0.0
    %262 = vmatpush2.msra.mxu0 0.0
    %263 = vmatprep.subr.mxu0 0.0
    %264 = vmatpush2.msra.mxu0 0.0
    %265 = vmatprep.subr.mxu0 0.0
    %266 = vmatpush2.msra.mxu0 0.0
    %267 = vmatprep.subr.mxu0 0.0
    %268 = vmatpush2.msra.mxu0 0.0
    %269 = vmatprep.subr.mxu0 0.0
    %270 = vmatpush2.msra.mxu0 0.0
    %271 = vmatprep.subr.mxu0 0.0
    %272 = vmatpush2.msra.mxu0 0.0
    %273 = vmatprep.subr.mxu0 0.0
    %274 = vmatpush2.msra.mxu0 0.0
    %275 = vmatprep.subr.mxu0 0.0
    %276 = vmatpush2.msra.mxu0 0.0
    %277 = vmatprep.subr.mxu0 0.0
    %278 = vmatpush2.msra.mxu0 0.0
    %279 = vmatprep.subr.mxu0 0.0
    %280 = vmatpush2.msra.mxu0 0.0
    %281 = vmatprep.mubr.f32.mxu0 0.0
    %282 = vmatmul.mubr.f32.gmra.mxu0 %v206
    %v283 = vpop.f32.mrf.mxu0
    %v284 = vadd.f32 %v203, %v283
    %v285 = vpop.f32.mrf.mxu0
    %286 = vmatprep.mubr.f32.mxu0 0.0
    %287 = vmatmul.mubr.f32.gmra.mxu0 %v209
    %v288 = vpop.f32.mrf.mxu0
    %v289 = vadd.f32 %v203, %v288
    %v290 = vpop.f32.mrf.mxu0
    %291 = vmatprep.mubr.f32.mxu0 0.0
    %292 = vmatmul.mubr.f32.gmra.mxu0 %v212
    %v293 = vpop.f32.mrf.mxu0
    %v294 = vadd.f32 %v203, %v293
    %v295 = vpop.f32.mrf.mxu0
    %296 = vmatprep.mubr.f32.mxu0 0.0
    %297 = vmatmul.mubr.f32.gmra.mxu0 %v215
    %v298 = vpop.f32.mrf.mxu0
    %v299 = vadd.f32 %v203, %v298
    %v300 = vpop.f32.mrf.mxu0
    %301 = vdwg.mxu0
    %v302 = vld [vmem:[%s8] sm:$0xff]
    %v303 = vld [vmem:[%s8 + $0x8] sm:$0xff]
    %v304 = vld [vmem:[%s8 + $0x10] sm:$0xff]
    %v305 = vld [vmem:[%s8 + $0x18] sm:$0xff]
    %v306 = vld [vmem:[%s9] sm:$0x1]
    %v308 = vlaneseq
    %v309 = vshrl.u32 %v308, 7
    %v310 = vsub.s32 0, %v309
    %v311 = vrot.slane %v306, %v310
    %313 = vmatprep.subr.mxu0 0.0
    %314 = vmatpush1.msra.mxu0 0.0
    %315 = vmatprep.subr.mxu0 0.0
    %316 = vmatpush1.msra.mxu0 0.0
    %317 = vmatprep.subr.mxu0 0.0
    %318 = vmatpush1.msra.mxu0 0.0
    %319 = vmatprep.subr.mxu0 0.0
    %320 = vmatpush1.msra.mxu0 0.0
    %321 = vmatprep.subr.mxu0 0.0
    %322 = vmatpush1.msra.mxu0 0.0
    %323 = vmatprep.subr.mxu0 0.0
    %324 = vmatpush1.msra.mxu0 0.0
    %325 = vmatprep.subr.mxu0 0.0
    %326 = vmatpush1.msra.mxu0 0.0
    %327 = vmatprep.subr.mxu0 0.0
    %328 = vmatpush1.msra.mxu0 0.0
    %329 = vmatprep.subr.mxu0 0.0
    %330 = vmatpush1.msra.mxu0 0.0
    %331 = vmatprep.subr.mxu0 0.0
    %332 = vmatpush1.msra.mxu0 0.0
    %333 = vmatprep.subr.mxu0 0.0
    %334 = vmatpush1.msra.mxu0 0.0
    %335 = vmatprep.subr.mxu0 0.0
    %336 = vmatpush1.msra.mxu0 0.0
    %337 = vmatprep.subr.mxu0 0.0
    %338 = vmatpush1.msra.mxu0 %v305
    %339 = vmatprep.subr.mxu0 0.0
    %340 = vmatpush1.msra.mxu0 %v304
    %341 = vmatprep.subr.mxu0 0.0
    %342 = vmatpush1.msra.mxu0 %v303
    %343 = vmatprep.subr.mxu0 0.0
    %344 = vmatpush1.msra.mxu0 %v302
    %345 = vmatprep.subr.mxu0 0.0
    %346 = vmatpush2.msra.mxu0 0.0
    %347 = vmatprep.subr.mxu0 0.0
    %348 = vmatpush2.msra.mxu0 0.0
    %349 = vmatprep.subr.mxu0 0.0
    %350 = vmatpush2.msra.mxu0 0.0
    %351 = vmatprep.subr.mxu0 0.0
    %352 = vmatpush2.msra.mxu0 0.0
    %353 = vmatprep.subr.mxu0 0.0
    %354 = vmatpush2.msra.mxu0 0.0
    %355 = vmatprep.subr.mxu0 0.0
    %356 = vmatpush2.msra.mxu0 0.0
    %357 = vmatprep.subr.mxu0 0.0
    %358 = vmatpush2.msra.mxu0 0.0
    %359 = vmatprep.subr.mxu0 0.0
    %360 = vmatpush2.msra.mxu0 0.0
    %361 = vmatprep.subr.mxu0 0.0
    %362 = vmatpush2.msra.mxu0 0.0
    %363 = vmatprep.subr.mxu0 0.0
    %364 = vmatpush2.msra.mxu0 0.0
    %365 = vmatprep.subr.mxu0 0.0
    %366 = vmatpush2.msra.mxu0 0.0
    %367 = vmatprep.subr.mxu0 0.0
    %368 = vmatpush2.msra.mxu0 0.0
    %369 = vmatprep.subr.mxu0 0.0
    %370 = vmatpush2.msra.mxu0 0.0
    %371 = vmatprep.subr.mxu0 0.0
    %372 = vmatpush2.msra.mxu0 0.0
    %373 = vmatprep.subr.mxu0 0.0
    %374 = vmatpush2.msra.mxu0 0.0
    %375 = vmatprep.subr.mxu0 0.0
    %376 = vmatpush2.msra.mxu0 0.0
    %377 = vmatprep.mubr.f32.mxu0 0.0
    %378 = vmatmul.mubr.f32.gmra.mxu0 %v206
    %v379 = vpop.f32.mrf.mxu0
    %v380 = vadd.f32 %v311, %v379
    %v381 = vpop.f32.mrf.mxu0
    %382 = vmatprep.mubr.f32.mxu0 0.0
    %383 = vmatmul.mubr.f32.gmra.mxu0 %v209
    %v384 = vpop.f32.mrf.mxu0
    %v385 = vadd.f32 %v311, %v384
    %v386 = vpop.f32.mrf.mxu0
    %387 = vmatprep.mubr.f32.mxu0 0.0
    %388 = vmatmul.mubr.f32.gmra.mxu0 %v212
    %v389 = vpop.f32.mrf.mxu0
    %v390 = vadd.f32 %v311, %v389
    %v391 = vpop.f32.mrf.mxu0
    %392 = vmatprep.mubr.f32.mxu0 0.0
    %393 = vmatmul.mubr.f32.gmra.mxu0 %v215
    %v394 = vpop.f32.mrf.mxu0
    %v395 = vadd.f32 %v311, %v394
    %v396 = vpop.f32.mrf.mxu0
    %397 = vdwg.mxu0
    %v400 = vunpack.c.l.s4 1966171168
    %v401 = vunpack.c.0.s8 %v400
    %v402 = vlaneseq
    %v403 = vshrl.u32 %v402, 7
    %v404 = vsub.s32 %v401, %v403
    %v405 = vrot.slane %v191, %v404
    %v406 = vcombine.high %v405, %v405
    %v408 = vunpack.c.l.s4 1966171168
    %v409 = vunpack.c.0.s8 %v408
    %v410 = vlaneseq
    %v411 = vshrl.u32 %v410, 7
    %v412 = vsub.s32 %v409, %v411
    %v413 = vrot.slane %v405, %v412
    %v415 = vunpack.c.l.s4 1966171168
    %v416 = vunpack.c.0.s8 %v415
    %v417 = vlaneseq
    %v418 = vshrl.u32 %v417, 7
    %v419 = vsub.s32 %v416, %v418
    %v420 = vrot.slane %v406, %v419
    %v421 = vlaneseq
    %v422 = vshrl.u32 %v421, 7
    %v423 = vsub.s32 0, %v422
    %v424 = vrot.slane %v413, %v423
    %v425 = vlaneseq
    %v426 = vshrl.u32 %v425, 7
    %v427 = vsub.s32 0, %v426
    %v428 = vrot.slane %v420, %v427
    %v431 = vmul.f32 %v424, %v284
    %v432 = vmul.f32 %v424, %v289
    %v433 = vmul.f32 %v428, %v294
    %v434 = vmul.f32 %v428, %v299
    %v435 = vsel %vm81, %v431, 0.0
    %436 = vadd.xlane.f32.xlu0 %v435
    %v437 = vpop.xlane.xlu0 %436
    %v438 = vsel %vm81, %v432, 0.0
    %439 = vadd.xlane.f32.xlu0 %v438
    %v440 = vpop.xlane.xlu0 %439
    %v441 = vsel %vm81, %v433, 0.0
    %442 = vadd.xlane.f32.xlu0 %v441
    %v443 = vpop.xlane.xlu0 %442
    %v444 = vsel %vm81, %v434, 0.0
    %445 = vadd.xlane.f32.xlu0 %v444
    %v446 = vpop.xlane.xlu0 %445
    %v447 = vmul.f32 %v437, 0.17677669
    %v448 = vmul.f32 %v440, 0.17677669
    %v449 = vmul.f32 %v443, 0.17677669
    %v450 = vmul.f32 %v446, 0.17677669
    %v455 = vlaneseq
    %v456 = vand.u32 %v455, 127
    %v457 = vlaneseq
    %v458 = vshrl.u32 %v457, 7
    %v459 = vsub.s32 %v456, %v458
    %v460 = vrot.slane %v447, %v459
    %v461 = vadd.s32 %v456, 4294967288
    %v462 = vlaneseq
    %v463 = vshrl.u32 %v462, 7
    %v464 = vsub.s32 %v461, %v463
    %v465 = vrot.slane %v448, %v464
    %vm466 = vcmask 130112
    %v467 = vsel %vm466, %v465, %v460
    %v468 = vlaneseq
    %v469 = vshrl.u32 %v468, 7
    %v470 = vsub.s32 %v456, %v469
    %v471 = vrot.slane %v449, %v470
    %v472 = vlaneseq
    %v473 = vshrl.u32 %v472, 7
    %v474 = vsub.s32 %v461, %v473
    %v475 = vrot.slane %v450, %v474
    %v476 = vsel %vm466, %v475, %v471
    %vm477 = vcmask 1041409
    %v478 = vsel %vm477, %v476, %v467
    %vm480 = vcmask 123904
    %v481 = vsel %vm480, %v478, -inf
    %482 = vmax.xlane.f32.xlu0 %v481
    %v483 = vpop.xlane.xlu0 %482
    %v485 = vlaneseq
    %v486 = vshrl.u32 %v485, 7
    %v487 = vsub.s32 0, %v486
    %v488 = vrot.slane %v483, %v487
    %v489 = vlaneseq
    %v490 = vshrl.u32 %v489, 7
    %v491 = vsub.s32 1, %v490
    %v492 = vrot.slane %v483, %v491
    %v495 = vsub.f32 %v447, %v488
    %v496 = vsub.f32 %v448, %v488
    %v497 = vsub.f32 %v449, %v492
    %v498 = vsub.f32 %v450, %v492
    %v499 = vmul.f32 %v495, 1.442695
    %v500 = vpow.pop %v499
    %v501 = vmul.f32 %v496, 1.442695
    %v502 = vpow.pop %v501
    %v503 = vmul.f32 %v497, 1.442695
    %v504 = vpow.pop %v503
    %v505 = vmul.f32 %v498, 1.442695
    %v506 = vpow.pop %v505
    %511 = vset.pattern.permute.xlu0 0
    %512 = vperm.xlu0 %511, %v500
    %v513 = vpop.permute.xlu0 %512
    %514 = vset.pattern.permute.xlu0 0
    %515 = vperm.xlu0 %514, %v502
    %v516 = vpop.permute.xlu0 %515
    %517 = vset.pattern.permute.xlu0 0
    %518 = vperm.xlu0 %517, %v504
    %v519 = vpop.permute.xlu0 %518
    %520 = vset.pattern.permute.xlu0 0
    %521 = vperm.xlu0 %520, %v506
    %v522 = vpop.permute.xlu0 %521
    %v523 = vlaneseq
    %v524 = vshrl.u32 %v523, 7
    %v525 = vsub.s32 %v456, %v524
    %v526 = vrot.slane %v513, %v525
    %v527 = vlaneseq
    %v528 = vshrl.u32 %v527, 7
    %v529 = vsub.s32 %v461, %v528
    %v530 = vrot.slane %v516, %v529
    %v531 = vsel %vm466, %v530, %v526
    %v532 = vlaneseq
    %v533 = vshrl.u32 %v532, 7
    %v534 = vsub.s32 %v456, %v533
    %v535 = vrot.slane %v519, %v534
    %v536 = vlaneseq
    %v537 = vshrl.u32 %v536, 7
    %v538 = vsub.s32 %v461, %v537
    %v539 = vrot.slane %v522, %v538
    %v540 = vsel %vm466, %v539, %v535
    %v541 = vsel %vm477, %v540, %v531
    %v543 = vsel %vm480, %v541, 0.0
    %544 = vadd.xlane.f32.xlu0 %v543
    %v545 = vpop.xlane.xlu0 %544
    %v546 = vrcp.pop %v545
    %v548 = vlaneseq
    %v549 = vshrl.u32 %v548, 7
    %v550 = vsub.s32 0, %v549
    %v551 = vrot.slane %v546, %v550
    %v552 = vlaneseq
    %v553 = vshrl.u32 %v552, 7
    %v554 = vsub.s32 1, %v553
    %v555 = vrot.slane %v546, %v554
    %v558 = vmul.f32 %v500, %v551
    %v559 = vmul.f32 %v502, %v551
    %v560 = vmul.f32 %v504, %v555
    %v561 = vmul.f32 %v506, %v555
    %563 = vset.pattern.permute.xlu0 0
    %564 = vperm.xlu0 %563, %v558
    %v565 = vpop.permute.xlu0 %564
    %568 = vset.pattern.permute.xlu0 0
    %569 = vperm.xlu0 %568, %v559
    %v570 = vpop.permute.xlu0 %569
    %573 = vset.pattern.permute.xlu0 0
    %574 = vperm.xlu0 %573, %v560
    %v575 = vpop.permute.xlu0 %574
    %578 = vset.pattern.permute.xlu0 0
    %579 = vperm.xlu0 %578, %v561
    %v580 = vpop.permute.xlu0 %579
    %v582 = vmul.f32 %v565, %v380
    %v583 = vmul.f32 %v570, %v385
    %v584 = vmul.f32 %v575, %v390
    %v585 = vmul.f32 %v580, %v395
    %v586 = vsel %vm81, %v582, 0.0
    %v587 = vsel %vm81, %v583, 0.0
    %v588 = vadd.f32 %v586, %v587
    %v589 = vrot.slane %v588, 4
    %v590 = vadd.f32 %v588, %v589
    %v591 = vrot.slane %v590, 2
    %v592 = vadd.f32 %v590, %v591
    %v593 = vrot.slane %v592, 1
    %v594 = vadd.f32 %v592, %v593
    %v595 = vsel %vm81, %v584, 0.0
    %v596 = vsel %vm81, %v585, 0.0
    %v597 = vadd.f32 %v595, %v596
    %v598 = vrot.slane %v597, 4
    %v599 = vadd.f32 %v597, %v598
    %v600 = vrot.slane %v599, 2
    %v601 = vadd.f32 %v599, %v600
    %v602 = vrot.slane %v601, 1
    %v603 = vadd.f32 %v601, %v602
    %v604 = vld [vmem:[%s10] sm:$0xff]
    %v605 = vld [vmem:[%s10 + $0x8] sm:$0xff]
    %v606 = vld [vmem:[%s10 + $0x10] sm:$0xff]
    %v607 = vld [vmem:[%s10 + $0x18] sm:$0xff]
    %v608 = vld [vmem:[%s11] sm:$0x1]
    %v610 = vlaneseq
    %v611 = vshrl.u32 %v610, 7
    %v612 = vsub.s32 0, %v611
    %v613 = vrot.slane %v608, %v612
    %v617 = vsel %vm477, %v603, %v594
    %v618 = vsel %vm81, %v617, 0
    %620 = vmatprep.subr.mxu0 0.0
    %621 = vmatpush1.msra.mxu0 0.0
    %622 = vmatprep.subr.mxu0 0.0
    %623 = vmatpush1.msra.mxu0 0.0
    %624 = vmatprep.subr.mxu0 0.0
    %625 = vmatpush1.msra.mxu0 0.0
    %626 = vmatprep.subr.mxu0 0.0
    %627 = vmatpush1.msra.mxu0 0.0
    %628 = vmatprep.subr.mxu0 0.0
    %629 = vmatpush1.msra.mxu0 0.0
    %630 = vmatprep.subr.mxu0 0.0
    %631 = vmatpush1.msra.mxu0 0.0
    %632 = vmatprep.subr.mxu0 0.0
    %633 = vmatpush1.msra.mxu0 0.0
    %634 = vmatprep.subr.mxu0 0.0
    %635 = vmatpush1.msra.mxu0 0.0
    %636 = vmatprep.subr.mxu0 0.0
    %637 = vmatpush1.msra.mxu0 0.0
    %638 = vmatprep.subr.mxu0 0.0
    %639 = vmatpush1.msra.mxu0 0.0
    %640 = vmatprep.subr.mxu0 0.0
    %641 = vmatpush1.msra.mxu0 0.0
    %642 = vmatprep.subr.mxu0 0.0
    %643 = vmatpush1.msra.mxu0 0.0
    %644 = vmatprep.subr.mxu0 0.0
    %645 = vmatpush1.msra.mxu0 %v607
    %646 = vmatprep.subr.mxu0 0.0
    %647 = vmatpush1.msra.mxu0 %v606
    %648 = vmatprep.subr.mxu0 0.0
    %649 = vmatpush1.msra.mxu0 %v605
    %650 = vmatprep.subr.mxu0 0.0
    %651 = vmatpush1.msra.mxu0 %v604
    %652 = vmatprep.subr.mxu0 0.0
    %653 = vmatpush2.msra.mxu0 0.0
    %654 = vmatprep.subr.mxu0 0.0
    %655 = vmatpush2.msra.mxu0 0.0
    %656 = vmatprep.subr.mxu0 0.0
    %657 = vmatpush2.msra.mxu0 0.0
    %658 = vmatprep.subr.mxu0 0.0
    %659 = vmatpush2.msra.mxu0 0.0
    %660 = vmatprep.subr.mxu0 0.0
    %661 = vmatpush2.msra.mxu0 0.0
    %662 = vmatprep.subr.mxu0 0.0
    %663 = vmatpush2.msra.mxu0 0.0
    %664 = vmatprep.subr.mxu0 0.0
    %665 = vmatpush2.msra.mxu0 0.0
    %666 = vmatprep.subr.mxu0 0.0
    %667 = vmatpush2.msra.mxu0 0.0
    %668 = vmatprep.subr.mxu0 0.0
    %669 = vmatpush2.msra.mxu0 0.0
    %670 = vmatprep.subr.mxu0 0.0
    %671 = vmatpush2.msra.mxu0 0.0
    %672 = vmatprep.subr.mxu0 0.0
    %673 = vmatpush2.msra.mxu0 0.0
    %674 = vmatprep.subr.mxu0 0.0
    %675 = vmatpush2.msra.mxu0 0.0
    %676 = vmatprep.subr.mxu0 0.0
    %677 = vmatpush2.msra.mxu0 0.0
    %678 = vmatprep.subr.mxu0 0.0
    %679 = vmatpush2.msra.mxu0 0.0
    %680 = vmatprep.subr.mxu0 0.0
    %681 = vmatpush2.msra.mxu0 0.0
    %682 = vmatprep.subr.mxu0 0.0
    %683 = vmatpush2.msra.mxu0 0.0
    %684 = vmatprep.mubr.f32.mxu0 0.0
    %685 = vmatmul.mubr.f32.gmra.mxu0 %v618
    %v686 = vpop.f32.mrf.mxu0
    %v687 = vadd.f32 %v613, %v686
    %v688 = vpop.f32.mrf.mxu0
    %689 = vdwg.mxu0
    %v690 = vadd.f32 %v77, %v687
    %v691 = vld [vmem:[%s12] sm:$0x1]
    %v692 = vld [vmem:[%s13] sm:$0x1]
    %vm693 = vcmask 254976
    %v694 = vsel %vm693, %v690, 0.0
    %695 = vadd.xlane.f32.xlu0 %v694
    %v696 = vpop.xlane.xlu0 %695
    %v697 = vmul.f32 %v696, %v85
    %v698 = vsub.f32 %v690, %v697
    %v699 = vmul.f32 %v698, %v698
    %v700 = vsel %vm693, %v699, 0.0
    %701 = vadd.xlane.f32.xlu0 %v700
    %v702 = vpop.xlane.xlu0 %701
    %v703 = vmul.f32 %v702, %v85
    %v704 = vadd.f32 %v703, 1e-06
    %v705 = vrsqrt.pop %v704
    %v706 = vmul.f32 %v698, %v705
    %v708 = vlaneseq
    %v709 = vshrl.u32 %v708, 7
    %v710 = vsub.s32 0, %v709
    %v711 = vrot.slane %v691, %v710
    %v713 = vmul.f32 %v706, %v711
    %v715 = vlaneseq
    %v716 = vshrl.u32 %v715, 7
    %v717 = vsub.s32 0, %v716
    %v718 = vrot.slane %v692, %v717
    %v720 = vadd.f32 %v713, %v718
    %v721 = vld [vmem:[%s14] sm:$0xff]
    %v722 = vld [vmem:[%s14 + $0x8] sm:$0xff]
    %v723 = vld [vmem:[%s14 + $0x10] sm:$0xff]
    %v724 = vld [vmem:[%s14 + $0x18] sm:$0xff]
    %v725 = vld [vmem:[%s15] sm:$0x1]
    %v727 = vlaneseq
    %v728 = vshrl.u32 %v727, 7
    %v729 = vsub.s32 0, %v728
    %v730 = vrot.slane %v725, %v729
    %v733 = vsel %vm81, %v720, 0
    %735 = vmatprep.subr.mxu0 0.0
    %736 = vmatpush1.msra.mxu0 0.0
    %737 = vmatprep.subr.mxu0 0.0
    %738 = vmatpush1.msra.mxu0 0.0
    %739 = vmatprep.subr.mxu0 0.0
    %740 = vmatpush1.msra.mxu0 0.0
    %741 = vmatprep.subr.mxu0 0.0
    %742 = vmatpush1.msra.mxu0 0.0
    %743 = vmatprep.subr.mxu0 0.0
    %744 = vmatpush1.msra.mxu0 0.0
    %745 = vmatprep.subr.mxu0 0.0
    %746 = vmatpush1.msra.mxu0 0.0
    %747 = vmatprep.subr.mxu0 0.0
    %748 = vmatpush1.msra.mxu0 0.0
    %749 = vmatprep.subr.mxu0 0.0
    %750 = vmatpush1.msra.mxu0 0.0
    %751 = vmatprep.subr.mxu0 0.0
    %752 = vmatpush1.msra.mxu0 0.0
    %753 = vmatprep.subr.mxu0 0.0
    %754 = vmatpush1.msra.mxu0 0.0
    %755 = vmatprep.subr.mxu0 0.0
    %756 = vmatpush1.msra.mxu0 0.0
    %757 = vmatprep.subr.mxu0 0.0
    %758 = vmatpush1.msra.mxu0 0.0
    %759 = vmatprep.subr.mxu0 0.0
    %760 = vmatpush1.msra.mxu0 %v724
    %761 = vmatprep.subr.mxu0 0.0
    %762 = vmatpush1.msra.mxu0 %v723
    %763 = vmatprep.subr.mxu0 0.0
    %764 = vmatpush1.msra.mxu0 %v722
    %765 = vmatprep.subr.mxu0 0.0
    %766 = vmatpush1.msra.mxu0 %v721
    %767 = vmatprep.subr.mxu0 0.0
    %768 = vmatpush2.msra.mxu0 0.0
    %769 = vmatprep.subr.mxu0 0.0
    %770 = vmatpush2.msra.mxu0 0.0
    %771 = vmatprep.subr.mxu0 0.0
    %772 = vmatpush2.msra.mxu0 0.0
    %773 = vmatprep.subr.mxu0 0.0
    %774 = vmatpush2.msra.mxu0 0.0
    %775 = vmatprep.subr.mxu0 0.0
    %776 = vmatpush2.msra.mxu0 0.0
    %777 = vmatprep.subr.mxu0 0.0
    %778 = vmatpush2.msra.mxu0 0.0
    %779 = vmatprep.subr.mxu0 0.0
    %780 = vmatpush2.msra.mxu0 0.0
    %781 = vmatprep.subr.mxu0 0.0
    %782 = vmatpush2.msra.mxu0 0.0
    %783 = vmatprep.subr.mxu0 0.0
    %784 = vmatpush2.msra.mxu0 0.0
    %785 = vmatprep.subr.mxu0 0.0
    %786 = vmatpush2.msra.mxu0 0.0
    %787 = vmatprep.subr.mxu0 0.0
    %788 = vmatpush2.msra.mxu0 0.0
    %789 = vmatprep.subr.mxu0 0.0
    %790 = vmatpush2.msra.mxu0 0.0
    %791 = vmatprep.subr.mxu0 0.0
    %792 = vmatpush2.msra.mxu0 0.0
    %793 = vmatprep.subr.mxu0 0.0
    %794 = vmatpush2.msra.mxu0 0.0
    %795 = vmatprep.subr.mxu0 0.0
    %796 = vmatpush2.msra.mxu0 0.0
    %797 = vmatprep.subr.mxu0 0.0
    %798 = vmatpush2.msra.mxu0 0.0
    %799 = vmatprep.mubr.f32.mxu0 0.0
    %800 = vmatmul.mubr.f32.gmra.mxu0 %v733
    %v801 = vpop.f32.mrf.mxu0
    %v802 = vadd.f32 %v730, %v801
    %v803 = vpop.f32.mrf.mxu0
    %804 = vdwg.mxu0
    %v805 = vmul.f32 %v802, %v802
    %v806 = vmul.f32 %v802, %v805
    %v807 = vmul.f32 %v806, 0.044715
    %v808 = vadd.f32 %v802, %v807
    %v809 = vmul.f32 %v808, 0.7978846
    %v810 = vtanh.pop %v809
    %v811 = vadd.f32 %v810, 1.0
    %v812 = vmul.f32 %v811, 0.5
    %v813 = vmul.f32 %v802, %v812
    %v814 = vld [vmem:[%s16] sm:$0xff]
    %v815 = vld [vmem:[%s16 + $0x8] sm:$0xff]
    %v816 = vld [vmem:[%s16 + $0x10] sm:$0xff]
    %v817 = vld [vmem:[%s16 + $0x18] sm:$0xff]
    %v818 = vld [vmem:[%s16 + $0x20] sm:$0xff]
    %v819 = vld [vmem:[%s16 + $0x28] sm:$0xff]
    %v820 = vld [vmem:[%s16 + $0x30] sm:$0xff]
    %v821 = vld [vmem:[%s16 + $0x38] sm:$0xff]
    %vm822 = vcmask 523264
    %v824 = vsel %vm822, %v813, 0
    %826 = vmatprep.subr.mxu0 0.0
    %827 = vmatpush1.msra.mxu0 0.0
    %828 = vmatprep.subr.mxu0 0.0
    %829 = vmatpush1.msra.mxu0 0.0
    %830 = vmatprep.subr.mxu0 0.0
    %831 = vmatpush1.msra.mxu0 0.0
    %832 = vmatprep.subr.mxu0 0.0
    %833 = vmatpush1.msra.mxu0 0.0
    %834 = vmatprep.subr.mxu0 0.0
    %835 = vmatpush1.msra.mxu0 0.0
    %836 = vmatprep.subr.mxu0 0.0
    %837 = vmatpush1.msra.mxu0 0.0
    %838 = vmatprep.subr.mxu0 0.0
    %839 = vmatpush1.msra.mxu0 0.0
    %840 = vmatprep.subr.mxu0 0.0
    %841 = vmatpush1.msra.mxu0 0.0
    %842 = vmatprep.subr.mxu0 0.0
    %843 = vmatpush1.msra.mxu0 %v821
    %844 = vmatprep.subr.mxu0 0.0
    %845 = vmatpush1.msra.mxu0 %v820
    %846 = vmatprep.subr.mxu0 0.0
    %847 = vmatpush1.msra.mxu0 %v819
    %848 = vmatprep.subr.mxu0 0.0
    %849 = vmatpush1.msra.mxu0 %v818
    %850 = vmatprep.subr.mxu0 0.0
    %851 = vmatpush1.msra.mxu0 %v817
    %852 = vmatprep.subr.mxu0 0.0
    %853 = vmatpush1.msra.mxu0 %v816
    %854 = vmatprep.subr.mxu0 0.0
    %855 = vmatpush1.msra.mxu0 %v815
    %856 = vmatprep.subr.mxu0 0.0
    %857 = vmatpush1.msra.mxu0 %v814
    %858 = vmatprep.subr.mxu0 0.0
    %859 = vmatpush2.msra.mxu0 0.0
    %860 = vmatprep.subr.mxu0 0.0
    %861 = vmatpush2.msra.mxu0 0.0
    %862 = vmatprep.subr.mxu0 0.0
    %863 = vmatpush2.msra.mxu0 0.0
    %864 = vmatprep.subr.mxu0 0.0
    %865 = vmatpush2.msra.mxu0 0.0
    %866 = vmatprep.subr.mxu0 0.0
    %867 = vmatpush2.msra.mxu0 0.0
    %868 = vmatprep.subr.mxu0 0.0
    %869 = vmatpush2.msra.mxu0 0.0
    %870 = vmatprep.subr.mxu0 0.0
    %871 = vmatpush2.msra.mxu0 0.0
    %872 = vmatprep.subr.mxu0 0.0
    %873 = vmatpush2.msra.mxu0 0.0
    %874 = vmatprep.subr.mxu0 0.0
    %875 = vmatpush2.msra.mxu0 0.0
    %876 = vmatprep.subr.mxu0 0.0
    %877 = vmatpush2.msra.mxu0 0.0
    %878 = vmatprep.subr.mxu0 0.0
    %879 = vmatpush2.msra.mxu0 0.0
    %880 = vmatprep.subr.mxu0 0.0
    %881 = vmatpush2.msra.mxu0 0.0
    %882 = vmatprep.subr.mxu0 0.0
    %883 = vmatpush2.msra.mxu0 0.0
    %884 = vmatprep.subr.mxu0 0.0
    %885 = vmatpush2.msra.mxu0 0.0
    %886 = vmatprep.subr.mxu0 0.0
    %887 = vmatpush2.msra.mxu0 0.0
    %888 = vmatprep.subr.mxu0 0.0
    %889 = vmatpush2.msra.mxu0 0.0
    %890 = vmatprep.mubr.f32.mxu0 0.0
    %891 = vmatmul.mubr.f32.gmra.mxu0 %v824
    %v892 = vpop.f32.mrf.mxu0
    %v893 = vadd.f32 0.0, %v892
    %v894 = vpop.f32.mrf.mxu0
    %895 = vdwg.mxu0
    %v896 = vadd.f32 %v690, %v893
    %v897 = vld [vmem:[%s17] sm:$0x1]
    %v899 = vlaneseq
    %v900 = vshrl.u32 %v899, 7
    %v901 = vsub.s32 0, %v900
    %v902 = vrot.slane %v897, %v901
    %v904 = vadd.f32 %v896, %v902
    %v905 = vld [vmem:[%s18] sm:$0xff]
    %v906 = vld [vmem:[%s18 + $0x8] sm:$0xff]
    %v907 = vld [vmem:[%s18 + $0x10] sm:$0xff]
    %v908 = vld [vmem:[%s18 + $0x18] sm:$0xff]
    %v909 = vld [vmem:[%s18 + $0x20] sm:$0xff]
    %v910 = vld [vmem:[%s18 + $0x28] sm:$0xff]
    %v911 = vld [vmem:[%s18 + $0x30] sm:$0xff]
    %v912 = vld [vmem:[%s18 + $0x38] sm:$0xff]
    %v913 = vld [vmem:[%s19] sm:$0x3]
    %v915 = vlaneseq
    %v916 = vshrl.u32 %v915, 7
    %v917 = vsub.s32 0, %v916
    %v918 = vrot.slane %v913, %v917
    %v919 = vlaneseq
    %v920 = vshrl.u32 %v919, 7
    %v921 = vsub.s32 1, %v920
    %v922 = vrot.slane %v913, %v921
    %v926 = vsel %vm81, %v904, 0
    %928 = vmatprep.subr.mxu0 0.0
    %929 = vmatpush1.msra.mxu0 0.0
    %930 = vmatprep.subr.mxu0 0.0
    %931 = vmatpush1.msra.mxu0 0.0
    %932 = vmatprep.subr.mxu0 0.0
    %933 = vmatpush1.msra.mxu0 0.0
    %934 = vmatprep.subr.mxu0 0.0
    %935 = vmatpush1.msra.mxu0 0.0
    %936 = vmatprep.subr.mxu0 0.0
    %937 = vmatpush1.msra.mxu0 0.0
    %938 = vmatprep.subr.mxu0 0.0
    %939 = vmatpush1.msra.mxu0 0.0
    %940 = vmatprep.subr.mxu0 0.0
    %941 = vmatpush1.msra.mxu0 0.0
    %942 = vmatprep.subr.mxu0 0.0
    %943 = vmatpush1.msra.mxu0 0.0
    %944 = vmatprep.subr.mxu0 0.0
    %945 = vmatpush1.msra.mxu0 0.0
    %946 = vmatprep.subr.mxu0 0.0
    %947 = vmatpush1.msra.mxu0 0.0
    %948 = vmatprep.subr.mxu0 0.0
    %949 = vmatpush1.msra.mxu0 0.0
    %950 = vmatprep.subr.mxu0 0.0
    %951 = vmatpush1.msra.mxu0 0.0
    %952 = vmatprep.subr.mxu0 %v912
    %953 = vmatpush1.msra.mxu0 %v911
    %954 = vmatprep.subr.mxu0 %v910
    %955 = vmatpush1.msra.mxu0 %v909
    %956 = vmatprep.subr.mxu0 %v908
    %957 = vmatpush1.msra.mxu0 %v907
    %958 = vmatprep.subr.mxu0 %v906
    %959 = vmatpush1.msra.mxu0 %v905
    %960 = vmatprep.subr.mxu0 0.0
    %961 = vmatpush2.msra.mxu0 0.0
    %962 = vmatprep.subr.mxu0 0.0
    %963 = vmatpush2.msra.mxu0 0.0
    %964 = vmatprep.subr.mxu0 0.0
    %965 = vmatpush2.msra.mxu0 0.0
    %966 = vmatprep.subr.mxu0 0.0
    %967 = vmatpush2.msra.mxu0 0.0
    %968 = vmatprep.subr.mxu0 0.0
    %969 = vmatpush2.msra.mxu0 0.0
    %970 = vmatprep.subr.mxu0 0.0
    %971 = vmatpush2.msra.mxu0 0.0
    %972 = vmatprep.subr.mxu0 0.0
    %973 = vmatpush2.msra.mxu0 0.0
    %974 = vmatprep.subr.mxu0 0.0
    %975 = vmatpush2.msra.mxu0 0.0
    %976 = vmatprep.subr.mxu0 0.0
    %977 = vmatpush2.msra.mxu0 0.0
    %978 = vmatprep.subr.mxu0 0.0
    %979 = vmatpush2.msra.mxu0 0.0
    %980 = vmatprep.subr.mxu0 0.0
    %981 = vmatpush2.msra.mxu0 0.0
    %982 = vmatprep.subr.mxu0 0.0
    %983 = vmatpush2.msra.mxu0 0.0
    %984 = vmatprep.subr.mxu0 0.0
    %985 = vmatpush2.msra.mxu0 0.0
    %986 = vmatprep.subr.mxu0 0.0
    %987 = vmatpush2.msra.mxu0 0.0
    %988 = vmatprep.subr.mxu0 0.0
    %989 = vmatpush2.msra.mxu0 0.0
    %990 = vmatprep.subr.mxu0 0.0
    %991 = vmatpush2.msra.mxu0 0.0
    %992 = vmatprep.mubr.f32.mxu0 0.0
    %993 = vmatmul.mubr.f32.gmra.mxu0 %v926
    %v994 = vpop.f32.mrf.mxu0
    %v995 = vadd.f32 %v918, %v994
    %v996 = vpop.f32.mrf.mxu0
    %v997 = vadd.f32 %v922, %v996
    %998 = vdwg.mxu0
    %v1001 = vcombine.low %v995, %v997
    %v1003 = vunpack.c.l.s4 1983009808
    %v1004 = vunpack.c.0.s8 %v1003
    %v1005 = vlaneseq
    %v1006 = vshrl.u32 %v1005, 7
    %v1007 = vsub.s32 %v1004, %v1006
    %v1008 = vrot.slane %v1001, %v1007
    %1010 = vst [vmem:[%s20] sm:$0xf] %v1008
    %v1011 = vmul.f32 %v997, 256.0
    %v1012 = vadd.f32 %v1011, 1e-09
    %v1013 = vrcp.pop %v1012
    %v1014 = vmul.f32 %v1013, 10000.0
    %1015 = vrot.lane.b32.xlu0 %v997, 101
    %v1016 = vpop.permute.xlu0 %1015
    %1019 = vrot.lane.b32.xlu0 %v1014, 104
    %v1020 = vpop.permute.xlu0 %1019
    %vm1022 = vcmask 15360
    %v1023 = vsel %vm1022, %v1016, %v1020
    %vm1024 = vcmask 17408
    %1025 = vst.msk [vmem:[#allocation2] sm:$0x3] %vm1024, %v1023
    // Predicated region
    $region82: #{hmr2_forward.3} parent=1 // pred_check
      _
    $region83: #{hmr2_forward.3} parent=1 // pred_check_branch
      %1027 = sbr.rel (0) target = $region85
    $region84: #{hmr2_forward.3} parent=1 // pred_region
      _
    $region85: #{hmr2_forward.3} parent=1 // pred_fallthru
      _
    // Predicated region
    $region86: #{hmr2_forward.3} parent=1 // pred_check
      _
    $region87: #{hmr2_forward.3} parent=1 // pred_check_branch
      %1029 = sbr.rel (0) target = $region89
    $region88: #{hmr2_forward.3} parent=1 // pred_region
      %s1031 = ssub.s32 32, 32
      %1032 = vsyncadd [#allocation3], %s1031
      %s1034 = sshll.u32 [#allocation2], 4
      %s1035 = int_to_ptr.vmem [resolvable:$true] %s1034
      %1037 = dma.vmem_to_hbm [thread:$0]  %s1035, 32, %s21, [#allocation3]
    $region89: #{hmr2_forward.3} parent=1 // pred_fallthru
      _
    // Predicated region
    $region90: #{hmr2_forward.3} parent=1 // pred_check
      _
    $region91: #{hmr2_forward.3} parent=1 // pred_check_branch
      %1039 = sbr.rel (0) target = $region93
    $region92: #{hmr2_forward.3} parent=1 // pred_region
      _
    $region93: #{hmr2_forward.3} parent=1 // pred_fallthru
      _
    // Predicated region
    $region94: #{hmr2_forward.3} parent=1 // pred_check
      _
    $region95: #{hmr2_forward.3} parent=1 // pred_check_branch
      %1041 = sbr.rel (0) target = $region97
    $region96: #{hmr2_forward.3} parent=1 // pred_region
      %1042 = dma.done [#allocation3], 32
    $region97: #{hmr2_forward.3} parent=1 // pred_fallthru
      _
    %1043 = vsyncpa [#allocation3], 1

// kernel: hmr2_forward.2
$region0: #{hmr2_forward.2}
  #allocation0 [shape = 'u32[]', space=smem, size = 0x4, offset = 0x4, fixed_abs, tag = 'smem constant byte address 0x4 - core index']
  #allocation1 [shape = 'u32[144,128]{1,0:T(1,128)}', space=vmem, size = 0x12000, scoped, tag = 'internal scratch']
  %s0 = inlined_call_operand.vmem [shape: f32[32,48], index: 0, kind: input, shape index: {}]
  %s1 = inlined_call_operand.vmem [shape: f32[48,32], index: 1, kind: input, shape index: {}]
  %s2 = inlined_call_operand.vmem [shape: f32[1,32], index: 2, kind: input, shape index: {}]
  %s3 = inlined_call_operand.vmem [shape: f32[16,32], index: 3, kind: input, shape index: {}]
  %s4 = inlined_call_operand.vmem [shape: f32[2,1,32], index: 4, kind: input, shape index: {}]
  %s5 = inlined_call_operand.vmem [shape: f32[2,1,32], index: 5, kind: input, shape index: {}]
  %s6 = inlined_call_operand.vmem [shape: f32[2,32,96], index: 6, kind: input, shape index: {}]
  %s7 = inlined_call_operand.vmem [shape: f32[2,1,96], index: 7, kind: input, shape index: {}]
  %s8 = inlined_call_operand.vmem [shape: f32[2,32,32], index: 8, kind: input, shape index: {}]
  %s9 = inlined_call_operand.vmem [shape: f32[2,1,32], index: 9, kind: input, shape index: {}]
  %s10 = inlined_call_operand.vmem [shape: f32[2,1,32], index: 10, kind: input, shape index: {}]
  %s11 = inlined_call_operand.vmem [shape: f32[2,1,32], index: 11, kind: input, shape index: {}]
  %s12 = inlined_call_operand.vmem [shape: f32[2,32,64], index: 12, kind: input, shape index: {}]
  %s13 = inlined_call_operand.vmem [shape: f32[2,1,64], index: 13, kind: input, shape index: {}]
  %s14 = inlined_call_operand.vmem [shape: f32[2,64,32], index: 14, kind: input, shape index: {}]
  %s15 = inlined_call_operand.vmem [shape: f32[2,1,32], index: 15, kind: input, shape index: {}]
  %s16 = inlined_call_operand.vmem [shape: f32[32,32], index: 16, kind: output, shape index: {}]
  %s17 = sld [smem:[#allocation0]]
  $region74: #{hmr2_forward.2} parent=0
    _
  %s19 = ssub.s32 1, %s17
  %s20 = scalar_select 0, %s19, %s17
  // Predicated region
  $region2: #{hmr2_forward.2} parent=0 // pred_check
    _
  $region3: #{hmr2_forward.2} parent=0 // pred_check_branch
    %22 = sbr.rel (0) target = $region5
  $region4: #{hmr2_forward.2} parent=0 // pred_region
    _
  $region5: #{hmr2_forward.2} parent=0 // pred_fallthru
    _
  // Predicated region
  $region6: #{hmr2_forward.2} parent=0 // pred_check
    _
  $region7: #{hmr2_forward.2} parent=0 // pred_check_branch
    %24 = sbr.rel (0) target = $region9
  $region8: #{hmr2_forward.2} parent=0 // pred_region
    _
  $region9: #{hmr2_forward.2} parent=0 // pred_fallthru
    _
  // Predicated region
  $region10: #{hmr2_forward.2} parent=0 // pred_check
    _
  $region11: #{hmr2_forward.2} parent=0 // pred_check_branch
    %26 = sbr.rel (0) target = $region13
  $region12: #{hmr2_forward.2} parent=0 // pred_region
    _
  $region13: #{hmr2_forward.2} parent=0 // pred_fallthru
    _
  // Predicated region
  $region14: #{hmr2_forward.2} parent=0 // pred_check
    _
  $region15: #{hmr2_forward.2} parent=0 // pred_check_branch
    %28 = sbr.rel (0) target = $region17
  $region16: #{hmr2_forward.2} parent=0 // pred_region
    _
  $region17: #{hmr2_forward.2} parent=0 // pred_fallthru
    _
  // Predicated region
  $region18: #{hmr2_forward.2} parent=0 // pred_check
    _
  $region19: #{hmr2_forward.2} parent=0 // pred_check_branch
    %30 = sbr.rel (0) target = $region21
  $region20: #{hmr2_forward.2} parent=0 // pred_region
    _
  $region21: #{hmr2_forward.2} parent=0 // pred_fallthru
    _
  // Predicated region
  $region22: #{hmr2_forward.2} parent=0 // pred_check
    _
  $region23: #{hmr2_forward.2} parent=0 // pred_check_branch
    %32 = sbr.rel (0) target = $region25
  $region24: #{hmr2_forward.2} parent=0 // pred_region
    _
  $region25: #{hmr2_forward.2} parent=0 // pred_fallthru
    _
  // Predicated region
  $region26: #{hmr2_forward.2} parent=0 // pred_check
    _
  $region27: #{hmr2_forward.2} parent=0 // pred_check_branch
    %34 = sbr.rel (0) target = $region29
  $region28: #{hmr2_forward.2} parent=0 // pred_region
    _
  $region29: #{hmr2_forward.2} parent=0 // pred_fallthru
    _
  // Predicated region
  $region30: #{hmr2_forward.2} parent=0 // pred_check
    _
  $region31: #{hmr2_forward.2} parent=0 // pred_check_branch
    %36 = sbr.rel (0) target = $region33
  $region32: #{hmr2_forward.2} parent=0 // pred_region
    _
  $region33: #{hmr2_forward.2} parent=0 // pred_fallthru
    _
  // Predicated region
  $region34: #{hmr2_forward.2} parent=0 // pred_check
    _
  $region35: #{hmr2_forward.2} parent=0 // pred_check_branch
    %38 = sbr.rel (0) target = $region37
  $region36: #{hmr2_forward.2} parent=0 // pred_region
    _
  $region37: #{hmr2_forward.2} parent=0 // pred_fallthru
    _
  // Predicated region
  $region38: #{hmr2_forward.2} parent=0 // pred_check
    _
  $region39: #{hmr2_forward.2} parent=0 // pred_check_branch
    %40 = sbr.rel (0) target = $region41
  $region40: #{hmr2_forward.2} parent=0 // pred_region
    _
  $region41: #{hmr2_forward.2} parent=0 // pred_fallthru
    _
  // Predicated region
  $region42: #{hmr2_forward.2} parent=0 // pred_check
    _
  $region43: #{hmr2_forward.2} parent=0 // pred_check_branch
    %42 = sbr.rel (0) target = $region45
  $region44: #{hmr2_forward.2} parent=0 // pred_region
    _
  $region45: #{hmr2_forward.2} parent=0 // pred_fallthru
    _
  // Predicated region
  $region46: #{hmr2_forward.2} parent=0 // pred_check
    _
  $region47: #{hmr2_forward.2} parent=0 // pred_check_branch
    %44 = sbr.rel (0) target = $region49
  $region48: #{hmr2_forward.2} parent=0 // pred_region
    _
  $region49: #{hmr2_forward.2} parent=0 // pred_fallthru
    _
  // Predicated region
  $region50: #{hmr2_forward.2} parent=0 // pred_check
    _
  $region51: #{hmr2_forward.2} parent=0 // pred_check_branch
    %46 = sbr.rel (0) target = $region53
  $region52: #{hmr2_forward.2} parent=0 // pred_region
    _
  $region53: #{hmr2_forward.2} parent=0 // pred_fallthru
    _
  // Predicated region
  $region54: #{hmr2_forward.2} parent=0 // pred_check
    _
  $region55: #{hmr2_forward.2} parent=0 // pred_check_branch
    %48 = sbr.rel (0) target = $region57
  $region56: #{hmr2_forward.2} parent=0 // pred_region
    _
  $region57: #{hmr2_forward.2} parent=0 // pred_fallthru
    _
  // Predicated region
  $region58: #{hmr2_forward.2} parent=0 // pred_check
    _
  $region59: #{hmr2_forward.2} parent=0 // pred_check_branch
    %50 = sbr.rel (0) target = $region61
  $region60: #{hmr2_forward.2} parent=0 // pred_region
    _
  $region61: #{hmr2_forward.2} parent=0 // pred_fallthru
    _
  // Predicated region
  $region62: #{hmr2_forward.2} parent=0 // pred_check
    _
  $region63: #{hmr2_forward.2} parent=0 // pred_check_branch
    %52 = sbr.rel (0) target = $region65
  $region64: #{hmr2_forward.2} parent=0 // pred_region
    _
  $region65: #{hmr2_forward.2} parent=0 // pred_fallthru
    _
  %v53 = vld [vmem:[%s0] sm:$0xff]
  %v54 = vld [vmem:[%s0 + $0x8] sm:$0xff]
  %v55 = vld [vmem:[%s0 + $0x10] sm:$0xff]
  %v56 = vld [vmem:[%s0 + $0x18] sm:$0xff]
  %v57 = vld [vmem:[%s1] sm:$0xff]
  %v58 = vld [vmem:[%s1 + $0x8] sm:$0xff]
  %v59 = vld [vmem:[%s1 + $0x10] sm:$0xff]
  %v60 = vld [vmem:[%s1 + $0x18] sm:$0xff]
  %v61 = vld [vmem:[%s1 + $0x20] sm:$0xff]
  %v62 = vld [vmem:[%s1 + $0x28] sm:$0xff]
  %v63 = vld [vmem:[%s2] sm:$0x1]
  %v65 = vlaneseq
  %v66 = vshrl.u32 %v65, 7
  %v67 = vsub.s32 0, %v66
  %v68 = vrot.slane %v63, %v67
  %vm70 = vcmask 392192
  %v72 = vsel %vm70, %v53, 0
  %v75 = vsel %vm70, %v54, 0
  %v78 = vsel %vm70, %v55, 0
  %v81 = vsel %vm70, %v56, 0
  %83 = vmatprep.subr.mxu0 0.0
  %84 = vmatpush1.msra.mxu0 0.0
  %85 = vmatprep.subr.mxu0 0.0
  %86 = vmatpush1.msra.mxu0 0.0
  %87 = vmatprep.subr.mxu0 0.0
  %88 = vmatpush1.msra.mxu0 0.0
  %89 = vmatprep.subr.mxu0 0.0
  %90 = vmatpush1.msra.mxu0 0.0
  %91 = vmatprep.subr.mxu0 0.0
  %92 = vmatpush1.msra.mxu0 0.0
  %93 = vmatprep.subr.mxu0 0.0
  %94 = vmatpush1.msra.mxu0 0.0
  %95 = vmatprep.subr.mxu0 0.0
  %96 = vmatpush1.msra.mxu0 0.0
  %97 = vmatprep.subr.mxu0 0.0
  %98 = vmatpush1.msra.mxu0 0.0
  %99 = vmatprep.subr.mxu0 0.0
  %100 = vmatpush1.msra.mxu0 0.0
  %101 = vmatprep.subr.mxu0 0.0
  %102 = vmatpush1.msra.mxu0 0.0
  %103 = vmatprep.subr.mxu0 0.0
  %104 = vmatpush1.msra.mxu0 %v62
  %105 = vmatprep.subr.mxu0 0.0
  %106 = vmatpush1.msra.mxu0 %v61
  %107 = vmatprep.subr.mxu0 0.0
  %108 = vmatpush1.msra.mxu0 %v60
  %109 = vmatprep.subr.mxu0 0.0
  %110 = vmatpush1.msra.mxu0 %v59
  %111 = vmatprep.subr.mxu0 0.0
  %112 = vmatpush1.msra.mxu0 %v58
  %113 = vmatprep.subr.mxu0 0.0
  %114 = vmatpush1.msra.mxu0 %v57
  %115 = vmatprep.subr.mxu0 0.0
  %116 = vmatpush2.msra.mxu0 0.0
  %117 = vmatprep.subr.mxu0 0.0
  %118 = vmatpush2.msra.mxu0 0.0
  %119 = vmatprep.subr.mxu0 0.0
  %120 = vmatpush2.msra.mxu0 0.0
  %121 = vmatprep.subr.mxu0 0.0
  %122 = vmatpush2.msra.mxu0 0.0
  %123 = vmatprep.subr.mxu0 0.0
  %124 = vmatpush2.msra.mxu0 0.0
  %125 = vmatprep.subr.mxu0 0.0
  %126 = vmatpush2.msra.mxu0 0.0
  %127 = vmatprep.subr.mxu0 0.0
  %128 = vmatpush2.msra.mxu0 0.0
  %129 = vmatprep.subr.mxu0 0.0
  %130 = vmatpush2.msra.mxu0 0.0
  %131 = vmatprep.subr.mxu0 0.0
  %132 = vmatpush2.msra.mxu0 0.0
  %133 = vmatprep.subr.mxu0 0.0
  %134 = vmatpush2.msra.mxu0 0.0
  %135 = vmatprep.subr.mxu0 0.0
  %136 = vmatpush2.msra.mxu0 0.0
  %137 = vmatprep.subr.mxu0 0.0
  %138 = vmatpush2.msra.mxu0 0.0
  %139 = vmatprep.subr.mxu0 0.0
  %140 = vmatpush2.msra.mxu0 0.0
  %141 = vmatprep.subr.mxu0 0.0
  %142 = vmatpush2.msra.mxu0 0.0
  %143 = vmatprep.subr.mxu0 0.0
  %144 = vmatpush2.msra.mxu0 0.0
  %145 = vmatprep.subr.mxu0 0.0
  %146 = vmatpush2.msra.mxu0 0.0
  %147 = vmatprep.mubr.f32.mxu0 0.0
  %148 = vmatmul.mubr.f32.gmra.mxu0 %v72
  %v149 = vpop.f32.mrf.mxu0
  %v150 = vadd.f32 %v68, %v149
  %v151 = vpop.f32.mrf.mxu0
  %152 = vmatprep.mubr.f32.mxu0 0.0
  %153 = vmatmul.mubr.f32.gmra.mxu0 %v75
  %v154 = vpop.f32.mrf.mxu0
  %v155 = vadd.f32 %v68, %v154
  %v156 = vpop.f32.mrf.mxu0
  %157 = vmatprep.mubr.f32.mxu0 0.0
  %158 = vmatmul.mubr.f32.gmra.mxu0 %v78
  %v159 = vpop.f32.mrf.mxu0
  %v160 = vadd.f32 %v68, %v159
  %v161 = vpop.f32.mrf.mxu0
  %162 = vmatprep.mubr.f32.mxu0 0.0
  %163 = vmatmul.mubr.f32.gmra.mxu0 %v81
  %v164 = vpop.f32.mrf.mxu0
  %v165 = vadd.f32 %v68, %v164
  %v166 = vpop.f32.mrf.mxu0
  %167 = vdwg.mxu0
  %v168 = vld [vmem:[%s3] sm:$0xff]
  %v169 = vld [vmem:[%s3 + $0x8] sm:$0xff]
  %v170 = vadd.f32 %v150, %v168
  %v171 = vadd.f32 %v155, %v169
  %v172 = vadd.f32 %v160, %v168
  %v173 = vadd.f32 %v165, %v169
  %v174 = vld [vmem:[%s4] sm:$0x1]
  %v175 = vld [vmem:[%s5] sm:$0x1]
  %vm176 = vcmask 261120
  %v177 = vsel %vm176, %v170, 0.0
  %178 = vadd.xlane.f32.xlu0 %v177
  %v179 = vpop.xlane.xlu0 %178
  %v180 = vsel %vm176, %v171, 0.0
  %181 = vadd.xlane.f32.xlu0 %v180
  %v182 = vpop.xlane.xlu0 %181
  %v183 = vsel %vm176, %v172, 0.0
  %184 = vadd.xlane.f32.xlu0 %v183
  %v185 = vpop.xlane.xlu0 %184
  %v186 = vsel %vm176, %v173, 0.0
  %187 = vadd.xlane.f32.xlu0 %v186
  %v188 = vpop.xlane.xlu0 %187
  %v189 = vrcp.pop 32.0
  %v190 = vmul.f32 %v179, %v189
  %v191 = vmul.f32 %v182, %v189
  %v192 = vmul.f32 %v185, %v189
  %v193 = vmul.f32 %v188, %v189
  %v194 = vsub.f32 %v170, %v190
  %v195 = vsub.f32 %v171, %v191
  %v196 = vsub.f32 %v172, %v192
  %v197 = vsub.f32 %v173, %v193
  %v198 = vmul.f32 %v194, %v194
  %v199 = vmul.f32 %v195, %v195
  %v200 = vmul.f32 %v196, %v196
  %v201 = vmul.f32 %v197, %v197
  %v202 = vsel %vm176, %v198, 0.0
  %203 = vadd.xlane.f32.xlu0 %v202
  %v204 = vpop.xlane.xlu0 %203
  %v205 = vsel %vm176, %v199, 0.0
  %206 = vadd.xlane.f32.xlu0 %v205
  %v207 = vpop.xlane.xlu0 %206
  %v208 = vsel %vm176, %v200, 0.0
  %209 = vadd.xlane.f32.xlu0 %v208
  %v210 = vpop.xlane.xlu0 %209
  %v211 = vsel %vm176, %v201, 0.0
  %212 = vadd.xlane.f32.xlu0 %v211
  %v213 = vpop.xlane.xlu0 %212
  %v214 = vmul.f32 %v204, %v189
  %v215 = vmul.f32 %v207, %v189
  %v216 = vmul.f32 %v210, %v189
  %v217 = vmul.f32 %v213, %v189
  %v218 = vadd.f32 %v214, 1e-06
  %v219 = vadd.f32 %v215, 1e-06
  %v220 = vadd.f32 %v216, 1e-06
  %v221 = vadd.f32 %v217, 1e-06
  %v222 = vrsqrt.pop %v218
  %v223 = vrsqrt.pop %v219
  %v224 = vrsqrt.pop %v220
  %v225 = vrsqrt.pop %v221
  %v226 = vmul.f32 %v194, %v222
  %v227 = vmul.f32 %v195, %v223
  %v228 = vmul.f32 %v196, %v224
  %v229 = vmul.f32 %v197, %v225
  %v231 = vlaneseq
  %v232 = vshrl.u32 %v231, 7
  %v233 = vsub.s32 0, %v232
  %v234 = vrot.slane %v174, %v233
  %v236 = vmul.f32 %v226, %v234
  %v237 = vmul.f32 %v227, %v234
  %v238 = vmul.f32 %v228, %v234
  %v239 = vmul.f32 %v229, %v234
  %v241 = vlaneseq
  %v242 = vshrl.u32 %v241, 7
  %v243 = vsub.s32 0, %v242
  %v244 = vrot.slane %v175, %v243
  %v246 = vadd.f32 %v236, %v244
  %v247 = vadd.f32 %v237, %v244
  %v248 = vadd.f32 %v238, %v244
  %v249 = vadd.f32 %v239, %v244
  %v250 = vld [vmem:[%s6] sm:$0xff]
  %v251 = vld [vmem:[%s6 + $0x8] sm:$0xff]
  %v252 = vld [vmem:[%s6 + $0x10] sm:$0xff]
  %v253 = vld [vmem:[%s6 + $0x18] sm:$0xff]
  %v254 = vld [vmem:[%s7] sm:$0x1]
  %v256 = vlaneseq
  %v257 = vshrl.u32 %v256, 7
  %v258 = vsub.s32 0, %v257
  %v259 = vrot.slane %v254, %v258
  %v262 = vsel %vm176, %v246, 0
  %v265 = vsel %vm176, %v247, 0
  %v268 = vsel %vm176, %v248, 0
  %v271 = vsel %vm176, %v249, 0
  %273 = vmatprep.subr.mxu0 0.0
  %274 = vmatpush1.msra.mxu0 0.0
  %275 = vmatprep.subr.mxu0 0.0
  %276 = vmatpush1.msra.mxu0 0.0
  %277 = vmatprep.subr.mxu0 0.0
  %278 = vmatpush1.msra.mxu0 0.0
  %279 = vmatprep.subr.mxu0 0.0
  %280 = vmatpush1.msra.mxu0 0.0
  %281 = vmatprep.subr.mxu0 0.0
  %282 = vmatpush1.msra.mxu0 0.0
  %283 = vmatprep.subr.mxu0 0.0
  %284 = vmatpush1.msra.mxu0 0.0
  %285 = vmatprep.subr.mxu0 0.0
  %286 = vmatpush1.msra.mxu0 0.0
  %287 = vmatprep.subr.mxu0 0.0
  %288 = vmatpush1.msra.mxu0 0.0
  %289 = vmatprep.subr.mxu0 0.0
  %290 = vmatpush1.msra.mxu0 0.0
  %291 = vmatprep.subr.mxu0 0.0
  %292 = vmatpush1.msra.mxu0 0.0
  %293 = vmatprep.subr.mxu0 0.0
  %294 = vmatpush1.msra.mxu0 0.0
  %295 = vmatprep.subr.mxu0 0.0
  %296 = vmatpush1.msra.mxu0 0.0
  %297 = vmatprep.subr.mxu0 0.0
  %298 = vmatpush1.msra.mxu0 %v253
  %299 = vmatprep.subr.mxu0 0.0
  %300 = vmatpush1.msra.mxu0 %v252
  %301 = vmatprep.subr.mxu0 0.0
  %302 = vmatpush1.msra.mxu0 %v251
  %303 = vmatprep.subr.mxu0 0.0
  %304 = vmatpush1.msra.mxu0 %v250
  %305 = vmatprep.subr.mxu0 0.0
  %306 = vmatpush2.msra.mxu0 0.0
  %307 = vmatprep.subr.mxu0 0.0
  %308 = vmatpush2.msra.mxu0 0.0
  %309 = vmatprep.subr.mxu0 0.0
  %310 = vmatpush2.msra.mxu0 0.0
  %311 = vmatprep.subr.mxu0 0.0
  %312 = vmatpush2.msra.mxu0 0.0
  %313 = vmatprep.subr.mxu0 0.0
  %314 = vmatpush2.msra.mxu0 0.0
  %315 = vmatprep.subr.mxu0 0.0
  %316 = vmatpush2.msra.mxu0 0.0
  %317 = vmatprep.subr.mxu0 0.0
  %318 = vmatpush2.msra.mxu0 0.0
  %319 = vmatprep.subr.mxu0 0.0
  %320 = vmatpush2.msra.mxu0 0.0
  %321 = vmatprep.subr.mxu0 0.0
  %322 = vmatpush2.msra.mxu0 0.0
  %323 = vmatprep.subr.mxu0 0.0
  %324 = vmatpush2.msra.mxu0 0.0
  %325 = vmatprep.subr.mxu0 0.0
  %326 = vmatpush2.msra.mxu0 0.0
  %327 = vmatprep.subr.mxu0 0.0
  %328 = vmatpush2.msra.mxu0 0.0
  %329 = vmatprep.subr.mxu0 0.0
  %330 = vmatpush2.msra.mxu0 0.0
  %331 = vmatprep.subr.mxu0 0.0
  %332 = vmatpush2.msra.mxu0 0.0
  %333 = vmatprep.subr.mxu0 0.0
  %334 = vmatpush2.msra.mxu0 0.0
  %335 = vmatprep.subr.mxu0 0.0
  %336 = vmatpush2.msra.mxu0 0.0
  %337 = vmatprep.mubr.f32.mxu0 0.0
  %338 = vmatmul.mubr.f32.gmra.mxu0 %v262
  %v339 = vpop.f32.mrf.mxu0
  %v340 = vadd.f32 %v259, %v339
  %v341 = vpop.f32.mrf.mxu0
  %342 = vmatprep.mubr.f32.mxu0 0.0
  %343 = vmatmul.mubr.f32.gmra.mxu0 %v265
  %v344 = vpop.f32.mrf.mxu0
  %v345 = vadd.f32 %v259, %v344
  %v346 = vpop.f32.mrf.mxu0
  %347 = vmatprep.mubr.f32.mxu0 0.0
  %348 = vmatmul.mubr.f32.gmra.mxu0 %v268
  %v349 = vpop.f32.mrf.mxu0
  %v350 = vadd.f32 %v259, %v349
  %v351 = vpop.f32.mrf.mxu0
  %352 = vmatprep.mubr.f32.mxu0 0.0
  %353 = vmatmul.mubr.f32.gmra.mxu0 %v271
  %v354 = vpop.f32.mrf.mxu0
  %v355 = vadd.f32 %v259, %v354
  %v356 = vpop.f32.mrf.mxu0
  %357 = vdwg.mxu0
  %v358 = vld [vmem:[%s8] sm:$0xff]
  %v359 = vld [vmem:[%s8 + $0x8] sm:$0xff]
  %v360 = vld [vmem:[%s8 + $0x10] sm:$0xff]
  %v361 = vld [vmem:[%s8 + $0x18] sm:$0xff]
  %364 = vrot.lane.b32.xlu0 %v340, 96
  %v365 = vpop.permute.xlu0 %364
  %366 = vrot.lane.b32.xlu0 %v345, 96
  %v367 = vpop.permute.xlu0 %366
  %vm368 = vcmask 64512
  %v369 = vsel %vm368, %v340, 0
  %v371 = vsel %vm368, %v345, 0
  %v373 = vsel %vm368, %v365, 0
  %v375 = vsel %vm368, %v367, 0
  %377 = vmatprep.subr.mxu0 0.0
  %378 = vmatpush1.xpose.msra.mxu0 0.0
  %379 = vmatprep.subr.mxu0 0.0
  %380 = vmatpush1.xpose.msra.mxu0 0.0
  %381 = vmatprep.subr.mxu0 0.0
  %382 = vmatpush1.xpose.msra.mxu0 0.0
  %383 = vmatprep.subr.mxu0 0.0
  %384 = vmatpush1.xpose.msra.mxu0 0.0
  %385 = vmatprep.subr.mxu0 0.0
  %386 = vmatpush1.xpose.msra.mxu0 0.0
  %387 = vmatprep.subr.mxu0 0.0
  %388 = vmatpush1.xpose.msra.mxu0 0.0
  %389 = vmatprep.subr.mxu0 0.0
  %390 = vmatpush1.xpose.msra.mxu0 0.0
  %391 = vmatprep.subr.mxu0 0.0
  %392 = vmatpush1.xpose.msra.mxu0 0.0
  %393 = vmatprep.subr.mxu0 0.0
  %394 = vmatpush1.xpose.msra.mxu0 0.0
  %395 = vmatprep.subr.mxu0 0.0
  %396 = vmatpush1.xpose.msra.mxu0 0.0
  %397 = vmatprep.subr.mxu0 0.0
  %398 = vmatpush1.xpose.msra.mxu0 0.0
  %399 = vmatprep.subr.mxu0 0.0
  %400 = vmatpush1.xpose.msra.mxu0 0.0
  %401 = vmatprep.subr.mxu0 0.0
  %402 = vmatpush1.xpose.msra.mxu0 0.0
  %403 = vmatprep.subr.mxu0 0.0
  %404 = vmatpush1.xpose.msra.mxu0 0.0
  %405 = vmatprep.subr.mxu0 0.0
  %406 = vmatpush1.xpose.msra.mxu0 %v375
  %407 = vmatprep.subr.mxu0 0.0
  %408 = vmatpush1.xpose.msra.mxu0 %v373
  %409 = vmatprep.subr.mxu0 0.0
  %410 = vmatpush2.xpose.msra.mxu0 0.0
  %411 = vmatprep.subr.mxu0 0.0
  %412 = vmatpush2.xpose.msra.mxu0 0.0
  %413 = vmatprep.subr.mxu0 0.0
  %414 = vmatpush2.xpose.msra.mxu0 0.0
  %415 = vmatprep.subr.mxu0 0.0
  %416 = vmatpush2.xpose.msra.mxu0 0.0
  %417 = vmatprep.subr.mxu0 0.0
  %418 = vmatpush2.xpose.msra.mxu0 0.0
  %419 = vmatprep.subr.mxu0 0.0
  %420 = vmatpush2.xpose.msra.mxu0 0.0
  %421 = vmatprep.subr.mxu0 0.0
  %422 = vmatpush2.xpose.msra.mxu0 0.0
  %423 = vmatprep.subr.mxu0 0.0
  %424 = vmatpush2.xpose.msra.mxu0 0.0
  %425 = vmatprep.subr.mxu0 0.0
  %426 = vmatpush2.xpose.msra.mxu0 0.0
  %427 = vmatprep.subr.mxu0 0.0
  %428 = vmatpush2.xpose.msra.mxu0 0.0
  %429 = vmatprep.subr.mxu0 0.0
  %430 = vmatpush2.xpose.msra.mxu0 0.0
  %431 = vmatprep.subr.mxu0 0.0
  %432 = vmatpush2.xpose.msra.mxu0 0.0
  %433 = vmatprep.subr.mxu0 0.0
  %434 = vmatpush2.xpose.msra.mxu0 0.0
  %435 = vmatprep.subr.mxu0 0.0
  %436 = vmatpush2.xpose.msra.mxu0 0.0
  %437 = vmatprep.subr.mxu0 0.0
  %438 = vmatpush2.xpose.msra.mxu0 0.0
  %439 = vmatprep.subr.mxu0 0.0
  %440 = vmatpush2.xpose.msra.mxu0 0.0
  %441 = vmatprep.mubr.f32.mxu0 0.0
  %442 = vmatmul.mubr.f32.gmra.mxu0 %v369
  %v443 = vpop.f32.mrf.mxu0
  %v444 = vadd.f32 0.0, %v443
  %v445 = vpop.f32.mrf.mxu0
  %446 = vmatprep.mubr.f32.mxu0 0.0
  %447 = vmatmul.mubr.f32.gmra.mxu0 %v371
  %v448 = vpop.f32.mrf.mxu0
  %v449 = vadd.f32 0.0, %v448
  %v450 = vpop.f32.mrf.mxu0
  %451 = vdwg.mxu0
  %454 = vrot.lane.b32.xlu0 %v350, 96
  %v455 = vpop.permute.xlu0 %454
  %456 = vrot.lane.b32.xlu0 %v355, 96
  %v457 = vpop.permute.xlu0 %456
  %v458 = vsel %vm368, %v350, 0
  %v460 = vsel %vm368, %v355, 0
  %v462 = vsel %vm368, %v455, 0
  %v464 = vsel %vm368, %v457, 0
  %466 = vmatprep.subr.mxu0 0.0
  %467 = vmatpush1.xpose.msra.mxu0 0.0
  %468 = vmatprep.subr.mxu0 0.0
  %469 = vmatpush1.xpose.msra.mxu0 0.0
  %470 = vmatprep.subr.mxu0 0.0
  %471 = vmatpush1.xpose.msra.mxu0 0.0
  %472 = vmatprep.subr.mxu0 0.0
  %473 = vmatpush1.xpose.msra.mxu0 0.0
  %474 = vmatprep.subr.mxu0 0.0
  %475 = vmatpush1.xpose.msra.mxu0 0.0
  %476 = vmatprep.subr.mxu0 0.0
  %477 = vmatpush1.xpose.msra.mxu0 0.0
  %478 = vmatprep.subr.mxu0 0.0
  %479 = vmatpush1.xpose.msra.mxu0 0.0
  %480 = vmatprep.subr.mxu0 0.0
  %481 = vmatpush1.xpose.msra.mxu0 0.0
  %482 = vmatprep.subr.mxu0 0.0
  %483 = vmatpush1.xpose.msra.mxu0 0.0
  %484 = vmatprep.subr.mxu0 0.0
  %485 = vmatpush1.xpose.msra.mxu0 0.0
  %486 = vmatprep.subr.mxu0 0.0
  %487 = vmatpush1.xpose.msra.mxu0 0.0
  %488 = vmatprep.subr.mxu0 0.0
  %489 = vmatpush1.xpose.msra.mxu0 0.0
  %490 = vmatprep.subr.mxu0 0.0
  %491 = vmatpush1.xpose.msra.mxu0 0.0
  %492 = vmatprep.subr.mxu0 0.0
  %493 = vmatpush1.xpose.msra.mxu0 0.0
  %494 = vmatprep.subr.mxu0 0.0
  %495 = vmatpush1.xpose.msra.mxu0 %v464
  %496 = vmatprep.subr.mxu0 0.0
  %497 = vmatpush1.xpose.msra.mxu0 %v462
  %498 = vmatprep.subr.mxu0 0.0
  %499 = vmatpush2.xpose.msra.mxu0 0.0
  %500 = vmatprep.subr.mxu0 0.0
  %501 = vmatpush2.xpose.msra.mxu0 0.0
  %502 = vmatprep.subr.mxu0 0.0
  %503 = vmatpush2.xpose.msra.mxu0 0.0
  %504 = vmatprep.subr.mxu0 0.0
  %505 = vmatpush2.xpose.msra.mxu0 0.0
  %506 = vmatprep.subr.mxu0 0.0
  %507 = vmatpush2.xpose.msra.mxu0 0.0
  %508 = vmatprep.subr.mxu0 0.0
  %509 = vmatpush2.xpose.msra.mxu0 0.0
  %510 = vmatprep.subr.mxu0 0.0
  %511 = vmatpush2.xpose.msra.mxu0 0.0
  %512 = vmatprep.subr.mxu0 0.0
  %513 = vmatpush2.xpose.msra.mxu0 0.0
  %514 = vmatprep.subr.mxu0 0.0
  %515 = vmatpush2.xpose.msra.mxu0 0.0
  %516 = vmatprep.subr.mxu0 0.0
  %517 = vmatpush2.xpose.msra.mxu0 0.0
  %518 = vmatprep.subr.mxu0 0.0
  %519 = vmatpush2.xpose.msra.mxu0 0.0
  %520 = vmatprep.subr.mxu0 0.0
  %521 = vmatpush2.xpose.msra.mxu0 0.0
  %522 = vmatprep.subr.mxu0 0.0
  %523 = vmatpush2.xpose.msra.mxu0 0.0
  %524 = vmatprep.subr.mxu0 0.0
  %525 = vmatpush2.xpose.msra.mxu0 0.0
  %526 = vmatprep.subr.mxu0 0.0
  %527 = vmatpush2.xpose.msra.mxu0 0.0
  %528 = vmatprep.subr.mxu0 0.0
  %529 = vmatpush2.xpose.msra.mxu0 0.0
  %530 = vmatprep.mubr.f32.mxu0 0.0
  %531 = vmatmul.mubr.f32.gmra.mxu0 %v458
  %v532 = vpop.f32.mrf.mxu0
  %v533 = vadd.f32 0.0, %v532
  %v534 = vpop.f32.mrf.mxu0
  %535 = vmatprep.mubr.f32.mxu0 0.0
  %536 = vmatmul.mubr.f32.gmra.mxu0 %v460
  %v537 = vpop.f32.mrf.mxu0
  %v538 = vadd.f32 0.0, %v537
  %v539 = vpop.f32.mrf.mxu0
  %540 = vdwg.mxu0
  %v541 = vmul.f32 %v444, 0.35355338
  %v542 = vmul.f32 %v449, 0.35355338
  %v543 = vmul.f32 %v533, 0.35355338
  %v544 = vmul.f32 %v538, 0.35355338
  %vm545 = vcmask 130048
  %v546 = vsel %vm545, %v541, -inf
  %547 = vmax.xlane.f32.xlu0 %v546
  %v548 = vpop.xlane.xlu0 %547
  %v549 = vsel %vm545, %v542, -inf
  %550 = vmax.xlane.f32.xlu0 %v549
  %v551 = vpop.xlane.xlu0 %550
  %v552 = vsel %vm545, %v543, -inf
  %553 = vmax.xlane.f32.xlu0 %v552
  %v554 = vpop.xlane.xlu0 %553
  %v555 = vsel %vm545, %v544, -inf
  %556 = vmax.xlane.f32.xlu0 %v555
  %v557 = vpop.xlane.xlu0 %556
  %v558 = vsub.f32 %v541, %v548
  %v559 = vsub.f32 %v542, %v551
  %v560 = vsub.f32 %v543, %v554
  %v561 = vsub.f32 %v544, %v557
  %v562 = vmul.f32 %v558, 1.442695
  %v563 = vpow.pop %v562
  %v564 = vmul.f32 %v559, 1.442695
  %v565 = vpow.pop %v564
  %v566 = vmul.f32 %v560, 1.442695
  %v567 = vpow.pop %v566
  %v568 = vmul.f32 %v561, 1.442695
  %v569 = vpow.pop %v568
  %v570 = vsel %vm545, %v563, 0.0
  %571 = vadd.xlane.f32.xlu0 %v570
  %v572 = vpop.xlane.xlu0 %571
  %v573 = vsel %vm545, %v565, 0.0
  %574 = vadd.xlane.f32.xlu0 %v573
  %v575 = vpop.xlane.xlu0 %574
  %v576 = vsel %vm545, %v567, 0.0
  %577 = vadd.xlane.f32.xlu0 %v576
  %v578 = vpop.xlane.xlu0 %577
  %v579 = vsel %vm545, %v569, 0.0
  %580 = vadd.xlane.f32.xlu0 %v579
  %v581 = vpop.xlane.xlu0 %580
  %v582 = vrcp.pop %v572
  %v583 = vrcp.pop %v575
  %v584 = vrcp.pop %v578
  %v585 = vrcp.pop %v581
  %v586 = vmul.f32 %v563, %v582
  %v587 = vmul.f32 %v565, %v583
  %v588 = vmul.f32 %v567, %v584
  %v589 = vmul.f32 %v569, %v585
  %590 = vrot.lane.b32.xlu0 %v340, 64
  %v591 = vpop.permute.xlu0 %590
  %592 = vrot.lane.b32.xlu0 %v345, 64
  %v593 = vpop.permute.xlu0 %592
  %v597 = vsel %vm545, %v586, 0
  %v600 = vsel %vm545, %v587, 0
  %602 = vmatprep.subr.mxu0 0.0
  %603 = vmatpush1.msra.mxu0 0.0
  %604 = vmatprep.subr.mxu0 0.0
  %605 = vmatpush1.msra.mxu0 0.0
  %606 = vmatprep.subr.mxu0 0.0
  %607 = vmatpush1.msra.mxu0 0.0
  %608 = vmatprep.subr.mxu0 0.0
  %609 = vmatpush1.msra.mxu0 0.0
  %610 = vmatprep.subr.mxu0 0.0
  %611 = vmatpush1.msra.mxu0 0.0
  %612 = vmatprep.subr.mxu0 0.0
  %613 = vmatpush1.msra.mxu0 0.0
  %614 = vmatprep.subr.mxu0 0.0
  %615 = vmatpush1.msra.mxu0 0.0
  %616 = vmatprep.subr.mxu0 0.0
  %617 = vmatpush1.msra.mxu0 0.0
  %618 = vmatprep.subr.mxu0 0.0
  %619 = vmatpush1.msra.mxu0 0.0
  %620 = vmatprep.subr.mxu0 0.0
  %621 = vmatpush1.msra.mxu0 0.0
  %622 = vmatprep.subr.mxu0 0.0
  %623 = vmatpush1.msra.mxu0 0.0
  %624 = vmatprep.subr.mxu0 0.0
  %625 = vmatpush1.msra.mxu0 0.0
  %626 = vmatprep.subr.mxu0 0.0
  %627 = vmatpush1.msra.mxu0 0.0
  %628 = vmatprep.subr.mxu0 0.0
  %629 = vmatpush1.msra.mxu0 0.0
  %630 = vmatprep.subr.mxu0 0.0
  %631 = vmatpush1.msra.mxu0 %v593
  %632 = vmatprep.subr.mxu0 0.0
  %633 = vmatpush1.msra.mxu0 %v591
  %634 = vmatprep.subr.mxu0 0.0
  %635 = vmatpush2.msra.mxu0 0.0
  %636 = vmatprep.subr.mxu0 0.0
  %637 = vmatpush2.msra.mxu0 0.0
  %638 = vmatprep.subr.mxu0 0.0
  %639 = vmatpush2.msra.mxu0 0.0
  %640 = vmatprep.subr.mxu0 0.0
  %641 = vmatpush2.msra.mxu0 0.0
  %642 = vmatprep.subr.mxu0 0.0
  %643 = vmatpush2.msra.mxu0 0.0
  %644 = vmatprep.subr.mxu0 0.0
  %645 = vmatpush2.msra.mxu0 0.0
  %646 = vmatprep.subr.mxu0 0.0
  %647 = vmatpush2.msra.mxu0 0.0
  %648 = vmatprep.subr.mxu0 0.0
  %649 = vmatpush2.msra.mxu0 0.0
  %650 = vmatprep.subr.mxu0 0.0
  %651 = vmatpush2.msra.mxu0 0.0
  %652 = vmatprep.subr.mxu0 0.0
  %653 = vmatpush2.msra.mxu0 0.0
  %654 = vmatprep.subr.mxu0 0.0
  %655 = vmatpush2.msra.mxu0 0.0
  %656 = vmatprep.subr.mxu0 0.0
  %657 = vmatpush2.msra.mxu0 0.0
  %658 = vmatprep.subr.mxu0 0.0
  %659 = vmatpush2.msra.mxu0 0.0
  %660 = vmatprep.subr.mxu0 0.0
  %661 = vmatpush2.msra.mxu0 0.0
  %662 = vmatprep.subr.mxu0 0.0
  %663 = vmatpush2.msra.mxu0 0.0
  %664 = vmatprep.subr.mxu0 0.0
  %665 = vmatpush2.msra.mxu0 0.0
  %666 = vmatprep.mubr.f32.mxu0 0.0
  %667 = vmatmul.mubr.f32.gmra.mxu0 %v597
  %v668 = vpop.f32.mrf.mxu0
  %v669 = vadd.f32 0.0, %v668
  %v670 = vpop.f32.mrf.mxu0
  %671 = vmatprep.mubr.f32.mxu0 0.0
  %672 = vmatmul.mubr.f32.gmra.mxu0 %v600
  %v673 = vpop.f32.mrf.mxu0
  %v674 = vadd.f32 0.0, %v673
  %v675 = vpop.f32.mrf.mxu0
  %676 = vdwg.mxu0
  %677 = vrot.lane.b32.xlu0 %v350, 64
  %v678 = vpop.permute.xlu0 %677
  %679 = vrot.lane.b32.xlu0 %v355, 64
  %v680 = vpop.permute.xlu0 %679
  %v684 = vsel %vm545, %v588, 0
  %v687 = vsel %vm545, %v589, 0
  %689 = vmatprep.subr.mxu0 0.0
  %690 = vmatpush1.msra.mxu0 0.0
  %691 = vmatprep.subr.mxu0 0.0
  %692 = vmatpush1.msra.mxu0 0.0
  %693 = vmatprep.subr.mxu0 0.0
  %694 = vmatpush1.msra.mxu0 0.0
  %695 = vmatprep.subr.mxu0 0.0
  %696 = vmatpush1.msra.mxu0 0.0
  %697 = vmatprep.subr.mxu0 0.0
  %698 = vmatpush1.msra.mxu0 0.0
  %699 = vmatprep.subr.mxu0 0.0
  %700 = vmatpush1.msra.mxu0 0.0
  %701 = vmatprep.subr.mxu0 0.0
  %702 = vmatpush1.msra.mxu0 0.0
  %703 = vmatprep.subr.mxu0 0.0
  %704 = vmatpush1.msra.mxu0 0.0
  %705 = vmatprep.subr.mxu0 0.0
  %706 = vmatpush1.msra.mxu0 0.0
  %707 = vmatprep.subr.mxu0 0.0
  %708 = vmatpush1.msra.mxu0 0.0
  %709 = vmatprep.subr.mxu0 0.0
  %710 = vmatpush1.msra.mxu0 0.0
  %711 = vmatprep.subr.mxu0 0.0
  %712 = vmatpush1.msra.mxu0 0.0
  %713 = vmatprep.subr.mxu0 0.0
  %714 = vmatpush1.msra.mxu0 0.0
  %715 = vmatprep.subr.mxu0 0.0
  %716 = vmatpush1.msra.mxu0 0.0
  %717 = vmatprep.subr.mxu0 0.0
  %718 = vmatpush1.msra.mxu0 %v680
  %719 = vmatprep.subr.mxu0 0.0
  %720 = vmatpush1.msra.mxu0 %v678
  %721 = vmatprep.subr.mxu0 0.0
  %722 = vmatpush2.msra.mxu0 0.0
  %723 = vmatprep.subr.mxu0 0.0
  %724 = vmatpush2.msra.mxu0 0.0
  %725 = vmatprep.subr.mxu0 0.0
  %726 = vmatpush2.msra.mxu0 0.0
  %727 = vmatprep.subr.mxu0 0.0
  %728 = vmatpush2.msra.mxu0 0.0
  %729 = vmatprep.subr.mxu0 0.0
  %730 = vmatpush2.msra.mxu0 0.0
  %731 = vmatprep.subr.mxu0 0.0
  %732 = vmatpush2.msra.mxu0 0.0
  %733 = vmatprep.subr.mxu0 0.0
  %734 = vmatpush2.msra.mxu0 0.0
  %735 = vmatprep.subr.mxu0 0.0
  %736 = vmatpush2.msra.mxu0 0.0
  %737 = vmatprep.subr.mxu0 0.0
  %738 = vmatpush2.msra.mxu0 0.0
  %739 = vmatprep.subr.mxu0 0.0
  %740 = vmatpush2.msra.mxu0 0.0
  %741 = vmatprep.subr.mxu0 0.0
  %742 = vmatpush2.msra.mxu0 0.0
  %743 = vmatprep.subr.mxu0 0.0
  %744 = vmatpush2.msra.mxu0 0.0
  %745 = vmatprep.subr.mxu0 0.0
  %746 = vmatpush2.msra.mxu0 0.0
  %747 = vmatprep.subr.mxu0 0.0
  %748 = vmatpush2.msra.mxu0 0.0
  %749 = vmatprep.subr.mxu0 0.0
  %750 = vmatpush2.msra.mxu0 0.0
  %751 = vmatprep.subr.mxu0 0.0
  %752 = vmatpush2.msra.mxu0 0.0
  %753 = vmatprep.mubr.f32.mxu0 0.0
  %754 = vmatmul.mubr.f32.gmra.mxu0 %v684
  %v755 = vpop.f32.mrf.mxu0
  %v756 = vadd.f32 0.0, %v755
  %v757 = vpop.f32.mrf.mxu0
  %758 = vmatprep.mubr.f32.mxu0 0.0
  %759 = vmatmul.mubr.f32.gmra.mxu0 %v687
  %v760 = vpop.f32.mrf.mxu0
  %v761 = vadd.f32 0.0, %v760
  %v762 = vpop.f32.mrf.mxu0
  %763 = vdwg.mxu0
  %764 = vrot.lane.b32.xlu0 %v340, 120
  %v765 = vpop.permute.xlu0 %764
  %766 = vrot.lane.b32.xlu0 %v345, 120
  %v767 = vpop.permute.xlu0 %766
  %768 = vrot.lane.b32.xlu0 %v340, 88
  %v769 = vpop.permute.xlu0 %768
  %770 = vrot.lane.b32.xlu0 %v345, 88
  %v771 = vpop.permute.xlu0 %770
  %v772 = vsel %vm368, %v765, 0
  %v774 = vsel %vm368, %v767, 0
  %v776 = vsel %vm368, %v769, 0
  %v778 = vsel %vm368, %v771, 0
  %780 = vmatprep.subr.mxu0 0.0
  %781 = vmatpush1.xpose.msra.mxu0 0.0
  %782 = vmatprep.subr.mxu0 0.0
  %783 = vmatpush1.xpose.msra.mxu0 0.0
  %784 = vmatprep.subr.mxu0 0.0
  %785 = vmatpush1.xpose.msra.mxu0 0.0
  %786 = vmatprep.subr.mxu0 0.0
  %787 = vmatpush1.xpose.msra.mxu0 0.0
  %788 = vmatprep.subr.mxu0 0.0
  %789 = vmatpush1.xpose.msra.mxu0 0.0
  %790 = vmatprep.subr.mxu0 0.0
  %791 = vmatpush1.xpose.msra.mxu0 0.0
  %792 = vmatprep.subr.mxu0 0.0
  %793 = vmatpush1.xpose.msra.mxu0 0.0
  %794 = vmatprep.subr.mxu0 0.0
  %795 = vmatpush1.xpose.msra.mxu0 0.0
  %796 = vmatprep.subr.mxu0 0.0
  %797 = vmatpush1.xpose.msra.mxu0 0.0
  %798 = vmatprep.subr.mxu0 0.0
  %799 = vmatpush1.xpose.msra.mxu0 0.0
  %800 = vmatprep.subr.mxu0 0.0
  %801 = vmatpush1.xpose.msra.mxu0 0.0
  %802 = vmatprep.subr.mxu0 0.0
  %803 = vmatpush1.xpose.msra.mxu0 0.0
  %804 = vmatprep.subr.mxu0 0.0
  %805 = vmatpush1.xpose.msra.mxu0 0.0
  %806 = vmatprep.subr.mxu0 0.0
  %807 = vmatpush1.xpose.msra.mxu0 0.0
  %808 = vmatprep.subr.mxu0 0.0
  %809 = vmatpush1.xpose.msra.mxu0 %v778
  %810 = vmatprep.subr.mxu0 0.0
  %811 = vmatpush1.xpose.msra.mxu0 %v776
  %812 = vmatprep.subr.mxu0 0.0
  %813 = vmatpush2.xpose.msra.mxu0 0.0
  %814 = vmatprep.subr.mxu0 0.0
  %815 = vmatpush2.xpose.msra.mxu0 0.0
  %816 = vmatprep.subr.mxu0 0.0
  %817 = vmatpush2.xpose.msra.mxu0 0.0
  %818 = vmatprep.subr.mxu0 0.0
  %819 = vmatpush2.xpose.msra.mxu0 0.0
  %820 = vmatprep.subr.mxu0 0.0
  %821 = vmatpush2.xpose.msra.mxu0 0.0
  %822 = vmatprep.subr.mxu0 0.0
  %823 = vmatpush2.xpose.msra.mxu0 0.0
  %824 = vmatprep.subr.mxu0 0.0
  %825 = vmatpush2.xpose.msra.mxu0 0.0
  %826 = vmatprep.subr.mxu0 0.0
  %827 = vmatpush2.xpose.msra.mxu0 0.0
  %828 = vmatprep.subr.mxu0 0.0
  %829 = vmatpush2.xpose.msra.mxu0 0.0
  %830 = vmatprep.subr.mxu0 0.0
  %831 = vmatpush2.xpose.msra.mxu0 0.0
  %832 = vmatprep.subr.mxu0 0.0
  %833 = vmatpush2.xpose.msra.mxu0 0.0
  %834 = vmatprep.subr.mxu0 0.0
  %835 = vmatpush2.xpose.msra.mxu0 0.0
  %836 = vmatprep.subr.mxu0 0.0
  %837 = vmatpush2.xpose.msra.mxu0 0.0
  %838 = vmatprep.subr.mxu0 0.0
  %839 = vmatpush2.xpose.msra.mxu0 0.0
  %840 = vmatprep.subr.mxu0 0.0
  %841 = vmatpush2.xpose.msra.mxu0 0.0
  %842 = vmatprep.subr.mxu0 0.0
  %843 = vmatpush2.xpose.msra.mxu0 0.0
  %844 = vmatprep.mubr.f32.mxu0 0.0
  %845 = vmatmul.mubr.f32.gmra.mxu0 %v772
  %v846 = vpop.f32.mrf.mxu0
  %v847 = vadd.f32 0.0, %v846
  %v848 = vpop.f32.mrf.mxu0
  %849 = vmatprep.mubr.f32.mxu0 0.0
  %850 = vmatmul.mubr.f32.gmra.mxu0 %v774
  %v851 = vpop.f32.mrf.mxu0
  %v852 = vadd.f32 0.0, %v851
  %v853 = vpop.f32.mrf.mxu0
  %854 = vdwg.mxu0
  %855 = vrot.lane.b32.xlu0 %v350, 120
  %v856 = vpop.permute.xlu0 %855
  %857 = vrot.lane.b32.xlu0 %v355, 120
  %v858 = vpop.permute.xlu0 %857
  %859 = vrot.lane.b32.xlu0 %v350, 88
  %v860 = vpop.permute.xlu0 %859
  %861 = vrot.lane.b32.xlu0 %v355, 88
  %v862 = vpop.permute.xlu0 %861
  %v863 = vsel %vm368, %v856, 0
  %v865 = vsel %vm368, %v858, 0
  %v867 = vsel %vm368, %v860, 0
  %v869 = vsel %vm368, %v862, 0
  %871 = vmatprep.subr.mxu0 0.0
  %872 = vmatpush1.xpose.msra.mxu0 0.0
  %873 = vmatprep.subr.mxu0 0.0
  %874 = vmatpush1.xpose.msra.mxu0 0.0
  %875 = vmatprep.subr.mxu0 0.0
  %876 = vmatpush1.xpose.msra.mxu0 0.0
  %877 = vmatprep.subr.mxu0 0.0
  %878 = vmatpush1.xpose.msra.mxu0 0.0
  %879 = vmatprep.subr.mxu0 0.0
  %880 = vmatpush1.xpose.msra.mxu0 0.0
  %881 = vmatprep.subr.mxu0 0.0
  %882 = vmatpush1.xpose.msra.mxu0 0.0
  %883 = vmatprep.subr.mxu0 0.0
  %884 = vmatpush1.xpose.msra.mxu0 0.0
  %885 = vmatprep.subr.mxu0 0.0
  %886 = vmatpush1.xpose.msra.mxu0 0.0
  %887 = vmatprep.subr.mxu0 0.0
  %888 = vmatpush1.xpose.msra.mxu0 0.0
  %889 = vmatprep.subr.mxu0 0.0
  %890 = vmatpush1.xpose.msra.mxu0 0.0
  %891 = vmatprep.subr.mxu0 0.0
  %892 = vmatpush1.xpose.msra.mxu0 0.0
  %893 = vmatprep.subr.mxu0 0.0
  %894 = vmatpush1.xpose.msra.mxu0 0.0
  %895 = vmatprep.subr.mxu0 0.0
  %896 = vmatpush1.xpose.msra.mxu0 0.0
  %897 = vmatprep.subr.mxu0 0.0
  %898 = vmatpush1.xpose.msra.mxu0 0.0
  %899 = vmatprep.subr.mxu0 0.0
  %900 = vmatpush1.xpose.msra.mxu0 %v869
  %901 = vmatprep.subr.mxu0 0.0
  %902 = vmatpush1.xpose.msra.mxu0 %v867
  %903 = vmatprep.subr.mxu0 0.0
  %904 = vmatpush2.xpose.msra.mxu0 0.0
  %905 = vmatprep.subr.mxu0 0.0
  %906 = vmatpush2.xpose.msra.mxu0 0.0
  %907 = vmatprep.subr.mxu0 0.0
  %908 = vmatpush2.xpose.msra.mxu0 0.0
  %909 = vmatprep.subr.mxu0 0.0
  %910 = vmatpush2.xpose.msra.mxu0 0.0
  %911 = vmatprep.subr.mxu0 0.0
  %912 = vmatpush2.xpose.msra.mxu0 0.0
  %913 = vmatprep.subr.mxu0 0.0
  %914 = vmatpush2.xpose.msra.mxu0 0.0
  %915 = vmatprep.subr.mxu0 0.0
  %916 = vmatpush2.xpose.msra.mxu0 0.0
  %917 = vmatprep.subr.mxu0 0.0
  %918 = vmatpush2.xpose.msra.mxu0 0.0
  %919 = vmatprep.subr.mxu0 0.0
  %920 = vmatpush2.xpose.msra.mxu0 0.0
  %921 = vmatprep.subr.mxu0 0.0
  %922 = vmatpush2.xpose.msra.mxu0 0.0
  %923 = vmatprep.subr.mxu0 0.0
  %924 = vmatpush2.xpose.msra.mxu0 0.0
  %925 = vmatprep.subr.mxu0 0.0
  %926 = vmatpush2.xpose.msra.mxu0 0.0
  %927 = vmatprep.subr.mxu0 0.0
  %928 = vmatpush2.xpose.msra.mxu0 0.0
  %929 = vmatprep.subr.mxu0 0.0
  %930 = vmatpush2.xpose.msra.mxu0 0.0
  %931 = vmatprep.subr.mxu0 0.0
  %932 = vmatpush2.xpose.msra.mxu0 0.0
  %933 = vmatprep.subr.mxu0 0.0
  %934 = vmatpush2.xpose.msra.mxu0 0.0
  %935 = vmatprep.mubr.f32.mxu0 0.0
  %936 = vmatmul.mubr.f32.gmra.mxu0 %v863
  %v937 = vpop.f32.mrf.mxu0
  %v938 = vadd.f32 0.0, %v937
  %v939 = vpop.f32.mrf.mxu0
  %940 = vmatprep.mubr.f32.mxu0 0.0
  %941 = vmatmul.mubr.f32.gmra.mxu0 %v865
  %v942 = vpop.f32.mrf.mxu0
  %v943 = vadd.f32 0.0, %v942
  %v944 = vpop.f32.mrf.mxu0
  %945 = vdwg.mxu0
  %v946 = vmul.f32 %v847, 0.35355338
  %v947 = vmul.f32 %v852, 0.35355338
  %v948 = vmul.f32 %v938, 0.35355338
  %v949 = vmul.f32 %v943, 0.35355338
  %v950 = vsel %vm545, %v946, -inf
  %951 = vmax.xlane.f32.xlu0 %v950
  %v952 = vpop.xlane.xlu0 %951
  %v953 = vsel %vm545, %v947, -inf
  %954 = vmax.xlane.f32.xlu0 %v953
  %v955 = vpop.xlane.xlu0 %954
  %v956 = vsel %vm545, %v948, -inf
  %957 = vmax.xlane.f32.xlu0 %v956
  %v958 = vpop.xlane.xlu0 %957
  %v959 = vsel %vm545, %v949, -inf
  %960 = vmax.xlane.f32.xlu0 %v959
  %v961 = vpop.xlane.xlu0 %960
  %v962 = vsub.f32 %v946, %v952
  %v963 = vsub.f32 %v947, %v955
  %v964 = vsub.f32 %v948, %v958
  %v965 = vsub.f32 %v949, %v961
  %v966 = vmul.f32 %v962, 1.442695
  %v967 = vpow.pop %v966
  %v968 = vmul.f32 %v963, 1.442695
  %v969 = vpow.pop %v968
  %v970 = vmul.f32 %v964, 1.442695
  %v971 = vpow.pop %v970
  %v972 = vmul.f32 %v965, 1.442695
  %v973 = vpow.pop %v972
  %v974 = vsel %vm545, %v967, 0.0
  %975 = vadd.xlane.f32.xlu0 %v974
  %v976 = vpop.xlane.xlu0 %975
  %v977 = vsel %vm545, %v969, 0.0
  %978 = vadd.xlane.f32.xlu0 %v977
  %v979 = vpop.xlane.xlu0 %978
  %v980 = vsel %vm545, %v971, 0.0
  %981 = vadd.xlane.f32.xlu0 %v980
  %v982 = vpop.xlane.xlu0 %981
  %v983 = vsel %vm545, %v973, 0.0
  %984 = vadd.xlane.f32.xlu0 %v983
  %v985 = vpop.xlane.xlu0 %984
  %v986 = vrcp.pop %v976
  %v987 = vrcp.pop %v979
  %v988 = vrcp.pop %v982
  %v989 = vrcp.pop %v985
  %v990 = vmul.f32 %v967, %v986
  %v991 = vmul.f32 %v969, %v987
  %v992 = vmul.f32 %v971, %v988
  %v993 = vmul.f32 %v973, %v989
  %994 = vrot.lane.b32.xlu0 %v340, 56
  %v995 = vpop.permute.xlu0 %994
  %996 = vrot.lane.b32.xlu0 %v345, 56
  %v997 = vpop.permute.xlu0 %996
  %v1001 = vsel %vm545, %v990, 0
  %v1004 = vsel %vm545, %v991, 0
  %1006 = vmatprep.subr.mxu0 0.0
  %1007 = vmatpush1.msra.mxu0 0.0
  %1008 = vmatprep.subr.mxu0 0.0
  %1009 = vmatpush1.msra.mxu0 0.0
  %1010 = vmatprep.subr.mxu0 0.0
  %1011 = vmatpush1.msra.mxu0 0.0
  %1012 = vmatprep.subr.mxu0 0.0
  %1013 = vmatpush1.msra.mxu0 0.0
  %1014 = vmatprep.subr.mxu0 0.0
  %1015 = vmatpush1.msra.mxu0 0.0
  %1016 = vmatprep.subr.mxu0 0.0
  %1017 = vmatpush1.msra.mxu0 0.0
  %1018 = vmatprep.subr.mxu0 0.0
  %1019 = vmatpush1.msra.mxu0 0.0
  %1020 = vmatprep.subr.mxu0 0.0
  %1021 = vmatpush1.msra.mxu0 0.0
  %1022 = vmatprep.subr.mxu0 0.0
  %1023 = vmatpush1.msra.mxu0 0.0
  %1024 = vmatprep.subr.mxu0 0.0
  %1025 = vmatpush1.msra.mxu0 0.0
  %1026 = vmatprep.subr.mxu0 0.0
  %1027 = vmatpush1.msra.mxu0 0.0
  %1028 = vmatprep.subr.mxu0 0.0
  %1029 = vmatpush1.msra.mxu0 0.0
  %1030 = vmatprep.subr.mxu0 0.0
  %1031 = vmatpush1.msra.mxu0 0.0
  %1032 = vmatprep.subr.mxu0 0.0
  %1033 = vmatpush1.msra.mxu0 0.0
  %1034 = vmatprep.subr.mxu0 0.0
  %1035 = vmatpush1.msra.mxu0 %v997
  %1036 = vmatprep.subr.mxu0 0.0
  %1037 = vmatpush1.msra.mxu0 %v995
  %1038 = vmatprep.subr.mxu0 0.0
  %1039 = vmatpush2.msra.mxu0 0.0
  %1040 = vmatprep.subr.mxu0 0.0
  %1041 = vmatpush2.msra.mxu0 0.0
  %1042 = vmatprep.subr.mxu0 0.0
  %1043 = vmatpush2.msra.mxu0 0.0
  %1044 = vmatprep.subr.mxu0 0.0
  %1045 = vmatpush2.msra.mxu0 0.0
  %1046 = vmatprep.subr.mxu0 0.0
  %1047 = vmatpush2.msra.mxu0 0.0
  %1048 = vmatprep.subr.mxu0 0.0
  %1049 = vmatpush2.msra.mxu0 0.0
  %1050 = vmatprep.subr.mxu0 0.0
  %1051 = vmatpush2.msra.mxu0 0.0
  %1052 = vmatprep.subr.mxu0 0.0
  %1053 = vmatpush2.msra.mxu0 0.0
  %1054 = vmatprep.subr.mxu0 0.0
  %1055 = vmatpush2.msra.mxu0 0.0
  %1056 = vmatprep.subr.mxu0 0.0
  %1057 = vmatpush2.msra.mxu0 0.0
  %1058 = vmatprep.subr.mxu0 0.0
  %1059 = vmatpush2.msra.mxu0 0.0
  %1060 = vmatprep.subr.mxu0 0.0
  %1061 = vmatpush2.msra.mxu0 0.0
  %1062 = vmatprep.subr.mxu0 0.0
  %1063 = vmatpush2.msra.mxu0 0.0
  %1064 = vmatprep.subr.mxu0 0.0
  %1065 = vmatpush2.msra.mxu0 0.0
  %1066 = vmatprep.subr.mxu0 0.0
  %1067 = vmatpush2.msra.mxu0 0.0
  %1068 = vmatprep.subr.mxu0 0.0
  %1069 = vmatpush2.msra.mxu0 0.0
  %1070 = vmatprep.mubr.f32.mxu0 0.0
  %1071 = vmatmul.mubr.f32.gmra.mxu0 %v1001
  %v1072 = vpop.f32.mrf.mxu0
  %v1073 = vadd.f32 0.0, %v1072
  %v1074 = vpop.f32.mrf.mxu0
  %1075 = vmatprep.mubr.f32.mxu0 0.0
  %1076 = vmatmul.mubr.f32.gmra.mxu0 %v1004
  %v1077 = vpop.f32.mrf.mxu0
  %v1078 = vadd.f32 0.0, %v1077
  %v1079 = vpop.f32.mrf.mxu0
  %1080 = vdwg.mxu0
  %1081 = vrot.lane.b32.xlu0 %v350, 56
  %v1082 = vpop.permute.xlu0 %1081
  %1083 = vrot.lane.b32.xlu0 %v355, 56
  %v1084 = vpop.permute.xlu0 %1083
  %v1088 = vsel %vm545, %v992, 0
  %v1091 = vsel %vm545, %v993, 0
  %1093 = vmatprep.subr.mxu0 0.0
  %1094 = vmatpush1.msra.mxu0 0.0
  %1095 = vmatprep.subr.mxu0 0.0
  %1096 = vmatpush1.msra.mxu0 0.0
  %1097 = vmatprep.subr.mxu0 0.0
  %1098 = vmatpush1.msra.mxu0 0.0
  %1099 = vmatprep.subr.mxu0 0.0
  %1100 = vmatpush1.msra.mxu0 0.0
  %1101 = vmatprep.subr.mxu0 0.0
  %1102 = vmatpush1.msra.mxu0 0.0
  %1103 = vmatprep.subr.mxu0 0.0
  %1104 = vmatpush1.msra.mxu0 0.0
  %1105 = vmatprep.subr.mxu0 0.0
  %1106 = vmatpush1.msra.mxu0 0.0
  %1107 = vmatprep.subr.mxu0 0.0
  %1108 = vmatpush1.msra.mxu0 0.0
  %1109 = vmatprep.subr.mxu0 0.0
  %1110 = vmatpush1.msra.mxu0 0.0
  %1111 = vmatprep.subr.mxu0 0.0
  %1112 = vmatpush1.msra.mxu0 0.0
  %1113 = vmatprep.subr.mxu0 0.0
  %1114 = vmatpush1.msra.mxu0 0.0
  %1115 = vmatprep.subr.mxu0 0.0
  %1116 = vmatpush1.msra.mxu0 0.0
  %1117 = vmatprep.subr.mxu0 0.0
  %1118 = vmatpush1.msra.mxu0 0.0
  %1119 = vmatprep.subr.mxu0 0.0
  %1120 = vmatpush1.msra.mxu0 0.0
  %1121 = vmatprep.subr.mxu0 0.0
  %1122 = vmatpush1.msra.mxu0 %v1084
  %1123 = vmatprep.subr.mxu0 0.0
  %1124 = vmatpush1.msra.mxu0 %v1082
  %1125 = vmatprep.subr.mxu0 0.0
  %1126 = vmatpush2.msra.mxu0 0.0
  %1127 = vmatprep.subr.mxu0 0.0
  %1128 = vmatpush2.msra.mxu0 0.0
  %1129 = vmatprep.subr.mxu0 0.0
  %1130 = vmatpush2.msra.mxu0 0.0
  %1131 = vmatprep.subr.mxu0 0.0
  %1132 = vmatpush2.msra.mxu0 0.0
  %1133 = vmatprep.subr.mxu0 0.0
  %1134 = vmatpush2.msra.mxu0 0.0
  %1135 = vmatprep.subr.mxu0 0.0
  %1136 = vmatpush2.msra.mxu0 0.0
  %1137 = vmatprep.subr.mxu0 0.0
  %1138 = vmatpush2.msra.mxu0 0.0
  %1139 = vmatprep.subr.mxu0 0.0
  %1140 = vmatpush2.msra.mxu0 0.0
  %1141 = vmatprep.subr.mxu0 0.0
  %1142 = vmatpush2.msra.mxu0 0.0
  %1143 = vmatprep.subr.mxu0 0.0
  %1144 = vmatpush2.msra.mxu0 0.0
  %1145 = vmatprep.subr.mxu0 0.0
  %1146 = vmatpush2.msra.mxu0 0.0
  %1147 = vmatprep.subr.mxu0 0.0
  %1148 = vmatpush2.msra.mxu0 0.0
  %1149 = vmatprep.subr.mxu0 0.0
  %1150 = vmatpush2.msra.mxu0 0.0
  %1151 = vmatprep.subr.mxu0 0.0
  %1152 = vmatpush2.msra.mxu0 0.0
  %1153 = vmatprep.subr.mxu0 0.0
  %1154 = vmatpush2.msra.mxu0 0.0
  %1155 = vmatprep.subr.mxu0 0.0
  %1156 = vmatpush2.msra.mxu0 0.0
  %1157 = vmatprep.mubr.f32.mxu0 0.0
  %1158 = vmatmul.mubr.f32.gmra.mxu0 %v1088
  %v1159 = vpop.f32.mrf.mxu0
  %v1160 = vadd.f32 0.0, %v1159
  %v1161 = vpop.f32.mrf.mxu0
  %1162 = vmatprep.mubr.f32.mxu0 0.0
  %1163 = vmatmul.mubr.f32.gmra.mxu0 %v1091
  %v1164 = vpop.f32.mrf.mxu0
  %v1165 = vadd.f32 0.0, %v1164
  %v1166 = vpop.f32.mrf.mxu0
  %1167 = vdwg.mxu0
  %v1169 = vsel %vm368, %v1073, 0
  %v1172 = vsel %vm368, %v1078, 0
  %v1175 = vsel %vm368, %v1160, 0
  %v1178 = vsel %vm368, %v1165, 0
  %1180 = vmatprep.subr.mxu0 0.0
  %1181 = vmatpush1.msra.mxu0 0.0
  %1182 = vmatprep.subr.mxu0 0.0
  %1183 = vmatpush1.msra.mxu0 0.0
  %1184 = vmatprep.subr.mxu0 0.0
  %1185 = vmatpush1.msra.mxu0 0.0
  %1186 = vmatprep.subr.mxu0 0.0
  %1187 = vmatpush1.msra.mxu0 0.0
  %1188 = vmatprep.subr.mxu0 0.0
  %1189 = vmatpush1.msra.mxu0 0.0
  %1190 = vmatprep.subr.mxu0 0.0
  %1191 = vmatpush1.msra.mxu0 0.0
  %1192 = vmatprep.subr.mxu0 0.0
  %1193 = vmatpush1.msra.mxu0 0.0
  %1194 = vmatprep.subr.mxu0 0.0
  %1195 = vmatpush1.msra.mxu0 0.0
  %1196 = vmatprep.subr.mxu0 0.0
  %1197 = vmatpush1.msra.mxu0 0.0
  %1198 = vmatprep.subr.mxu0 0.0
  %1199 = vmatpush1.msra.mxu0 0.0
  %1200 = vmatprep.subr.mxu0 0.0
  %1201 = vmatpush1.msra.mxu0 0.0
  %1202 = vmatprep.subr.mxu0 0.0
  %1203 = vmatpush1.msra.mxu0 0.0
  %1204 = vmatprep.subr.mxu0 0.0
  %1205 = vmatpush1.msra.mxu0 0.0
  %1206 = vmatprep.subr.mxu0 0.0
  %1207 = vmatpush1.msra.mxu0 0.0
  %1208 = vmatprep.subr.mxu0 0.0
  %1209 = vmatpush1.msra.mxu0 0.0
  %1210 = vmatprep.subr.mxu0 0.0
  %1211 = vmatpush1.msra.mxu0 %v359
  %1212 = vmatprep.subr.mxu0 0.0
  %1213 = vmatpush2.msra.mxu0 0.0
  %1214 = vmatprep.subr.mxu0 0.0
  %1215 = vmatpush2.msra.mxu0 0.0
  %1216 = vmatprep.subr.mxu0 0.0
  %1217 = vmatpush2.msra.mxu0 0.0
  %1218 = vmatprep.subr.mxu0 0.0
  %1219 = vmatpush2.msra.mxu0 0.0
  %1220 = vmatprep.subr.mxu0 0.0
  %1221 = vmatpush2.msra.mxu0 0.0
  %1222 = vmatprep.subr.mxu0 0.0
  %1223 = vmatpush2.msra.mxu0 0.0
  %1224 = vmatprep.subr.mxu0 0.0
  %1225 = vmatpush2.msra.mxu0 0.0
  %1226 = vmatprep.subr.mxu0 0.0
  %1227 = vmatpush2.msra.mxu0 0.0
  %1228 = vmatprep.subr.mxu0 0.0
  %1229 = vmatpush2.msra.mxu0 0.0
  %1230 = vmatprep.subr.mxu0 0.0
  %1231 = vmatpush2.msra.mxu0 0.0
  %1232 = vmatprep.subr.mxu0 0.0
  %1233 = vmatpush2.msra.mxu0 0.0
  %1234 = vmatprep.subr.mxu0 0.0
  %1235 = vmatpush2.msra.mxu0 0.0
  %1236 = vmatprep.subr.mxu0 0.0
  %1237 = vmatpush2.msra.mxu0 0.0
  %1238 = vmatprep.subr.mxu0 0.0
  %1239 = vmatpush2.msra.mxu0 0.0
  %1240 = vmatprep.subr.mxu0 0.0
  %1241 = vmatpush2.msra.mxu0 0.0
  %1242 = vmatprep.subr.mxu0 0.0
  %1243 = vmatpush2.msra.mxu0 0.0
  %1244 = vmatprep.mubr.f32.mxu0 0.0
  %1245 = vmatmul.mubr.f32.gmra.mxu0 %v1169
  %v1246 = vpop.f32.mrf.mxu0
  %v1247 = vadd.f32 0.0, %v1246
  %v1248 = vpop.f32.mrf.mxu0
  %1249 = vmatprep.mubr.f32.mxu0 0.0
  %1250 = vmatmul.mubr.f32.gmra.mxu0 %v1172
  %v1251 = vpop.f32.mrf.mxu0
  %v1252 = vadd.f32 0.0, %v1251
  %v1253 = vpop.f32.mrf.mxu0
  %1254 = vmatprep.mubr.f32.mxu0 0.0
  %1255 = vmatmul.mubr.f32.gmra.mxu0 %v1175
  %v1256 = vpop.f32.mrf.mxu0
  %v1257 = vadd.f32 0.0, %v1256
  %v1258 = vpop.f32.mrf.mxu0
  %1259 = vmatprep.mubr.f32.mxu0 0.0
  %1260 = vmatmul.mubr.f32.gmra.mxu0 %v1178
  %v1261 = vpop.f32.mrf.mxu0
  %v1262 = vadd.f32 0.0, %v1261
  %v1263 = vpop.f32.mrf.mxu0
  %1264 = vdwg.mxu0
  %v1266 = vsel %vm368, %v669, 0
  %v1269 = vsel %vm368, %v674, 0
  %v1272 = vsel %vm368, %v756, 0
  %v1275 = vsel %vm368, %v761, 0
  %1277 = vmatprep.subr.mxu0 0.0
  %1278 = vmatpush1.msra.mxu0 0.0
  %1279 = vmatprep.subr.mxu0 0.0
  %1280 = vmatpush1.msra.mxu0 0.0
  %1281 = vmatprep.subr.mxu0 0.0
  %1282 = vmatpush1.msra.mxu0 0.0
  %1283 = vmatprep.subr.mxu0 0.0
  %1284 = vmatpush1.msra.mxu0 0.0
  %1285 = vmatprep.subr.mxu0 0.0
  %1286 = vmatpush1.msra.mxu0 0.0
  %1287 = vmatprep.subr.mxu0 0.0
  %1288 = vmatpush1.msra.mxu0 0.0
  %1289 = vmatprep.subr.mxu0 0.0
  %1290 = vmatpush1.msra.mxu0 0.0
  %1291 = vmatprep.subr.mxu0 0.0
  %1292 = vmatpush1.msra.mxu0 0.0
  %1293 = vmatprep.subr.mxu0 0.0
  %1294 = vmatpush1.msra.mxu0 0.0
  %1295 = vmatprep.subr.mxu0 0.0
  %1296 = vmatpush1.msra.mxu0 0.0
  %1297 = vmatprep.subr.mxu0 0.0
  %1298 = vmatpush1.msra.mxu0 0.0
  %1299 = vmatprep.subr.mxu0 0.0
  %1300 = vmatpush1.msra.mxu0 0.0
  %1301 = vmatprep.subr.mxu0 0.0
  %1302 = vmatpush1.msra.mxu0 0.0
  %1303 = vmatprep.subr.mxu0 0.0
  %1304 = vmatpush1.msra.mxu0 0.0
  %1305 = vmatprep.subr.mxu0 0.0
  %1306 = vmatpush1.msra.mxu0 0.0
  %1307 = vmatprep.subr.mxu0 0.0
  %1308 = vmatpush1.msra.mxu0 %v358
  %1309 = vmatprep.subr.mxu0 0.0
  %1310 = vmatpush2.msra.mxu0 0.0
  %1311 = vmatprep.subr.mxu0 0.0
  %1312 = vmatpush2.msra.mxu0 0.0
  %1313 = vmatprep.subr.mxu0 0.0
  %1314 = vmatpush2.msra.mxu0 0.0
  %1315 = vmatprep.subr.mxu0 0.0
  %1316 = vmatpush2.msra.mxu0 0.0
  %1317 = vmatprep.subr.mxu0 0.0
  %1318 = vmatpush2.msra.mxu0 0.0
  %1319 = vmatprep.subr.mxu0 0.0
  %1320 = vmatpush2.msra.mxu0 0.0
  %1321 = vmatprep.subr.mxu0 0.0
  %1322 = vmatpush2.msra.mxu0 0.0
  %1323 = vmatprep.subr.mxu0 0.0
  %1324 = vmatpush2.msra.mxu0 0.0
  %1325 = vmatprep.subr.mxu0 0.0
  %1326 = vmatpush2.msra.mxu0 0.0
  %1327 = vmatprep.subr.mxu0 0.0
  %1328 = vmatpush2.msra.mxu0 0.0
  %1329 = vmatprep.subr.mxu0 0.0
  %1330 = vmatpush2.msra.mxu0 0.0
  %1331 = vmatprep.subr.mxu0 0.0
  %1332 = vmatpush2.msra.mxu0 0.0
  %1333 = vmatprep.subr.mxu0 0.0
  %1334 = vmatpush2.msra.mxu0 0.0
  %1335 = vmatprep.subr.mxu0 0.0
  %1336 = vmatpush2.msra.mxu0 0.0
  %1337 = vmatprep.subr.mxu0 0.0
  %1338 = vmatpush2.msra.mxu0 0.0
  %1339 = vmatprep.subr.mxu0 0.0
  %1340 = vmatpush2.msra.mxu0 0.0
  %1341 = vmatprep.mubr.f32.mxu0 0.0
  %1342 = vmatmul.mubr.f32.gmra.mxu0 %v1266
  %v1343 = vpop.f32.mrf.mxu0
  %v1344 = vadd.f32 %v1247, %v1343
  %v1345 = vpop.f32.mrf.mxu0
  %1346 = vmatprep.mubr.f32.mxu0 0.0
  %1347 = vmatmul.mubr.f32.gmra.mxu0 %v1269
  %v1348 = vpop.f32.mrf.mxu0
  %v1349 = vadd.f32 %v1252, %v1348
  %v1350 = vpop.f32.mrf.mxu0
  %1351 = vmatprep.mubr.f32.mxu0 0.0
  %1352 = vmatmul.mubr.f32.gmra.mxu0 %v1272
  %v1353 = vpop.f32.mrf.mxu0
  %v1354 = vadd.f32 %v1257, %v1353
  %v1355 = vpop.f32.mrf.mxu0
  %1356 = vmatprep.mubr.f32.mxu0 0.0
  %1357 = vmatmul.mubr.f32.gmra.mxu0 %v1275
  %v1358 = vpop.f32.mrf.mxu0
  %v1359 = vadd.f32 %v1262, %v1358
  %v1360 = vpop.f32.mrf.mxu0
  %1361 = vdwg.mxu0
  %1362 = vrot.lane.b32.xlu0 %v340, 112
  %v1363 = vpop.permute.xlu0 %1362
  %1364 = vrot.lane.b32.xlu0 %v345, 112
  %v1365 = vpop.permute.xlu0 %1364
  %1366 = vrot.lane.b32.xlu0 %v340, 80
  %v1367 = vpop.permute.xlu0 %1366
  %1368 = vrot.lane.b32.xlu0 %v345, 80
  %v1369 = vpop.permute.xlu0 %1368
  %v1370 = vsel %vm368, %v1363, 0
  %v1372 = vsel %vm368, %v1365, 0
  %v1374 = vsel %vm368, %v1367, 0
  %v1376 = vsel %vm368, %v1369, 0
  %1378 = vmatprep.subr.mxu0 0.0
  %1379 = vmatpush1.xpose.msra.mxu0 0.0
  %1380 = vmatprep.subr.mxu0 0.0
  %1381 = vmatpush1.xpose.msra.mxu0 0.0
  %1382 = vmatprep.subr.mxu0 0.0
  %1383 = vmatpush1.xpose.msra.mxu0 0.0
  %1384 = vmatprep.subr.mxu0 0.0
  %1385 = vmatpush1.xpose.msra.mxu0 0.0
  %1386 = vmatprep.subr.mxu0 0.0
  %1387 = vmatpush1.xpose.msra.mxu0 0.0
  %1388 = vmatprep.subr.mxu0 0.0
  %1389 = vmatpush1.xpose.msra.mxu0 0.0
  %1390 = vmatprep.subr.mxu0 0.0
  %1391 = vmatpush1.xpose.msra.mxu0 0.0
  %1392 = vmatprep.subr.mxu0 0.0
  %1393 = vmatpush1.xpose.msra.mxu0 0.0
  %1394 = vmatprep.subr.mxu0 0.0
  %1395 = vmatpush1.xpose.msra.mxu0 0.0
  %1396 = vmatprep.subr.mxu0 0.0
  %1397 = vmatpush1.xpose.msra.mxu0 0.0
  %1398 = vmatprep.subr.mxu0 0.0
  %1399 = vmatpush1.xpose.msra.mxu0 0.0
  %1400 = vmatprep.subr.mxu0 0.0
  %1401 = vmatpush1.xpose.msra.mxu0 0.0
  %1402 = vmatprep.subr.mxu0 0.0
  %1403 = vmatpush1.xpose.msra.mxu0 0.0
  %1404 = vmatprep.subr.mxu0 0.0
  %1405 = vmatpush1.xpose.msra.mxu0 0.0
  %1406 = vmatprep.subr.mxu0 0.0
  %1407 = vmatpush1.xpose.msra.mxu0 %v1376
  %1408 = vmatprep.subr.mxu0 0.0
  %1409 = vmatpush1.xpose.msra.mxu0 %v1374
  %1410 = vmatprep.subr.mxu0 0.0
  %1411 = vmatpush2.xpose.msra.mxu0 0.0
  %1412 = vmatprep.subr.mxu0 0.0
  %1413 = vmatpush2.xpose.msra.mxu0 0.0
  %1414 = vmatprep.subr.mxu0 0.0
  %1415 = vmatpush2.xpose.msra.mxu0 0.0
  %1416 = vmatprep.subr.mxu0 0.0
  %1417 = vmatpush2.xpose.msra.mxu0 0.0
  %1418 = vmatprep.subr.mxu0 0.0
  %1419 = vmatpush2.xpose.msra.mxu0 0.0
  %1420 = vmatprep.subr.mxu0 0.0
  %1421 = vmatpush2.xpose.msra.mxu0 0.0
  %1422 = vmatprep.subr.mxu0 0.0
  %1423 = vmatpush2.xpose.msra.mxu0 0.0
  %1424 = vmatprep.subr.mxu0 0.0
  %1425 = vmatpush2.xpose.msra.mxu0 0.0
  %1426 = vmatprep.subr.mxu0 0.0
  %1427 = vmatpush2.xpose.msra.mxu0 0.0
  %1428 = vmatprep.subr.mxu0 0.0
  %1429 = vmatpush2.xpose.msra.mxu0 0.0
  %1430 = vmatprep.subr.mxu0 0.0
  %1431 = vmatpush2.xpose.msra.mxu0 0.0
  %1432 = vmatprep.subr.mxu0 0.0
  %1433 = vmatpush2.xpose.msra.mxu0 0.0
  %1434 = vmatprep.subr.mxu0 0.0
  %1435 = vmatpush2.xpose.msra.mxu0 0.0
  %1436 = vmatprep.subr.mxu0 0.0
  %1437 = vmatpush2.xpose.msra.mxu0 0.0
  %1438 = vmatprep.subr.mxu0 0.0
  %1439 = vmatpush2.xpose.msra.mxu0 0.0
  %1440 = vmatprep.subr.mxu0 0.0
  %1441 = vmatpush2.xpose.msra.mxu0 0.0
  %1442 = vmatprep.mubr.f32.mxu0 0.0
  %1443 = vmatmul.mubr.f32.gmra.mxu0 %v1370
  %v1444 = vpop.f32.mrf.mxu0
  %v1445 = vadd.f32 0.0, %v1444
  %v1446 = vpop.f32.mrf.mxu0
  %1447 = vmatprep.mubr.f32.mxu0 0.0
  %1448 = vmatmul.mubr.f32.gmra.mxu0 %v1372
  %v1449 = vpop.f32.mrf.mxu0
  %v1450 = vadd.f32 0.0, %v1449
  %v1451 = vpop.f32.mrf.mxu0
  %1452 = vdwg.mxu0
  %1453 = vrot.lane.b32.xlu0 %v350, 112
  %v1454 = vpop.permute.xlu0 %1453
  %1455 = vrot.lane.b32.xlu0 %v355, 112
  %v1456 = vpop.permute.xlu0 %1455
  %1457 = vrot.lane.b32.xlu0 %v350, 80
  %v1458 = vpop.permute.xlu0 %1457
  %1459 = vrot.lane.b32.xlu0 %v355, 80
  %v1460 = vpop.permute.xlu0 %1459
  %v1461 = vsel %vm368, %v1454, 0
  %v1463 = vsel %vm368, %v1456, 0
  %v1465 = vsel %vm368, %v1458, 0
  %v1467 = vsel %vm368, %v1460, 0
  %1469 = vmatprep.subr.mxu0 0.0
  %1470 = vmatpush1.xpose.msra.mxu0 0.0
  %1471 = vmatprep.subr.mxu0 0.0
  %1472 = vmatpush1.xpose.msra.mxu0 0.0
  %1473 = vmatprep.subr.mxu0 0.0
  %1474 = vmatpush1.xpose.msra.mxu0 0.0
  %1475 = vmatprep.subr.mxu0 0.0
  %1476 = vmatpush1.xpose.msra.mxu0 0.0
  %1477 = vmatprep.subr.mxu0 0.0
  %1478 = vmatpush1.xpose.msra.mxu0 0.0
  %1479 = vmatprep.subr.mxu0 0.0
  %1480 = vmatpush1.xpose.msra.mxu0 0.0
  %1481 = vmatprep.subr.mxu0 0.0
  %1482 = vmatpush1.xpose.msra.mxu0 0.0
  %1483 = vmatprep.subr.mxu0 0.0
  %1484 = vmatpush1.xpose.msra.mxu0 0.0
  %1485 = vmatprep.subr.mxu0 0.0
  %1486 = vmatpush1.xpose.msra.mxu0 0.0
  %1487 = vmatprep.subr.mxu0 0.0
  %1488 = vmatpush1.xpose.msra.mxu0 0.0
  %1489 = vmatprep.subr.mxu0 0.0
  %1490 = vmatpush1.xpose.msra.mxu0 0.0
  %1491 = vmatprep.subr.mxu0 0.0
  %1492 = vmatpush1.xpose.msra.mxu0 0.0
  %1493 = vmatprep.subr.mxu0 0.0
  %1494 = vmatpush1.xpose.msra.mxu0 0.0
  %1495 = vmatprep.subr.mxu0 0.0
  %1496 = vmatpush1.xpose.msra.mxu0 0.0
  %1497 = vmatprep.subr.mxu0 0.0
  %1498 = vmatpush1.xpose.msra.mxu0 %v1467
  %1499 = vmatprep.subr.mxu0 0.0
  %1500 = vmatpush1.xpose.msra.mxu0 %v1465
  %1501 = vmatprep.subr.mxu0 0.0
  %1502 = vmatpush2.xpose.msra.mxu0 0.0
  %1503 = vmatprep.subr.mxu0 0.0
  %1504 = vmatpush2.xpose.msra.mxu0 0.0
  %1505 = vmatprep.subr.mxu0 0.0
  %1506 = vmatpush2.xpose.msra.mxu0 0.0
  %1507 = vmatprep.subr.mxu0 0.0
  %1508 = vmatpush2.xpose.msra.mxu0 0.0
  %1509 = vmatprep.subr.mxu0 0.0
  %1510 = vmatpush2.xpose.msra.mxu0 0.0
  %1511 = vmatprep.subr.mxu0 0.0
  %1512 = vmatpush2.xpose.msra.mxu0 0.0
  %1513 = vmatprep.subr.mxu0 0.0
  %1514 = vmatpush2.xpose.msra.mxu0 0.0
  %1515 = vmatprep.subr.mxu0 0.0
  %1516 = vmatpush2.xpose.msra.mxu0 0.0
  %1517 = vmatprep.subr.mxu0 0.0
  %1518 = vmatpush2.xpose.msra.mxu0 0.0
  %1519 = vmatprep.subr.mxu0 0.0
  %1520 = vmatpush2.xpose.msra.mxu0 0.0
  %1521 = vmatprep.subr.mxu0 0.0
  %1522 = vmatpush2.xpose.msra.mxu0 0.0
  %1523 = vmatprep.subr.mxu0 0.0
  %1524 = vmatpush2.xpose.msra.mxu0 0.0
  %1525 = vmatprep.subr.mxu0 0.0
  %1526 = vmatpush2.xpose.msra.mxu0 0.0
  %1527 = vmatprep.subr.mxu0 0.0
  %1528 = vmatpush2.xpose.msra.mxu0 0.0
  %1529 = vmatprep.subr.mxu0 0.0
  %1530 = vmatpush2.xpose.msra.mxu0 0.0
  %1531 = vmatprep.subr.mxu0 0.0
  %1532 = vmatpush2.xpose.msra.mxu0 0.0
  %1533 = vmatprep.mubr.f32.mxu0 0.0
  %1534 = vmatmul.mubr.f32.gmra.mxu0 %v1461
  %v1535 = vpop.f32.mrf.mxu0
  %v1536 = vadd.f32 0.0, %v1535
  %v1537 = vpop.f32.mrf.mxu0
  %1538 = vmatprep.mubr.f32.mxu0 0.0
  %1539 = vmatmul.mubr.f32.gmra.mxu0 %v1463
  %v1540 = vpop.f32.mrf.mxu0
  %v1541 = vadd.f32 0.0, %v1540
  %v1542 = vpop.f32.mrf.mxu0
  %1543 = vdwg.mxu0
  %v1544 = vmul.f32 %v1445, 0.35355338
  %v1545 = vmul.f32 %v1450, 0.35355338
  %v1546 = vmul.f32 %v1536, 0.35355338
  %v1547 = vmul.f32 %v1541, 0.35355338
  %v1548 = vsel %vm545, %v1544, -inf
  %1549 = vmax.xlane.f32.xlu0 %v1548
  %v1550 = vpop.xlane.xlu0 %1549
  %v1551 = vsel %vm545, %v1545, -inf
  %1552 = vmax.xlane.f32.xlu0 %v1551
  %v1553 = vpop.xlane.xlu0 %1552
  %v1554 = vsel %vm545, %v1546, -inf
  %1555 = vmax.xlane.f32.xlu0 %v1554
  %v1556 = vpop.xlane.xlu0 %1555
  %v1557 = vsel %vm545, %v1547, -inf
  %1558 = vmax.xlane.f32.xlu0 %v1557
  %v1559 = vpop.xlane.xlu0 %1558
  %v1560 = vsub.f32 %v1544, %v1550
  %v1561 = vsub.f32 %v1545, %v1553
  %v1562 = vsub.f32 %v1546, %v1556
  %v1563 = vsub.f32 %v1547, %v1559
  %v1564 = vmul.f32 %v1560, 1.442695
  %v1565 = vpow.pop %v1564
  %v1566 = vmul.f32 %v1561, 1.442695
  %v1567 = vpow.pop %v1566
  %v1568 = vmul.f32 %v1562, 1.442695
  %v1569 = vpow.pop %v1568
  %v1570 = vmul.f32 %v1563, 1.442695
  %v1571 = vpow.pop %v1570
  %v1572 = vsel %vm545, %v1565, 0.0
  %1573 = vadd.xlane.f32.xlu0 %v1572
  %v1574 = vpop.xlane.xlu0 %1573
  %v1575 = vsel %vm545, %v1567, 0.0
  %1576 = vadd.xlane.f32.xlu0 %v1575
  %v1577 = vpop.xlane.xlu0 %1576
  %v1578 = vsel %vm545, %v1569, 0.0
  %1579 = vadd.xlane.f32.xlu0 %v1578
  %v1580 = vpop.xlane.xlu0 %1579
  %v1581 = vsel %vm545, %v1571, 0.0
  %1582 = vadd.xlane.f32.xlu0 %v1581
  %v1583 = vpop.xlane.xlu0 %1582
  %v1584 = vrcp.pop %v1574
  %v1585 = vrcp.pop %v1577
  %v1586 = vrcp.pop %v1580
  %v1587 = vrcp.pop %v1583
  %v1588 = vmul.f32 %v1565, %v1584
  %v1589 = vmul.f32 %v1567, %v1585
  %v1590 = vmul.f32 %v1569, %v1586
  %v1591 = vmul.f32 %v1571, %v1587
  %1592 = vrot.lane.b32.xlu0 %v340, 48
  %v1593 = vpop.permute.xlu0 %1592
  %1594 = vrot.lane.b32.xlu0 %v345, 48
  %v1595 = vpop.permute.xlu0 %1594
  %v1599 = vsel %vm545, %v1588, 0
  %v1602 = vsel %vm545, %v1589, 0
  %1604 = vmatprep.subr.mxu0 0.0
  %1605 = vmatpush1.msra.mxu0 0.0
  %1606 = vmatprep.subr.mxu0 0.0
  %1607 = vmatpush1.msra.mxu0 0.0
  %1608 = vmatprep.subr.mxu0 0.0
  %1609 = vmatpush1.msra.mxu0 0.0
  %1610 = vmatprep.subr.mxu0 0.0
  %1611 = vmatpush1.msra.mxu0 0.0
  %1612 = vmatprep.subr.mxu0 0.0
  %1613 = vmatpush1.msra.mxu0 0.0
  %1614 = vmatprep.subr.mxu0 0.0
  %1615 = vmatpush1.msra.mxu0 0.0
  %1616 = vmatprep.subr.mxu0 0.0
  %1617 = vmatpush1.msra.mxu0 0.0
  %1618 = vmatprep.subr.mxu0 0.0
  %1619 = vmatpush1.msra.mxu0 0.0
  %1620 = vmatprep.subr.mxu0 0.0
  %1621 = vmatpush1.msra.mxu0 0.0
  %1622 = vmatprep.subr.mxu0 0.0
  %1623 = vmatpush1.msra.mxu0 0.0
  %1624 = vmatprep.subr.mxu0 0.0
  %1625 = vmatpush1.msra.mxu0 0.0
  %1626 = vmatprep.subr.mxu0 0.0
  %1627 = vmatpush1.msra.mxu0 0.0
  %1628 = vmatprep.subr.mxu0 0.0
  %1629 = vmatpush1.msra.mxu0 0.0
  %1630 = vmatprep.subr.mxu0 0.0
  %1631 = vmatpush1.msra.mxu0 0.0
  %1632 = vmatprep.subr.mxu0 0.0
  %1633 = vmatpush1.msra.mxu0 %v1595
  %1634 = vmatprep.subr.mxu0 0.0
  %1635 = vmatpush1.msra.mxu0 %v1593
  %1636 = vmatprep.subr.mxu0 0.0
  %1637 = vmatpush2.msra.mxu0 0.0
  %1638 = vmatprep.subr.mxu0 0.0
  %1639 = vmatpush2.msra.mxu0 0.0
  %1640 = vmatprep.subr.mxu0 0.0
  %1641 = vmatpush2.msra.mxu0 0.0
  %1642 = vmatprep.subr.mxu0 0.0
  %1643 = vmatpush2.msra.mxu0 0.0
  %1644 = vmatprep.subr.mxu0 0.0
  %1645 = vmatpush2.msra.mxu0 0.0
  %1646 = vmatprep.subr.mxu0 0.0
  %1647 = vmatpush2.msra.mxu0 0.0
  %1648 = vmatprep.subr.mxu0 0.0
  %1649 = vmatpush2.msra.mxu0 0.0
  %1650 = vmatprep.subr.mxu0 0.0
  %1651 = vmatpush2.msra.mxu0 0.0
  %1652 = vmatprep.subr.mxu0 0.0
  %1653 = vmatpush2.msra.mxu0 0.0
  %1654 = vmatprep.subr.mxu0 0.0
  %1655 = vmatpush2.msra.mxu0 0.0
  %1656 = vmatprep.subr.mxu0 0.0
  %1657 = vmatpush2.msra.mxu0 0.0
  %1658 = vmatprep.subr.mxu0 0.0
  %1659 = vmatpush2.msra.mxu0 0.0
  %1660 = vmatprep.subr.mxu0 0.0
  %1661 = vmatpush2.msra.mxu0 0.0
  %1662 = vmatprep.subr.mxu0 0.0
  %1663 = vmatpush2.msra.mxu0 0.0
  %1664 = vmatprep.subr.mxu0 0.0
  %1665 = vmatpush2.msra.mxu0 0.0
  %1666 = vmatprep.subr.mxu0 0.0
  %1667 = vmatpush2.msra.mxu0 0.0
  %1668 = vmatprep.mubr.f32.mxu0 0.0
  %1669 = vmatmul.mubr.f32.gmra.mxu0 %v1599
  %v1670 = vpop.f32.mrf.mxu0
  %v1671 = vadd.f32 0.0, %v1670
  %v1672 = vpop.f32.mrf.mxu0
  %1673 = vmatprep.mubr.f32.mxu0 0.0
  %1674 = vmatmul.mubr.f32.gmra.mxu0 %v1602
  %v1675 = vpop.f32.mrf.mxu0
  %v1676 = vadd.f32 0.0, %v1675
  %v1677 = vpop.f32.mrf.mxu0
  %1678 = vdwg.mxu0
  %1679 = vrot.lane.b32.xlu0 %v350, 48
  %v1680 = vpop.permute.xlu0 %1679
  %1681 = vrot.lane.b32.xlu0 %v355, 48
  %v1682 = vpop.permute.xlu0 %1681
  %v1686 = vsel %vm545, %v1590, 0
  %v1689 = vsel %vm545, %v1591, 0
  %1691 = vmatprep.subr.mxu0 0.0
  %1692 = vmatpush1.msra.mxu0 0.0
  %1693 = vmatprep.subr.mxu0 0.0
  %1694 = vmatpush1.msra.mxu0 0.0
  %1695 = vmatprep.subr.mxu0 0.0
  %1696 = vmatpush1.msra.mxu0 0.0
  %1697 = vmatprep.subr.mxu0 0.0
  %1698 = vmatpush1.msra.mxu0 0.0
  %1699 = vmatprep.subr.mxu0 0.0
  %1700 = vmatpush1.msra.mxu0 0.0
  %1701 = vmatprep.subr.mxu0 0.0
  %1702 = vmatpush1.msra.mxu0 0.0
  %1703 = vmatprep.subr.mxu0 0.0
  %1704 = vmatpush1.msra.mxu0 0.0
  %1705 = vmatprep.subr.mxu0 0.0
  %1706 = vmatpush1.msra.mxu0 0.0
  %1707 = vmatprep.subr.mxu0 0.0
  %1708 = vmatpush1.msra.mxu0 0.0
  %1709 = vmatprep.subr.mxu0 0.0
  %1710 = vmatpush1.msra.mxu0 0.0
  %1711 = vmatprep.subr.mxu0 0.0
  %1712 = vmatpush1.msra.mxu0 0.0
  %1713 = vmatprep.subr.mxu0 0.0
  %1714 = vmatpush1.msra.mxu0 0.0
  %1715 = vmatprep.subr.mxu0 0.0
  %1716 = vmatpush1.msra.mxu0 0.0
  %1717 = vmatprep.subr.mxu0 0.0
  %1718 = vmatpush1.msra.mxu0 0.0
  %1719 = vmatprep.subr.mxu0 0.0
  %1720 = vmatpush1.msra.mxu0 %v1682
  %1721 = vmatprep.subr.mxu0 0.0
  %1722 = vmatpush1.msra.mxu0 %v1680
  %1723 = vmatprep.subr.mxu0 0.0
  %1724 = vmatpush2.msra.mxu0 0.0
  %1725 = vmatprep.subr.mxu0 0.0
  %1726 = vmatpush2.msra.mxu0 0.0
  %1727 = vmatprep.subr.mxu0 0.0
  %1728 = vmatpush2.msra.mxu0 0.0
  %1729 = vmatprep.subr.mxu0 0.0
  %1730 = vmatpush2.msra.mxu0 0.0
  %1731 = vmatprep.subr.mxu0 0.0
  %1732 = vmatpush2.msra.mxu0 0.0
  %1733 = vmatprep.subr.mxu0 0.0
  %1734 = vmatpush2.msra.mxu0 0.0
  %1735 = vmatprep.subr.mxu0 0.0
  %1736 = vmatpush2.msra.mxu0 0.0
  %1737 = vmatprep.subr.mxu0 0.0
  %1738 = vmatpush2.msra.mxu0 0.0
  %1739 = vmatprep.subr.mxu0 0.0
  %1740 = vmatpush2.msra.mxu0 0.0
  %1741 = vmatprep.subr.mxu0 0.0
  %1742 = vmatpush2.msra.mxu0 0.0
  %1743 = vmatprep.subr.mxu0 0.0
  %1744 = vmatpush2.msra.mxu0 0.0
  %1745 = vmatprep.subr.mxu0 0.0
  %1746 = vmatpush2.msra.mxu0 0.0
  %1747 = vmatprep.subr.mxu0 0.0
  %1748 = vmatpush2.msra.mxu0 0.0
  %1749 = vmatprep.subr.mxu0 0.0
  %1750 = vmatpush2.msra.mxu0 0.0
  %1751 = vmatprep.subr.mxu0 0.0
  %1752 = vmatpush2.msra.mxu0 0.0
  %1753 = vmatprep.subr.mxu0 0.0
  %1754 = vmatpush2.msra.mxu0 0.0
  %1755 = vmatprep.mubr.f32.mxu0 0.0
  %1756 = vmatmul.mubr.f32.gmra.mxu0 %v1686
  %v1757 = vpop.f32.mrf.mxu0
  %v1758 = vadd.f32 0.0, %v1757
  %v1759 = vpop.f32.mrf.mxu0
  %1760 = vmatprep.mubr.f32.mxu0 0.0
  %1761 = vmatmul.mubr.f32.gmra.mxu0 %v1689
  %v1762 = vpop.f32.mrf.mxu0
  %v1763 = vadd.f32 0.0, %v1762
  %v1764 = vpop.f32.mrf.mxu0
  %1765 = vdwg.mxu0
  %v1767 = vsel %vm368, %v1671, 0
  %v1770 = vsel %vm368, %v1676, 0
  %v1773 = vsel %vm368, %v1758, 0
  %v1776 = vsel %vm368, %v1763, 0
  %1778 = vmatprep.subr.mxu0 0.0
  %1779 = vmatpush1.msra.mxu0 0.0
  %1780 = vmatprep.subr.mxu0 0.0
  %1781 = vmatpush1.msra.mxu0 0.0
  %1782 = vmatprep.subr.mxu0 0.0
  %1783 = vmatpush1.msra.mxu0 0.0
  %1784 = vmatprep.subr.mxu0 0.0
  %1785 = vmatpush1.msra.mxu0 0.0
  %1786 = vmatprep.subr.mxu0 0.0
  %1787 = vmatpush1.msra.mxu0 0.0
  %1788 = vmatprep.subr.mxu0 0.0
  %1789 = vmatpush1.msra.mxu0 0.0
  %1790 = vmatprep.subr.mxu0 0.0
  %1791 = vmatpush1.msra.mxu0 0.0
  %1792 = vmatprep.subr.mxu0 0.0
  %1793 = vmatpush1.msra.mxu0 0.0
  %1794 = vmatprep.subr.mxu0 0.0
  %1795 = vmatpush1.msra.mxu0 0.0
  %1796 = vmatprep.subr.mxu0 0.0
  %1797 = vmatpush1.msra.mxu0 0.0
  %1798 = vmatprep.subr.mxu0 0.0
  %1799 = vmatpush1.msra.mxu0 0.0
  %1800 = vmatprep.subr.mxu0 0.0
  %1801 = vmatpush1.msra.mxu0 0.0
  %1802 = vmatprep.subr.mxu0 0.0
  %1803 = vmatpush1.msra.mxu0 0.0
  %1804 = vmatprep.subr.mxu0 0.0
  %1805 = vmatpush1.msra.mxu0 0.0
  %1806 = vmatprep.subr.mxu0 0.0
  %1807 = vmatpush1.msra.mxu0 0.0
  %1808 = vmatprep.subr.mxu0 0.0
  %1809 = vmatpush1.msra.mxu0 %v360
  %1810 = vmatprep.subr.mxu0 0.0
  %1811 = vmatpush2.msra.mxu0 0.0
  %1812 = vmatprep.subr.mxu0 0.0
  %1813 = vmatpush2.msra.mxu0 0.0
  %1814 = vmatprep.subr.mxu0 0.0
  %1815 = vmatpush2.msra.mxu0 0.0
  %1816 = vmatprep.subr.mxu0 0.0
  %1817 = vmatpush2.msra.mxu0 0.0
  %1818 = vmatprep.subr.mxu0 0.0
  %1819 = vmatpush2.msra.mxu0 0.0
  %1820 = vmatprep.subr.mxu0 0.0
  %1821 = vmatpush2.msra.mxu0 0.0
  %1822 = vmatprep.subr.mxu0 0.0
  %1823 = vmatpush2.msra.mxu0 0.0
  %1824 = vmatprep.subr.mxu0 0.0
  %1825 = vmatpush2.msra.mxu0 0.0
  %1826 = vmatprep.subr.mxu0 0.0
  %1827 = vmatpush2.msra.mxu0 0.0
  %1828 = vmatprep.subr.mxu0 0.0
  %1829 = vmatpush2.msra.mxu0 0.0
  %1830 = vmatprep.subr.mxu0 0.0
  %1831 = vmatpush2.msra.mxu0 0.0
  %1832 = vmatprep.subr.mxu0 0.0
  %1833 = vmatpush2.msra.mxu0 0.0
  %1834 = vmatprep.subr.mxu0 0.0
  %1835 = vmatpush2.msra.mxu0 0.0
  %1836 = vmatprep.subr.mxu0 0.0
  %1837 = vmatpush2.msra.mxu0 0.0
  %1838 = vmatprep.subr.mxu0 0.0
  %1839 = vmatpush2.msra.mxu0 0.0
  %1840 = vmatprep.subr.mxu0 0.0
  %1841 = vmatpush2.msra.mxu0 0.0
  %1842 = vmatprep.mubr.f32.mxu0 0.0
  %1843 = vmatmul.mubr.f32.gmra.mxu0 %v1767
  %v1844 = vpop.f32.mrf.mxu0
  %v1845 = vadd.f32 0.0, %v1844
  %v1846 = vpop.f32.mrf.mxu0
  %1847 = vmatprep.mubr.f32.mxu0 0.0
  %1848 = vmatmul.mubr.f32.gmra.mxu0 %v1770
  %v1849 = vpop.f32.mrf.mxu0
  %v1850 = vadd.f32 0.0, %v1849
  %v1851 = vpop.f32.mrf.mxu0
  %1852 = vmatprep.mubr.f32.mxu0 0.0
  %1853 = vmatmul.mubr.f32.gmra.mxu0 %v1773
  %v1854 = vpop.f32.mrf.mxu0
  %v1855 = vadd.f32 0.0, %v1854
  %v1856 = vpop.f32.mrf.mxu0
  %1857 = vmatprep.mubr.f32.mxu0 0.0
  %1858 = vmatmul.mubr.f32.gmra.mxu0 %v1776
  %v1859 = vpop.f32.mrf.mxu0
  %v1860 = vadd.f32 0.0, %v1859
  %v1861 = vpop.f32.mrf.mxu0
  %1862 = vdwg.mxu0
  %v1863 = vadd.f32 %v1344, %v1845
  %v1864 = vadd.f32 %v1349, %v1850
  %v1865 = vadd.f32 %v1354, %v1855
  %v1866 = vadd.f32 %v1359, %v1860
  %1867 = vrot.lane.b32.xlu0 %v340, 104
  %v1868 = vpop.permute.xlu0 %1867
  %1869 = vrot.lane.b32.xlu0 %v345, 104
  %v1870 = vpop.permute.xlu0 %1869
  %1871 = vrot.lane.b32.xlu0 %v340, 72
  %v1872 = vpop.permute.xlu0 %1871
  %1873 = vrot.lane.b32.xlu0 %v345, 72
  %v1874 = vpop.permute.xlu0 %1873
  %v1875 = vsel %vm368, %v1868, 0
  %v1877 = vsel %vm368, %v1870, 0
  %v1879 = vsel %vm368, %v1872, 0
  %v1881 = vsel %vm368, %v1874, 0
  %1883 = vmatprep.subr.mxu0 0.0
  %1884 = vmatpush1.xpose.msra.mxu0 0.0
  %1885 = vmatprep.subr.mxu0 0.0
  %1886 = vmatpush1.xpose.msra.mxu0 0.0
  %1887 = vmatprep.subr.mxu0 0.0
  %1888 = vmatpush1.xpose.msra.mxu0 0.0
  %1889 = vmatprep.subr.mxu0 0.0
  %1890 = vmatpush1.xpose.msra.mxu0 0.0
  %1891 = vmatprep.subr.mxu0 0.0
  %1892 = vmatpush1.xpose.msra.mxu0 0.0
  %1893 = vmatprep.subr.mxu0 0.0
  %1894 = vmatpush1.xpose.msra.mxu0 0.0
  %1895 = vmatprep.subr.mxu0 0.0
  %1896 = vmatpush1.xpose.msra.mxu0 0.0
  %1897 = vmatprep.subr.mxu0 0.0
  %1898 = vmatpush1.xpose.msra.mxu0 0.0
  %1899 = vmatprep.subr.mxu0 0.0
  %1900 = vmatpush1.xpose.msra.mxu0 0.0
  %1901 = vmatprep.subr.mxu0 0.0
  %1902 = vmatpush1.xpose.msra.mxu0 0.0
  %1903 = vmatprep.subr.mxu0 0.0
  %1904 = vmatpush1.xpose.msra.mxu0 0.0
  %1905 = vmatprep.subr.mxu0 0.0
  %1906 = vmatpush1.xpose.msra.mxu0 0.0
  %1907 = vmatprep.subr.mxu0 0.0
  %1908 = vmatpush1.xpose.msra.mxu0 0.0
  %1909 = vmatprep.subr.mxu0 0.0
  %1910 = vmatpush1.xpose.msra.mxu0 0.0
  %1911 = vmatprep.subr.mxu0 0.0
  %1912 = vmatpush1.xpose.msra.mxu0 %v1881
  %1913 = vmatprep.subr.mxu0 0.0
  %1914 = vmatpush1.xpose.msra.mxu0 %v1879
  %1915 = vmatprep.subr.mxu0 0.0
  %1916 = vmatpush2.xpose.msra.mxu0 0.0
  %1917 = vmatprep.subr.mxu0 0.0
  %1918 = vmatpush2.xpose.msra.mxu0 0.0
  %1919 = vmatprep.subr.mxu0 0.0
  %1920 = vmatpush2.xpose.msra.mxu0 0.0
  %1921 = vmatprep.subr.mxu0 0.0
  %1922 = vmatpush2.xpose.msra.mxu0 0.0
  %1923 = vmatprep.subr.mxu0 0.0
  %1924 = vmatpush2.xpose.msra.mxu0 0.0
  %1925 = vmatprep.subr.mxu0 0.0
  %1926 = vmatpush2.xpose.msra.mxu0 0.0
  %1927 = vmatprep.subr.mxu0 0.0
  %1928 = vmatpush2.xpose.msra.mxu0 0.0
  %1929 = vmatprep.subr.mxu0 0.0
  %1930 = vmatpush2.xpose.msra.mxu0 0.0
  %1931 = vmatprep.subr.mxu0 0.0
  %1932 = vmatpush2.xpose.msra.mxu0 0.0
  %1933 = vmatprep.subr.mxu0 0.0
  %1934 = vmatpush2.xpose.msra.mxu0 0.0
  %1935 = vmatprep.subr.mxu0 0.0
  %1936 = vmatpush2.xpose.msra.mxu0 0.0
  %1937 = vmatprep.subr.mxu0 0.0
  %1938 = vmatpush2.xpose.msra.mxu0 0.0
  %1939 = vmatprep.subr.mxu0 0.0
  %1940 = vmatpush2.xpose.msra.mxu0 0.0
  %1941 = vmatprep.subr.mxu0 0.0
  %1942 = vmatpush2.xpose.msra.mxu0 0.0
  %1943 = vmatprep.subr.mxu0 0.0
  %1944 = vmatpush2.xpose.msra.mxu0 0.0
  %1945 = vmatprep.subr.mxu0 0.0
  %1946 = vmatpush2.xpose.msra.mxu0 0.0
  %1947 = vmatprep.mubr.f32.mxu0 0.0
  %1948 = vmatmul.mubr.f32.gmra.mxu0 %v1875
  %v1949 = vpop.f32.mrf.mxu0
  %v1950 = vadd.f32 0.0, %v1949
  %v1951 = vpop.f32.mrf.mxu0
  %1952 = vmatprep.mubr.f32.mxu0 0.0
  %1953 = vmatmul.mubr.f32.gmra.mxu0 %v1877
  %v1954 = vpop.f32.mrf.mxu0
  %v1955 = vadd.f32 0.0, %v1954
  %v1956 = vpop.f32.mrf.mxu0
  %1957 = vdwg.mxu0
  %1958 = vrot.lane.b32.xlu0 %v350, 104
  %v1959 = vpop.permute.xlu0 %1958
  %1960 = vrot.lane.b32.xlu0 %v355, 104
  %v1961 = vpop.permute.xlu0 %1960
  %1962 = vrot.lane.b32.xlu0 %v350, 72
  %v1963 = vpop.permute.xlu0 %1962
  %1964 = vrot.lane.b32.xlu0 %v355, 72
  %v1965 = vpop.permute.xlu0 %1964
  %v1966 = vsel %vm368, %v1959, 0
  %v1968 = vsel %vm368, %v1961, 0
  %v1970 = vsel %vm368, %v1963, 0
  %v1972 = vsel %vm368, %v1965, 0
  %1974 = vmatprep.subr.mxu0 0.0
  %1975 = vmatpush1.xpose.msra.mxu0 0.0
  %1976 = vmatprep.subr.mxu0 0.0
  %1977 = vmatpush1.xpose.msra.mxu0 0.0
  %1978 = vmatprep.subr.mxu0 0.0
  %1979 = vmatpush1.xpose.msra.mxu0 0.0
  %1980 = vmatprep.subr.mxu0 0.0
  %1981 = vmatpush1.xpose.msra.mxu0 0.0
  %1982 = vmatprep.subr.mxu0 0.0
  %1983 = vmatpush1.xpose.msra.mxu0 0.0
  %1984 = vmatprep.subr.mxu0 0.0
  %1985 = vmatpush1.xpose.msra.mxu0 0.0
  %1986 = vmatprep.subr.mxu0 0.0
  %1987 = vmatpush1.xpose.msra.mxu0 0.0
  %1988 = vmatprep.subr.mxu0 0.0
  %1989 = vmatpush1.xpose.msra.mxu0 0.0
  %1990 = vmatprep.subr.mxu0 0.0
  %1991 = vmatpush1.xpose.msra.mxu0 0.0
  %1992 = vmatprep.subr.mxu0 0.0
  %1993 = vmatpush1.xpose.msra.mxu0 0.0
  %1994 = vmatprep.subr.mxu0 0.0
  %1995 = vmatpush1.xpose.msra.mxu0 0.0
  %1996 = vmatprep.subr.mxu0 0.0
  %1997 = vmatpush1.xpose.msra.mxu0 0.0
  %1998 = vmatprep.subr.mxu0 0.0
  %1999 = vmatpush1.xpose.msra.mxu0 0.0
  %2000 = vmatprep.subr.mxu0 0.0
  %2001 = vmatpush1.xpose.msra.mxu0 0.0
  %2002 = vmatprep.subr.mxu0 0.0
  %2003 = vmatpush1.xpose.msra.mxu0 %v1972
  %2004 = vmatprep.subr.mxu0 0.0
  %2005 = vmatpush1.xpose.msra.mxu0 %v1970
  %2006 = vmatprep.subr.mxu0 0.0
  %2007 = vmatpush2.xpose.msra.mxu0 0.0
  %2008 = vmatprep.subr.mxu0 0.0
  %2009 = vmatpush2.xpose.msra.mxu0 0.0
  %2010 = vmatprep.subr.mxu0 0.0
  %2011 = vmatpush2.xpose.msra.mxu0 0.0
  %2012 = vmatprep.subr.mxu0 0.0
  %2013 = vmatpush2.xpose.msra.mxu0 0.0
  %2014 = vmatprep.subr.mxu0 0.0
  %2015 = vmatpush2.xpose.msra.mxu0 0.0
  %2016 = vmatprep.subr.mxu0 0.0
  %2017 = vmatpush2.xpose.msra.mxu0 0.0
  %2018 = vmatprep.subr.mxu0 0.0
  %2019 = vmatpush2.xpose.msra.mxu0 0.0
  %2020 = vmatprep.subr.mxu0 0.0
  %2021 = vmatpush2.xpose.msra.mxu0 0.0
  %2022 = vmatprep.subr.mxu0 0.0
  %2023 = vmatpush2.xpose.msra.mxu0 0.0
  %2024 = vmatprep.subr.mxu0 0.0
  %2025 = vmatpush2.xpose.msra.mxu0 0.0
  %2026 = vmatprep.subr.mxu0 0.0
  %2027 = vmatpush2.xpose.msra.mxu0 0.0
  %2028 = vmatprep.subr.mxu0 0.0
  %2029 = vmatpush2.xpose.msra.mxu0 0.0
  %2030 = vmatprep.subr.mxu0 0.0
  %2031 = vmatpush2.xpose.msra.mxu0 0.0
  %2032 = vmatprep.subr.mxu0 0.0
  %2033 = vmatpush2.xpose.msra.mxu0 0.0
  %2034 = vmatprep.subr.mxu0 0.0
  %2035 = vmatpush2.xpose.msra.mxu0 0.0
  %2036 = vmatprep.subr.mxu0 0.0
  %2037 = vmatpush2.xpose.msra.mxu0 0.0
  %2038 = vmatprep.mubr.f32.mxu0 0.0
  %2039 = vmatmul.mubr.f32.gmra.mxu0 %v1966
  %v2040 = vpop.f32.mrf.mxu0
  %v2041 = vadd.f32 0.0, %v2040
  %v2042 = vpop.f32.mrf.mxu0
  %2043 = vmatprep.mubr.f32.mxu0 0.0
  %2044 = vmatmul.mubr.f32.gmra.mxu0 %v1968
  %v2045 = vpop.f32.mrf.mxu0
  %v2046 = vadd.f32 0.0, %v2045
  %v2047 = vpop.f32.mrf.mxu0
  %2048 = vdwg.mxu0
  %v2049 = vmul.f32 %v1950, 0.35355338
  %v2050 = vmul.f32 %v1955, 0.35355338
  %v2051 = vmul.f32 %v2041, 0.35355338
  %v2052 = vmul.f32 %v2046, 0.35355338
  %v2053 = vsel %vm545, %v2049, -inf
  %2054 = vmax.xlane.f32.xlu0 %v2053
  %v2055 = vpop.xlane.xlu0 %2054
  %v2056 = vsel %vm545, %v2050, -inf
  %2057 = vmax.xlane.f32.xlu0 %v2056
  %v2058 = vpop.xlane.xlu0 %2057
  %v2059 = vsel %vm545, %v2051, -inf
  %2060 = vmax.xlane.f32.xlu0 %v2059
  %v2061 = vpop.xlane.xlu0 %2060
  %v2062 = vsel %vm545, %v2052, -inf
  %2063 = vmax.xlane.f32.xlu0 %v2062
  %v2064 = vpop.xlane.xlu0 %2063
  %v2065 = vsub.f32 %v2049, %v2055
  %v2066 = vsub.f32 %v2050, %v2058
  %v2067 = vsub.f32 %v2051, %v2061
  %v2068 = vsub.f32 %v2052, %v2064
  %v2069 = vmul.f32 %v2065, 1.442695
  %v2070 = vpow.pop %v2069
  %v2071 = vmul.f32 %v2066, 1.442695
  %v2072 = vpow.pop %v2071
  %v2073 = vmul.f32 %v2067, 1.442695
  %v2074 = vpow.pop %v2073
  %v2075 = vmul.f32 %v2068, 1.442695
  %v2076 = vpow.pop %v2075
  %v2077 = vsel %vm545, %v2070, 0.0
  %2078 = vadd.xlane.f32.xlu0 %v2077
  %v2079 = vpop.xlane.xlu0 %2078
  %v2080 = vsel %vm545, %v2072, 0.0
  %2081 = vadd.xlane.f32.xlu0 %v2080
  %v2082 = vpop.xlane.xlu0 %2081
  %v2083 = vsel %vm545, %v2074, 0.0
  %2084 = vadd.xlane.f32.xlu0 %v2083
  %v2085 = vpop.xlane.xlu0 %2084
  %v2086 = vsel %vm545, %v2076, 0.0
  %2087 = vadd.xlane.f32.xlu0 %v2086
  %v2088 = vpop.xlane.xlu0 %2087
  %v2089 = vrcp.pop %v2079
  %v2090 = vrcp.pop %v2082
  %v2091 = vrcp.pop %v2085
  %v2092 = vrcp.pop %v2088
  %v2093 = vmul.f32 %v2070, %v2089
  %v2094 = vmul.f32 %v2072, %v2090
  %v2095 = vmul.f32 %v2074, %v2091
  %v2096 = vmul.f32 %v2076, %v2092
  %2097 = vrot.lane.b32.xlu0 %v340, 40
  %v2098 = vpop.permute.xlu0 %2097
  %2099 = vrot.lane.b32.xlu0 %v345, 40
  %v2100 = vpop.permute.xlu0 %2099
  %v2104 = vsel %vm545, %v2093, 0
  %v2107 = vsel %vm545, %v2094, 0
  %2109 = vmatprep.subr.mxu0 0.0
  %2110 = vmatpush1.msra.mxu0 0.0
  %2111 = vmatprep.subr.mxu0 0.0
  %2112 = vmatpush1.msra.mxu0 0.0
  %2113 = vmatprep.subr.mxu0 0.0
  %2114 = vmatpush1.msra.mxu0 0.0
  %2115 = vmatprep.subr.mxu0 0.0
  %2116 = vmatpush1.msra.mxu0 0.0
  %2117 = vmatprep.subr.mxu0 0.0
  %2118 = vmatpush1.msra.mxu0 0.0
  %2119 = vmatprep.subr.mxu0 0.0
  %2120 = vmatpush1.msra.mxu0 0.0
  %2121 = vmatprep.subr.mxu0 0.0
  %2122 = vmatpush1.msra.mxu0 0.0
  %2123 = vmatprep.subr.mxu0 0.0
  %2124 = vmatpush1.msra.mxu0 0.0
  %2125 = vmatprep.subr.mxu0 0.0
  %2126 = vmatpush1.msra.mxu0 0.0
  %2127 = vmatprep.subr.mxu0 0.0
  %2128 = vmatpush1.msra.mxu0 0.0
  %2129 = vmatprep.subr.mxu0 0.0
  %2130 = vmatpush1.msra.mxu0 0.0
  %2131 = vmatprep.subr.mxu0 0.0
  %2132 = vmatpush1.msra.mxu0 0.0
  %2133 = vmatprep.subr.mxu0 0.0
  %2134 = vmatpush1.msra.mxu0 0.0
  %2135 = vmatprep.subr.mxu0 0.0
  %2136 = vmatpush1.msra.mxu0 0.0
  %2137 = vmatprep.subr.mxu0 0.0
  %2138 = vmatpush1.msra.mxu0 %v2100
  %2139 = vmatprep.subr.mxu0 0.0
  %2140 = vmatpush1.msra.mxu0 %v2098
  %2141 = vmatprep.subr.mxu0 0.0
  %2142 = vmatpush2.msra.mxu0 0.0
  %2143 = vmatprep.subr.mxu0 0.0
  %2144 = vmatpush2.msra.mxu0 0.0
  %2145 = vmatprep.subr.mxu0 0.0
  %2146 = vmatpush2.msra.mxu0 0.0
  %2147 = vmatprep.subr.mxu0 0.0
  %2148 = vmatpush2.msra.mxu0 0.0
  %2149 = vmatprep.subr.mxu0 0.0
  %2150 = vmatpush2.msra.mxu0 0.0
  %2151 = vmatprep.subr.mxu0 0.0
  %2152 = vmatpush2.msra.mxu0 0.0
  %2153 = vmatprep.subr.mxu0 0.0
  %2154 = vmatpush2.msra.mxu0 0.0
  %2155 = vmatprep.subr.mxu0 0.0
  %2156 = vmatpush2.msra.mxu0 0.0
  %2157 = vmatprep.subr.mxu0 0.0
  %2158 = vmatpush2.msra.mxu0 0.0
  %2159 = vmatprep.subr.mxu0 0.0
  %2160 = vmatpush2.msra.mxu0 0.0
  %2161 = vmatprep.subr.mxu0 0.0
  %2162 = vmatpush2.msra.mxu0 0.0
  %2163 = vmatprep.subr.mxu0 0.0
  %2164 = vmatpush2.msra.mxu0 0.0
  %2165 = vmatprep.subr.mxu0 0.0
  %2166 = vmatpush2.msra.mxu0 0.0
  %2167 = vmatprep.subr.mxu0 0.0
  %2168 = vmatpush2.msra.mxu0 0.0
  %2169 = vmatprep.subr.mxu0 0.0
  %2170 = vmatpush2.msra.mxu0 0.0
  %2171 = vmatprep.subr.mxu0 0.0
  %2172 = vmatpush2.msra.mxu0 0.0
  %2173 = vmatprep.mubr.f32.mxu0 0.0
  %2174 = vmatmul.mubr.f32.gmra.mxu0 %v2104
  %v2175 = vpop.f32.mrf.mxu0
  %v2176 = vadd.f32 0.0, %v2175
  %v2177 = vpop.f32.mrf.mxu0
  %2178 = vmatprep.mubr.f32.mxu0 0.0
  %2179 = vmatmul.mubr.f32.gmra.mxu0 %v2107
  %v2180 = vpop.f32.mrf.mxu0
  %v2181 = vadd.f32 0.0, %v2180
  %v2182 = vpop.f32.mrf.mxu0
  %2183 = vdwg.mxu0
  %2184 = vrot.lane.b32.xlu0 %v350, 40
  %v2185 = vpop.permute.xlu0 %2184
  %2186 = vrot.lane.b32.xlu0 %v355, 40
  %v2187 = vpop.permute.xlu0 %2186
  %v2191 = vsel %vm545, %v2095, 0
  %v2194 = vsel %vm545, %v2096, 0
  %2196 = vmatprep.subr.mxu0 0.0
  %2197 = vmatpush1.msra.mxu0 0.0
  %2198 = vmatprep.subr.mxu0 0.0
  %2199 = vmatpush1.msra.mxu0 0.0
  %2200 = vmatprep.subr.mxu0 0.0
  %2201 = vmatpush1.msra.mxu0 0.0
  %2202 = vmatprep.subr.mxu0 0.0
  %2203 = vmatpush1.msra.mxu0 0.0
  %2204 = vmatprep.subr.mxu0 0.0
  %2205 = vmatpush1.msra.mxu0 0.0
  %2206 = vmatprep.subr.mxu0 0.0
  %2207 = vmatpush1.msra.mxu0 0.0
  %2208 = vmatprep.subr.mxu0 0.0
  %2209 = vmatpush1.msra.mxu0 0.0
  %2210 = vmatprep.subr.mxu0 0.0
  %2211 = vmatpush1.msra.mxu0 0.0
  %2212 = vmatprep.subr.mxu0 0.0
  %2213 = vmatpush1.msra.mxu0 0.0
  %2214 = vmatprep.subr.mxu0 0.0
  %2215 = vmatpush1.msra.mxu0 0.0
  %2216 = vmatprep.subr.mxu0 0.0
  %2217 = vmatpush1.msra.mxu0 0.0
  %2218 = vmatprep.subr.mxu0 0.0
  %2219 = vmatpush1.msra.mxu0 0.0
  %2220 = vmatprep.subr.mxu0 0.0
  %2221 = vmatpush1.msra.mxu0 0.0
  %2222 = vmatprep.subr.mxu0 0.0
  %2223 = vmatpush1.msra.mxu0 0.0
  %2224 = vmatprep.subr.mxu0 0.0
  %2225 = vmatpush1.msra.mxu0 %v2187
  %2226 = vmatprep.subr.mxu0 0.0
  %2227 = vmatpush1.msra.mxu0 %v2185
  %2228 = vmatprep.subr.mxu0 0.0
  %2229 = vmatpush2.msra.mxu0 0.0
  %2230 = vmatprep.subr.mxu0 0.0
  %2231 = vmatpush2.msra.mxu0 0.0
  %2232 = vmatprep.subr.mxu0 0.0
  %2233 = vmatpush2.msra.mxu0 0.0
  %2234 = vmatprep.subr.mxu0 0.0
  %2235 = vmatpush2.msra.mxu0 0.0
  %2236 = vmatprep.subr.mxu0 0.0
  %2237 = vmatpush2.msra.mxu0 0.0
  %2238 = vmatprep.subr.mxu0 0.0
  %2239 = vmatpush2.msra.mxu0 0.0
  %2240 = vmatprep.subr.mxu0 0.0
  %2241 = vmatpush2.msra.mxu0 0.0
  %2242 = vmatprep.subr.mxu0 0.0
  %2243 = vmatpush2.msra.mxu0 0.0
  %2244 = vmatprep.subr.mxu0 0.0
  %2245 = vmatpush2.msra.mxu0 0.0
  %2246 = vmatprep.subr.mxu0 0.0
  %2247 = vmatpush2.msra.mxu0 0.0
  %2248 = vmatprep.subr.mxu0 0.0
  %2249 = vmatpush2.msra.mxu0 0.0
  %2250 = vmatprep.subr.mxu0 0.0
  %2251 = vmatpush2.msra.mxu0 0.0
  %2252 = vmatprep.subr.mxu0 0.0
  %2253 = vmatpush2.msra.mxu0 0.0
  %2254 = vmatprep.subr.mxu0 0.0
  %2255 = vmatpush2.msra.mxu0 0.0
  %2256 = vmatprep.subr.mxu0 0.0
  %2257 = vmatpush2.msra.mxu0 0.0
  %2258 = vmatprep.subr.mxu0 0.0
  %2259 = vmatpush2.msra.mxu0 0.0
  %2260 = vmatprep.mubr.f32.mxu0 0.0
  %2261 = vmatmul.mubr.f32.gmra.mxu0 %v2191
  %v2262 = vpop.f32.mrf.mxu0
  %v2263 = vadd.f32 0.0, %v2262
  %v2264 = vpop.f32.mrf.mxu0
  %2265 = vmatprep.mubr.f32.mxu0 0.0
  %2266 = vmatmul.mubr.f32.gmra.mxu0 %v2194
  %v2267 = vpop.f32.mrf.mxu0
  %v2268 = vadd.f32 0.0, %v2267
  %v2269 = vpop.f32.mrf.mxu0
  %2270 = vdwg.mxu0
  %v2272 = vsel %vm368, %v2176, 0
  %v2275 = vsel %vm368, %v2181, 0
  %v2278 = vsel %vm368, %v2263, 0
  %v2281 = vsel %vm368, %v2268, 0
  %2283 = vmatprep.subr.mxu0 0.0
  %2284 = vmatpush1.msra.mxu0 0.0
  %2285 = vmatprep.subr.mxu0 0.0
  %2286 = vmatpush1.msra.mxu0 0.0
  %2287 = vmatprep.subr.mxu0 0.0
  %2288 = vmatpush1.msra.mxu0 0.0
  %2289 = vmatprep.subr.mxu0 0.0
  %2290 = vmatpush1.msra.mxu0 0.0
  %2291 = vmatprep.subr.mxu0 0.0
  %2292 = vmatpush1.msra.mxu0 0.0
  %2293 = vmatprep.subr.mxu0 0.0
  %2294 = vmatpush1.msra.mxu0 0.0
  %2295 = vmatprep.subr.mxu0 0.0
  %2296 = vmatpush1.msra.mxu0 0.0
  %2297 = vmatprep.subr.mxu0 0.0
  %2298 = vmatpush1.msra.mxu0 0.0
  %2299 = vmatprep.subr.mxu0 0.0
  %2300 = vmatpush1.msra.mxu0 0.0
  %2301 = vmatprep.subr.mxu0 0.0
  %2302 = vmatpush1.msra.mxu0 0.0
  %2303 = vmatprep.subr.mxu0 0.0
  %2304 = vmatpush1.msra.mxu0 0.0
  %2305 = vmatprep.subr.mxu0 0.0
  %2306 = vmatpush1.msra.mxu0 0.0
  %2307 = vmatprep.subr.mxu0 0.0
  %2308 = vmatpush1.msra.mxu0 0.0
  %2309 = vmatprep.subr.mxu0 0.0
  %2310 = vmatpush1.msra.mxu0 0.0
  %2311 = vmatprep.subr.mxu0 0.0
  %2312 = vmatpush1.msra.mxu0 0.0
  %2313 = vmatprep.subr.mxu0 0.0
  %2314 = vmatpush1.msra.mxu0 %v361
  %2315 = vmatprep.subr.mxu0 0.0
  %2316 = vmatpush2.msra.mxu0 0.0
  %2317 = vmatprep.subr.mxu0 0.0
  %2318 = vmatpush2.msra.mxu0 0.0
  %2319 = vmatprep.subr.mxu0 0.0
  %2320 = vmatpush2.msra.mxu0 0.0
  %2321 = vmatprep.subr.mxu0 0.0
  %2322 = vmatpush2.msra.mxu0 0.0
  %2323 = vmatprep.subr.mxu0 0.0
  %2324 = vmatpush2.msra.mxu0 0.0
  %2325 = vmatprep.subr.mxu0 0.0
  %2326 = vmatpush2.msra.mxu0 0.0
  %2327 = vmatprep.subr.mxu0 0.0
  %2328 = vmatpush2.msra.mxu0 0.0
  %2329 = vmatprep.subr.mxu0 0.0
  %2330 = vmatpush2.msra.mxu0 0.0
  %2331 = vmatprep.subr.mxu0 0.0
  %2332 = vmatpush2.msra.mxu0 0.0
  %2333 = vmatprep.subr.mxu0 0.0
  %2334 = vmatpush2.msra.mxu0 0.0
  %2335 = vmatprep.subr.mxu0 0.0
  %2336 = vmatpush2.msra.mxu0 0.0
  %2337 = vmatprep.subr.mxu0 0.0
  %2338 = vmatpush2.msra.mxu0 0.0
  %2339 = vmatprep.subr.mxu0 0.0
  %2340 = vmatpush2.msra.mxu0 0.0
  %2341 = vmatprep.subr.mxu0 0.0
  %2342 = vmatpush2.msra.mxu0 0.0
  %2343 = vmatprep.subr.mxu0 0.0
  %2344 = vmatpush2.msra.mxu0 0.0
  %2345 = vmatprep.subr.mxu0 0.0
  %2346 = vmatpush2.msra.mxu0 0.0
  %2347 = vmatprep.mubr.f32.mxu0 0.0
  %2348 = vmatmul.mubr.f32.gmra.mxu0 %v2272
  %v2349 = vpop.f32.mrf.mxu0
  %v2350 = vadd.f32 0.0, %v2349
  %v2351 = vpop.f32.mrf.mxu0
  %2352 = vmatprep.mubr.f32.mxu0 0.0
  %2353 = vmatmul.mubr.f32.gmra.mxu0 %v2275
  %v2354 = vpop.f32.mrf.mxu0
  %v2355 = vadd.f32 0.0, %v2354
  %v2356 = vpop.f32.mrf.mxu0
  %2357 = vmatprep.mubr.f32.mxu0 0.0
  %2358 = vmatmul.mubr.f32.gmra.mxu0 %v2278
  %v2359 = vpop.f32.mrf.mxu0
  %v2360 = vadd.f32 0.0, %v2359
  %v2361 = vpop.f32.mrf.mxu0
  %2362 = vmatprep.mubr.f32.mxu0 0.0
  %2363 = vmatmul.mubr.f32.gmra.mxu0 %v2281
  %v2364 = vpop.f32.mrf.mxu0
  %v2365 = vadd.f32 0.0, %v2364
  %v2366 = vpop.f32.mrf.mxu0
  %2367 = vdwg.mxu0
  %v2368 = vadd.f32 %v1863, %v2350
  %v2369 = vadd.f32 %v1864, %v2355
  %v2370 = vadd.f32 %v1865, %v2360
  %v2371 = vadd.f32 %v1866, %v2365
  %v2372 = vadd.f32 %v170, %v2368
  %v2373 = vadd.f32 %v171, %v2369
  %v2374 = vadd.f32 %v172, %v2370
  %v2375 = vadd.f32 %v173, %v2371
  %v2376 = vld [vmem:[%s9] sm:$0x1]
  %v2378 = vlaneseq
  %v2379 = vshrl.u32 %v2378, 7
  %v2380 = vsub.s32 0, %v2379
  %v2381 = vrot.slane %v2376, %v2380
  %v2383 = vadd.f32 %v2372, %v2381
  %v2384 = vadd.f32 %v2373, %v2381
  %v2385 = vadd.f32 %v2374, %v2381
  %v2386 = vadd.f32 %v2375, %v2381
  %v2387 = vld [vmem:[%s10] sm:$0x1]
  %v2388 = vld [vmem:[%s11] sm:$0x1]
  %v2389 = vsel %vm176, %v2383, 0.0
  %2390 = vadd.xlane.f32.xlu0 %v2389
  %v2391 = vpop.xlane.xlu0 %2390
  %v2392 = vsel %vm176, %v2384, 0.0
  %2393 = vadd.xlane.f32.xlu0 %v2392
  %v2394 = vpop.xlane.xlu0 %2393
  %v2395 = vsel %vm176, %v2385, 0.0
  %2396 = vadd.xlane.f32.xlu0 %v2395
  %v2397 = vpop.xlane.xlu0 %2396
  %v2398 = vsel %vm176, %v2386, 0.0
  %2399 = vadd.xlane.f32.xlu0 %v2398
  %v2400 = vpop.xlane.xlu0 %2399
  %v2401 = vmul.f32 %v2391, %v189
  %v2402 = vmul.f32 %v2394, %v189
  %v2403 = vmul.f32 %v2397, %v189
  %v2404 = vmul.f32 %v2400, %v189
  %v2405 = vsub.f32 %v2383, %v2401
  %v2406 = vsub.f32 %v2384, %v2402
  %v2407 = vsub.f32 %v2385, %v2403
  %v2408 = vsub.f32 %v2386, %v2404
  %v2409 = vmul.f32 %v2405, %v2405
  %v2410 = vmul.f32 %v2406, %v2406
  %v2411 = vmul.f32 %v2407, %v2407
  %v2412 = vmul.f32 %v2408, %v2408
  %v2413 = vsel %vm176, %v2409, 0.0
  %2414 = vadd.xlane.f32.xlu0 %v2413
  %v2415 = vpop.xlane.xlu0 %2414
  %v2416 = vsel %vm176, %v2410, 0.0
  %2417 = vadd.xlane.f32.xlu0 %v2416
  %v2418 = vpop.xlane.xlu0 %2417
  %v2419 = vsel %vm176, %v2411, 0.0
  %2420 = vadd.xlane.f32.xlu0 %v2419
  %v2421 = vpop.xlane.xlu0 %2420
  %v2422 = vsel %vm176, %v2412, 0.0
  %2423 = vadd.xlane.f32.xlu0 %v2422
  %v2424 = vpop.xlane.xlu0 %2423
  %v2425 = vmul.f32 %v2415, %v189
  %v2426 = vmul.f32 %v2418, %v189
  %v2427 = vmul.f32 %v2421, %v189
  %v2428 = vmul.f32 %v2424, %v189
  %v2429 = vadd.f32 %v2425, 1e-06
  %v2430 = vadd.f32 %v2426, 1e-06
  %v2431 = vadd.f32 %v2427, 1e-06
  %v2432 = vadd.f32 %v2428, 1e-06
  %v2433 = vrsqrt.pop %v2429
  %v2434 = vrsqrt.pop %v2430
  %v2435 = vrsqrt.pop %v2431
  %v2436 = vrsqrt.pop %v2432
  %v2437 = vmul.f32 %v2405, %v2433
  %v2438 = vmul.f32 %v2406, %v2434
  %v2439 = vmul.f32 %v2407, %v2435
  %v2440 = vmul.f32 %v2408, %v2436
  %v2442 = vlaneseq
  %v2443 = vshrl.u32 %v2442, 7
  %v2444 = vsub.s32 0, %v2443
  %v2445 = vrot.slane %v2387, %v2444
  %v2447 = vmul.f32 %v2437, %v2445
  %v2448 = vmul.f32 %v2438, %v2445
  %v2449 = vmul.f32 %v2439, %v2445
  %v2450 = vmul.f32 %v2440, %v2445
  %v2452 = vlaneseq
  %v2453 = vshrl.u32 %v2452, 7
  %v2454 = vsub.s32 0, %v2453
  %v2455 = vrot.slane %v2388, %v2454
  %v2457 = vadd.f32 %v2447, %v2455
  %v2458 = vadd.f32 %v2448, %v2455
  %v2459 = vadd.f32 %v2449, %v2455
  %v2460 = vadd.f32 %v2450, %v2455
  %v2461 = vld [vmem:[%s12] sm:$0xff]
  %v2462 = vld [vmem:[%s12 + $0x8] sm:$0xff]
  %v2463 = vld [vmem:[%s12 + $0x10] sm:$0xff]
  %v2464 = vld [vmem:[%s12 + $0x18] sm:$0xff]
  %v2465 = vld [vmem:[%s13] sm:$0x1]
  %v2467 = vlaneseq
  %v2468 = vshrl.u32 %v2467, 7
  %v2469 = vsub.s32 0, %v2468
  %v2470 = vrot.slane %v2465, %v2469
  %v2473 = vsel %vm176, %v2457, 0
  %v2476 = vsel %vm176, %v2458, 0
  %v2479 = vsel %vm176, %v2459, 0
  %v2482 = vsel %vm176, %v2460, 0
  %2484 = vmatprep.subr.mxu0 0.0
  %2485 = vmatpush1.msra.mxu0 0.0
  %2486 = vmatprep.subr.mxu0 0.0
  %2487 = vmatpush1.msra.mxu0 0.0
  %2488 = vmatprep.subr.mxu0 0.0
  %2489 = vmatpush1.msra.mxu0 0.0
  %2490 = vmatprep.subr.mxu0 0.0
  %2491 = vmatpush1.msra.mxu0 0.0
  %2492 = vmatprep.subr.mxu0 0.0
  %2493 = vmatpush1.msra.mxu0 0.0
  %2494 = vmatprep.subr.mxu0 0.0
  %2495 = vmatpush1.msra.mxu0 0.0
  %2496 = vmatprep.subr.mxu0 0.0
  %2497 = vmatpush1.msra.mxu0 0.0
  %2498 = vmatprep.subr.mxu0 0.0
  %2499 = vmatpush1.msra.mxu0 0.0
  %2500 = vmatprep.subr.mxu0 0.0
  %2501 = vmatpush1.msra.mxu0 0.0
  %2502 = vmatprep.subr.mxu0 0.0
  %2503 = vmatpush1.msra.mxu0 0.0
  %2504 = vmatprep.subr.mxu0 0.0
  %2505 = vmatpush1.msra.mxu0 0.0
  %2506 = vmatprep.subr.mxu0 0.0
  %2507 = vmatpush1.msra.mxu0 0.0
  %2508 = vmatprep.subr.mxu0 0.0
  %2509 = vmatpush1.msra.mxu0 %v2464
  %2510 = vmatprep.subr.mxu0 0.0
  %2511 = vmatpush1.msra.mxu0 %v2463
  %2512 = vmatprep.subr.mxu0 0.0
  %2513 = vmatpush1.msra.mxu0 %v2462
  %2514 = vmatprep.subr.mxu0 0.0
  %2515 = vmatpush1.msra.mxu0 %v2461
  %2516 = vmatprep.subr.mxu0 0.0
  %2517 = vmatpush2.msra.mxu0 0.0
  %2518 = vmatprep.subr.mxu0 0.0
  %2519 = vmatpush2.msra.mxu0 0.0
  %2520 = vmatprep.subr.mxu0 0.0
  %2521 = vmatpush2.msra.mxu0 0.0
  %2522 = vmatprep.subr.mxu0 0.0
  %2523 = vmatpush2.msra.mxu0 0.0
  %2524 = vmatprep.subr.mxu0 0.0
  %2525 = vmatpush2.msra.mxu0 0.0
  %2526 = vmatprep.subr.mxu0 0.0
  %2527 = vmatpush2.msra.mxu0 0.0
  %2528 = vmatprep.subr.mxu0 0.0
  %2529 = vmatpush2.msra.mxu0 0.0
  %2530 = vmatprep.subr.mxu0 0.0
  %2531 = vmatpush2.msra.mxu0 0.0
  %2532 = vmatprep.subr.mxu0 0.0
  %2533 = vmatpush2.msra.mxu0 0.0
  %2534 = vmatprep.subr.mxu0 0.0
  %2535 = vmatpush2.msra.mxu0 0.0
  %2536 = vmatprep.subr.mxu0 0.0
  %2537 = vmatpush2.msra.mxu0 0.0
  %2538 = vmatprep.subr.mxu0 0.0
  %2539 = vmatpush2.msra.mxu0 0.0
  %2540 = vmatprep.subr.mxu0 0.0
  %2541 = vmatpush2.msra.mxu0 0.0
  %2542 = vmatprep.subr.mxu0 0.0
  %2543 = vmatpush2.msra.mxu0 0.0
  %2544 = vmatprep.subr.mxu0 0.0
  %2545 = vmatpush2.msra.mxu0 0.0
  %2546 = vmatprep.subr.mxu0 0.0
  %2547 = vmatpush2.msra.mxu0 0.0
  %2548 = vmatprep.mubr.f32.mxu0 0.0
  %2549 = vmatmul.mubr.f32.gmra.mxu0 %v2473
  %v2550 = vpop.f32.mrf.mxu0
  %v2551 = vadd.f32 %v2470, %v2550
  %v2552 = vpop.f32.mrf.mxu0
  %2553 = vmatprep.mubr.f32.mxu0 0.0
  %2554 = vmatmul.mubr.f32.gmra.mxu0 %v2476
  %v2555 = vpop.f32.mrf.mxu0
  %v2556 = vadd.f32 %v2470, %v2555
  %v2557 = vpop.f32.mrf.mxu0
  %2558 = vmatprep.mubr.f32.mxu0 0.0
  %2559 = vmatmul.mubr.f32.gmra.mxu0 %v2479
  %v2560 = vpop.f32.mrf.mxu0
  %v2561 = vadd.f32 %v2470, %v2560
  %v2562 = vpop.f32.mrf.mxu0
  %2563 = vmatprep.mubr.f32.mxu0 0.0
  %2564 = vmatmul.mubr.f32.gmra.mxu0 %v2482
  %v2565 = vpop.f32.mrf.mxu0
  %v2566 = vadd.f32 %v2470, %v2565
  %v2567 = vpop.f32.mrf.mxu0
  %2568 = vdwg.mxu0
  %v2569 = vmul.f32 %v2551, %v2551
  %v2570 = vmul.f32 %v2556, %v2556
  %v2571 = vmul.f32 %v2561, %v2561
  %v2572 = vmul.f32 %v2566, %v2566
  %v2573 = vmul.f32 %v2551, %v2569
  %v2574 = vmul.f32 %v2556, %v2570
  %v2575 = vmul.f32 %v2561, %v2571
  %v2576 = vmul.f32 %v2566, %v2572
  %v2577 = vmul.f32 %v2573, 0.044715
  %v2578 = vmul.f32 %v2574, 0.044715
  %v2579 = vmul.f32 %v2575, 0.044715
  %v2580 = vmul.f32 %v2576, 0.044715
  %v2581 = vadd.f32 %v2551, %v2577
  %v2582 = vadd.f32 %v2556, %v2578
  %v2583 = vadd.f32 %v2561, %v2579
  %v2584 = vadd.f32 %v2566, %v2580
  %v2585 = vmul.f32 %v2581, 0.7978846
  %v2586 = vmul.f32 %v2582, 0.7978846
  %v2587 = vmul.f32 %v2583, 0.7978846
  %v2588 = vmul.f32 %v2584, 0.7978846
  %v2589 = vtanh.pop %v2585
  %v2590 = vtanh.pop %v2586
  %v2591 = vtanh.pop %v2587
  %v2592 = vtanh.pop %v2588
  %v2593 = vadd.f32 %v2589, 1.0
  %v2594 = vadd.f32 %v2590, 1.0
  %v2595 = vadd.f32 %v2591, 1.0
  %v2596 = vadd.f32 %v2592, 1.0
  %v2597 = vmul.f32 %v2593, 0.5
  %v2598 = vmul.f32 %v2594, 0.5
  %v2599 = vmul.f32 %v2595, 0.5
  %v2600 = vmul.f32 %v2596, 0.5
  %v2601 = vmul.f32 %v2551, %v2597
  %v2602 = vmul.f32 %v2556, %v2598
  %v2603 = vmul.f32 %v2561, %v2599
  %v2604 = vmul.f32 %v2566, %v2600
  %v2605 = vld [vmem:[%s14] sm:$0xff]
  %v2606 = vld [vmem:[%s14 + $0x8] sm:$0xff]
  %v2607 = vld [vmem:[%s14 + $0x10] sm:$0xff]
  %v2608 = vld [vmem:[%s14 + $0x18] sm:$0xff]
  %v2609 = vld [vmem:[%s14 + $0x20] sm:$0xff]
  %v2610 = vld [vmem:[%s14 + $0x28] sm:$0xff]
  %v2611 = vld [vmem:[%s14 + $0x30] sm:$0xff]
  %v2612 = vld [vmem:[%s14 + $0x38] sm:$0xff]
  %vm2613 = vcmask 523264
  %v2615 = vsel %vm2613, %v2601, 0
  %v2618 = vsel %vm2613, %v2602, 0
  %v2621 = vsel %vm2613, %v2603, 0
  %v2624 = vsel %vm2613, %v2604, 0
  %2626 = vmatprep.subr.mxu0 0.0
  %2627 = vmatpush1.msra.mxu0 0.0
  %2628 = vmatprep.subr.mxu0 0.0
  %2629 = vmatpush1.msra.mxu0 0.0
  %2630 = vmatprep.subr.mxu0 0.0
  %2631 = vmatpush1.msra.mxu0 0.0
  %2632 = vmatprep.subr.mxu0 0.0
  %2633 = vmatpush1.msra.mxu0 0.0
  %2634 = vmatprep.subr.mxu0 0.0
  %2635 = vmatpush1.msra.mxu0 0.0
  %2636 = vmatprep.subr.mxu0 0.0
  %2637 = vmatpush1.msra.mxu0 0.0
  %2638 = vmatprep.subr.mxu0 0.0
  %2639 = vmatpush1.msra.mxu0 0.0
  %2640 = vmatprep.subr.mxu0 0.0
  %2641 = vmatpush1.msra.mxu0 0.0
  %2642 = vmatprep.subr.mxu0 0.0
  %2643 = vmatpush1.msra.mxu0 %v2612
  %2644 = vmatprep.subr.mxu0 0.0
  %2645 = vmatpush1.msra.mxu0 %v2611
  %2646 = vmatprep.subr.mxu0 0.0
  %2647 = vmatpush1.msra.mxu0 %v2610
  %2648 = vmatprep.subr.mxu0 0.0
  %2649 = vmatpush1.msra.mxu0 %v2609
  %2650 = vmatprep.subr.mxu0 0.0
  %2651 = vmatpush1.msra.mxu0 %v2608
  %2652 = vmatprep.subr.mxu0 0.0
  %2653 = vmatpush1.msra.mxu0 %v2607
  %2654 = vmatprep.subr.mxu0 0.0
  %2655 = vmatpush1.msra.mxu0 %v2606
  %2656 = vmatprep.subr.mxu0 0.0
  %2657 = vmatpush1.msra.mxu0 %v2605
  %2658 = vmatprep.subr.mxu0 0.0
  %2659 = vmatpush2.msra.mxu0 0.0
  %2660 = vmatprep.subr.mxu0 0.0
  %2661 = vmatpush2.msra.mxu0 0.0
  %2662 = vmatprep.subr.mxu0 0.0
  %2663 = vmatpush2.msra.mxu0 0.0
  %2664 = vmatprep.subr.mxu0 0.0
  %2665 = vmatpush2.msra.mxu0 0.0
  %2666 = vmatprep.subr.mxu0 0.0
  %2667 = vmatpush2.msra.mxu0 0.0
  %2668 = vmatprep.subr.mxu0 0.0
  %2669 = vmatpush2.msra.mxu0 0.0
  %2670 = vmatprep.subr.mxu0 0.0
  %2671 = vmatpush2.msra.mxu0 0.0
  %2672 = vmatprep.subr.mxu0 0.0
  %2673 = vmatpush2.msra.mxu0 0.0
  %2674 = vmatprep.subr.mxu0 0.0
  %2675 = vmatpush2.msra.mxu0 0.0
  %2676 = vmatprep.subr.mxu0 0.0
  %2677 = vmatpush2.msra.mxu0 0.0
  %2678 = vmatprep.subr.mxu0 0.0
  %2679 = vmatpush2.msra.mxu0 0.0
  %2680 = vmatprep.subr.mxu0 0.0
  %2681 = vmatpush2.msra.mxu0 0.0
  %2682 = vmatprep.subr.mxu0 0.0
  %2683 = vmatpush2.msra.mxu0 0.0
  %2684 = vmatprep.subr.mxu0 0.0
  %2685 = vmatpush2.msra.mxu0 0.0
  %2686 = vmatprep.subr.mxu0 0.0
  %2687 = vmatpush2.msra.mxu0 0.0
  %2688 = vmatprep.subr.mxu0 0.0
  %2689 = vmatpush2.msra.mxu0 0.0
  %2690 = vmatprep.mubr.f32.mxu0 0.0
  %2691 = vmatmul.mubr.f32.gmra.mxu0 %v2615
  %v2692 = vpop.f32.mrf.mxu0
  %v2693 = vadd.f32 0.0, %v2692
  %v2694 = vpop.f32.mrf.mxu0
  %2695 = vmatprep.mubr.f32.mxu0 0.0
  %2696 = vmatmul.mubr.f32.gmra.mxu0 %v2618
  %v2697 = vpop.f32.mrf.mxu0
  %v2698 = vadd.f32 0.0, %v2697
  %v2699 = vpop.f32.mrf.mxu0
  %2700 = vmatprep.mubr.f32.mxu0 0.0
  %2701 = vmatmul.mubr.f32.gmra.mxu0 %v2621
  %v2702 = vpop.f32.mrf.mxu0
  %v2703 = vadd.f32 0.0, %v2702
  %v2704 = vpop.f32.mrf.mxu0
  %2705 = vmatprep.mubr.f32.mxu0 0.0
  %2706 = vmatmul.mubr.f32.gmra.mxu0 %v2624
  %v2707 = vpop.f32.mrf.mxu0
  %v2708 = vadd.f32 0.0, %v2707
  %v2709 = vpop.f32.mrf.mxu0
  %2710 = vdwg.mxu0
  %v2711 = vadd.f32 %v2383, %v2693
  %v2712 = vadd.f32 %v2384, %v2698
  %v2713 = vadd.f32 %v2385, %v2703
  %v2714 = vadd.f32 %v2386, %v2708
  %v2715 = vld [vmem:[%s15] sm:$0x1]
  %v2717 = vlaneseq
  %v2718 = vshrl.u32 %v2717, 7
  %v2719 = vsub.s32 0, %v2718
  %v2720 = vrot.slane %v2715, %v2719
  %v2722 = vadd.f32 %v2711, %v2720
  %v2723 = vadd.f32 %v2712, %v2720
  %v2724 = vadd.f32 %v2713, %v2720
  %v2725 = vadd.f32 %v2714, %v2720
  %s2726 = scalar_lea.vmem %s4, 1
  %v2727 = vld [vmem:[%s2726] sm:$0x1]
  %s2728 = scalar_lea.vmem %s5, 1
  %v2729 = vld [vmem:[%s2728] sm:$0x1]
  %v2730 = vsel %vm176, %v2722, 0.0
  %2731 = vadd.xlane.f32.xlu0 %v2730
  %v2732 = vpop.xlane.xlu0 %2731
  %v2733 = vsel %vm176, %v2723, 0.0
  %2734 = vadd.xlane.f32.xlu0 %v2733
  %v2735 = vpop.xlane.xlu0 %2734
  %v2736 = vsel %vm176, %v2724, 0.0
  %2737 = vadd.xlane.f32.xlu0 %v2736
  %v2738 = vpop.xlane.xlu0 %2737
  %v2739 = vsel %vm176, %v2725, 0.0
  %2740 = vadd.xlane.f32.xlu0 %v2739
  %v2741 = vpop.xlane.xlu0 %2740
  %v2742 = vmul.f32 %v2732, %v189
  %v2743 = vmul.f32 %v2735, %v189
  %v2744 = vmul.f32 %v2738, %v189
  %v2745 = vmul.f32 %v2741, %v189
  %v2746 = vsub.f32 %v2722, %v2742
  %v2747 = vsub.f32 %v2723, %v2743
  %v2748 = vsub.f32 %v2724, %v2744
  %v2749 = vsub.f32 %v2725, %v2745
  %v2750 = vmul.f32 %v2746, %v2746
  %v2751 = vmul.f32 %v2747, %v2747
  %v2752 = vmul.f32 %v2748, %v2748
  %v2753 = vmul.f32 %v2749, %v2749
  %v2754 = vsel %vm176, %v2750, 0.0
  %2755 = vadd.xlane.f32.xlu0 %v2754
  %v2756 = vpop.xlane.xlu0 %2755
  %v2757 = vsel %vm176, %v2751, 0.0
  %2758 = vadd.xlane.f32.xlu0 %v2757
  %v2759 = vpop.xlane.xlu0 %2758
  %v2760 = vsel %vm176, %v2752, 0.0
  %2761 = vadd.xlane.f32.xlu0 %v2760
  %v2762 = vpop.xlane.xlu0 %2761
  %v2763 = vsel %vm176, %v2753, 0.0
  %2764 = vadd.xlane.f32.xlu0 %v2763
  %v2765 = vpop.xlane.xlu0 %2764
  %v2766 = vmul.f32 %v2756, %v189
  %v2767 = vmul.f32 %v2759, %v189
  %v2768 = vmul.f32 %v2762, %v189
  %v2769 = vmul.f32 %v2765, %v189
  %v2770 = vadd.f32 %v2766, 1e-06
  %v2771 = vadd.f32 %v2767, 1e-06
  %v2772 = vadd.f32 %v2768, 1e-06
  %v2773 = vadd.f32 %v2769, 1e-06
  %v2774 = vrsqrt.pop %v2770
  %v2775 = vrsqrt.pop %v2771
  %v2776 = vrsqrt.pop %v2772
  %v2777 = vrsqrt.pop %v2773
  %v2778 = vmul.f32 %v2746, %v2774
  %v2779 = vmul.f32 %v2747, %v2775
  %v2780 = vmul.f32 %v2748, %v2776
  %v2781 = vmul.f32 %v2749, %v2777
  %v2783 = vlaneseq
  %v2784 = vshrl.u32 %v2783, 7
  %v2785 = vsub.s32 0, %v2784
  %v2786 = vrot.slane %v2727, %v2785
  %v2788 = vmul.f32 %v2778, %v2786
  %v2789 = vmul.f32 %v2779, %v2786
  %v2790 = vmul.f32 %v2780, %v2786
  %v2791 = vmul.f32 %v2781, %v2786
  %v2793 = vlaneseq
  %v2794 = vshrl.u32 %v2793, 7
  %v2795 = vsub.s32 0, %v2794
  %v2796 = vrot.slane %v2729, %v2795
  %v2798 = vadd.f32 %v2788, %v2796
  %v2799 = vadd.f32 %v2789, %v2796
  %v2800 = vadd.f32 %v2790, %v2796
  %v2801 = vadd.f32 %v2791, %v2796
  %s2802 = scalar_lea.vmem %s6, 32
  %v2803 = vld [vmem:[%s2802] sm:$0xff]
  %v2804 = vld [vmem:[%s2802 + $0x8] sm:$0xff]
  %v2805 = vld [vmem:[%s2802 + $0x10] sm:$0xff]
  %v2806 = vld [vmem:[%s2802 + $0x18] sm:$0xff]
  %s2807 = scalar_lea.vmem %s7, 1
  %v2808 = vld [vmem:[%s2807] sm:$0x1]
  %v2810 = vlaneseq
  %v2811 = vshrl.u32 %v2810, 7
  %v2812 = vsub.s32 0, %v2811
  %v2813 = vrot.slane %v2808, %v2812
  %v2816 = vsel %vm176, %v2798, 0
  %v2819 = vsel %vm176, %v2799, 0
  %v2822 = vsel %vm176, %v2800, 0
  %v2825 = vsel %vm176, %v2801, 0
  %2827 = vmatprep.subr.mxu0 0.0
  %2828 = vmatpush1.msra.mxu0 0.0
  %2829 = vmatprep.subr.mxu0 0.0
  %2830 = vmatpush1.msra.mxu0 0.0
  %2831 = vmatprep.subr.mxu0 0.0
  %2832 = vmatpush1.msra.mxu0 0.0
  %2833 = vmatprep.subr.mxu0 0.0
  %2834 = vmatpush1.msra.mxu0 0.0
  %2835 = vmatprep.subr.mxu0 0.0
  %2836 = vmatpush1.msra.mxu0 0.0
  %2837 = vmatprep.subr.mxu0 0.0
  %2838 = vmatpush1.msra.mxu0 0.0
  %2839 = vmatprep.subr.mxu0 0.0
  %2840 = vmatpush1.msra.mxu0 0.0
  %2841 = vmatprep.subr.mxu0 0.0
  %2842 = vmatpush1.msra.mxu0 0.0
  %2843 = vmatprep.subr.mxu0 0.0
  %2844 = vmatpush1.msra.mxu0 0.0
  %2845 = vmatprep.subr.mxu0 0.0
  %2846 = vmatpush1.msra.mxu0 0.0
  %2847 = vmatprep.subr.mxu0 0.0
  %2848 = vmatpush1.msra.mxu0 0.0
  %2849 = vmatprep.subr.mxu0 0.0
  %2850 = vmatpush1.msra.mxu0 0.0
  %2851 = vmatprep.subr.mxu0 0.0
  %2852 = vmatpush1.msra.mxu0 %v2806
  %2853 = vmatprep.subr.mxu0 0.0
  %2854 = vmatpush1.msra.mxu0 %v2805
  %2855 = vmatprep.subr.mxu0 0.0
  %2856 = vmatpush1.msra.mxu0 %v2804
  %2857 = vmatprep.subr.mxu0 0.0
  %2858 = vmatpush1.msra.mxu0 %v2803
  %2859 = vmatprep.subr.mxu0 0.0
  %2860 = vmatpush2.msra.mxu0 0.0
  %2861 = vmatprep.subr.mxu0 0.0
  %2862 = vmatpush2.msra.mxu0 0.0
  %2863 = vmatprep.subr.mxu0 0.0
  %2864 = vmatpush2.msra.mxu0 0.0
  %2865 = vmatprep.subr.mxu0 0.0
  %2866 = vmatpush2.msra.mxu0 0.0
  %2867 = vmatprep.subr.mxu0 0.0
  %2868 = vmatpush2.msra.mxu0 0.0
  %2869 = vmatprep.subr.mxu0 0.0
  %2870 = vmatpush2.msra.mxu0 0.0
  %2871 = vmatprep.subr.mxu0 0.0
  %2872 = vmatpush2.msra.mxu0 0.0
  %2873 = vmatprep.subr.mxu0 0.0
  %2874 = vmatpush2.msra.mxu0 0.0
  %2875 = vmatprep.subr.mxu0 0.0
  %2876 = vmatpush2.msra.mxu0 0.0
  %2877 = vmatprep.subr.mxu0 0.0
  %2878 = vmatpush2.msra.mxu0 0.0
  %2879 = vmatprep.subr.mxu0 0.0
  %2880 = vmatpush2.msra.mxu0 0.0
  %2881 = vmatprep.subr.mxu0 0.0
  %2882 = vmatpush2.msra.mxu0 0.0
  %2883 = vmatprep.subr.mxu0 0.0
  %2884 = vmatpush2.msra.mxu0 0.0
  %2885 = vmatprep.subr.mxu0 0.0
  %2886 = vmatpush2.msra.mxu0 0.0
  %2887 = vmatprep.subr.mxu0 0.0
  %2888 = vmatpush2.msra.mxu0 0.0
  %2889 = vmatprep.subr.mxu0 0.0
  %2890 = vmatpush2.msra.mxu0 0.0
  %2891 = vmatprep.mubr.f32.mxu0 0.0
  %2892 = vmatmul.mubr.f32.gmra.mxu0 %v2816
  %v2893 = vpop.f32.mrf.mxu0
  %v2894 = vadd.f32 %v2813, %v2893
  %v2895 = vpop.f32.mrf.mxu0
  %2896 = vmatprep.mubr.f32.mxu0 0.0
  %2897 = vmatmul.mubr.f32.gmra.mxu0 %v2819
  %v2898 = vpop.f32.mrf.mxu0
  %v2899 = vadd.f32 %v2813, %v2898
  %v2900 = vpop.f32.mrf.mxu0
  %2901 = vmatprep.mubr.f32.mxu0 0.0
  %2902 = vmatmul.mubr.f32.gmra.mxu0 %v2822
  %v2903 = vpop.f32.mrf.mxu0
  %v2904 = vadd.f32 %v2813, %v2903
  %v2905 = vpop.f32.mrf.mxu0
  %2906 = vmatprep.mubr.f32.mxu0 0.0
  %2907 = vmatmul.mubr.f32.gmra.mxu0 %v2825
  %v2908 = vpop.f32.mrf.mxu0
  %v2909 = vadd.f32 %v2813, %v2908
  %v2910 = vpop.f32.mrf.mxu0
  %2911 = vdwg.mxu0
  %s2912 = scalar_lea.vmem %s8, 32
  %v2913 = vld [vmem:[%s2912] sm:$0xff]
  %v2914 = vld [vmem:[%s2912 + $0x8] sm:$0xff]
  %v2915 = vld [vmem:[%s2912 + $0x10] sm:$0xff]
  %v2916 = vld [vmem:[%s2912 + $0x18] sm:$0xff]
  %2919 = vrot.lane.b32.xlu0 %v2894, 96
  %v2920 = vpop.permute.xlu0 %2919
  %2921 = vrot.lane.b32.xlu0 %v2899, 96
  %v2922 = vpop.permute.xlu0 %2921
  %v2923 = vsel %vm368, %v2894, 0
  %v2925 = vsel %vm368, %v2899, 0
  %v2927 = vsel %vm368, %v2920, 0
  %v2929 = vsel %vm368, %v2922, 0
  %2931 = vmatprep.subr.mxu0 0.0
  %2932 = vmatpush1.xpose.msra.mxu0 0.0
  %2933 = vmatprep.subr.mxu0 0.0
  %2934 = vmatpush1.xpose.msra.mxu0 0.0
  %2935 = vmatprep.subr.mxu0 0.0
  %2936 = vmatpush1.xpose.msra.mxu0 0.0
  %2937 = vmatprep.subr.mxu0 0.0
  %2938 = vmatpush1.xpose.msra.mxu0 0.0
  %2939 = vmatprep.subr.mxu0 0.0
  %2940 = vmatpush1.xpose.msra.mxu0 0.0
  %2941 = vmatprep.subr.mxu0 0.0
  %2942 = vmatpush1.xpose.msra.mxu0 0.0
  %2943 = vmatprep.subr.mxu0 0.0
  %2944 = vmatpush1.xpose.msra.mxu0 0.0
  %2945 = vmatprep.subr.mxu0 0.0
  %2946 = vmatpush1.xpose.msra.mxu0 0.0
  %2947 = vmatprep.subr.mxu0 0.0
  %2948 = vmatpush1.xpose.msra.mxu0 0.0
  %2949 = vmatprep.subr.mxu0 0.0
  %2950 = vmatpush1.xpose.msra.mxu0 0.0
  %2951 = vmatprep.subr.mxu0 0.0
  %2952 = vmatpush1.xpose.msra.mxu0 0.0
  %2953 = vmatprep.subr.mxu0 0.0
  %2954 = vmatpush1.xpose.msra.mxu0 0.0
  %2955 = vmatprep.subr.mxu0 0.0
  %2956 = vmatpush1.xpose.msra.mxu0 0.0
  %2957 = vmatprep.subr.mxu0 0.0
  %2958 = vmatpush1.xpose.msra.mxu0 0.0
  %2959 = vmatprep.subr.mxu0 0.0
  %2960 = vmatpush1.xpose.msra.mxu0 %v2929
  %2961 = vmatprep.subr.mxu0 0.0
  %2962 = vmatpush1.xpose.msra.mxu0 %v2927
  %2963 = vmatprep.subr.mxu0 0.0
  %2964 = vmatpush2.xpose.msra.mxu0 0.0
  %2965 = vmatprep.subr.mxu0 0.0
  %2966 = vmatpush2.xpose.msra.mxu0 0.0
  %2967 = vmatprep.subr.mxu0 0.0
  %2968 = vmatpush2.xpose.msra.mxu0 0.0
  %2969 = vmatprep.subr.mxu0 0.0
  %2970 = vmatpush2.xpose.msra.mxu0 0.0
  %2971 = vmatprep.subr.mxu0 0.0
  %2972 = vmatpush2.xpose.msra.mxu0 0.0
  %2973 = vmatprep.subr.mxu0 0.0
  %2974 = vmatpush2.xpose.msra.mxu0 0.0
  %2975 = vmatprep.subr.mxu0 0.0
  %2976 = vmatpush2.xpose.msra.mxu0 0.0
  %2977 = vmatprep.subr.mxu0 0.0
  %2978 = vmatpush2.xpose.msra.mxu0 0.0
  %2979 = vmatprep.subr.mxu0 0.0
  %2980 = vmatpush2.xpose.msra.mxu0 0.0
  %2981 = vmatprep.subr.mxu0 0.0
  %2982 = vmatpush2.xpose.msra.mxu0 0.0
  %2983 = vmatprep.subr.mxu0 0.0
  %2984 = vmatpush2.xpose.msra.mxu0 0.0
  %2985 = vmatprep.subr.mxu0 0.0
  %2986 = vmatpush2.xpose.msra.mxu0 0.0
  %2987 = vmatprep.subr.mxu0 0.0
  %2988 = vmatpush2.xpose.msra.mxu0 0.0
  %2989 = vmatprep.subr.mxu0 0.0
  %2990 = vmatpush2.xpose.msra.mxu0 0.0
  %2991 = vmatprep.subr.mxu0 0.0
  %2992 = vmatpush2.xpose.msra.mxu0 0.0
  %2993 = vmatprep.subr.mxu0 0.0
  %2994 = vmatpush2.xpose.msra.mxu0 0.0
  %2995 = vmatprep.mubr.f32.mxu0 0.0
  %2996 = vmatmul.mubr.f32.gmra.mxu0 %v2923
  %v2997 = vpop.f32.mrf.mxu0
  %v2998 = vadd.f32 0.0, %v2997
  %v2999 = vpop.f32.mrf.mxu0
  %3000 = vmatprep.mubr.f32.mxu0 0.0
  %3001 = vmatmul.mubr.f32.gmra.mxu0 %v2925
  %v3002 = vpop.f32.mrf.mxu0
  %v3003 = vadd.f32 0.0, %v3002
  %v3004 = vpop.f32.mrf.mxu0
  %3005 = vdwg.mxu0
  %3008 = vrot.lane.b32.xlu0 %v2904, 96
  %v3009 = vpop.permute.xlu0 %3008
  %3010 = vrot.lane.b32.xlu0 %v2909, 96
  %v3011 = vpop.permute.xlu0 %3010
  %v3012 = vsel %vm368, %v2904, 0
  %v3014 = vsel %vm368, %v2909, 0
  %v3016 = vsel %vm368, %v3009, 0
  %v3018 = vsel %vm368, %v3011, 0
  %3020 = vmatprep.subr.mxu0 0.0
  %3021 = vmatpush1.xpose.msra.mxu0 0.0
  %3022 = vmatprep.subr.mxu0 0.0
  %3023 = vmatpush1.xpose.msra.mxu0 0.0
  %3024 = vmatprep.subr.mxu0 0.0
  %3025 = vmatpush1.xpose.msra.mxu0 0.0
  %3026 = vmatprep.subr.mxu0 0.0
  %3027 = vmatpush1.xpose.msra.mxu0 0.0
  %3028 = vmatprep.subr.mxu0 0.0
  %3029 = vmatpush1.xpose.msra.mxu0 0.0
  %3030 = vmatprep.subr.mxu0 0.0
  %3031 = vmatpush1.xpose.msra.mxu0 0.0
  %3032 = vmatprep.subr.mxu0 0.0
  %3033 = vmatpush1.xpose.msra.mxu0 0.0
  %3034 = vmatprep.subr.mxu0 0.0
  %3035 = vmatpush1.xpose.msra.mxu0 0.0
  %3036 = vmatprep.subr.mxu0 0.0
  %3037 = vmatpush1.xpose.msra.mxu0 0.0
  %3038 = vmatprep.subr.mxu0 0.0
  %3039 = vmatpush1.xpose.msra.mxu0 0.0
  %3040 = vmatprep.subr.mxu0 0.0
  %3041 = vmatpush1.xpose.msra.mxu0 0.0
  %3042 = vmatprep.subr.mxu0 0.0
  %3043 = vmatpush1.xpose.msra.mxu0 0.0
  %3044 = vmatprep.subr.mxu0 0.0
  %3045 = vmatpush1.xpose.msra.mxu0 0.0
  %3046 = vmatprep.subr.mxu0 0.0
  %3047 = vmatpush1.xpose.msra.mxu0 0.0
  %3048 = vmatprep.subr.mxu0 0.0
  %3049 = vmatpush1.xpose.msra.mxu0 %v3018
  %3050 = vmatprep.subr.mxu0 0.0
  %3051 = vmatpush1.xpose.msra.mxu0 %v3016
  %3052 = vmatprep.subr.mxu0 0.0
  %3053 = vmatpush2.xpose.msra.mxu0 0.0
  %3054 = vmatprep.subr.mxu0 0.0
  %3055 = vmatpush2.xpose.msra.mxu0 0.0
  %3056 = vmatprep.subr.mxu0 0.0
  %3057 = vmatpush2.xpose.msra.mxu0 0.0
  %3058 = vmatprep.subr.mxu0 0.0
  %3059 = vmatpush2.xpose.msra.mxu0 0.0
  %3060 = vmatprep.subr.mxu0 0.0
  %3061 = vmatpush2.xpose.msra.mxu0 0.0
  %3062 = vmatprep.subr.mxu0 0.0
  %3063 = vmatpush2.xpose.msra.mxu0 0.0
  %3064 = vmatprep.subr.mxu0 0.0
  %3065 = vmatpush2.xpose.msra.mxu0 0.0
  %3066 = vmatprep.subr.mxu0 0.0
  %3067 = vmatpush2.xpose.msra.mxu0 0.0
  %3068 = vmatprep.subr.mxu0 0.0
  %3069 = vmatpush2.xpose.msra.mxu0 0.0
  %3070 = vmatprep.subr.mxu0 0.0
  %3071 = vmatpush2.xpose.msra.mxu0 0.0
  %3072 = vmatprep.subr.mxu0 0.0
  %3073 = vmatpush2.xpose.msra.mxu0 0.0
  %3074 = vmatprep.subr.mxu0 0.0
  %3075 = vmatpush2.xpose.msra.mxu0 0.0
  %3076 = vmatprep.subr.mxu0 0.0
  %3077 = vmatpush2.xpose.msra.mxu0 0.0
  %3078 = vmatprep.subr.mxu0 0.0
  %3079 = vmatpush2.xpose.msra.mxu0 0.0
  %3080 = vmatprep.subr.mxu0 0.0
  %3081 = vmatpush2.xpose.msra.mxu0 0.0
  %3082 = vmatprep.subr.mxu0 0.0
  %3083 = vmatpush2.xpose.msra.mxu0 0.0
  %3084 = vmatprep.mubr.f32.mxu0 0.0
  %3085 = vmatmul.mubr.f32.gmra.mxu0 %v3012
  %v3086 = vpop.f32.mrf.mxu0
  %v3087 = vadd.f32 0.0, %v3086
  %v3088 = vpop.f32.mrf.mxu0
  %3089 = vmatprep.mubr.f32.mxu0 0.0
  %3090 = vmatmul.mubr.f32.gmra.mxu0 %v3014
  %v3091 = vpop.f32.mrf.mxu0
  %v3092 = vadd.f32 0.0, %v3091
  %v3093 = vpop.f32.mrf.mxu0
  %3094 = vdwg.mxu0
  %v3095 = vmul.f32 %v2998, 0.35355338
  %v3096 = vmul.f32 %v3003, 0.35355338
  %v3097 = vmul.f32 %v3087, 0.35355338
  %v3098 = vmul.f32 %v3092, 0.35355338
  %v3099 = vsel %vm545, %v3095, -inf
  %3100 = vmax.xlane.f32.xlu0 %v3099
  %v3101 = vpop.xlane.xlu0 %3100
  %v3102 = vsel %vm545, %v3096, -inf
  %3103 = vmax.xlane.f32.xlu0 %v3102
  %v3104 = vpop.xlane.xlu0 %3103
  %v3105 = vsel %vm545, %v3097, -inf
  %3106 = vmax.xlane.f32.xlu0 %v3105
  %v3107 = vpop.xlane.xlu0 %3106
  %v3108 = vsel %vm545, %v3098, -inf
  %3109 = vmax.xlane.f32.xlu0 %v3108
  %v3110 = vpop.xlane.xlu0 %3109
  %v3111 = vsub.f32 %v3095, %v3101
  %v3112 = vsub.f32 %v3096, %v3104
  %v3113 = vsub.f32 %v3097, %v3107
  %v3114 = vsub.f32 %v3098, %v3110
  %v3115 = vmul.f32 %v3111, 1.442695
  %v3116 = vpow.pop %v3115
  %v3117 = vmul.f32 %v3112, 1.442695
  %v3118 = vpow.pop %v3117
  %v3119 = vmul.f32 %v3113, 1.442695
  %v3120 = vpow.pop %v3119
  %v3121 = vmul.f32 %v3114, 1.442695
  %v3122 = vpow.pop %v3121
  %v3123 = vsel %vm545, %v3116, 0.0
  %3124 = vadd.xlane.f32.xlu0 %v3123
  %v3125 = vpop.xlane.xlu0 %3124
  %v3126 = vsel %vm545, %v3118, 0.0
  %3127 = vadd.xlane.f32.xlu0 %v3126
  %v3128 = vpop.xlane.xlu0 %3127
  %v3129 = vsel %vm545, %v3120, 0.0
  %3130 = vadd.xlane.f32.xlu0 %v3129
  %v3131 = vpop.xlane.xlu0 %3130
  %v3132 = vsel %vm545, %v3122, 0.0
  %3133 = vadd.xlane.f32.xlu0 %v3132
  %v3134 = vpop.xlane.xlu0 %3133
  %v3135 = vrcp.pop %v3125
  %v3136 = vrcp.pop %v3128
  %v3137 = vrcp.pop %v3131
  %v3138 = vrcp.pop %v3134
  %v3139 = vmul.f32 %v3116, %v3135
  %v3140 = vmul.f32 %v3118, %v3136
  %v3141 = vmul.f32 %v3120, %v3137
  %v3142 = vmul.f32 %v3122, %v3138
  %3143 = vrot.lane.b32.xlu0 %v2894, 64
  %v3144 = vpop.permute.xlu0 %3143
  %3145 = vrot.lane.b32.xlu0 %v2899, 64
  %v3146 = vpop.permute.xlu0 %3145
  %v3150 = vsel %vm545, %v3139, 0
  %v3153 = vsel %vm545, %v3140, 0
  %3155 = vmatprep.subr.mxu0 0.0
  %3156 = vmatpush1.msra.mxu0 0.0
  %3157 = vmatprep.subr.mxu0 0.0
  %3158 = vmatpush1.msra.mxu0 0.0
  %3159 = vmatprep.subr.mxu0 0.0
  %3160 = vmatpush1.msra.mxu0 0.0
  %3161 = vmatprep.subr.mxu0 0.0
  %3162 = vmatpush1.msra.mxu0 0.0
  %3163 = vmatprep.subr.mxu0 0.0
  %3164 = vmatpush1.msra.mxu0 0.0
  %3165 = vmatprep.subr.mxu0 0.0
  %3166 = vmatpush1.msra.mxu0 0.0
  %3167 = vmatprep.subr.mxu0 0.0
  %3168 = vmatpush1.msra.mxu0 0.0
  %3169 = vmatprep.subr.mxu0 0.0
  %3170 = vmatpush1.msra.mxu0 0.0
  %3171 = vmatprep.subr.mxu0 0.0
  %3172 = vmatpush1.msra.mxu0 0.0
  %3173 = vmatprep.subr.mxu0 0.0
  %3174 = vmatpush1.msra.mxu0 0.0
  %3175 = vmatprep.subr.mxu0 0.0
  %3176 = vmatpush1.msra.mxu0 0.0
  %3177 = vmatprep.subr.mxu0 0.0
  %3178 = vmatpush1.msra.mxu0 0.0
  %3179 = vmatprep.subr.mxu0 0.0
  %3180 = vmatpush1.msra.mxu0 0.0
  %3181 = vmatprep.subr.mxu0 0.0
  %3182 = vmatpush1.msra.mxu0 0.0
  %3183 = vmatprep.subr.mxu0 0.0
  %3184 = vmatpush1.msra.mxu0 %v3146
  %3185 = vmatprep.subr.mxu0 0.0
  %3186 = vmatpush1.msra.mxu0 %v3144
  %3187 = vmatprep.subr.mxu0 0.0
  %3188 = vmatpush2.msra.mxu0 0.0
  %3189 = vmatprep.subr.mxu0 0.0
  %3190 = vmatpush2.msra.mxu0 0.0
  %3191 = vmatprep.subr.mxu0 0.0
  %3192 = vmatpush2.msra.mxu0 0.0
  %3193 = vmatprep.subr.mxu0 0.0
  %3194 = vmatpush2.msra.mxu0 0.0
  %3195 = vmatprep.subr.mxu0 0.0
  %3196 = vmatpush2.msra.mxu0 0.0
  %3197 = vmatprep.subr.mxu0 0.0
  %3198 = vmatpush2.msra.mxu0 0.0
  %3199 = vmatprep.subr.mxu0 0.0
  %3200 = vmatpush2.msra.mxu0 0.0
  %3201 = vmatprep.subr.mxu0 0.0
  %3202 = vmatpush2.msra.mxu0 0.0
  %3203 = vmatprep.subr.mxu0 0.0
  %3204 = vmatpush2.msra.mxu0 0.0
  %3205 = vmatprep.subr.mxu0 0.0
  %3206 = vmatpush2.msra.mxu0 0.0
  %3207 = vmatprep.subr.mxu0 0.0
  %3208 = vmatpush2.msra.mxu0 0.0
  %3209 = vmatprep.subr.mxu0 0.0
  %3210 = vmatpush2.msra.mxu0 0.0
  %3211 = vmatprep.subr.mxu0 0.0
  %3212 = vmatpush2.msra.mxu0 0.0
  %3213 = vmatprep.subr.mxu0 0.0
  %3214 = vmatpush2.msra.mxu0 0.0
  %3215 = vmatprep.subr.mxu0 0.0
  %3216 = vmatpush2.msra.mxu0 0.0
  %3217 = vmatprep.subr.mxu0 0.0
  %3218 = vmatpush2.msra.mxu0 0.0
  %3219 = vmatprep.mubr.f32.mxu0 0.0
  %3220 = vmatmul.mubr.f32.gmra.mxu0 %v3150
  %v3221 = vpop.f32.mrf.mxu0
  %v3222 = vadd.f32 0.0, %v3221
  %v3223 = vpop.f32.mrf.mxu0
  %3224 = vmatprep.mubr.f32.mxu0 0.0
  %3225 = vmatmul.mubr.f32.gmra.mxu0 %v3153
  %v3226 = vpop.f32.mrf.mxu0
  %v3227 = vadd.f32 0.0, %v3226
  %v3228 = vpop.f32.mrf.mxu0
  %3229 = vdwg.mxu0
  %3230 = vrot.lane.b32.xlu0 %v2904, 64
  %v3231 = vpop.permute.xlu0 %3230
  %3232 = vrot.lane.b32.xlu0 %v2909, 64
  %v3233 = vpop.permute.xlu0 %3232
  %v3237 = vsel %vm545, %v3141, 0
  %v3240 = vsel %vm545, %v3142, 0
  %3242 = vmatprep.subr.mxu0 0.0
  %3243 = vmatpush1.msra.mxu0 0.0
  %3244 = vmatprep.subr.mxu0 0.0
  %3245 = vmatpush1.msra.mxu0 0.0
  %3246 = vmatprep.subr.mxu0 0.0
  %3247 = vmatpush1.msra.mxu0 0.0
  %3248 = vmatprep.subr.mxu0 0.0
  %3249 = vmatpush1.msra.mxu0 0.0
  %3250 = vmatprep.subr.mxu0 0.0
  %3251 = vmatpush1.msra.mxu0 0.0
  %3252 = vmatprep.subr.mxu0 0.0
  %3253 = vmatpush1.msra.mxu0 0.0
  %3254 = vmatprep.subr.mxu0 0.0
  %3255 = vmatpush1.msra.mxu0 0.0
  %3256 = vmatprep.subr.mxu0 0.0
  %3257 = vmatpush1.msra.mxu0 0.0
  %3258 = vmatprep.subr.mxu0 0.0
  %3259 = vmatpush1.msra.mxu0 0.0
  %3260 = vmatprep.subr.mxu0 0.0
  %3261 = vmatpush1.msra.mxu0 0.0
  %3262 = vmatprep.subr.mxu0 0.0
  %3263 = vmatpush1.msra.mxu0 0.0
  %3264 = vmatprep.subr.mxu0 0.0
  %3265 = vmatpush1.msra.mxu0 0.0
  %3266 = vmatprep.subr.mxu0 0.0
  %3267 = vmatpush1.msra.mxu0 0.0
  %3268 = vmatprep.subr.mxu0 0.0
  %3269 = vmatpush1.msra.mxu0 0.0
  %3270 = vmatprep.subr.mxu0 0.0
  %3271 = vmatpush1.msra.mxu0 %v3233
  %3272 = vmatprep.subr.mxu0 0.0
  %3273 = vmatpush1.msra.mxu0 %v3231
  %3274 = vmatprep.subr.mxu0 0.0
  %3275 = vmatpush2.msra.mxu0 0.0
  %3276 = vmatprep.subr.mxu0 0.0
  %3277 = vmatpush2.msra.mxu0 0.0
  %3278 = vmatprep.subr.mxu0 0.0
  %3279 = vmatpush2.msra.mxu0 0.0
  %3280 = vmatprep.subr.mxu0 0.0
  %3281 = vmatpush2.msra.mxu0 0.0
  %3282 = vmatprep.subr.mxu0 0.0
  %3283 = vmatpush2.msra.mxu0 0.0
  %3284 = vmatprep.subr.mxu0 0.0
  %3285 = vmatpush2.msra.mxu0 0.0
  %3286 = vmatprep.subr.mxu0 0.0
  %3287 = vmatpush2.msra.mxu0 0.0
  %3288 = vmatprep.subr.mxu0 0.0
  %3289 = vmatpush2.msra.mxu0 0.0
  %3290 = vmatprep.subr.mxu0 0.0
  %3291 = vmatpush2.msra.mxu0 0.0
  %3292 = vmatprep.subr.mxu0 0.0
  %3293 = vmatpush2.msra.mxu0 0.0
  %3294 = vmatprep.subr.mxu0 0.0
  %3295 = vmatpush2.msra.mxu0 0.0
  %3296 = vmatprep.subr.mxu0 0.0
  %3297 = vmatpush2.msra.mxu0 0.0
  %3298 = vmatprep.subr.mxu0 0.0
  %3299 = vmatpush2.msra.mxu0 0.0
  %3300 = vmatprep.subr.mxu0 0.0
  %3301 = vmatpush2.msra.mxu0 0.0
  %3302 = vmatprep.subr.mxu0 0.0
  %3303 = vmatpush2.msra.mxu0 0.0
  %3304 = vmatprep.subr.mxu0 0.0
  %3305 = vmatpush2.msra.mxu0 0.0
  %3306 = vmatprep.mubr.f32.mxu0 0.0
  %3307 = vmatmul.mubr.f32.gmra.mxu0 %v3237
  %v3308 = vpop.f32.mrf.mxu0
  %v3309 = vadd.f32 0.0, %v3308
  %v3310 = vpop.f32.mrf.mxu0
  %3311 = vmatprep.mubr.f32.mxu0 0.0
  %3312 = vmatmul.mubr.f32.gmra.mxu0 %v3240
  %v3313 = vpop.f32.mrf.mxu0
  %v3314 = vadd.f32 0.0, %v3313
  %v3315 = vpop.f32.mrf.mxu0
  %3316 = vdwg.mxu0
  %3317 = vrot.lane.b32.xlu0 %v2894, 120
  %v3318 = vpop.permute.xlu0 %3317
  %3319 = vrot.lane.b32.xlu0 %v2899, 120
  %v3320 = vpop.permute.xlu0 %3319
  %3321 = vrot.lane.b32.xlu0 %v2894, 88
  %v3322 = vpop.permute.xlu0 %3321
  %3323 = vrot.lane.b32.xlu0 %v2899, 88
  %v3324 = vpop.permute.xlu0 %3323
  %v3325 = vsel %vm368, %v3318, 0
  %v3327 = vsel %vm368, %v3320, 0
  %v3329 = vsel %vm368, %v3322, 0
  %v3331 = vsel %vm368, %v3324, 0
  %3333 = vmatprep.subr.mxu0 0.0
  %3334 = vmatpush1.xpose.msra.mxu0 0.0
  %3335 = vmatprep.subr.mxu0 0.0
  %3336 = vmatpush1.xpose.msra.mxu0 0.0
  %3337 = vmatprep.subr.mxu0 0.0
  %3338 = vmatpush1.xpose.msra.mxu0 0.0
  %3339 = vmatprep.subr.mxu0 0.0
  %3340 = vmatpush1.xpose.msra.mxu0 0.0
  %3341 = vmatprep.subr.mxu0 0.0
  %3342 = vmatpush1.xpose.msra.mxu0 0.0
  %3343 = vmatprep.subr.mxu0 0.0
  %3344 = vmatpush1.xpose.msra.mxu0 0.0
  %3345 = vmatprep.subr.mxu0 0.0
  %3346 = vmatpush1.xpose.msra.mxu0 0.0
  %3347 = vmatprep.subr.mxu0 0.0
  %3348 = vmatpush1.xpose.msra.mxu0 0.0
  %3349 = vmatprep.subr.mxu0 0.0
  %3350 = vmatpush1.xpose.msra.mxu0 0.0
  %3351 = vmatprep.subr.mxu0 0.0
  %3352 = vmatpush1.xpose.msra.mxu0 0.0
  %3353 = vmatprep.subr.mxu0 0.0
  %3354 = vmatpush1.xpose.msra.mxu0 0.0
  %3355 = vmatprep.subr.mxu0 0.0
  %3356 = vmatpush1.xpose.msra.mxu0 0.0
  %3357 = vmatprep.subr.mxu0 0.0
  %3358 = vmatpush1.xpose.msra.mxu0 0.0
  %3359 = vmatprep.subr.mxu0 0.0
  %3360 = vmatpush1.xpose.msra.mxu0 0.0
  %3361 = vmatprep.subr.mxu0 0.0
  %3362 = vmatpush1.xpose.msra.mxu0 %v3331
  %3363 = vmatprep.subr.mxu0 0.0
  %3364 = vmatpush1.xpose.msra.mxu0 %v3329
  %3365 = vmatprep.subr.mxu0 0.0
  %3366 = vmatpush2.xpose.msra.mxu0 0.0
  %3367 = vmatprep.subr.mxu0 0.0
  %3368 = vmatpush2.xpose.msra.mxu0 0.0
  %3369 = vmatprep.subr.mxu0 0.0
  %3370 = vmatpush2.xpose.msra.mxu0 0.0
  %3371 = vmatprep.subr.mxu0 0.0
  %3372 = vmatpush2.xpose.msra.mxu0 0.0
  %3373 = vmatprep.subr.mxu0 0.0
  %3374 = vmatpush2.xpose.msra.mxu0 0.0
  %3375 = vmatprep.subr.mxu0 0.0
  %3376 = vmatpush2.xpose.msra.mxu0 0.0
  %3377 = vmatprep.subr.mxu0 0.0
  %3378 = vmatpush2.xpose.msra.mxu0 0.0
  %3379 = vmatprep.subr.mxu0 0.0
  %3380 = vmatpush2.xpose.msra.mxu0 0.0
  %3381 = vmatprep.subr.mxu0 0.0
  %3382 = vmatpush2.xpose.msra.mxu0 0.0
  %3383 = vmatprep.subr.mxu0 0.0
  %3384 = vmatpush2.xpose.msra.mxu0 0.0
  %3385 = vmatprep.subr.mxu0 0.0
  %3386 = vmatpush2.xpose.msra.mxu0 0.0
  %3387 = vmatprep.subr.mxu0 0.0
  %3388 = vmatpush2.xpose.msra.mxu0 0.0
  %3389 = vmatprep.subr.mxu0 0.0
  %3390 = vmatpush2.xpose.msra.mxu0 0.0
  %3391 = vmatprep.subr.mxu0 0.0
  %3392 = vmatpush2.xpose.msra.mxu0 0.0
  %3393 = vmatprep.subr.mxu0 0.0
  %3394 = vmatpush2.xpose.msra.mxu0 0.0
  %3395 = vmatprep.subr.mxu0 0.0
  %3396 = vmatpush2.xpose.msra.mxu0 0.0
  %3397 = vmatprep.mubr.f32.mxu0 0.0
  %3398 = vmatmul.mubr.f32.gmra.mxu0 %v3325
  %v3399 = vpop.f32.mrf.mxu0
  %v3400 = vadd.f32 0.0, %v3399
  %v3401 = vpop.f32.mrf.mxu0
  %3402 = vmatprep.mubr.f32.mxu0 0.0
  %3403 = vmatmul.mubr.f32.gmra.mxu0 %v3327
  %v3404 = vpop.f32.mrf.mxu0
  %v3405 = vadd.f32 0.0, %v3404
  %v3406 = vpop.f32.mrf.mxu0
  %3407 = vdwg.mxu0
  %3408 = vrot.lane.b32.xlu0 %v2904, 120
  %v3409 = vpop.permute.xlu0 %3408
  %3410 = vrot.lane.b32.xlu0 %v2909, 120
  %v3411 = vpop.permute.xlu0 %3410
  %3412 = vrot.lane.b32.xlu0 %v2904, 88
  %v3413 = vpop.permute.xlu0 %3412
  %3414 = vrot.lane.b32.xlu0 %v2909, 88
  %v3415 = vpop.permute.xlu0 %3414
  %v3416 = vsel %vm368, %v3409, 0
  %v3418 = vsel %vm368, %v3411, 0
  %v3420 = vsel %vm368, %v3413, 0
  %v3422 = vsel %vm368, %v3415, 0
  %3424 = vmatprep.subr.mxu0 0.0
  %3425 = vmatpush1.xpose.msra.mxu0 0.0
  %3426 = vmatprep.subr.mxu0 0.0
  %3427 = vmatpush1.xpose.msra.mxu0 0.0
  %3428 = vmatprep.subr.mxu0 0.0
  %3429 = vmatpush1.xpose.msra.mxu0 0.0
  %3430 = vmatprep.subr.mxu0 0.0
  %3431 = vmatpush1.xpose.msra.mxu0 0.0
  %3432 = vmatprep.subr.mxu0 0.0
  %3433 = vmatpush1.xpose.msra.mxu0 0.0
  %3434 = vmatprep.subr.mxu0 0.0
  %3435 = vmatpush1.xpose.msra.mxu0 0.0
  %3436 = vmatprep.subr.mxu0 0.0
  %3437 = vmatpush1.xpose.msra.mxu0 0.0
  %3438 = vmatprep.subr.mxu0 0.0
  %3439 = vmatpush1.xpose.msra.mxu0 0.0
  %3440 = vmatprep.subr.mxu0 0.0
  %3441 = vmatpush1.xpose.msra.mxu0 0.0
  %3442 = vmatprep.subr.mxu0 0.0
  %3443 = vmatpush1.xpose.msra.mxu0 0.0
  %3444 = vmatprep.subr.mxu0 0.0
  %3445 = vmatpush1.xpose.msra.mxu0 0.0
  %3446 = vmatprep.subr.mxu0 0.0
  %3447 = vmatpush1.xpose.msra.mxu0 0.0
  %3448 = vmatprep.subr.mxu0 0.0
  %3449 = vmatpush1.xpose.msra.mxu0 0.0
  %3450 = vmatprep.subr.mxu0 0.0
  %3451 = vmatpush1.xpose.msra.mxu0 0.0
  %3452 = vmatprep.subr.mxu0 0.0
  %3453 = vmatpush1.xpose.msra.mxu0 %v3422
  %3454 = vmatprep.subr.mxu0 0.0
  %3455 = vmatpush1.xpose.msra.mxu0 %v3420
  %3456 = vmatprep.subr.mxu0 0.0
  %3457 = vmatpush2.xpose.msra.mxu0 0.0
  %3458 = vmatprep.subr.mxu0 0.0
  %3459 = vmatpush2.xpose.msra.mxu0 0.0
  %3460 = vmatprep.subr.mxu0 0.0
  %3461 = vmatpush2.xpose.msra.mxu0 0.0
  %3462 = vmatprep.subr.mxu0 0.0
  %3463 = vmatpush2.xpose.msra.mxu0 0.0
  %3464 = vmatprep.subr.mxu0 0.0
  %3465 = vmatpush2.xpose.msra.mxu0 0.0
  %3466 = vmatprep.subr.mxu0 0.0
  %3467 = vmatpush2.xpose.msra.mxu0 0.0
  %3468 = vmatprep.subr.mxu0 0.0
  %3469 = vmatpush2.xpose.msra.mxu0 0.0
  %3470 = vmatprep.subr.mxu0 0.0
  %3471 = vmatpush2.xpose.msra.mxu0 0.0
  %3472 = vmatprep.subr.mxu0 0.0
  %3473 = vmatpush2.xpose.msra.mxu0 0.0
  %3474 = vmatprep.subr.mxu0 0.0
  %3475 = vmatpush2.xpose.msra.mxu0 0.0
  %3476 = vmatprep.subr.mxu0 0.0
  %3477 = vmatpush2.xpose.msra.mxu0 0.0
  %3478 = vmatprep.subr.mxu0 0.0
  %3479 = vmatpush2.xpose.msra.mxu0 0.0
  %3480 = vmatprep.subr.mxu0 0.0
  %3481 = vmatpush2.xpose.msra.mxu0 0.0
  %3482 = vmatprep.subr.mxu0 0.0
  %3483 = vmatpush2.xpose.msra.mxu0 0.0
  %3484 = vmatprep.subr.mxu0 0.0
  %3485 = vmatpush2.xpose.msra.mxu0 0.0
  %3486 = vmatprep.subr.mxu0 0.0
  %3487 = vmatpush2.xpose.msra.mxu0 0.0
  %3488 = vmatprep.mubr.f32.mxu0 0.0
  %3489 = vmatmul.mubr.f32.gmra.mxu0 %v3416
  %v3490 = vpop.f32.mrf.mxu0
  %v3491 = vadd.f32 0.0, %v3490
  %v3492 = vpop.f32.mrf.mxu0
  %3493 = vmatprep.mubr.f32.mxu0 0.0
  %3494 = vmatmul.mubr.f32.gmra.mxu0 %v3418
  %v3495 = vpop.f32.mrf.mxu0
  %v3496 = vadd.f32 0.0, %v3495
  %v3497 = vpop.f32.mrf.mxu0
  %3498 = vdwg.mxu0
  %v3499 = vmul.f32 %v3400, 0.35355338
  %v3500 = vmul.f32 %v3405, 0.35355338
  %v3501 = vmul.f32 %v3491, 0.35355338
  %v3502 = vmul.f32 %v3496, 0.35355338
  %v3503 = vsel %vm545, %v3499, -inf
  %3504 = vmax.xlane.f32.xlu0 %v3503
  %v3505 = vpop.xlane.xlu0 %3504
  %v3506 = vsel %vm545, %v3500, -inf
  %3507 = vmax.xlane.f32.xlu0 %v3506
  %v3508 = vpop.xlane.xlu0 %3507
  %v3509 = vsel %vm545, %v3501, -inf
  %3510 = vmax.xlane.f32.xlu0 %v3509
  %v3511 = vpop.xlane.xlu0 %3510
  %v3512 = vsel %vm545, %v3502, -inf
  %3513 = vmax.xlane.f32.xlu0 %v3512
  %v3514 = vpop.xlane.xlu0 %3513
  %v3515 = vsub.f32 %v3499, %v3505
  %v3516 = vsub.f32 %v3500, %v3508
  %v3517 = vsub.f32 %v3501, %v3511
  %v3518 = vsub.f32 %v3502, %v3514
  %v3519 = vmul.f32 %v3515, 1.442695
  %v3520 = vpow.pop %v3519
  %v3521 = vmul.f32 %v3516, 1.442695
  %v3522 = vpow.pop %v3521
  %v3523 = vmul.f32 %v3517, 1.442695
  %v3524 = vpow.pop %v3523
  %v3525 = vmul.f32 %v3518, 1.442695
  %v3526 = vpow.pop %v3525
  %v3527 = vsel %vm545, %v3520, 0.0
  %3528 = vadd.xlane.f32.xlu0 %v3527
  %v3529 = vpop.xlane.xlu0 %3528
  %v3530 = vsel %vm545, %v3522, 0.0
  %3531 = vadd.xlane.f32.xlu0 %v3530
  %v3532 = vpop.xlane.xlu0 %3531
  %v3533 = vsel %vm545, %v3524, 0.0
  %3534 = vadd.xlane.f32.xlu0 %v3533
  %v3535 = vpop.xlane.xlu0 %3534
  %v3536 = vsel %vm545, %v3526, 0.0
  %3537 = vadd.xlane.f32.xlu0 %v3536
  %v3538 = vpop.xlane.xlu0 %3537
  %v3539 = vrcp.pop %v3529
  %v3540 = vrcp.pop %v3532
  %v3541 = vrcp.pop %v3535
  %v3542 = vrcp.pop %v3538
  %v3543 = vmul.f32 %v3520, %v3539
  %v3544 = vmul.f32 %v3522, %v3540
  %v3545 = vmul.f32 %v3524, %v3541
  %v3546 = vmul.f32 %v3526, %v3542
  %3547 = vrot.lane.b32.xlu0 %v2894, 56
  %v3548 = vpop.permute.xlu0 %3547
  %3549 = vrot.lane.b32.xlu0 %v2899, 56
  %v3550 = vpop.permute.xlu0 %3549
  %v3554 = vsel %vm545, %v3543, 0
  %v3557 = vsel %vm545, %v3544, 0
  %3559 = vmatprep.subr.mxu0 0.0
  %3560 = vmatpush1.msra.mxu0 0.0
  %3561 = vmatprep.subr.mxu0 0.0
  %3562 = vmatpush1.msra.mxu0 0.0
  %3563 = vmatprep.subr.mxu0 0.0
  %3564 = vmatpush1.msra.mxu0 0.0
  %3565 = vmatprep.subr.mxu0 0.0
  %3566 = vmatpush1.msra.mxu0 0.0
  %3567 = vmatprep.subr.mxu0 0.0
  %3568 = vmatpush1.msra.mxu0 0.0
  %3569 = vmatprep.subr.mxu0 0.0
  %3570 = vmatpush1.msra.mxu0 0.0
  %3571 = vmatprep.subr.mxu0 0.0
  %3572 = vmatpush1.msra.mxu0 0.0
  %3573 = vmatprep.subr.mxu0 0.0
  %3574 = vmatpush1.msra.mxu0 0.0
  %3575 = vmatprep.subr.mxu0 0.0
  %3576 = vmatpush1.msra.mxu0 0.0
  %3577 = vmatprep.subr.mxu0 0.0
  %3578 = vmatpush1.msra.mxu0 0.0
  %3579 = vmatprep.subr.mxu0 0.0
  %3580 = vmatpush1.msra.mxu0 0.0
  %3581 = vmatprep.subr.mxu0 0.0
  %3582 = vmatpush1.msra.mxu0 0.0
  %3583 = vmatprep.subr.mxu0 0.0
  %3584 = vmatpush1.msra.mxu0 0.0
  %3585 = vmatprep.subr.mxu0 0.0
  %3586 = vmatpush1.msra.mxu0 0.0
  %3587 = vmatprep.subr.mxu0 0.0
  %3588 = vmatpush1.msra.mxu0 %v3550
  %3589 = vmatprep.subr.mxu0 0.0
  %3590 = vmatpush1.msra.mxu0 %v3548
  %3591 = vmatprep.subr.mxu0 0.0
  %3592 = vmatpush2.msra.mxu0 0.0
  %3593 = vmatprep.subr.mxu0 0.0
  %3594 = vmatpush2.msra.mxu0 0.0
  %3595 = vmatprep.subr.mxu0 0.0
  %3596 = vmatpush2.msra.mxu0 0.0
  %3597 = vmatprep.subr.mxu0 0.0
  %3598 = vmatpush2.msra.mxu0 0.0
  %3599 = vmatprep.subr.mxu0 0.0
  %3600 = vmatpush2.msra.mxu0 0.0
  %3601 = vmatprep.subr.mxu0 0.0
  %3602 = vmatpush2.msra.mxu0 0.0
  %3603 = vmatprep.subr.mxu0 0.0
  %3604 = vmatpush2.msra.mxu0 0.0
  %3605 = vmatprep.subr.mxu0 0.0
  %3606 = vmatpush2.msra.mxu0 0.0
  %3607 = vmatprep.subr.mxu0 0.0
  %3608 = vmatpush2.msra.mxu0 0.0
  %3609 = vmatprep.subr.mxu0 0.0
  %3610 = vmatpush2.msra.mxu0 0.0
  %3611 = vmatprep.subr.mxu0 0.0
  %3612 = vmatpush2.msra.mxu0 0.0
  %3613 = vmatprep.subr.mxu0 0.0
  %3614 = vmatpush2.msra.mxu0 0.0
  %3615 = vmatprep.subr.mxu0 0.0
  %3616 = vmatpush2.msra.mxu0 0.0
  %3617 = vmatprep.subr.mxu0 0.0
  %3618 = vmatpush2.msra.mxu0 0.0
  %3619 = vmatprep.subr.mxu0 0.0
  %3620 = vmatpush2.msra.mxu0 0.0
  %3621 = vmatprep.subr.mxu0 0.0
  %3622 = vmatpush2.msra.mxu0 0.0
  %3623 = vmatprep.mubr.f32.mxu0 0.0
  %3624 = vmatmul.mubr.f32.gmra.mxu0 %v3554
  %v3625 = vpop.f32.mrf.mxu0
  %v3626 = vadd.f32 0.0, %v3625
  %v3627 = vpop.f32.mrf.mxu0
  %3628 = vmatprep.mubr.f32.mxu0 0.0
  %3629 = vmatmul.mubr.f32.gmra.mxu0 %v3557
  %v3630 = vpop.f32.mrf.mxu0
  %v3631 = vadd.f32 0.0, %v3630
  %v3632 = vpop.f32.mrf.mxu0
  %3633 = vdwg.mxu0
  %3634 = vrot.lane.b32.xlu0 %v2904, 56
  %v3635 = vpop.permute.xlu0 %3634
  %3636 = vrot.lane.b32.xlu0 %v2909, 56
  %v3637 = vpop.permute.xlu0 %3636
  %v3641 = vsel %vm545, %v3545, 0
  %v3644 = vsel %vm545, %v3546, 0
  %3646 = vmatprep.subr.mxu0 0.0
  %3647 = vmatpush1.msra.mxu0 0.0
  %3648 = vmatprep.subr.mxu0 0.0
  %3649 = vmatpush1.msra.mxu0 0.0
  %3650 = vmatprep.subr.mxu0 0.0
  %3651 = vmatpush1.msra.mxu0 0.0
  %3652 = vmatprep.subr.mxu0 0.0
  %3653 = vmatpush1.msra.mxu0 0.0
  %3654 = vmatprep.subr.mxu0 0.0
  %3655 = vmatpush1.msra.mxu0 0.0
  %3656 = vmatprep.subr.mxu0 0.0
  %3657 = vmatpush1.msra.mxu0 0.0
  %3658 = vmatprep.subr.mxu0 0.0
  %3659 = vmatpush1.msra.mxu0 0.0
  %3660 = vmatprep.subr.mxu0 0.0
  %3661 = vmatpush1.msra.mxu0 0.0
  %3662 = vmatprep.subr.mxu0 0.0
  %3663 = vmatpush1.msra.mxu0 0.0
  %3664 = vmatprep.subr.mxu0 0.0
  %3665 = vmatpush1.msra.mxu0 0.0
  %3666 = vmatprep.subr.mxu0 0.0
  %3667 = vmatpush1.msra.mxu0 0.0
  %3668 = vmatprep.subr.mxu0 0.0
  %3669 = vmatpush1.msra.mxu0 0.0
  %3670 = vmatprep.subr.mxu0 0.0
  %3671 = vmatpush1.msra.mxu0 0.0
  %3672 = vmatprep.subr.mxu0 0.0
  %3673 = vmatpush1.msra.mxu0 0.0
  %3674 = vmatprep.subr.mxu0 0.0
  %3675 = vmatpush1.msra.mxu0 %v3637
  %3676 = vmatprep.subr.mxu0 0.0
  %3677 = vmatpush1.msra.mxu0 %v3635
  %3678 = vmatprep.subr.mxu0 0.0
  %3679 = vmatpush2.msra.mxu0 0.0
  %3680 = vmatprep.subr.mxu0 0.0
  %3681 = vmatpush2.msra.mxu0 0.0
  %3682 = vmatprep.subr.mxu0 0.0
  %3683 = vmatpush2.msra.mxu0 0.0
  %3684 = vmatprep.subr.mxu0 0.0
  %3685 = vmatpush2.msra.mxu0 0.0
  %3686 = vmatprep.subr.mxu0 0.0
  %3687 = vmatpush2.msra.mxu0 0.0
  %3688 = vmatprep.subr.mxu0 0.0
  %3689 = vmatpush2.msra.mxu0 0.0
  %3690 = vmatprep.subr.mxu0 0.0
  %3691 = vmatpush2.msra.mxu0 0.0
  %3692 = vmatprep.subr.mxu0 0.0
  %3693 = vmatpush2.msra.mxu0 0.0
  %3694 = vmatprep.subr.mxu0 0.0
  %3695 = vmatpush2.msra.mxu0 0.0
  %3696 = vmatprep.subr.mxu0 0.0
  %3697 = vmatpush2.msra.mxu0 0.0
  %3698 = vmatprep.subr.mxu0 0.0
  %3699 = vmatpush2.msra.mxu0 0.0
  %3700 = vmatprep.subr.mxu0 0.0
  %3701 = vmatpush2.msra.mxu0 0.0
  %3702 = vmatprep.subr.mxu0 0.0
  %3703 = vmatpush2.msra.mxu0 0.0
  %3704 = vmatprep.subr.mxu0 0.0
  %3705 = vmatpush2.msra.mxu0 0.0
  %3706 = vmatprep.subr.mxu0 0.0
  %3707 = vmatpush2.msra.mxu0 0.0
  %3708 = vmatprep.subr.mxu0 0.0
  %3709 = vmatpush2.msra.mxu0 0.0
  %3710 = vmatprep.mubr.f32.mxu0 0.0
  %3711 = vmatmul.mubr.f32.gmra.mxu0 %v3641
  %v3712 = vpop.f32.mrf.mxu0
  %v3713 = vadd.f32 0.0, %v3712
  %v3714 = vpop.f32.mrf.mxu0
  %3715 = vmatprep.mubr.f32.mxu0 0.0
  %3716 = vmatmul.mubr.f32.gmra.mxu0 %v3644
  %v3717 = vpop.f32.mrf.mxu0
  %v3718 = vadd.f32 0.0, %v3717
  %v3719 = vpop.f32.mrf.mxu0
  %3720 = vdwg.mxu0
  %v3722 = vsel %vm368, %v3626, 0
  %v3725 = vsel %vm368, %v3631, 0
  %v3728 = vsel %vm368, %v3713, 0
  %v3731 = vsel %vm368, %v3718, 0
  %3733 = vmatprep.subr.mxu0 0.0
  %3734 = vmatpush1.msra.mxu0 0.0
  %3735 = vmatprep.subr.mxu0 0.0
  %3736 = vmatpush1.msra.mxu0 0.0
  %3737 = vmatprep.subr.mxu0 0.0
  %3738 = vmatpush1.msra.mxu0 0.0
  %3739 = vmatprep.subr.mxu0 0.0
  %3740 = vmatpush1.msra.mxu0 0.0
  %3741 = vmatprep.subr.mxu0 0.0
  %3742 = vmatpush1.msra.mxu0 0.0
  %3743 = vmatprep.subr.mxu0 0.0
  %3744 = vmatpush1.msra.mxu0 0.0
  %3745 = vmatprep.subr.mxu0 0.0
  %3746 = vmatpush1.msra.mxu0 0.0
  %3747 = vmatprep.subr.mxu0 0.0
  %3748 = vmatpush1.msra.mxu0 0.0
  %3749 = vmatprep.subr.mxu0 0.0
  %3750 = vmatpush1.msra.mxu0 0.0
  %3751 = vmatprep.subr.mxu0 0.0
  %3752 = vmatpush1.msra.mxu0 0.0
  %3753 = vmatprep.subr.mxu0 0.0
  %3754 = vmatpush1.msra.mxu0 0.0
  %3755 = vmatprep.subr.mxu0 0.0
  %3756 = vmatpush1.msra.mxu0 0.0
  %3757 = vmatprep.subr.mxu0 0.0
  %3758 = vmatpush1.msra.mxu0 0.0
  %3759 = vmatprep.subr.mxu0 0.0
  %3760 = vmatpush1.msra.mxu0 0.0
  %3761 = vmatprep.subr.mxu0 0.0
  %3762 = vmatpush1.msra.mxu0 0.0
  %3763 = vmatprep.subr.mxu0 0.0
  %3764 = vmatpush1.msra.mxu0 %v2914
  %3765 = vmatprep.subr.mxu0 0.0
  %3766 = vmatpush2.msra.mxu0 0.0
  %3767 = vmatprep.subr.mxu0 0.0
  %3768 = vmatpush2.msra.mxu0 0.0
  %3769 = vmatprep.subr.mxu0 0.0
  %3770 = vmatpush2.msra.mxu0 0.0
  %3771 = vmatprep.subr.mxu0 0.0
  %3772 = vmatpush2.msra.mxu0 0.0
  %3773 = vmatprep.subr.mxu0 0.0
  %3774 = vmatpush2.msra.mxu0 0.0
  %3775 = vmatprep.subr.mxu0 0.0
  %3776 = vmatpush2.msra.mxu0 0.0
  %3777 = vmatprep.subr.mxu0 0.0
  %3778 = vmatpush2.msra.mxu0 0.0
  %3779 = vmatprep.subr.mxu0 0.0
  %3780 = vmatpush2.msra.mxu0 0.0
  %3781 = vmatprep.subr.mxu0 0.0
  %3782 = vmatpush2.msra.mxu0 0.0
  %3783 = vmatprep.subr.mxu0 0.0
  %3784 = vmatpush2.msra.mxu0 0.0
  %3785 = vmatprep.subr.mxu0 0.0
  %3786 = vmatpush2.msra.mxu0 0.0
  %3787 = vmatprep.subr.mxu0 0.0
  %3788 = vmatpush2.msra.mxu0 0.0
  %3789 = vmatprep.subr.mxu0 0.0
  %3790 = vmatpush2.msra.mxu0 0.0
  %3791 = vmatprep.subr.mxu0 0.0
  %3792 = vmatpush2.msra.mxu0 0.0
  %3793 = vmatprep.subr.mxu0 0.0
  %3794 = vmatpush2.msra.mxu0 0.0
  %3795 = vmatprep.subr.mxu0 0.0
  %3796 = vmatpush2.msra.mxu0 0.0
  %3797 = vmatprep.mubr.f32.mxu0 0.0
  %3798 = vmatmul.mubr.f32.gmra.mxu0 %v3722
  %v3799 = vpop.f32.mrf.mxu0
  %v3800 = vadd.f32 0.0, %v3799
  %v3801 = vpop.f32.mrf.mxu0
  %3802 = vmatprep.mubr.f32.mxu0 0.0
  %3803 = vmatmul.mubr.f32.gmra.mxu0 %v3725
  %v3804 = vpop.f32.mrf.mxu0
  %v3805 = vadd.f32 0.0, %v3804
  %v3806 = vpop.f32.mrf.mxu0
  %3807 = vmatprep.mubr.f32.mxu0 0.0
  %3808 = vmatmul.mubr.f32.gmra.mxu0 %v3728
  %v3809 = vpop.f32.mrf.mxu0
  %v3810 = vadd.f32 0.0, %v3809
  %v3811 = vpop.f32.mrf.mxu0
  %3812 = vmatprep.mubr.f32.mxu0 0.0
  %3813 = vmatmul.mubr.f32.gmra.mxu0 %v3731
  %v3814 = vpop.f32.mrf.mxu0
  %v3815 = vadd.f32 0.0, %v3814
  %v3816 = vpop.f32.mrf.mxu0
  %3817 = vdwg.mxu0
  %v3819 = vsel %vm368, %v3222, 0
  %v3822 = vsel %vm368, %v3227, 0
  %v3825 = vsel %vm368, %v3309, 0
  %v3828 = vsel %vm368, %v3314, 0
  %3830 = vmatprep.subr.mxu0 0.0
  %3831 = vmatpush1.msra.mxu0 0.0
  %3832 = vmatprep.subr.mxu0 0.0
  %3833 = vmatpush1.msra.mxu0 0.0
  %3834 = vmatprep.subr.mxu0 0.0
  %3835 = vmatpush1.msra.mxu0 0.0
  %3836 = vmatprep.subr.mxu0 0.0
  %3837 = vmatpush1.msra.mxu0 0.0
  %3838 = vmatprep.subr.mxu0 0.0
  %3839 = vmatpush1.msra.mxu0 0.0
  %3840 = vmatprep.subr.mxu0 0.0
  %3841 = vmatpush1.msra.mxu0 0.0
  %3842 = vmatprep.subr.mxu0 0.0
  %3843 = vmatpush1.msra.mxu0 0.0
  %3844 = vmatprep.subr.mxu0 0.0
  %3845 = vmatpush1.msra.mxu0 0.0
  %3846 = vmatprep.subr.mxu0 0.0
  %3847 = vmatpush1.msra.mxu0 0.0
  %3848 = vmatprep.subr.mxu0 0.0
  %3849 = vmatpush1.msra.mxu0 0.0
  %3850 = vmatprep.subr.mxu0 0.0
  %3851 = vmatpush1.msra.mxu0 0.0
  %3852 = vmatprep.subr.mxu0 0.0
  %3853 = vmatpush1.msra.mxu0 0.0
  %3854 = vmatprep.subr.mxu0 0.0
  %3855 = vmatpush1.msra.mxu0 0.0
  %3856 = vmatprep.subr.mxu0 0.0
  %3857 = vmatpush1.msra.mxu0 0.0
  %3858 = vmatprep.subr.mxu0 0.0
  %3859 = vmatpush1.msra.mxu0 0.0
  %3860 = vmatprep.subr.mxu0 0.0
  %3861 = vmatpush1.msra.mxu0 %v2913
  %3862 = vmatprep.subr.mxu0 0.0
  %3863 = vmatpush2.msra.mxu0 0.0
  %3864 = vmatprep.subr.mxu0 0.0
  %3865 = vmatpush2.msra.mxu0 0.0
  %3866 = vmatprep.subr.mxu0 0.0
  %3867 = vmatpush2.msra.mxu0 0.0
  %3868 = vmatprep.subr.mxu0 0.0
  %3869 = vmatpush2.msra.mxu0 0.0
  %3870 = vmatprep.subr.mxu0 0.0
  %3871 = vmatpush2.msra.mxu0 0.0
  %3872 = vmatprep.subr.mxu0 0.0
  %3873 = vmatpush2.msra.mxu0 0.0
  %3874 = vmatprep.subr.mxu0 0.0
  %3875 = vmatpush2.msra.mxu0 0.0
  %3876 = vmatprep.subr.mxu0 0.0
  %3877 = vmatpush2.msra.mxu0 0.0
  %3878 = vmatprep.subr.mxu0 0.0
  %3879 = vmatpush2.msra.mxu0 0.0
  %3880 = vmatprep.subr.mxu0 0.0
  %3881 = vmatpush2.msra.mxu0 0.0
  %3882 = vmatprep.subr.mxu0 0.0
  %3883 = vmatpush2.msra.mxu0 0.0
  %3884 = vmatprep.subr.mxu0 0.0
  %3885 = vmatpush2.msra.mxu0 0.0
  %3886 = vmatprep.subr.mxu0 0.0
  %3887 = vmatpush2.msra.mxu0 0.0
  %3888 = vmatprep.subr.mxu0 0.0
  %3889 = vmatpush2.msra.mxu0 0.0
  %3890 = vmatprep.subr.mxu0 0.0
  %3891 = vmatpush2.msra.mxu0 0.0
  %3892 = vmatprep.subr.mxu0 0.0
  %3893 = vmatpush2.msra.mxu0 0.0
  %3894 = vmatprep.mubr.f32.mxu0 0.0
  %3895 = vmatmul.mubr.f32.gmra.mxu0 %v3819
  %v3896 = vpop.f32.mrf.mxu0
  %v3897 = vadd.f32 %v3800, %v3896
  %v3898 = vpop.f32.mrf.mxu0
  %3899 = vmatprep.mubr.f32.mxu0 0.0
  %3900 = vmatmul.mubr.f32.gmra.mxu0 %v3822
  %v3901 = vpop.f32.mrf.mxu0
  %v3902 = vadd.f32 %v3805, %v3901
  %v3903 = vpop.f32.mrf.mxu0
  %3904 = vmatprep.mubr.f32.mxu0 0.0
  %3905 = vmatmul.mubr.f32.gmra.mxu0 %v3825
  %v3906 = vpop.f32.mrf.mxu0
  %v3907 = vadd.f32 %v3810, %v3906
  %v3908 = vpop.f32.mrf.mxu0
  %3909 = vmatprep.mubr.f32.mxu0 0.0
  %3910 = vmatmul.mubr.f32.gmra.mxu0 %v3828
  %v3911 = vpop.f32.mrf.mxu0
  %v3912 = vadd.f32 %v3815, %v3911
  %v3913 = vpop.f32.mrf.mxu0
  %3914 = vdwg.mxu0
  %3915 = vrot.lane.b32.xlu0 %v2894, 112
  %v3916 = vpop.permute.xlu0 %3915
  %3917 = vrot.lane.b32.xlu0 %v2899, 112
  %v3918 = vpop.permute.xlu0 %3917
  %3919 = vrot.lane.b32.xlu0 %v2894, 80
  %v3920 = vpop.permute.xlu0 %3919
  %3921 = vrot.lane.b32.xlu0 %v2899, 80
  %v3922 = vpop.permute.xlu0 %3921
  %v3923 = vsel %vm368, %v3916, 0
  %v3925 = vsel %vm368, %v3918, 0
  %v3927 = vsel %vm368, %v3920, 0
  %v3929 = vsel %vm368, %v3922, 0
  %3931 = vmatprep.subr.mxu0 0.0
  %3932 = vmatpush1.xpose.msra.mxu0 0.0
  %3933 = vmatprep.subr.mxu0 0.0
  %3934 = vmatpush1.xpose.msra.mxu0 0.0
  %3935 = vmatprep.subr.mxu0 0.0
  %3936 = vmatpush1.xpose.msra.mxu0 0.0
  %3937 = vmatprep.subr.mxu0 0.0
  %3938 = vmatpush1.xpose.msra.mxu0 0.0
  %3939 = vmatprep.subr.mxu0 0.0
  %3940 = vmatpush1.xpose.msra.mxu0 0.0
  %3941 = vmatprep.subr.mxu0 0.0
  %3942 = vmatpush1.xpose.msra.mxu0 0.0
  %3943 = vmatprep.subr.mxu0 0.0
  %3944 = vmatpush1.xpose.msra.mxu0 0.0
  %3945 = vmatprep.subr.mxu0 0.0
  %3946 = vmatpush1.xpose.msra.mxu0 0.0
  %3947 = vmatprep.subr.mxu0 0.0
  %3948 = vmatpush1.xpose.msra.mxu0 0.0
  %3949 = vmatprep.subr.mxu0 0.0
  %3950 = vmatpush1.xpose.msra.mxu0 0.0
  %3951 = vmatprep.subr.mxu0 0.0
  %3952 = vmatpush1.xpose.msra.mxu0 0.0
  %3953 = vmatprep.subr.mxu0 0.0
  %3954 = vmatpush1.xpose.msra.mxu0 0.0
  %3955 = vmatprep.subr.mxu0 0.0
  %3956 = vmatpush1.xpose.msra.mxu0 0.0
  %3957 = vmatprep.subr.mxu0 0.0
  %3958 = vmatpush1.xpose.msra.mxu0 0.0
  %3959 = vmatprep.subr.mxu0 0.0
  %3960 = vmatpush1.xpose.msra.mxu0 %v3929
  %3961 = vmatprep.subr.mxu0 0.0
  %3962 = vmatpush1.xpose.msra.mxu0 %v3927
  %3963 = vmatprep.subr.mxu0 0.0
  %3964 = vmatpush2.xpose.msra.mxu0 0.0
  %3965 = vmatprep.subr.mxu0 0.0
  %3966 = vmatpush2.xpose.msra.mxu0 0.0
  %3967 = vmatprep.subr.mxu0 0.0
  %3968 = vmatpush2.xpose.msra.mxu0 0.0
  %3969 = vmatprep.subr.mxu0 0.0
  %3970 = vmatpush2.xpose.msra.mxu0 0.0
  %3971 = vmatprep.subr.mxu0 0.0
  %3972 = vmatpush2.xpose.msra.mxu0 0.0
  %3973 = vmatprep.subr.mxu0 0.0
  %3974 = vmatpush2.xpose.msra.mxu0 0.0
  %3975 = vmatprep.subr.mxu0 0.0
  %3976 = vmatpush2.xpose.msra.mxu0 0.0
  %3977 = vmatprep.subr.mxu0 0.0
  %3978 = vmatpush2.xpose.msra.mxu0 0.0
  %3979 = vmatprep.subr.mxu0 0.0
  %3980 = vmatpush2.xpose.msra.mxu0 0.0
  %3981 = vmatprep.subr.mxu0 0.0
  %3982 = vmatpush2.xpose.msra.mxu0 0.0
  %3983 = vmatprep.subr.mxu0 0.0
  %3984 = vmatpush2.xpose.msra.mxu0 0.0
  %3985 = vmatprep.subr.mxu0 0.0
  %3986 = vmatpush2.xpose.msra.mxu0 0.0
  %3987 = vmatprep.subr.mxu0 0.0
  %3988 = vmatpush2.xpose.msra.mxu0 0.0
  %3989 = vmatprep.subr.mxu0 0.0
  %3990 = vmatpush2.xpose.msra.mxu0 0.0
  %3991 = vmatprep.subr.mxu0 0.0
  %3992 = vmatpush2.xpose.msra.mxu0 0.0
  %3993 = vmatprep.subr.mxu0 0.0
  %3994 = vmatpush2.xpose.msra.mxu0 0.0
  %3995 = vmatprep.mubr.f32.mxu0 0.0
  %3996 = vmatmul.mubr.f32.gmra.mxu0 %v3923
  %v3997 = vpop.f32.mrf.mxu0
  %v3998 = vadd.f32 0.0, %v3997
  %v3999 = vpop.f32.mrf.mxu0
  %4000 = vmatprep.mubr.f32.mxu0 0.0
  %4001 = vmatmul.mubr.f32.gmra.mxu0 %v3925
  %v4002 = vpop.f32.mrf.mxu0
  %v4003 = vadd.f32 0.0, %v4002
  %v4004 = vpop.f32.mrf.mxu0
  %4005 = vdwg.mxu0
  %4006 = vrot.lane.b32.xlu0 %v2904, 112
  %v4007 = vpop.permute.xlu0 %4006
  %4008 = vrot.lane.b32.xlu0 %v2909, 112
  %v4009 = vpop.permute.xlu0 %4008
  %4010 = vrot.lane.b32.xlu0 %v2904, 80
  %v4011 = vpop.permute.xlu0 %4010
  %4012 = vrot.lane.b32.xlu0 %v2909, 80
  %v4013 = vpop.permute.xlu0 %4012
  %v4014 = vsel %vm368, %v4007, 0
  %v4016 = vsel %vm368, %v4009, 0
  %v4018 = vsel %vm368, %v4011, 0
  %v4020 = vsel %vm368, %v4013, 0
  %4022 = vmatprep.subr.mxu0 0.0
  %4023 = vmatpush1.xpose.msra.mxu0 0.0
  %4024 = vmatprep.subr.mxu0 0.0
  %4025 = vmatpush1.xpose.msra.mxu0 0.0
  %4026 = vmatprep.subr.mxu0 0.0
  %4027 = vmatpush1.xpose.msra.mxu0 0.0
  %4028 = vmatprep.subr.mxu0 0.0
  %4029 = vmatpush1.xpose.msra.mxu0 0.0
  %4030 = vmatprep.subr.mxu0 0.0
  %4031 = vmatpush1.xpose.msra.mxu0 0.0
  %4032 = vmatprep.subr.mxu0 0.0
  %4033 = vmatpush1.xpose.msra.mxu0 0.0
  %4034 = vmatprep.subr.mxu0 0.0
  %4035 = vmatpush1.xpose.msra.mxu0 0.0
  %4036 = vmatprep.subr.mxu0 0.0
  %4037 = vmatpush1.xpose.msra.mxu0 0.0
  %4038 = vmatprep.subr.mxu0 0.0
  %4039 = vmatpush1.xpose.msra.mxu0 0.0
  %4040 = vmatprep.subr.mxu0 0.0
  %4041 = vmatpush1.xpose.msra.mxu0 0.0
  %4042 = vmatprep.subr.mxu0 0.0
  %4043 = vmatpush1.xpose.msra.mxu0 0.0
  %4044 = vmatprep.subr.mxu0 0.0
  %4045 = vmatpush1.xpose.msra.mxu0 0.0
  %4046 = vmatprep.subr.mxu0 0.0
  %4047 = vmatpush1.xpose.msra.mxu0 0.0
  %4048 = vmatprep.subr.mxu0 0.0
  %4049 = vmatpush1.xpose.msra.mxu0 0.0
  %4050 = vmatprep.subr.mxu0 0.0
  %4051 = vmatpush1.xpose.msra.mxu0 %v4020
  %4052 = vmatprep.subr.mxu0 0.0
  %4053 = vmatpush1.xpose.msra.mxu0 %v4018
  %4054 = vmatprep.subr.mxu0 0.0
  %4055 = vmatpush2.xpose.msra.mxu0 0.0
  %4056 = vmatprep.subr.mxu0 0.0
  %4057 = vmatpush2.xpose.msra.mxu0 0.0
  %4058 = vmatprep.subr.mxu0 0.0
  %4059 = vmatpush2.xpose.msra.mxu0 0.0
  %4060 = vmatprep.subr.mxu0 0.0
  %4061 = vmatpush2.xpose.msra.mxu0 0.0
  %4062 = vmatprep.subr.mxu0 0.0
  %4063 = vmatpush2.xpose.msra.mxu0 0.0
  %4064 = vmatprep.subr.mxu0 0.0
  %4065 = vmatpush2.xpose.msra.mxu0 0.0
  %4066 = vmatprep.subr.mxu0 0.0
  %4067 = vmatpush2.xpose.msra.mxu0 0.0
  %4068 = vmatprep.subr.mxu0 0.0
  %4069 = vmatpush2.xpose.msra.mxu0 0.0
  %4070 = vmatprep.subr.mxu0 0.0
  %4071 = vmatpush2.xpose.msra.mxu0 0.0
  %4072 = vmatprep.subr.mxu0 0.0
  %4073 = vmatpush2.xpose.msra.mxu0 0.0
  %4074 = vmatprep.subr.mxu0 0.0
  %4075 = vmatpush2.xpose.msra.mxu0 0.0
  %4076 = vmatprep.subr.mxu0 0.0
  %4077 = vmatpush2.xpose.msra.mxu0 0.0
  %4078 = vmatprep.subr.mxu0 0.0
  %4079 = vmatpush2.xpose.msra.mxu0 0.0
  %4080 = vmatprep.subr.mxu0 0.0
  %4081 = vmatpush2.xpose.msra.mxu0 0.0
  %4082 = vmatprep.subr.mxu0 0.0
  %4083 = vmatpush2.xpose.msra.mxu0 0.0
  %4084 = vmatprep.subr.mxu0 0.0
  %4085 = vmatpush2.xpose.msra.mxu0 0.0
  %4086 = vmatprep.mubr.f32.mxu0 0.0
  %4087 = vmatmul.mubr.f32.gmra.mxu0 %v4014
  %v4088 = vpop.f32.mrf.mxu0
  %v4089 = vadd.f32 0.0, %v4088
  %v4090 = vpop.f32.mrf.mxu0
  %4091 = vmatprep.mubr.f32.mxu0 0.0
  %4092 = vmatmul.mubr.f32.gmra.mxu0 %v4016
  %v4093 = vpop.f32.mrf.mxu0
  %v4094 = vadd.f32 0.0, %v4093
  %v4095 = vpop.f32.mrf.mxu0
  %4096 = vdwg.mxu0
  %v4097 = vmul.f32 %v3998, 0.35355338
  %v4098 = vmul.f32 %v4003, 0.35355338
  %v4099 = vmul.f32 %v4089, 0.35355338
  %v4100 = vmul.f32 %v4094, 0.35355338
  %v4101 = vsel %vm545, %v4097, -inf
  %4102 = vmax.xlane.f32.xlu0 %v4101
  %v4103 = vpop.xlane.xlu0 %4102
  %v4104 = vsel %vm545, %v4098, -inf
  %4105 = vmax.xlane.f32.xlu0 %v4104
  %v4106 = vpop.xlane.xlu0 %4105
  %v4107 = vsel %vm545, %v4099, -inf
  %4108 = vmax.xlane.f32.xlu0 %v4107
  %v4109 = vpop.xlane.xlu0 %4108
  %v4110 = vsel %vm545, %v4100, -inf
  %4111 = vmax.xlane.f32.xlu0 %v4110
  %v4112 = vpop.xlane.xlu0 %4111
  %v4113 = vsub.f32 %v4097, %v4103
  %v4114 = vsub.f32 %v4098, %v4106
  %v4115 = vsub.f32 %v4099, %v4109
  %v4116 = vsub.f32 %v4100, %v4112
  %v4117 = vmul.f32 %v4113, 1.442695
  %v4118 = vpow.pop %v4117
  %v4119 = vmul.f32 %v4114, 1.442695
  %v4120 = vpow.pop %v4119
  %v4121 = vmul.f32 %v4115, 1.442695
  %v4122 = vpow.pop %v4121
  %v4123 = vmul.f32 %v4116, 1.442695
  %v4124 = vpow.pop %v4123
  %v4125 = vsel %vm545, %v4118, 0.0
  %4126 = vadd.xlane.f32.xlu0 %v4125
  %v4127 = vpop.xlane.xlu0 %4126
  %v4128 = vsel %vm545, %v4120, 0.0
  %4129 = vadd.xlane.f32.xlu0 %v4128
  %v4130 = vpop.xlane.xlu0 %4129
  %v4131 = vsel %vm545, %v4122, 0.0
  %4132 = vadd.xlane.f32.xlu0 %v4131
  %v4133 = vpop.xlane.xlu0 %4132
  %v4134 = vsel %vm545, %v4124, 0.0
  %4135 = vadd.xlane.f32.xlu0 %v4134
  %v4136 = vpop.xlane.xlu0 %4135
  %v4137 = vrcp.pop %v4127
  %v4138 = vrcp.pop %v4130
  %v4139 = vrcp.pop %v4133
  %v4140 = vrcp.pop %v4136
  %v4141 = vmul.f32 %v4118, %v4137
  %v4142 = vmul.f32 %v4120, %v4138
  %v4143 = vmul.f32 %v4122, %v4139
  %v4144 = vmul.f32 %v4124, %v4140
  %4145 = vrot.lane.b32.xlu0 %v2894, 48
  %v4146 = vpop.permute.xlu0 %4145
  %4147 = vrot.lane.b32.xlu0 %v2899, 48
  %v4148 = vpop.permute.xlu0 %4147
  %v4152 = vsel %vm545, %v4141, 0
  %v4155 = vsel %vm545, %v4142, 0
  %4157 = vmatprep.subr.mxu0 0.0
  %4158 = vmatpush1.msra.mxu0 0.0
  %4159 = vmatprep.subr.mxu0 0.0
  %4160 = vmatpush1.msra.mxu0 0.0
  %4161 = vmatprep.subr.mxu0 0.0
  %4162 = vmatpush1.msra.mxu0 0.0
  %4163 = vmatprep.subr.mxu0 0.0
  %4164 = vmatpush1.msra.mxu0 0.0
  %4165 = vmatprep.subr.mxu0 0.0
  %4166 = vmatpush1.msra.mxu0 0.0
  %4167 = vmatprep.subr.mxu0 0.0
  %4168 = vmatpush1.msra.mxu0 0.0
  %4169 = vmatprep.subr.mxu0 0.0
  %4170 = vmatpush1.msra.mxu0 0.0
  %4171 = vmatprep.subr.mxu0 0.0
  %4172 = vmatpush1.msra.mxu0 0.0
  %4173 = vmatprep.subr.mxu0 0.0
  %4174 = vmatpush1.msra.mxu0 0.0
  %4175 = vmatprep.subr.mxu0 0.0
  %4176 = vmatpush1.msra.mxu0 0.0
  %4177 = vmatprep.subr.mxu0 0.0
  %4178 = vmatpush1.msra.mxu0 0.0
  %4179 = vmatprep.subr.mxu0 0.0
  %4180 = vmatpush1.msra.mxu0 0.0
  %4181 = vmatprep.subr.mxu0 0.0
  %4182 = vmatpush1.msra.mxu0 0.0
  %4183 = vmatprep.subr.mxu0 0.0
  %4184 = vmatpush1.msra.mxu0 0.0
  %4185 = vmatprep.subr.mxu0 0.0
  %4186 = vmatpush1.msra.mxu0 %v4148
  %4187 = vmatprep.subr.mxu0 0.0
  %4188 = vmatpush1.msra.mxu0 %v4146
  %4189 = vmatprep.subr.mxu0 0.0
  %4190 = vmatpush2.msra.mxu0 0.0
  %4191 = vmatprep.subr.mxu0 0.0
  %4192 = vmatpush2.msra.mxu0 0.0
  %4193 = vmatprep.subr.mxu0 0.0
  %4194 = vmatpush2.msra.mxu0 0.0
  %4195 = vmatprep.subr.mxu0 0.0
  %4196 = vmatpush2.msra.mxu0 0.0
  %4197 = vmatprep.subr.mxu0 0.0
  %4198 = vmatpush2.msra.mxu0 0.0
  %4199 = vmatprep.subr.mxu0 0.0
  %4200 = vmatpush2.msra.mxu0 0.0
  %4201 = vmatprep.subr.mxu0 0.0
  %4202 = vmatpush2.msra.mxu0 0.0
  %4203 = vmatprep.subr.mxu0 0.0
  %4204 = vmatpush2.msra.mxu0 0.0
  %4205 = vmatprep.subr.mxu0 0.0
  %4206 = vmatpush2.msra.mxu0 0.0
  %4207 = vmatprep.subr.mxu0 0.0
  %4208 = vmatpush2.msra.mxu0 0.0
  %4209 = vmatprep.subr.mxu0 0.0
  %4210 = vmatpush2.msra.mxu0 0.0
  %4211 = vmatprep.subr.mxu0 0.0
  %4212 = vmatpush2.msra.mxu0 0.0
  %4213 = vmatprep.subr.mxu0 0.0
  %4214 = vmatpush2.msra.mxu0 0.0
  %4215 = vmatprep.subr.mxu0 0.0
  %4216 = vmatpush2.msra.mxu0 0.0
  %4217 = vmatprep.subr.mxu0 0.0
  %4218 = vmatpush2.msra.mxu0 0.0
  %4219 = vmatprep.subr.mxu0 0.0
  %4220 = vmatpush2.msra.mxu0 0.0
  %4221 = vmatprep.mubr.f32.mxu0 0.0
  %4222 = vmatmul.mubr.f32.gmra.mxu0 %v4152
  %v4223 = vpop.f32.mrf.mxu0
  %v4224 = vadd.f32 0.0, %v4223
  %v4225 = vpop.f32.mrf.mxu0
  %4226 = vmatprep.mubr.f32.mxu0 0.0
  %4227 = vmatmul.mubr.f32.gmra.mxu0 %v4155
  %v4228 = vpop.f32.mrf.mxu0
  %v4229 = vadd.f32 0.0, %v4228
  %v4230 = vpop.f32.mrf.mxu0
  %4231 = vdwg.mxu0
  %4232 = vrot.lane.b32.xlu0 %v2904, 48
  %v4233 = vpop.permute.xlu0 %4232
  %4234 = vrot.lane.b32.xlu0 %v2909, 48
  %v4235 = vpop.permute.xlu0 %4234
  %v4239 = vsel %vm545, %v4143, 0
  %v4242 = vsel %vm545, %v4144, 0
  %4244 = vmatprep.subr.mxu0 0.0
  %4245 = vmatpush1.msra.mxu0 0.0
  %4246 = vmatprep.subr.mxu0 0.0
  %4247 = vmatpush1.msra.mxu0 0.0
  %4248 = vmatprep.subr.mxu0 0.0
  %4249 = vmatpush1.msra.mxu0 0.0
  %4250 = vmatprep.subr.mxu0 0.0
  %4251 = vmatpush1.msra.mxu0 0.0
  %4252 = vmatprep.subr.mxu0 0.0
  %4253 = vmatpush1.msra.mxu0 0.0
  %4254 = vmatprep.subr.mxu0 0.0
  %4255 = vmatpush1.msra.mxu0 0.0
  %4256 = vmatprep.subr.mxu0 0.0
  %4257 = vmatpush1.msra.mxu0 0.0
  %4258 = vmatprep.subr.mxu0 0.0
  %4259 = vmatpush1.msra.mxu0 0.0
  %4260 = vmatprep.subr.mxu0 0.0
  %4261 = vmatpush1.msra.mxu0 0.0
  %4262 = vmatprep.subr.mxu0 0.0
  %4263 = vmatpush1.msra.mxu0 0.0
  %4264 = vmatprep.subr.mxu0 0.0
  %4265 = vmatpush1.msra.mxu0 0.0
  %4266 = vmatprep.subr.mxu0 0.0
  %4267 = vmatpush1.msra.mxu0 0.0
  %4268 = vmatprep.subr.mxu0 0.0
  %4269 = vmatpush1.msra.mxu0 0.0
  %4270 = vmatprep.subr.mxu0 0.0
  %4271 = vmatpush1.msra.mxu0 0.0
  %4272 = vmatprep.subr.mxu0 0.0
  %4273 = vmatpush1.msra.mxu0 %v4235
  %4274 = vmatprep.subr.mxu0 0.0
  %4275 = vmatpush1.msra.mxu0 %v4233
  %4276 = vmatprep.subr.mxu0 0.0
  %4277 = vmatpush2.msra.mxu0 0.0
  %4278 = vmatprep.subr.mxu0 0.0
  %4279 = vmatpush2.msra.mxu0 0.0
  %4280 = vmatprep.subr.mxu0 0.0
  %4281 = vmatpush2.msra.mxu0 0.0
  %4282 = vmatprep.subr.mxu0 0.0
  %4283 = vmatpush2.msra.mxu0 0.0
  %4284 = vmatprep.subr.mxu0 0.0
  %4285 = vmatpush2.msra.mxu0 0.0
  %4286 = vmatprep.subr.mxu0 0.0
  %4287 = vmatpush2.msra.mxu0 0.0
  %4288 = vmatprep.subr.mxu0 0.0
  %4289 = vmatpush2.msra.mxu0 0.0
  %4290 = vmatprep.subr.mxu0 0.0
  %4291 = vmatpush2.msra.mxu0 0.0
  %4292 = vmatprep.subr.mxu0 0.0
  %4293 = vmatpush2.msra.mxu0 0.0
  %4294 = vmatprep.subr.mxu0 0.0
  %4295 = vmatpush2.msra.mxu0 0.0
  %4296 = vmatprep.subr.mxu0 0.0
  %4297 = vmatpush2.msra.mxu0 0.0
  %4298 = vmatprep.subr.mxu0 0.0
  %4299 = vmatpush2.msra.mxu0 0.0
  %4300 = vmatprep.subr.mxu0 0.0
  %4301 = vmatpush2.msra.mxu0 0.0
  %4302 = vmatprep.subr.mxu0 0.0
  %4303 = vmatpush2.msra.mxu0 0.0
  %4304 = vmatprep.subr.mxu0 0.0
  %4305 = vmatpush2.msra.mxu0 0.0
  %4306 = vmatprep.subr.mxu0 0.0
  %4307 = vmatpush2.msra.mxu0 0.0
  %4308 = vmatprep.mubr.f32.mxu0 0.0
  %4309 = vmatmul.mubr.f32.gmra.mxu0 %v4239
  %v4310 = vpop.f32.mrf.mxu0
  %v4311 = vadd.f32 0.0, %v4310
  %v4312 = vpop.f32.mrf.mxu0
  %4313 = vmatprep.mubr.f32.mxu0 0.0
  %4314 = vmatmul.mubr.f32.gmra.mxu0 %v4242
  %v4315 = vpop.f32.mrf.mxu0
  %v4316 = vadd.f32 0.0, %v4315
  %v4317 = vpop.f32.mrf.mxu0
  %4318 = vdwg.mxu0
  %v4320 = vsel %vm368, %v4224, 0
  %v4323 = vsel %vm368, %v4229, 0
  %v4326 = vsel %vm368, %v4311, 0
  %v4329 = vsel %vm368, %v4316, 0
  %4331 = vmatprep.subr.mxu0 0.0
  %4332 = vmatpush1.msra.mxu0 0.0
  %4333 = vmatprep.subr.mxu0 0.0
  %4334 = vmatpush1.msra.mxu0 0.0
  %4335 = vmatprep.subr.mxu0 0.0
  %4336 = vmatpush1.msra.mxu0 0.0
  %4337 = vmatprep.subr.mxu0 0.0
  %4338 = vmatpush1.msra.mxu0 0.0
  %4339 = vmatprep.subr.mxu0 0.0
  %4340 = vmatpush1.msra.mxu0 0.0
  %4341 = vmatprep.subr.mxu0 0.0
  %4342 = vmatpush1.msra.mxu0 0.0
  %4343 = vmatprep.subr.mxu0 0.0
  %4344 = vmatpush1.msra.mxu0 0.0
  %4345 = vmatprep.subr.mxu0 0.0
  %4346 = vmatpush1.msra.mxu0 0.0
  %4347 = vmatprep.subr.mxu0 0.0
  %4348 = vmatpush1.msra.mxu0 0.0
  %4349 = vmatprep.subr.mxu0 0.0
  %4350 = vmatpush1.msra.mxu0 0.0
  %4351 = vmatprep.subr.mxu0 0.0
  %4352 = vmatpush1.msra.mxu0 0.0
  %4353 = vmatprep.subr.mxu0 0.0
  %4354 = vmatpush1.msra.mxu0 0.0
  %4355 = vmatprep.subr.mxu0 0.0
  %4356 = vmatpush1.msra.mxu0 0.0
  %4357 = vmatprep.subr.mxu0 0.0
  %4358 = vmatpush1.msra.mxu0 0.0
  %4359 = vmatprep.subr.mxu0 0.0
  %4360 = vmatpush1.msra.mxu0 0.0
  %4361 = vmatprep.subr.mxu0 0.0
  %4362 = vmatpush1.msra.mxu0 %v2915
  %4363 = vmatprep.subr.mxu0 0.0
  %4364 = vmatpush2.msra.mxu0 0.0
  %4365 = vmatprep.subr.mxu0 0.0
  %4366 = vmatpush2.msra.mxu0 0.0
  %4367 = vmatprep.subr.mxu0 0.0
  %4368 = vmatpush2.msra.mxu0 0.0
  %4369 = vmatprep.subr.mxu0 0.0
  %4370 = vmatpush2.msra.mxu0 0.0
  %4371 = vmatprep.subr.mxu0 0.0
  %4372 = vmatpush2.msra.mxu0 0.0
  %4373 = vmatprep.subr.mxu0 0.0
  %4374 = vmatpush2.msra.mxu0 0.0
  %4375 = vmatprep.subr.mxu0 0.0
  %4376 = vmatpush2.msra.mxu0 0.0
  %4377 = vmatprep.subr.mxu0 0.0
  %4378 = vmatpush2.msra.mxu0 0.0
  %4379 = vmatprep.subr.mxu0 0.0
  %4380 = vmatpush2.msra.mxu0 0.0
  %4381 = vmatprep.subr.mxu0 0.0
  %4382 = vmatpush2.msra.mxu0 0.0
  %4383 = vmatprep.subr.mxu0 0.0
  %4384 = vmatpush2.msra.mxu0 0.0
  %4385 = vmatprep.subr.mxu0 0.0
  %4386 = vmatpush2.msra.mxu0 0.0
  %4387 = vmatprep.subr.mxu0 0.0
  %4388 = vmatpush2.msra.mxu0 0.0
  %4389 = vmatprep.subr.mxu0 0.0
  %4390 = vmatpush2.msra.mxu0 0.0
  %4391 = vmatprep.subr.mxu0 0.0
  %4392 = vmatpush2.msra.mxu0 0.0
  %4393 = vmatprep.subr.mxu0 0.0
  %4394 = vmatpush2.msra.mxu0 0.0
  %4395 = vmatprep.mubr.f32.mxu0 0.0
  %4396 = vmatmul.mubr.f32.gmra.mxu0 %v4320
  %v4397 = vpop.f32.mrf.mxu0
  %v4398 = vadd.f32 0.0, %v4397
  %v4399 = vpop.f32.mrf.mxu0
  %4400 = vmatprep.mubr.f32.mxu0 0.0
  %4401 = vmatmul.mubr.f32.gmra.mxu0 %v4323
  %v4402 = vpop.f32.mrf.mxu0
  %v4403 = vadd.f32 0.0, %v4402
  %v4404 = vpop.f32.mrf.mxu0
  %4405 = vmatprep.mubr.f32.mxu0 0.0
  %4406 = vmatmul.mubr.f32.gmra.mxu0 %v4326
  %v4407 = vpop.f32.mrf.mxu0
  %v4408 = vadd.f32 0.0, %v4407
  %v4409 = vpop.f32.mrf.mxu0
  %4410 = vmatprep.mubr.f32.mxu0 0.0
  %4411 = vmatmul.mubr.f32.gmra.mxu0 %v4329
  %v4412 = vpop.f32.mrf.mxu0
  %v4413 = vadd.f32 0.0, %v4412
  %v4414 = vpop.f32.mrf.mxu0
  %4415 = vdwg.mxu0
  %v4416 = vadd.f32 %v3897, %v4398
  %v4417 = vadd.f32 %v3902, %v4403
  %v4418 = vadd.f32 %v3907, %v4408
  %v4419 = vadd.f32 %v3912, %v4413
  %4420 = vrot.lane.b32.xlu0 %v2894, 104
  %v4421 = vpop.permute.xlu0 %4420
  %4422 = vrot.lane.b32.xlu0 %v2899, 104
  %v4423 = vpop.permute.xlu0 %4422
  %4424 = vrot.lane.b32.xlu0 %v2894, 72
  %v4425 = vpop.permute.xlu0 %4424
  %4426 = vrot.lane.b32.xlu0 %v2899, 72
  %v4427 = vpop.permute.xlu0 %4426
  %v4428 = vsel %vm368, %v4421, 0
  %v4430 = vsel %vm368, %v4423, 0
  %v4432 = vsel %vm368, %v4425, 0
  %v4434 = vsel %vm368, %v4427, 0
  %4436 = vmatprep.subr.mxu0 0.0
  %4437 = vmatpush1.xpose.msra.mxu0 0.0
  %4438 = vmatprep.subr.mxu0 0.0
  %4439 = vmatpush1.xpose.msra.mxu0 0.0
  %4440 = vmatprep.subr.mxu0 0.0
  %4441 = vmatpush1.xpose.msra.mxu0 0.0
  %4442 = vmatprep.subr.mxu0 0.0
  %4443 = vmatpush1.xpose.msra.mxu0 0.0
  %4444 = vmatprep.subr.mxu0 0.0
  %4445 = vmatpush1.xpose.msra.mxu0 0.0
  %4446 = vmatprep.subr.mxu0 0.0
  %4447 = vmatpush1.xpose.msra.mxu0 0.0
  %4448 = vmatprep.subr.mxu0 0.0
  %4449 = vmatpush1.xpose.msra.mxu0 0.0
  %4450 = vmatprep.subr.mxu0 0.0
  %4451 = vmatpush1.xpose.msra.mxu0 0.0
  %4452 = vmatprep.subr.mxu0 0.0
  %4453 = vmatpush1.xpose.msra.mxu0 0.0
  %4454 = vmatprep.subr.mxu0 0.0
  %4455 = vmatpush1.xpose.msra.mxu0 0.0
  %4456 = vmatprep.subr.mxu0 0.0
  %4457 = vmatpush1.xpose.msra.mxu0 0.0
  %4458 = vmatprep.subr.mxu0 0.0
  %4459 = vmatpush1.xpose.msra.mxu0 0.0
  %4460 = vmatprep.subr.mxu0 0.0
  %4461 = vmatpush1.xpose.msra.mxu0 0.0
  %4462 = vmatprep.subr.mxu0 0.0
  %4463 = vmatpush1.xpose.msra.mxu0 0.0
  %4464 = vmatprep.subr.mxu0 0.0
  %4465 = vmatpush1.xpose.msra.mxu0 %v4434
  %4466 = vmatprep.subr.mxu0 0.0
  %4467 = vmatpush1.xpose.msra.mxu0 %v4432
  %4468 = vmatprep.subr.mxu0 0.0
  %4469 = vmatpush2.xpose.msra.mxu0 0.0
  %4470 = vmatprep.subr.mxu0 0.0
  %4471 = vmatpush2.xpose.msra.mxu0 0.0
  %4472 = vmatprep.subr.mxu0 0.0
  %4473 = vmatpush2.xpose.msra.mxu0 0.0
  %4474 = vmatprep.subr.mxu0 0.0
  %4475 = vmatpush2.xpose.msra.mxu0 0.0
  %4476 = vmatprep.subr.mxu0 0.0
  %4477 = vmatpush2.xpose.msra.mxu0 0.0
  %4478 = vmatprep.subr.mxu0 0.0
  %4479 = vmatpush2.xpose.msra.mxu0 0.0
  %4480 = vmatprep.subr.mxu0 0.0
  %4481 = vmatpush2.xpose.msra.mxu0 0.0
  %4482 = vmatprep.subr.mxu0 0.0
  %4483 = vmatpush2.xpose.msra.mxu0 0.0
  %4484 = vmatprep.subr.mxu0 0.0
  %4485 = vmatpush2.xpose.msra.mxu0 0.0
  %4486 = vmatprep.subr.mxu0 0.0
  %4487 = vmatpush2.xpose.msra.mxu0 0.0
  %4488 = vmatprep.subr.mxu0 0.0
  %4489 = vmatpush2.xpose.msra.mxu0 0.0
  %4490 = vmatprep.subr.mxu0 0.0
  %4491 = vmatpush2.xpose.msra.mxu0 0.0
  %4492 = vmatprep.subr.mxu0 0.0
  %4493 = vmatpush2.xpose.msra.mxu0 0.0
  %4494 = vmatprep.subr.mxu0 0.0
  %4495 = vmatpush2.xpose.msra.mxu0 0.0
  %4496 = vmatprep.subr.mxu0 0.0
  %4497 = vmatpush2.xpose.msra.mxu0 0.0
  %4498 = vmatprep.subr.mxu0 0.0
  %4499 = vmatpush2.xpose.msra.mxu0 0.0
  %4500 = vmatprep.mubr.f32.mxu0 0.0
  %4501 = vmatmul.mubr.f32.gmra.mxu0 %v4428
  %v4502 = vpop.f32.mrf.mxu0
  %v4503 = vadd.f32 0.0, %v4502
  %v4504 = vpop.f32.mrf.mxu0
  %4505 = vmatprep.mubr.f32.mxu0 0.0
  %4506 = vmatmul.mubr.f32.gmra.mxu0 %v4430
  %v4507 = vpop.f32.mrf.mxu0
  %v4508 = vadd.f32 0.0, %v4507
  %v4509 = vpop.f32.mrf.mxu0
  %4510 = vdwg.mxu0
  %4511 = vrot.lane.b32.xlu0 %v2904, 104
  %v4512 = vpop.permute.xlu0 %4511
  %4513 = vrot.lane.b32.xlu0 %v2909, 104
  %v4514 = vpop.permute.xlu0 %4513
  %4515 = vrot.lane.b32.xlu0 %v2904, 72
  %v4516 = vpop.permute.xlu0 %4515
  %4517 = vrot.lane.b32.xlu0 %v2909, 72
  %v4518 = vpop.permute.xlu0 %4517
  %v4519 = vsel %vm368, %v4512, 0
  %v4521 = vsel %vm368, %v4514, 0
  %v4523 = vsel %vm368, %v4516, 0
  %v4525 = vsel %vm368, %v4518, 0
  %4527 = vmatprep.subr.mxu0 0.0
  %4528 = vmatpush1.xpose.msra.mxu0 0.0
  %4529 = vmatprep.subr.mxu0 0.0
  %4530 = vmatpush1.xpose.msra.mxu0 0.0
  %4531 = vmatprep.subr.mxu0 0.0
  %4532 = vmatpush1.xpose.msra.mxu0 0.0
  %4533 = vmatprep.subr.mxu0 0.0
  %4534 = vmatpush1.xpose.msra.mxu0 0.0
  %4535 = vmatprep.subr.mxu0 0.0
  %4536 = vmatpush1.xpose.msra.mxu0 0.0
  %4537 = vmatprep.subr.mxu0 0.0
  %4538 = vmatpush1.xpose.msra.mxu0 0.0
  %4539 = vmatprep.subr.mxu0 0.0
  %4540 = vmatpush1.xpose.msra.mxu0 0.0
  %4541 = vmatprep.subr.mxu0 0.0
  %4542 = vmatpush1.xpose.msra.mxu0 0.0
  %4543 = vmatprep.subr.mxu0 0.0
  %4544 = vmatpush1.xpose.msra.mxu0 0.0
  %4545 = vmatprep.subr.mxu0 0.0
  %4546 = vmatpush1.xpose.msra.mxu0 0.0
  %4547 = vmatprep.subr.mxu0 0.0
  %4548 = vmatpush1.xpose.msra.mxu0 0.0
  %4549 = vmatprep.subr.mxu0 0.0
  %4550 = vmatpush1.xpose.msra.mxu0 0.0
  %4551 = vmatprep.subr.mxu0 0.0
  %4552 = vmatpush1.xpose.msra.mxu0 0.0
  %4553 = vmatprep.subr.mxu0 0.0
  %4554 = vmatpush1.xpose.msra.mxu0 0.0
  %4555 = vmatprep.subr.mxu0 0.0
  %4556 = vmatpush1.xpose.msra.mxu0 %v4525
  %4557 = vmatprep.subr.mxu0 0.0
  %4558 = vmatpush1.xpose.msra.mxu0 %v4523
  %4559 = vmatprep.subr.mxu0 0.0
  %4560 = vmatpush2.xpose.msra.mxu0 0.0
  %4561 = vmatprep.subr.mxu0 0.0
  %4562 = vmatpush2.xpose.msra.mxu0 0.0
  %4563 = vmatprep.subr.mxu0 0.0
  %4564 = vmatpush2.xpose.msra.mxu0 0.0
  %4565 = vmatprep.subr.mxu0 0.0
  %4566 = vmatpush2.xpose.msra.mxu0 0.0
  %4567 = vmatprep.subr.mxu0 0.0
  %4568 = vmatpush2.xpose.msra.mxu0 0.0
  %4569 = vmatprep.subr.mxu0 0.0
  %4570 = vmatpush2.xpose.msra.mxu0 0.0
  %4571 = vmatprep.subr.mxu0 0.0
  %4572 = vmatpush2.xpose.msra.mxu0 0.0
  %4573 = vmatprep.subr.mxu0 0.0
  %4574 = vmatpush2.xpose.msra.mxu0 0.0
  %4575 = vmatprep.subr.mxu0 0.0
  %4576 = vmatpush2.xpose.msra.mxu0 0.0
  %4577 = vmatprep.subr.mxu0 0.0
  %4578 = vmatpush2.xpose.msra.mxu0 0.0
  %4579 = vmatprep.subr.mxu0 0.0
  %4580 = vmatpush2.xpose.msra.mxu0 0.0
  %4581 = vmatprep.subr.mxu0 0.0
  %4582 = vmatpush2.xpose.msra.mxu0 0.0
  %4583 = vmatprep.subr.mxu0 0.0
  %4584 = vmatpush2.xpose.msra.mxu0 0.0
  %4585 = vmatprep.subr.mxu0 0.0
  %4586 = vmatpush2.xpose.msra.mxu0 0.0
  %4587 = vmatprep.subr.mxu0 0.0
  %4588 = vmatpush2.xpose.msra.mxu0 0.0
  %4589 = vmatprep.subr.mxu0 0.0
  %4590 = vmatpush2.xpose.msra.mxu0 0.0
  %4591 = vmatprep.mubr.f32.mxu0 0.0
  %4592 = vmatmul.mubr.f32.gmra.mxu0 %v4519
  %v4593 = vpop.f32.mrf.mxu0
  %v4594 = vadd.f32 0.0, %v4593
  %v4595 = vpop.f32.mrf.mxu0
  %4596 = vmatprep.mubr.f32.mxu0 0.0
  %4597 = vmatmul.mubr.f32.gmra.mxu0 %v4521
  %v4598 = vpop.f32.mrf.mxu0
  %v4599 = vadd.f32 0.0, %v4598
  %v4600 = vpop.f32.mrf.mxu0
  %4601 = vdwg.mxu0
  %v4602 = vmul.f32 %v4503, 0.35355338
  %v4603 = vmul.f32 %v4508, 0.35355338
  %v4604 = vmul.f32 %v4594, 0.35355338
  %v4605 = vmul.f32 %v4599, 0.35355338
  %v4606 = vsel %vm545, %v4602, -inf
  %4607 = vmax.xlane.f32.xlu0 %v4606
  %v4608 = vpop.xlane.xlu0 %4607
  %v4609 = vsel %vm545, %v4603, -inf
  %4610 = vmax.xlane.f32.xlu0 %v4609
  %v4611 = vpop.xlane.xlu0 %4610
  %v4612 = vsel %vm545, %v4604, -inf
  %4613 = vmax.xlane.f32.xlu0 %v4612
  %v4614 = vpop.xlane.xlu0 %4613
  %v4615 = vsel %vm545, %v4605, -inf
  %4616 = vmax.xlane.f32.xlu0 %v4615
  %v4617 = vpop.xlane.xlu0 %4616
  %v4618 = vsub.f32 %v4602, %v4608
  %v4619 = vsub.f32 %v4603, %v4611
  %v4620 = vsub.f32 %v4604, %v4614
  %v4621 = vsub.f32 %v4605, %v4617
  %v4622 = vmul.f32 %v4618, 1.442695
  %v4623 = vpow.pop %v4622
  %v4624 = vmul.f32 %v4619, 1.442695
  %v4625 = vpow.pop %v4624
  %v4626 = vmul.f32 %v4620, 1.442695
  %v4627 = vpow.pop %v4626
  %v4628 = vmul.f32 %v4621, 1.442695
  %v4629 = vpow.pop %v4628
  %v4630 = vsel %vm545, %v4623, 0.0
  %4631 = vadd.xlane.f32.xlu0 %v4630
  %v4632 = vpop.xlane.xlu0 %4631
  %v4633 = vsel %vm545, %v4625, 0.0
  %4634 = vadd.xlane.f32.xlu0 %v4633
  %v4635 = vpop.xlane.xlu0 %4634
  %v4636 = vsel %vm545, %v4627, 0.0
  %4637 = vadd.xlane.f32.xlu0 %v4636
  %v4638 = vpop.xlane.xlu0 %4637
  %v4639 = vsel %vm545, %v4629, 0.0
  %4640 = vadd.xlane.f32.xlu0 %v4639
  %v4641 = vpop.xlane.xlu0 %4640
  %v4642 = vrcp.pop %v4632
  %v4643 = vrcp.pop %v4635
  %v4644 = vrcp.pop %v4638
  %v4645 = vrcp.pop %v4641
  %v4646 = vmul.f32 %v4623, %v4642
  %v4647 = vmul.f32 %v4625, %v4643
  %v4648 = vmul.f32 %v4627, %v4644
  %v4649 = vmul.f32 %v4629, %v4645
  %4650 = vrot.lane.b32.xlu0 %v2894, 40
  %v4651 = vpop.permute.xlu0 %4650
  %4652 = vrot.lane.b32.xlu0 %v2899, 40
  %v4653 = vpop.permute.xlu0 %4652
  %v4657 = vsel %vm545, %v4646, 0
  %v4660 = vsel %vm545, %v4647, 0
  %4662 = vmatprep.subr.mxu0 0.0
  %4663 = vmatpush1.msra.mxu0 0.0
  %4664 = vmatprep.subr.mxu0 0.0
  %4665 = vmatpush1.msra.mxu0 0.0
  %4666 = vmatprep.subr.mxu0 0.0
  %4667 = vmatpush1.msra.mxu0 0.0
  %4668 = vmatprep.subr.mxu0 0.0
  %4669 = vmatpush1.msra.mxu0 0.0
  %4670 = vmatprep.subr.mxu0 0.0
  %4671 = vmatpush1.msra.mxu0 0.0
  %4672 = vmatprep.subr.mxu0 0.0
  %4673 = vmatpush1.msra.mxu0 0.0
  %4674 = vmatprep.subr.mxu0 0.0
  %4675 = vmatpush1.msra.mxu0 0.0
  %4676 = vmatprep.subr.mxu0 0.0
  %4677 = vmatpush1.msra.mxu0 0.0
  %4678 = vmatprep.subr.mxu0 0.0
  %4679 = vmatpush1.msra.mxu0 0.0
  %4680 = vmatprep.subr.mxu0 0.0
  %4681 = vmatpush1.msra.mxu0 0.0
  %4682 = vmatprep.subr.mxu0 0.0
  %4683 = vmatpush1.msra.mxu0 0.0
  %4684 = vmatprep.subr.mxu0 0.0
  %4685 = vmatpush1.msra.mxu0 0.0
  %4686 = vmatprep.subr.mxu0 0.0
  %4687 = vmatpush1.msra.mxu0 0.0
  %4688 = vmatprep.subr.mxu0 0.0
  %4689 = vmatpush1.msra.mxu0 0.0
  %4690 = vmatprep.subr.mxu0 0.0
  %4691 = vmatpush1.msra.mxu0 %v4653
  %4692 = vmatprep.subr.mxu0 0.0
  %4693 = vmatpush1.msra.mxu0 %v4651
  %4694 = vmatprep.subr.mxu0 0.0
  %4695 = vmatpush2.msra.mxu0 0.0
  %4696 = vmatprep.subr.mxu0 0.0
  %4697 = vmatpush2.msra.mxu0 0.0
  %4698 = vmatprep.subr.mxu0 0.0
  %4699 = vmatpush2.msra.mxu0 0.0
  %4700 = vmatprep.subr.mxu0 0.0
  %4701 = vmatpush2.msra.mxu0 0.0
  %4702 = vmatprep.subr.mxu0 0.0
  %4703 = vmatpush2.msra.mxu0 0.0
  %4704 = vmatprep.subr.mxu0 0.0
  %4705 = vmatpush2.msra.mxu0 0.0
  %4706 = vmatprep.subr.mxu0 0.0
  %4707 = vmatpush2.msra.mxu0 0.0
  %4708 = vmatprep.subr.mxu0 0.0
  %4709 = vmatpush2.msra.mxu0 0.0
  %4710 = vmatprep.subr.mxu0 0.0
  %4711 = vmatpush2.msra.mxu0 0.0
  %4712 = vmatprep.subr.mxu0 0.0
  %4713 = vmatpush2.msra.mxu0 0.0
  %4714 = vmatprep.subr.mxu0 0.0
  %4715 = vmatpush2.msra.mxu0 0.0
  %4716 = vmatprep.subr.mxu0 0.0
  %4717 = vmatpush2.msra.mxu0 0.0
  %4718 = vmatprep.subr.mxu0 0.0
  %4719 = vmatpush2.msra.mxu0 0.0
  %4720 = vmatprep.subr.mxu0 0.0
  %4721 = vmatpush2.msra.mxu0 0.0
  %4722 = vmatprep.subr.mxu0 0.0
  %4723 = vmatpush2.msra.mxu0 0.0
  %4724 = vmatprep.subr.mxu0 0.0
  %4725 = vmatpush2.msra.mxu0 0.0
  %4726 = vmatprep.mubr.f32.mxu0 0.0
  %4727 = vmatmul.mubr.f32.gmra.mxu0 %v4657
  %v4728 = vpop.f32.mrf.mxu0
  %v4729 = vadd.f32 0.0, %v4728
  %v4730 = vpop.f32.mrf.mxu0
  %4731 = vmatprep.mubr.f32.mxu0 0.0
  %4732 = vmatmul.mubr.f32.gmra.mxu0 %v4660
  %v4733 = vpop.f32.mrf.mxu0
  %v4734 = vadd.f32 0.0, %v4733
  %v4735 = vpop.f32.mrf.mxu0
  %4736 = vdwg.mxu0
  %4737 = vrot.lane.b32.xlu0 %v2904, 40
  %v4738 = vpop.permute.xlu0 %4737
  %4739 = vrot.lane.b32.xlu0 %v2909, 40
  %v4740 = vpop.permute.xlu0 %4739
  %v4744 = vsel %vm545, %v4648, 0
  %v4747 = vsel %vm545, %v4649, 0
  %4749 = vmatprep.subr.mxu0 0.0
  %4750 = vmatpush1.msra.mxu0 0.0
  %4751 = vmatprep.subr.mxu0 0.0
  %4752 = vmatpush1.msra.mxu0 0.0
  %4753 = vmatprep.subr.mxu0 0.0
  %4754 = vmatpush1.msra.mxu0 0.0
  %4755 = vmatprep.subr.mxu0 0.0
  %4756 = vmatpush1.msra.mxu0 0.0
  %4757 = vmatprep.subr.mxu0 0.0
  %4758 = vmatpush1.msra.mxu0 0.0
  %4759 = vmatprep.subr.mxu0 0.0
  %4760 = vmatpush1.msra.mxu0 0.0
  %4761 = vmatprep.subr.mxu0 0.0
  %4762 = vmatpush1.msra.mxu0 0.0
  %4763 = vmatprep.subr.mxu0 0.0
  %4764 = vmatpush1.msra.mxu0 0.0
  %4765 = vmatprep.subr.mxu0 0.0
  %4766 = vmatpush1.msra.mxu0 0.0
  %4767 = vmatprep.subr.mxu0 0.0
  %4768 = vmatpush1.msra.mxu0 0.0
  %4769 = vmatprep.subr.mxu0 0.0
  %4770 = vmatpush1.msra.mxu0 0.0
  %4771 = vmatprep.subr.mxu0 0.0
  %4772 = vmatpush1.msra.mxu0 0.0
  %4773 = vmatprep.subr.mxu0 0.0
  %4774 = vmatpush1.msra.mxu0 0.0
  %4775 = vmatprep.subr.mxu0 0.0
  %4776 = vmatpush1.msra.mxu0 0.0
  %4777 = vmatprep.subr.mxu0 0.0
  %4778 = vmatpush1.msra.mxu0 %v4740
  %4779 = vmatprep.subr.mxu0 0.0
  %4780 = vmatpush1.msra.mxu0 %v4738
  %4781 = vmatprep.subr.mxu0 0.0
  %4782 = vmatpush2.msra.mxu0 0.0
  %4783 = vmatprep.subr.mxu0 0.0
  %4784 = vmatpush2.msra.mxu0 0.0
  %4785 = vmatprep.subr.mxu0 0.0
  %4786 = vmatpush2.msra.mxu0 0.0
  %4787 = vmatprep.subr.mxu0 0.0
  %4788 = vmatpush2.msra.mxu0 0.0
  %4789 = vmatprep.subr.mxu0 0.0
  %4790 = vmatpush2.msra.mxu0 0.0
  %4791 = vmatprep.subr.mxu0 0.0
  %4792 = vmatpush2.msra.mxu0 0.0
  %4793 = vmatprep.subr.mxu0 0.0
  %4794 = vmatpush2.msra.mxu0 0.0
  %4795 = vmatprep.subr.mxu0 0.0
  %4796 = vmatpush2.msra.mxu0 0.0
  %4797 = vmatprep.subr.mxu0 0.0
  %4798 = vmatpush2.msra.mxu0 0.0
  %4799 = vmatprep.subr.mxu0 0.0
  %4800 = vmatpush2.msra.mxu0 0.0
  %4801 = vmatprep.subr.mxu0 0.0
  %4802 = vmatpush2.msra.mxu0 0.0
  %4803 = vmatprep.subr.mxu0 0.0
  %4804 = vmatpush2.msra.mxu0 0.0
  %4805 = vmatprep.subr.mxu0 0.0
  %4806 = vmatpush2.msra.mxu0 0.0
  %4807 = vmatprep.subr.mxu0 0.0
  %4808 = vmatpush2.msra.mxu0 0.0
  %4809 = vmatprep.subr.mxu0 0.0
  %4810 = vmatpush2.msra.mxu0 0.0
  %4811 = vmatprep.subr.mxu0 0.0
  %4812 = vmatpush2.msra.mxu0 0.0
  %4813 = vmatprep.mubr.f32.mxu0 0.0
  %4814 = vmatmul.mubr.f32.gmra.mxu0 %v4744
  %v4815 = vpop.f32.mrf.mxu0
  %v4816 = vadd.f32 0.0, %v4815
  %v4817 = vpop.f32.mrf.mxu0
  %4818 = vmatprep.mubr.f32.mxu0 0.0
  %4819 = vmatmul.mubr.f32.gmra.mxu0 %v4747
  %v4820 = vpop.f32.mrf.mxu0
  %v4821 = vadd.f32 0.0, %v4820
  %v4822 = vpop.f32.mrf.mxu0
  %4823 = vdwg.mxu0
  %v4825 = vsel %vm368, %v4729, 0
  %v4828 = vsel %vm368, %v4734, 0
  %v4831 = vsel %vm368, %v4816, 0
  %v4834 = vsel %vm368, %v4821, 0
  %4836 = vmatprep.subr.mxu0 0.0
  %4837 = vmatpush1.msra.mxu0 0.0
  %4838 = vmatprep.subr.mxu0 0.0
  %4839 = vmatpush1.msra.mxu0 0.0
  %4840 = vmatprep.subr.mxu0 0.0
  %4841 = vmatpush1.msra.mxu0 0.0
  %4842 = vmatprep.subr.mxu0 0.0
  %4843 = vmatpush1.msra.mxu0 0.0
  %4844 = vmatprep.subr.mxu0 0.0
  %4845 = vmatpush1.msra.mxu0 0.0
  %4846 = vmatprep.subr.mxu0 0.0
  %4847 = vmatpush1.msra.mxu0 0.0
  %4848 = vmatprep.subr.mxu0 0.0
  %4849 = vmatpush1.msra.mxu0 0.0
  %4850 = vmatprep.subr.mxu0 0.0
  %4851 = vmatpush1.msra.mxu0 0.0
  %4852 = vmatprep.subr.mxu0 0.0
  %4853 = vmatpush1.msra.mxu0 0.0
  %4854 = vmatprep.subr.mxu0 0.0
  %4855 = vmatpush1.msra.mxu0 0.0
  %4856 = vmatprep.subr.mxu0 0.0
  %4857 = vmatpush1.msra.mxu0 0.0
  %4858 = vmatprep.subr.mxu0 0.0
  %4859 = vmatpush1.msra.mxu0 0.0
  %4860 = vmatprep.subr.mxu0 0.0
  %4861 = vmatpush1.msra.mxu0 0.0
  %4862 = vmatprep.subr.mxu0 0.0
  %4863 = vmatpush1.msra.mxu0 0.0
  %4864 = vmatprep.subr.mxu0 0.0
  %4865 = vmatpush1.msra.mxu0 0.0
  %4866 = vmatprep.subr.mxu0 0.0
  %4867 = vmatpush1.msra.mxu0 %v2916
  %4868 = vmatprep.subr.mxu0 0.0
  %4869 = vmatpush2.msra.mxu0 0.0
  %4870 = vmatprep.subr.mxu0 0.0
  %4871 = vmatpush2.msra.mxu0 0.0
  %4872 = vmatprep.subr.mxu0 0.0
  %4873 = vmatpush2.msra.mxu0 0.0
  %4874 = vmatprep.subr.mxu0 0.0
  %4875 = vmatpush2.msra.mxu0 0.0
  %4876 = vmatprep.subr.mxu0 0.0
  %4877 = vmatpush2.msra.mxu0 0.0
  %4878 = vmatprep.subr.mxu0 0.0
  %4879 = vmatpush2.msra.mxu0 0.0
  %4880 = vmatprep.subr.mxu0 0.0
  %4881 = vmatpush2.msra.mxu0 0.0
  %4882 = vmatprep.subr.mxu0 0.0
  %4883 = vmatpush2.msra.mxu0 0.0
  %4884 = vmatprep.subr.mxu0 0.0
  %4885 = vmatpush2.msra.mxu0 0.0
  %4886 = vmatprep.subr.mxu0 0.0
  %4887 = vmatpush2.msra.mxu0 0.0
  %4888 = vmatprep.subr.mxu0 0.0
  %4889 = vmatpush2.msra.mxu0 0.0
  %4890 = vmatprep.subr.mxu0 0.0
  %4891 = vmatpush2.msra.mxu0 0.0
  %4892 = vmatprep.subr.mxu0 0.0
  %4893 = vmatpush2.msra.mxu0 0.0
  %4894 = vmatprep.subr.mxu0 0.0
  %4895 = vmatpush2.msra.mxu0 0.0
  %4896 = vmatprep.subr.mxu0 0.0
  %4897 = vmatpush2.msra.mxu0 0.0
  %4898 = vmatprep.subr.mxu0 0.0
  %4899 = vmatpush2.msra.mxu0 0.0
  %4900 = vmatprep.mubr.f32.mxu0 0.0
  %4901 = vmatmul.mubr.f32.gmra.mxu0 %v4825
  %v4902 = vpop.f32.mrf.mxu0
  %v4903 = vadd.f32 0.0, %v4902
  %v4904 = vpop.f32.mrf.mxu0
  %4905 = vmatprep.mubr.f32.mxu0 0.0
  %4906 = vmatmul.mubr.f32.gmra.mxu0 %v4828
  %v4907 = vpop.f32.mrf.mxu0
  %v4908 = vadd.f32 0.0, %v4907
  %v4909 = vpop.f32.mrf.mxu0
  %4910 = vmatprep.mubr.f32.mxu0 0.0
  %4911 = vmatmul.mubr.f32.gmra.mxu0 %v4831
  %v4912 = vpop.f32.mrf.mxu0
  %v4913 = vadd.f32 0.0, %v4912
  %v4914 = vpop.f32.mrf.mxu0
  %4915 = vmatprep.mubr.f32.mxu0 0.0
  %4916 = vmatmul.mubr.f32.gmra.mxu0 %v4834
  %v4917 = vpop.f32.mrf.mxu0
  %v4918 = vadd.f32 0.0, %v4917
  %v4919 = vpop.f32.mrf.mxu0
  %4920 = vdwg.mxu0
  %v4921 = vadd.f32 %v4416, %v4903
  %v4922 = vadd.f32 %v4417, %v4908
  %v4923 = vadd.f32 %v4418, %v4913
  %v4924 = vadd.f32 %v4419, %v4918
  %v4925 = vadd.f32 %v2722, %v4921
  %v4926 = vadd.f32 %v2723, %v4922
  %v4927 = vadd.f32 %v2724, %v4923
  %v4928 = vadd.f32 %v2725, %v4924
  %s4929 = scalar_lea.vmem %s9, 1
  %v4930 = vld [vmem:[%s4929] sm:$0x1]
  %v4932 = vlaneseq
  %v4933 = vshrl.u32 %v4932, 7
  %v4934 = vsub.s32 0, %v4933
  %v4935 = vrot.slane %v4930, %v4934
  %v4937 = vadd.f32 %v4925, %v4935
  %v4938 = vadd.f32 %v4926, %v4935
  %v4939 = vadd.f32 %v4927, %v4935
  %v4940 = vadd.f32 %v4928, %v4935
  %s4941 = scalar_lea.vmem %s10, 1
  %v4942 = vld [vmem:[%s4941] sm:$0x1]
  %s4943 = scalar_lea.vmem %s11, 1
  %v4944 = vld [vmem:[%s4943] sm:$0x1]
  %v4945 = vsel %vm176, %v4937, 0.0
  %4946 = vadd.xlane.f32.xlu0 %v4945
  %v4947 = vpop.xlane.xlu0 %4946
  %v4948 = vsel %vm176, %v4938, 0.0
  %4949 = vadd.xlane.f32.xlu0 %v4948
  %v4950 = vpop.xlane.xlu0 %4949
  %v4951 = vsel %vm176, %v4939, 0.0
  %4952 = vadd.xlane.f32.xlu0 %v4951
  %v4953 = vpop.xlane.xlu0 %4952
  %v4954 = vsel %vm176, %v4940, 0.0
  %4955 = vadd.xlane.f32.xlu0 %v4954
  %v4956 = vpop.xlane.xlu0 %4955
  %v4957 = vmul.f32 %v4947, %v189
  %v4958 = vmul.f32 %v4950, %v189
  %v4959 = vmul.f32 %v4953, %v189
  %v4960 = vmul.f32 %v4956, %v189
  %v4961 = vsub.f32 %v4937, %v4957
  %v4962 = vsub.f32 %v4938, %v4958
  %v4963 = vsub.f32 %v4939, %v4959
  %v4964 = vsub.f32 %v4940, %v4960
  %v4965 = vmul.f32 %v4961, %v4961
  %v4966 = vmul.f32 %v4962, %v4962
  %v4967 = vmul.f32 %v4963, %v4963
  %v4968 = vmul.f32 %v4964, %v4964
  %v4969 = vsel %vm176, %v4965, 0.0
  %4970 = vadd.xlane.f32.xlu0 %v4969
  %v4971 = vpop.xlane.xlu0 %4970
  %v4972 = vsel %vm176, %v4966, 0.0
  %4973 = vadd.xlane.f32.xlu0 %v4972
  %v4974 = vpop.xlane.xlu0 %4973
  %v4975 = vsel %vm176, %v4967, 0.0
  %4976 = vadd.xlane.f32.xlu0 %v4975
  %v4977 = vpop.xlane.xlu0 %4976
  %v4978 = vsel %vm176, %v4968, 0.0
  %4979 = vadd.xlane.f32.xlu0 %v4978
  %v4980 = vpop.xlane.xlu0 %4979
  %v4981 = vmul.f32 %v4971, %v189
  %v4982 = vmul.f32 %v4974, %v189
  %v4983 = vmul.f32 %v4977, %v189
  %v4984 = vmul.f32 %v4980, %v189
  %v4985 = vadd.f32 %v4981, 1e-06
  %v4986 = vadd.f32 %v4982, 1e-06
  %v4987 = vadd.f32 %v4983, 1e-06
  %v4988 = vadd.f32 %v4984, 1e-06
  %v4989 = vrsqrt.pop %v4985
  %v4990 = vrsqrt.pop %v4986
  %v4991 = vrsqrt.pop %v4987
  %v4992 = vrsqrt.pop %v4988
  %v4993 = vmul.f32 %v4961, %v4989
  %v4994 = vmul.f32 %v4962, %v4990
  %v4995 = vmul.f32 %v4963, %v4991
  %v4996 = vmul.f32 %v4964, %v4992
  %v4998 = vlaneseq
  %v4999 = vshrl.u32 %v4998, 7
  %v5000 = vsub.s32 0, %v4999
  %v5001 = vrot.slane %v4942, %v5000
  %v5003 = vmul.f32 %v4993, %v5001
  %v5004 = vmul.f32 %v4994, %v5001
  %v5005 = vmul.f32 %v4995, %v5001
  %v5006 = vmul.f32 %v4996, %v5001
  %v5008 = vlaneseq
  %v5009 = vshrl.u32 %v5008, 7
  %v5010 = vsub.s32 0, %v5009
  %v5011 = vrot.slane %v4944, %v5010
  %v5013 = vadd.f32 %v5003, %v5011
  %v5014 = vadd.f32 %v5004, %v5011
  %v5015 = vadd.f32 %v5005, %v5011
  %v5016 = vadd.f32 %v5006, %v5011
  %s5017 = scalar_lea.vmem %s12, 32
  %v5018 = vld [vmem:[%s5017] sm:$0xff]
  %v5019 = vld [vmem:[%s5017 + $0x8] sm:$0xff]
  %v5020 = vld [vmem:[%s5017 + $0x10] sm:$0xff]
  %v5021 = vld [vmem:[%s5017 + $0x18] sm:$0xff]
  %s5022 = scalar_lea.vmem %s13, 1
  %v5023 = vld [vmem:[%s5022] sm:$0x1]
  %v5025 = vlaneseq
  %v5026 = vshrl.u32 %v5025, 7
  %v5027 = vsub.s32 0, %v5026
  %v5028 = vrot.slane %v5023, %v5027
  %v5031 = vsel %vm176, %v5013, 0
  %v5034 = vsel %vm176, %v5014, 0
  %v5037 = vsel %vm176, %v5015, 0
  %v5040 = vsel %vm176, %v5016, 0
  %5042 = vmatprep.subr.mxu0 0.0
  %5043 = vmatpush1.msra.mxu0 0.0
  %5044 = vmatprep.subr.mxu0 0.0
  %5045 = vmatpush1.msra.mxu0 0.0
  %5046 = vmatprep.subr.mxu0 0.0
  %5047 = vmatpush1.msra.mxu0 0.0
  %5048 = vmatprep.subr.mxu0 0.0
  %5049 = vmatpush1.msra.mxu0 0.0
  %5050 = vmatprep.subr.mxu0 0.0
  %5051 = vmatpush1.msra.mxu0 0.0
  %5052 = vmatprep.subr.mxu0 0.0
  %5053 = vmatpush1.msra.mxu0 0.0
  %5054 = vmatprep.subr.mxu0 0.0
  %5055 = vmatpush1.msra.mxu0 0.0
  %5056 = vmatprep.subr.mxu0 0.0
  %5057 = vmatpush1.msra.mxu0 0.0
  %5058 = vmatprep.subr.mxu0 0.0
  %5059 = vmatpush1.msra.mxu0 0.0
  %5060 = vmatprep.subr.mxu0 0.0
  %5061 = vmatpush1.msra.mxu0 0.0
  %5062 = vmatprep.subr.mxu0 0.0
  %5063 = vmatpush1.msra.mxu0 0.0
  %5064 = vmatprep.subr.mxu0 0.0
  %5065 = vmatpush1.msra.mxu0 0.0
  %5066 = vmatprep.subr.mxu0 0.0
  %5067 = vmatpush1.msra.mxu0 %v5021
  %5068 = vmatprep.subr.mxu0 0.0
  %5069 = vmatpush1.msra.mxu0 %v5020
  %5070 = vmatprep.subr.mxu0 0.0
  %5071 = vmatpush1.msra.mxu0 %v5019
  %5072 = vmatprep.subr.mxu0 0.0
  %5073 = vmatpush1.msra.mxu0 %v5018
  %5074 = vmatprep.subr.mxu0 0.0
  %5075 = vmatpush2.msra.mxu0 0.0
  %5076 = vmatprep.subr.mxu0 0.0
  %5077 = vmatpush2.msra.mxu0 0.0
  %5078 = vmatprep.subr.mxu0 0.0
  %5079 = vmatpush2.msra.mxu0 0.0
  %5080 = vmatprep.subr.mxu0 0.0
  %5081 = vmatpush2.msra.mxu0 0.0
  %5082 = vmatprep.subr.mxu0 0.0
  %5083 = vmatpush2.msra.mxu0 0.0
  %5084 = vmatprep.subr.mxu0 0.0
  %5085 = vmatpush2.msra.mxu0 0.0
  %5086 = vmatprep.subr.mxu0 0.0
  %5087 = vmatpush2.msra.mxu0 0.0
  %5088 = vmatprep.subr.mxu0 0.0
  %5089 = vmatpush2.msra.mxu0 0.0
  %5090 = vmatprep.subr.mxu0 0.0
  %5091 = vmatpush2.msra.mxu0 0.0
  %5092 = vmatprep.subr.mxu0 0.0
  %5093 = vmatpush2.msra.mxu0 0.0
  %5094 = vmatprep.subr.mxu0 0.0
  %5095 = vmatpush2.msra.mxu0 0.0
  %5096 = vmatprep.subr.mxu0 0.0
  %5097 = vmatpush2.msra.mxu0 0.0
  %5098 = vmatprep.subr.mxu0 0.0
  %5099 = vmatpush2.msra.mxu0 0.0
  %5100 = vmatprep.subr.mxu0 0.0
  %5101 = vmatpush2.msra.mxu0 0.0
  %5102 = vmatprep.subr.mxu0 0.0
  %5103 = vmatpush2.msra.mxu0 0.0
  %5104 = vmatprep.subr.mxu0 0.0
  %5105 = vmatpush2.msra.mxu0 0.0
  %5106 = vmatprep.mubr.f32.mxu0 0.0
  %5107 = vmatmul.mubr.f32.gmra.mxu0 %v5031
  %v5108 = vpop.f32.mrf.mxu0
  %v5109 = vadd.f32 %v5028, %v5108
  %v5110 = vpop.f32.mrf.mxu0
  %5111 = vmatprep.mubr.f32.mxu0 0.0
  %5112 = vmatmul.mubr.f32.gmra.mxu0 %v5034
  %v5113 = vpop.f32.mrf.mxu0
  %v5114 = vadd.f32 %v5028, %v5113
  %v5115 = vpop.f32.mrf.mxu0
  %5116 = vmatprep.mubr.f32.mxu0 0.0
  %5117 = vmatmul.mubr.f32.gmra.mxu0 %v5037
  %v5118 = vpop.f32.mrf.mxu0
  %v5119 = vadd.f32 %v5028, %v5118
  %v5120 = vpop.f32.mrf.mxu0
  %5121 = vmatprep.mubr.f32.mxu0 0.0
  %5122 = vmatmul.mubr.f32.gmra.mxu0 %v5040
  %v5123 = vpop.f32.mrf.mxu0
  %v5124 = vadd.f32 %v5028, %v5123
  %v5125 = vpop.f32.mrf.mxu0
  %5126 = vdwg.mxu0
  %v5127 = vmul.f32 %v5109, %v5109
  %v5128 = vmul.f32 %v5114, %v5114
  %v5129 = vmul.f32 %v5119, %v5119
  %v5130 = vmul.f32 %v5124, %v5124
  %v5131 = vmul.f32 %v5109, %v5127
  %v5132 = vmul.f32 %v5114, %v5128
  %v5133 = vmul.f32 %v5119, %v5129
  %v5134 = vmul.f32 %v5124, %v5130
  %v5135 = vmul.f32 %v5131, 0.044715
  %v5136 = vmul.f32 %v5132, 0.044715
  %v5137 = vmul.f32 %v5133, 0.044715
  %v5138 = vmul.f32 %v5134, 0.044715
  %v5139 = vadd.f32 %v5109, %v5135
  %v5140 = vadd.f32 %v5114, %v5136
  %v5141 = vadd.f32 %v5119, %v5137
  %v5142 = vadd.f32 %v5124, %v5138
  %v5143 = vmul.f32 %v5139, 0.7978846
  %v5144 = vmul.f32 %v5140, 0.7978846
  %v5145 = vmul.f32 %v5141, 0.7978846
  %v5146 = vmul.f32 %v5142, 0.7978846
  %v5147 = vtanh.pop %v5143
  %v5148 = vtanh.pop %v5144
  %v5149 = vtanh.pop %v5145
  %v5150 = vtanh.pop %v5146
  %v5151 = vadd.f32 %v5147, 1.0
  %v5152 = vadd.f32 %v5148, 1.0
  %v5153 = vadd.f32 %v5149, 1.0
  %v5154 = vadd.f32 %v5150, 1.0
  %v5155 = vmul.f32 %v5151, 0.5
  %v5156 = vmul.f32 %v5152, 0.5
  %v5157 = vmul.f32 %v5153, 0.5
  %v5158 = vmul.f32 %v5154, 0.5
  %v5159 = vmul.f32 %v5109, %v5155
  %v5160 = vmul.f32 %v5114, %v5156
  %v5161 = vmul.f32 %v5119, %v5157
  %v5162 = vmul.f32 %v5124, %v5158
  %s5163 = scalar_lea.vmem %s14, 64
  %v5164 = vld [vmem:[%s5163] sm:$0xff]
  %v5165 = vld [vmem:[%s5163 + $0x8] sm:$0xff]
  %v5166 = vld [vmem:[%s5163 + $0x10] sm:$0xff]
  %v5167 = vld [vmem:[%s5163 + $0x18] sm:$0xff]
  %v5168 = vld [vmem:[%s5163 + $0x20] sm:$0xff]
  %v5169 = vld [vmem:[%s5163 + $0x28] sm:$0xff]
  %v5170 = vld [vmem:[%s5163 + $0x30] sm:$0xff]
  %v5171 = vld [vmem:[%s5163 + $0x38] sm:$0xff]
  %v5173 = vsel %vm2613, %v5159, 0
  %v5176 = vsel %vm2613, %v5160, 0
  %v5179 = vsel %vm2613, %v5161, 0
  %v5182 = vsel %vm2613, %v5162, 0
  %5184 = vmatprep.subr.mxu0 0.0
  %5185 = vmatpush1.msra.mxu0 0.0
  %5186 = vmatprep.subr.mxu0 0.0
  %5187 = vmatpush1.msra.mxu0 0.0
  %5188 = vmatprep.subr.mxu0 0.0
  %5189 = vmatpush1.msra.mxu0 0.0
  %5190 = vmatprep.subr.mxu0 0.0
  %5191 = vmatpush1.msra.mxu0 0.0
  %5192 = vmatprep.subr.mxu0 0.0
  %5193 = vmatpush1.msra.mxu0 0.0
  %5194 = vmatprep.subr.mxu0 0.0
  %5195 = vmatpush1.msra.mxu0 0.0
  %5196 = vmatprep.subr.mxu0 0.0
  %5197 = vmatpush1.msra.mxu0 0.0
  %5198 = vmatprep.subr.mxu0 0.0
  %5199 = vmatpush1.msra.mxu0 0.0
  %5200 = vmatprep.subr.mxu0 0.0
  %5201 = vmatpush1.msra.mxu0 %v5171
  %5202 = vmatprep.subr.mxu0 0.0
  %5203 = vmatpush1.msra.mxu0 %v5170
  %5204 = vmatprep.subr.mxu0 0.0
  %5205 = vmatpush1.msra.mxu0 %v5169
  %5206 = vmatprep.subr.mxu0 0.0
  %5207 = vmatpush1.msra.mxu0 %v5168
  %5208 = vmatprep.subr.mxu0 0.0
  %5209 = vmatpush1.msra.mxu0 %v5167
  %5210 = vmatprep.subr.mxu0 0.0
  %5211 = vmatpush1.msra.mxu0 %v5166
  %5212 = vmatprep.subr.mxu0 0.0
  %5213 = vmatpush1.msra.mxu0 %v5165
  %5214 = vmatprep.subr.mxu0 0.0
  %5215 = vmatpush1.msra.mxu0 %v5164
  %5216 = vmatprep.subr.mxu0 0.0
  %5217 = vmatpush2.msra.mxu0 0.0
  %5218 = vmatprep.subr.mxu0 0.0
  %5219 = vmatpush2.msra.mxu0 0.0
  %5220 = vmatprep.subr.mxu0 0.0
  %5221 = vmatpush2.msra.mxu0 0.0
  %5222 = vmatprep.subr.mxu0 0.0
  %5223 = vmatpush2.msra.mxu0 0.0
  %5224 = vmatprep.subr.mxu0 0.0
  %5225 = vmatpush2.msra.mxu0 0.0
  %5226 = vmatprep.subr.mxu0 0.0
  %5227 = vmatpush2.msra.mxu0 0.0
  %5228 = vmatprep.subr.mxu0 0.0
  %5229 = vmatpush2.msra.mxu0 0.0
  %5230 = vmatprep.subr.mxu0 0.0
  %5231 = vmatpush2.msra.mxu0 0.0
  %5232 = vmatprep.subr.mxu0 0.0
  %5233 = vmatpush2.msra.mxu0 0.0
  %5234 = vmatprep.subr.mxu0 0.0
  %5235 = vmatpush2.msra.mxu0 0.0
  %5236 = vmatprep.subr.mxu0 0.0
  %5237 = vmatpush2.msra.mxu0 0.0
  %5238 = vmatprep.subr.mxu0 0.0
  %5239 = vmatpush2.msra.mxu0 0.0
  %5240 = vmatprep.subr.mxu0 0.0
  %5241 = vmatpush2.msra.mxu0 0.0
  %5242 = vmatprep.subr.mxu0 0.0
  %5243 = vmatpush2.msra.mxu0 0.0
  %5244 = vmatprep.subr.mxu0 0.0
  %5245 = vmatpush2.msra.mxu0 0.0
  %5246 = vmatprep.subr.mxu0 0.0
  %5247 = vmatpush2.msra.mxu0 0.0
  %5248 = vmatprep.mubr.f32.mxu0 0.0
  %5249 = vmatmul.mubr.f32.gmra.mxu0 %v5173
  %v5250 = vpop.f32.mrf.mxu0
  %v5251 = vadd.f32 0.0, %v5250
  %v5252 = vpop.f32.mrf.mxu0
  %5253 = vmatprep.mubr.f32.mxu0 0.0
  %5254 = vmatmul.mubr.f32.gmra.mxu0 %v5176
  %v5255 = vpop.f32.mrf.mxu0
  %v5256 = vadd.f32 0.0, %v5255
  %v5257 = vpop.f32.mrf.mxu0
  %5258 = vmatprep.mubr.f32.mxu0 0.0
  %5259 = vmatmul.mubr.f32.gmra.mxu0 %v5179
  %v5260 = vpop.f32.mrf.mxu0
  %v5261 = vadd.f32 0.0, %v5260
  %v5262 = vpop.f32.mrf.mxu0
  %5263 = vmatprep.mubr.f32.mxu0 0.0
  %5264 = vmatmul.mubr.f32.gmra.mxu0 %v5182
  %v5265 = vpop.f32.mrf.mxu0
  %v5266 = vadd.f32 0.0, %v5265
  %v5267 = vpop.f32.mrf.mxu0
  %5268 = vdwg.mxu0
  %v5269 = vadd.f32 %v4937, %v5251
  %v5270 = vadd.f32 %v4938, %v5256
  %v5271 = vadd.f32 %v4939, %v5261
  %v5272 = vadd.f32 %v4940, %v5266
  %s5273 = scalar_lea.vmem %s15, 1
  %v5274 = vld [vmem:[%s5273] sm:$0x1]
  %v5276 = vlaneseq
  %v5277 = vshrl.u32 %v5276, 7
  %v5278 = vsub.s32 0, %v5277
  %v5279 = vrot.slane %v5274, %v5278
  %v5281 = vadd.f32 %v5269, %v5279
  %v5282 = vadd.f32 %v5270, %v5279
  %v5283 = vadd.f32 %v5271, %v5279
  %v5284 = vadd.f32 %v5272, %v5279
  %5285 = vst.msk [vmem:[%s16] sm:$0xff] %vm176, %v5281
  %5286 = vst.msk [vmem:[%s16 + $0x8] sm:$0xff] %vm176, %v5282
  %5287 = vst.msk [vmem:[%s16 + $0x10] sm:$0xff] %vm176, %v5283
  %5288 = vst.msk [vmem:[%s16 + $0x18] sm:$0xff] %vm176, %v5284
  // Predicated region
  $region66: #{hmr2_forward.2} parent=0 // pred_check
    _
  $region67: #{hmr2_forward.2} parent=0 // pred_check_branch
    %5290 = sbr.rel (0) target = $region69
  $region68: #{hmr2_forward.2} parent=0 // pred_region
    _
  $region69: #{hmr2_forward.2} parent=0 // pred_fallthru
    _
  // Predicated region
  $region70: #{hmr2_forward.2} parent=0 // pred_check
    _
  $region71: #{hmr2_forward.2} parent=0 // pred_check_branch
    %5292 = sbr.rel (0) target = $region73
  $region72: #{hmr2_forward.2} parent=0 // pred_region
    _
  $region73: #{hmr2_forward.2} parent=0 // pred_fallthru
    _

</llo_original>
